<compile_context>
chip_gen: v5e
topology: v5e:2x2
jax: 0.10.0
libtpu: 0.0.40
codegen_flags: <defaults>
</compile_context>

<pallas_src>
import jax
import jax.numpy as jnp
from jax.experimental import pallas as pl
from jax.experimental.pallas import tpu as pltpu

C_IN = 2048
C_MID = 512
C_OUT = 512
BN_EPS = 1e-5


def context_branch_kernel(x_ref, w_ref, b_ref, out_k_ref, out_v_ref):
    # x_ref: (C_IN, tn); w_ref: (2*C_OUT, C_IN) bf16; b_ref: (2*C_OUT, 1) f32.
    x = x_ref[...]
    if x_ref.dtype != jnp.bfloat16:
        x = x.astype(jnp.bfloat16)                     # in-kernel cast (VMEM-local)
    # One fused MXU matmul for both branches; f32 accumulation.
    y = jnp.dot(w_ref[...], x, preferred_element_type=jnp.float32)   # (1024, tn)
    y = jnp.maximum(y + b_ref[...], 0.0)                             # bias + ReLU
    out_k_ref[...] = y[:C_OUT, :].astype(out_k_ref.dtype)
    out_v_ref[...] = y[C_OUT:, :].astype(out_v_ref.dtype)


def _fold_branch(p):
    """Fold Conv1 -> BN1 -> Conv2 -> BN2 into (W_fused, b_fused) in f32."""
    w1 = p["w1"].reshape(C_MID, C_IN).astype(jnp.float32)
    w2 = p["w2"].reshape(C_OUT, C_MID).astype(jnp.float32)
    s1 = p["bn1_g"] / jnp.sqrt(p["bn1_v"] + BN_EPS)
    b1 = p["bn1_b"] - s1 * p["bn1_m"]
    s2 = p["bn2_g"] / jnp.sqrt(p["bn2_v"] + BN_EPS)
    b2 = p["bn2_b"] - s2 * p["bn2_m"]
    w_fused = (s2[:, None] * (w2 * s1[None, :])) @ w1     # (512, 2048), f32
    b_fused = s2 * (w2 @ b1) + b2                          # (512,),      f32
    return w_fused, b_fused


def context_branch_pallas(x_nchw, params, *, out_dtype=None, tn=None):
    """x_nchw: (B, 2048, H, W).  Returns (key, value), each (B, 512, H, W)."""
    B, C, H, W = x_nchw.shape
    assert C == C_IN
    HW = H * W
    out_dtype = x_nchw.dtype if out_dtype is None else out_dtype

    # Pad the spatial extent to a multiple of 128 so the lane block dim is
    # always 128-aligned (avoids masked partial stores on the outputs).
    HW_pad = ((HW + 127) // 128) * 128

    if tn is None:
        # Largest 128-multiple divisor of HW_pad that (a) is <= 1024 and
        # (b) leaves >= 4 total grid steps so the grid can shard across
        # v7x's two TensorCores and still pipeline; otherwise the smallest.
        cands = [m for m in range(128, 1025, 128) if HW_pad % m == 0]
        tn = cands[0]
        for c in reversed(cands):
            if B * (HW_pad // c) >= 4:
                tn = c
                break
    assert tn % 128 == 0 and HW_pad % tn == 0

    # NCHW -> (B, C, H*W) is a free reshape.  The zero-pad (only when HW is not
    # already a multiple of 128) is the one extra HBM copy we accept in
    # exchange for unmasked lane-dense stores.
    x3 = x_nchw.reshape(B, C_IN, HW)
    if HW_pad != HW:
        x3 = jnp.pad(x3, ((0, 0), (0, 0), (0, HW_pad - HW)))

    # Fold both branches in f32, concatenate on output channels, cast once.
    wk, bk = _fold_branch(params["key"])
    wv, bv = _fold_branch(params["value"])
    w_fused = jnp.concatenate([wk, wv], axis=0).astype(jnp.bfloat16)   # (1024, 2048)
    b_fused = jnp.concatenate([bk, bv]).reshape(2 * C_OUT, 1)          # (1024, 1) f32

    in_specs = [
        pl.BlockSpec((None, C_IN, tn), lambda b, j: (b, 0, j)),        # x tile
        pl.BlockSpec((2 * C_OUT, C_IN), lambda b, j: (0, 0)),          # fused weight
        pl.BlockSpec((2 * C_OUT, 1), lambda b, j: (0, 0)),             # fused bias
    ]
    out_spec = pl.BlockSpec((None, C_OUT, tn), lambda b, j: (b, 0, j))

    out_k, out_v = pl.pallas_call(
        context_branch_kernel,
        out_shape=(
            jax.ShapeDtypeStruct((B, C_OUT, HW_pad), out_dtype),
            jax.ShapeDtypeStruct((B, C_OUT, HW_pad), out_dtype),
        ),
        grid_spec=pltpu.PrefetchScalarGridSpec(
            num_scalar_prefetch=0,
            grid=(B, HW_pad // tn),
            in_specs=in_specs,
            out_specs=[out_spec, out_spec],
        ),
        compiler_params=pltpu.CompilerParams(
            dimension_semantics=("parallel", "parallel"),
            vmem_limit_bytes=56 << 20,     # fits v7x's 64 MiB physical VMEM
        ),
    )(x3, w_fused, b_fused)

    if HW_pad != HW:
        out_k = out_k[:, :, :HW]
        out_v = out_v[:, :, :HW]
    return out_k.reshape(B, C_OUT, H, W), out_v.reshape(B, C_OUT, H, W)


def make_params(key):
    """Deterministic synthetic parameters matching the module's __init__ shapes."""
    def branch(k):
        ks = jax.random.split(k, 10)
        return {
            "w1": jax.random.normal(ks[0], (C_MID, C_IN, 1, 1), jnp.float32) * 0.02,
            "bn1_g": jax.random.uniform(ks[1], (C_MID,), jnp.float32, 0.5, 1.5),
            "bn1_b": jax.random.normal(ks[2], (C_MID,), jnp.float32) * 0.1,
            "bn1_m": jax.random.normal(ks[3], (C_MID,), jnp.float32) * 0.1,
            "bn1_v": jax.random.uniform(ks[4], (C_MID,), jnp.float32, 0.5, 1.5),
            "w2": jax.random.normal(ks[5], (C_OUT, C_MID, 1, 1), jnp.float32) * 0.02,
            "bn2_g": jax.random.uniform(ks[6], (C_OUT,), jnp.float32, 0.5, 1.5),
            "bn2_b": jax.random.normal(ks[7], (C_OUT,), jnp.float32) * 0.1,
            "bn2_m": jax.random.normal(ks[8], (C_OUT,), jnp.float32) * 0.1,
            "bn2_v": jax.random.uniform(ks[9], (C_OUT,), jnp.float32, 0.5, 1.5),
        }

    kk, kv = jax.random.split(key)
    return {"key": branch(kk), "value": branch(kv)}


def _reference(x_nchw, params):
    """Pure-JAX f32 reference (eval-mode BN, un-folded) for correctness."""
    def bcast(v):
        return v[None, :, None, None]

    def branch(x, p):
        w1 = p["w1"].reshape(C_MID, C_IN)
        w2 = p["w2"].reshape(C_OUT, C_MID)
        h = jnp.einsum("oc,bchw->bohw", w1, x)
        s1 = p["bn1_g"] / jnp.sqrt(p["bn1_v"] + BN_EPS)
        h = (h - bcast(p["bn1_m"])) * bcast(s1) + bcast(p["bn1_b"])
        h = jnp.einsum("oc,bchw->bohw", w2, h)
        s2 = p["bn2_g"] / jnp.sqrt(p["bn2_v"] + BN_EPS)
        h = (h - bcast(p["bn2_m"])) * bcast(s2) + bcast(p["bn2_b"])
        return jnp.maximum(h, 0.0)

    return branch(x_nchw, params["key"]), branch(x_nchw, params["value"])


def _check(x, params):
    out_k, out_v = context_branch_pallas(x, params)
    jax.block_until_ready((out_k, out_v))
    ref_k, ref_v = _reference(x, params)
    assert out_k.shape == ref_k.shape and out_v.shape == ref_v.shape
    # bf16 matmul operands (f32 accumulation + f32 weight fold): 3e-2 headroom.
    assert jnp.allclose(out_k, ref_k, atol=3e-2, rtol=3e-2)
    assert jnp.allclose(out_v, ref_v, atol=3e-2, rtol=3e-2)


if __name__ == "__main__":
    root = jax.random.PRNGKey(0)
    kx1, kx2, kp = jax.random.split(root, 3)
    params = make_params(kp)

    # Channel counts (2048 -> 512) are fixed by the module; keep spatial small.
    # Case 1: tiny feature map (H*W = 16) exercises the pad-to-128 path.
    x1 = jax.random.normal(kx1, (2, C_IN, 4, 4), jnp.float32)
    _check(x1, params)

    # Case 2: H*W = 256 (already 128-aligned) exercises the multi-tile path.
    x2 = jax.random.normal(kx2, (1, C_IN, 16, 16), jnp.float32)
    _check(x2, params)

    print("KERNEL_OK")
</pallas_src>

<mosaic_0001>
module attributes {stable_mosaic.version = 11 : i64} {
  func.func @context_branch_kernel(%arg0: i32, %arg1: i32, %arg2: memref<1x2048x128xf32, #tpu.memory_space<vmem>>, %arg3: memref<1024x2048xbf16, #tpu.memory_space<vmem>>, %arg4: memref<1024x1xf32, #tpu.memory_space<vmem>>, %arg5: memref<1x512x128xf32, #tpu.memory_space<vmem>>, %arg6: memref<1x512x128xf32, #tpu.memory_space<vmem>>) attributes {dimension_semantics = [#tpu.dimension_semantics<parallel>, #tpu.dimension_semantics<parallel>], iteration_bounds = array<i64: 2, 1>, scalar_prefetch = 0 : i64, scratch_operands = 0 : i64, tpu.core_type = #tpu.core_type<tc>, window_params = [{transform_indices = @transform_0, window_bounds = array<i64: 1, 2048, 128>}, {pipeline_mode = #tpu.pipeline_mode<synchronous>, transform_indices = @transform_1, window_bounds = array<i64: 1024, 2048>}, {pipeline_mode = #tpu.pipeline_mode<synchronous>, transform_indices = @transform_2, window_bounds = array<i64: 1024, 1>}, {transform_indices = @transform_3, window_bounds = array<i64: 1, 512, 128>}, {transform_indices = @transform_4, window_bounds = array<i64: 1, 512, 128>}]} {
    %c0 = arith.constant 0 : index
    %c0_0 = arith.constant 0 : index
    %c0_1 = arith.constant 0 : index
    %0 = vector.load %arg2[%c0, %c0_0, %c0_1] : memref<1x2048x128xf32, #tpu.memory_space<vmem>>, vector<1x2048x128xf32>
    %1 = vector.shape_cast %0 : vector<1x2048x128xf32> to vector<2048x128xf32>
    %2 = arith.truncf %1 : vector<2048x128xf32> to vector<2048x128xbf16>
    %c0_2 = arith.constant 0 : index
    %c0_3 = arith.constant 0 : index
    %3 = vector.load %arg3[%c0_2, %c0_3] : memref<1024x2048xbf16, #tpu.memory_space<vmem>>, vector<1024x2048xbf16>
    %cst = arith.constant dense<0.000000e+00> : vector<1024x128xf32>
    %4 = tpu.matmul %3, %2, %cst {dimension_numbers = #tpu.dot_dimension_numbers<[1], [0], [0], [1], [0, 0, 1, 1], [], []>} : vector<1024x2048xbf16>, vector<2048x128xbf16>, vector<1024x128xf32> -> vector<1024x128xf32>
    %c0_4 = arith.constant 0 : index
    %c0_5 = arith.constant 0 : index
    %5 = vector.load %arg4[%c0_4, %c0_5] : memref<1024x1xf32, #tpu.memory_space<vmem>>, vector<1024x1xf32>
    %6 = vector.broadcast %5 : vector<1024x1xf32> to vector<1024x128xf32>
    %7 = arith.addf %4, %6 : vector<1024x128xf32>
    %cst_6 = arith.constant 0.000000e+00 : f32
    %8 = vector.broadcast %cst_6 : f32 to vector<1024x128xf32>
    %9 = arith.maximumf %7, %8 : vector<1024x128xf32>
    %10 = vector.extract_strided_slice %9 {offsets = [0, 0], sizes = [512, 128], strides = [1, 1]} : vector<1024x128xf32> to vector<512x128xf32>
    %c0_7 = arith.constant 0 : index
    %c0_8 = arith.constant 0 : index
    %c0_9 = arith.constant 0 : index
    %11 = vector.load %arg5[%c0_7, %c0_8, %c0_9] : memref<1x512x128xf32, #tpu.memory_space<vmem>>, vector<1x512x128xf32>
    %12 = vector.shape_cast %11 : vector<1x512x128xf32> to vector<512x128xf32>
    %13 = vector.shape_cast %10 : vector<512x128xf32> to vector<1x512x128xf32>
    tpu.vector_store %arg5[%c0_7, %c0_8, %c0_9], %13 {strides = array<i32>} : memref<1x512x128xf32, #tpu.memory_space<vmem>>, vector<1x512x128xf32>,
    %14 = vector.extract_strided_slice %9 {offsets = [512, 0], sizes = [512, 128], strides = [1, 1]} : vector<1024x128xf32> to vector<512x128xf32>
    %c0_10 = arith.constant 0 : index
    %c0_11 = arith.constant 0 : index
    %c0_12 = arith.constant 0 : index
    %15 = vector.load %arg6[%c0_10, %c0_11, %c0_12] : memref<1x512x128xf32, #tpu.memory_space<vmem>>, vector<1x512x128xf32>
    %16 = vector.shape_cast %15 : vector<1x512x128xf32> to vector<512x128xf32>
    %17 = vector.shape_cast %14 : vector<512x128xf32> to vector<1x512x128xf32>
    tpu.vector_store %arg6[%c0_10, %c0_11, %c0_12], %17 {strides = array<i32>} : memref<1x512x128xf32, #tpu.memory_space<vmem>>, vector<1x512x128xf32>,
    return
  }
  func.func @transform_0(%arg0: i32, %arg1: i32) -> (i32, i32, i32) {
    %c0_i32 = arith.constant 0 : i32
    %c0_i32_0 = arith.constant 0 : i32
    return %arg0, %c0_i32, %arg1 : i32, i32, i32
  }
  func.func @transform_1(%arg0: i32, %arg1: i32) -> (i32, i32) {
    %c0_i32 = arith.constant 0 : i32
    %c0_i32_0 = arith.constant 0 : i32
    %c0_i32_1 = arith.constant 0 : i32
    return %c0_i32, %c0_i32_0 : i32, i32
  }
  func.func @transform_2(%arg0: i32, %arg1: i32) -> (i32, i32) {
    %c0_i32 = arith.constant 0 : i32
    %c0_i32_0 = arith.constant 0 : i32
    %c0_i32_1 = arith.constant 0 : i32
    return %c0_i32, %c0_i32_0 : i32, i32
  }
  func.func @transform_3(%arg0: i32, %arg1: i32) -> (i32, i32, i32) {
    %c0_i32 = arith.constant 0 : i32
    %c0_i32_0 = arith.constant 0 : i32
    return %arg0, %c0_i32, %arg1 : i32, i32, i32
  }
  func.func @transform_4(%arg0: i32, %arg1: i32) -> (i32, i32, i32) {
    %c0_i32 = arith.constant 0 : i32
    %c0_i32_0 = arith.constant 0 : i32
    return %arg0, %c0_i32, %arg1 : i32, i32, i32
  }
}

</mosaic_0001>

<llo_original>
// kernel: tpu_custom_call.1
$region0: #{tpu_custom_call.1}
  #allocation0 [shape = 'u32[]', space=smem, size = 0x4, offset = 0x4, fixed_abs, tag = 'smem constant byte address 0x4 - core index']
  #allocation1 [shape = 'u32[72,128]{1,0:T(1,128)}', space=vmem, size = 0x9000, scoped, tag = 'internal scratch']
  %s0 = inlined_call_operand.hbm [shape: f32[2,2048,128], index: 0, kind: input, shape index: {}]
  %s1 = inlined_call_operand.hbm [shape: bf16[1024,2048], index: 1, kind: input, shape index: {}]
  %s2 = inlined_call_operand.vmem [shape: f32[1024,1], index: 2, kind: input, shape index: {}]
  %s3 = inlined_call_operand.hbm [shape: f32[2,512,128], index: 3, kind: output, shape index: {0}]
  %s4 = inlined_call_operand.hbm [shape: f32[2,512,128], index: 4, kind: output, shape index: {1}]
  %5 = xla_tuple %s3, %s4
  %s6 = sld [smem:[#allocation0]]
  $region61: #{tpu_custom_call.1} parent=0
    _
  %s8 = ssub.s32 1, %s6
  %s9 = scalar_select 0, %s8, %s6
  $region1: #{tpu_custom_call.1} parent=0
    #allocation2 [shape = 'u8[2097152]{0}', space=vmem, size = 0x200000, scoped, tag = 'input window, operand 0']
    #allocation3 [shape = 's32[2]{0}', space=sflag, size = 0x8, scoped, tag = 'scoped memory for tpu_custom_call.1']
    #allocation4 [shape = 's32[2]{0}', space=sflag, size = 0x8, scoped, tag = 'scoped memory for tpu_custom_call.1']
    #allocation5 [shape = 'u8[4194304]{0}', space=vmem, size = 0x400000, scoped, tag = 'input window, operand 1, single buffered']
    #allocation6 [shape = 's32[1]{0}', space=sflag, size = 0x4, scoped, tag = 'scoped memory for tpu_custom_call.1']
    #allocation7 [shape = 'u8[524288]{0}', space=vmem, size = 0x80000, scoped, tag = 'output window, operand 0']
    #allocation8 [shape = 'u8[524288]{0}', space=vmem, size = 0x80000, scoped, tag = 'output window, operand 1']
    #allocation9 [shape = 's32[2]{0}', space=sflag, size = 0x8, scoped, tag = 'scoped memory for tpu_custom_call.1']
    %10 = vsyncpa [#allocation3], 0
    %s11 = scalar_lea.sflag [#allocation3], 1
    %12 = vsyncpa %s11, 0
    %13 = vsyncpa [#allocation6], 0
    %14 = vsyncpa [#allocation4], 0
    %s15 = scalar_lea.sflag [#allocation4], 1
    %16 = vsyncpa %s15, 0
    %17 = vsyncpa [#allocation9], 0
    %s18 = scalar_lea.sflag [#allocation9], 1
    %19 = vsyncpa %s18, 0
    loop: start=0, step=1, limit=4
    $region2: #{tpu_custom_call.1} parent=1 // loop_pre_header
      _
    $region3: #{tpu_custom_call.1} parent=1 // loop_header
      %s21 = sphi 0, %s25
      %p22 = scmp.ge.s32.totalorder %s21, 4
      %s28 = sphi 0, %s40
      %s29 = sphi 0, %s36
      %s30 = sphi 0, %s28
      %s31 = sphi 0, %s29
      %s32 = sphi 0, %s30
      %s33 = sphi 0, %s31
      %s45 = sphi 0, %s47
      %s48 = sphi 0, %s45
      %s49 = sphi 0, %s48
      %s65 = sphi 0, %s49
      %s69 = sphi 0, %s69
      %s71 = sphi 0, %s69
      %s72 = sphi 0, %s71
      %s86 = sphi 0, %s72
      %s90 = sphi 0, %s90
      %s92 = sphi 0, %s90
      %s93 = sphi 0, %s92
      %s107 = sphi 0, %s93
      %s115 = sphi 0, %s117
      %s118 = sphi 0, %s115
      %s119 = sphi 0, %s118
      %s135 = sphi 0, %s119
      %s143 = sphi 0, %s145
      %s146 = sphi 0, %s143
      %s147 = sphi 0, %s146
      %s163 = sphi 0, %s147
    $region4: #{tpu_custom_call.1} parent=1 // loop_header_branch
      %24 = sbr.rel (%p22) target = $region8
    $region5: #{tpu_custom_call.1} parent=1 // loop_body
      %s26 = ssub.s32 %s21, 1
      %s27 = ssub.s32 %s21, 2
      %s34 = sadd.s32 1, %s29
      %p35 = scmp.ge.s32.totalorder %s34, 1
      %s36 = scalar_select %p35, 0, %s34
      %s37 = sadd.s32 1, %s28
      %s38 = scalar_select %p35, %s37, %s28
      %p39 = scmp.ge.s32.totalorder %s38, 2
      %s40 = scalar_select %p39, 0, %s38
      %s41 = ssub.s32 %s28, %s40
      %s42 = ssub.s32 %s29, %s36
      %s43 = sor.u32 %s41, %s42
      %p44 = scmp.eq.s32.totalorder %s43, 0
      %s46 = sadd.s32 %s45, 1
      %s47 = scalar_select %p44, %s45, %s46
      %p50 = pneg %p44
      %p51 = scmp.eq.s32.totalorder %s21, 1
      %p52 = por %p50, %p51
      %p53 = scmp.ne.s32.totalorder %s45, %s48
      %p54 = scmp.eq.s32.totalorder %s21, 0
      %p55 = por %p53, %p54
      %p56 = scmp.ne.s32.totalorder %s45, %s48
      %p57 = scmp.eq.s32.totalorder %s26, 1
      %p58 = por %p56, %p57
      %p59 = scmp.ne.s32.totalorder %s48, %s49
      %p60 = scmp.eq.s32.totalorder %s26, 0
      %p61 = por %p59, %p60
      %p62 = scmp.ne.s32.totalorder %s48, %s49
      %p63 = scmp.eq.s32.totalorder %s27, 1
      %p64 = por %p62, %p63
      %p66 = scmp.ne.s32.totalorder %s49, %s65
      %p67 = scmp.eq.s32.totalorder %s27, 0
      %p68 = por %p66, %p67
      %s70 = sadd.s32 %s69, 1
      %p73 = scmp.eq.s32.totalorder %s21, 1
      %p74 = scmp.ne.s32.totalorder %s69, %s71
      %p75 = scmp.eq.s32.totalorder %s21, 0
      %p76 = por %p74, %p75
      %p77 = scmp.ne.s32.totalorder %s69, %s71
      %p78 = scmp.eq.s32.totalorder %s26, 1
      %p79 = por %p77, %p78
      %p80 = scmp.ne.s32.totalorder %s71, %s72
      %p81 = scmp.eq.s32.totalorder %s26, 0
      %p82 = por %p80, %p81
      %p83 = scmp.ne.s32.totalorder %s71, %s72
      %p84 = scmp.eq.s32.totalorder %s27, 1
      %p85 = por %p83, %p84
      %p87 = scmp.ne.s32.totalorder %s72, %s86
      %p88 = scmp.eq.s32.totalorder %s27, 0
      %p89 = por %p87, %p88
      %s91 = sadd.s32 %s90, 1
      %p94 = scmp.eq.s32.totalorder %s21, 1
      %p95 = scmp.ne.s32.totalorder %s90, %s92
      %p96 = scmp.eq.s32.totalorder %s21, 0
      %p97 = por %p95, %p96
      %p98 = scmp.ne.s32.totalorder %s90, %s92
      %p99 = scmp.eq.s32.totalorder %s26, 1
      %p100 = por %p98, %p99
      %p101 = scmp.ne.s32.totalorder %s92, %s93
      %p102 = scmp.eq.s32.totalorder %s26, 0
      %p103 = por %p101, %p102
      %p104 = scmp.ne.s32.totalorder %s92, %s93
      %p105 = scmp.eq.s32.totalorder %s27, 1
      %p106 = por %p104, %p105
      %p108 = scmp.ne.s32.totalorder %s93, %s107
      %p109 = scmp.eq.s32.totalorder %s27, 0
      %p110 = por %p108, %p109
      %s111 = ssub.s32 %s28, %s40
      %s112 = ssub.s32 %s29, %s36
      %s113 = sor.u32 %s111, %s112
      %p114 = scmp.eq.s32.totalorder %s113, 0
      %s116 = sadd.s32 %s115, 1
      %s117 = scalar_select %p114, %s115, %s116
      %p120 = pneg %p114
      %p121 = scmp.eq.s32.totalorder %s21, 1
      %p122 = por %p120, %p121
      %p123 = scmp.ne.s32.totalorder %s115, %s118
      %p124 = scmp.eq.s32.totalorder %s21, 0
      %p125 = por %p123, %p124
      %p126 = scmp.ne.s32.totalorder %s115, %s118
      %p127 = scmp.eq.s32.totalorder %s26, 1
      %p128 = por %p126, %p127
      %p129 = scmp.ne.s32.totalorder %s118, %s119
      %p130 = scmp.eq.s32.totalorder %s26, 0
      %p131 = por %p129, %p130
      %p132 = scmp.ne.s32.totalorder %s118, %s119
      %p133 = scmp.eq.s32.totalorder %s27, 1
      %p134 = por %p132, %p133
      %p136 = scmp.ne.s32.totalorder %s119, %s135
      %p137 = scmp.eq.s32.totalorder %s27, 0
      %p138 = por %p136, %p137
      %s139 = ssub.s32 %s28, %s40
      %s140 = ssub.s32 %s29, %s36
      %s141 = sor.u32 %s139, %s140
      %p142 = scmp.eq.s32.totalorder %s141, 0
      %s144 = sadd.s32 %s143, 1
      %s145 = scalar_select %p142, %s143, %s144
      %p148 = pneg %p142
      %p149 = scmp.eq.s32.totalorder %s21, 1
      %p150 = por %p148, %p149
      %p151 = scmp.ne.s32.totalorder %s143, %s146
      %p152 = scmp.eq.s32.totalorder %s21, 0
      %p153 = por %p151, %p152
      %p154 = scmp.ne.s32.totalorder %s143, %s146
      %p155 = scmp.eq.s32.totalorder %s26, 1
      %p156 = por %p154, %p155
      %p157 = scmp.ne.s32.totalorder %s146, %s147
      %p158 = scmp.eq.s32.totalorder %s26, 0
      %p159 = por %p157, %p158
      %p160 = scmp.ne.s32.totalorder %s146, %s147
      %p161 = scmp.eq.s32.totalorder %s27, 1
      %p162 = por %p160, %p161
      %p164 = scmp.ne.s32.totalorder %s147, %s163
      %p165 = scmp.eq.s32.totalorder %s27, 0
      %p166 = por %p164, %p165
      %p167 = scmp.le.s32.totalorder 1, %s21
      %p168 = scmp.lt.s32.totalorder %s21, 3
      %p169 = pnand %p167, %p168
      %p170 = pneg %p169
      // Predicated region
      $region9: #{tpu_custom_call.1} parent=5 // pred_check
        _
      $region10: #{tpu_custom_call.1} parent=5 // pred_check_branch
        %172 = sbr.rel (%p169) target = $region12
      $region11: #{tpu_custom_call.1} parent=5 // pred_region
        %s173 = ssub.s32 %s21, 1
        // Predicated region
        $region13: #{tpu_custom_call.1} parent=11 // pred_check
          %p174 = pneg %p82
        $region14: #{tpu_custom_call.1} parent=11 // pred_check_branch
          %176 = sbr.rel (%p174) target = $region16
        $region15: #{tpu_custom_call.1} parent=11 // pred_region
          %178 = vsyncadd [#allocation6], 0
          %s179 = sshll.u32 %s1, 4
          %s180 = int_to_ptr.hbm [resolvable:$true] %s179
          %s181 = sshll.u32 [#allocation5], 4
          %s182 = int_to_ptr.vmem [resolvable:$true] %s181
          %187 = dma.hbm_to_vmem [thread:$0]  %s180, 131072, %s182, [#allocation6], 1024, 1024, 64
        $region16: #{tpu_custom_call.1} parent=11 // pred_fallthru
          _
        // Predicated region
        $region17: #{tpu_custom_call.1} parent=11 // pred_check
          %p188 = pneg %p103
        $region18: #{tpu_custom_call.1} parent=11 // pred_check_branch
          %190 = sbr.rel (%p188) target = $region20
        $region19: #{tpu_custom_call.1} parent=11 // pred_region
          _
        $region20: #{tpu_custom_call.1} parent=11 // pred_fallthru
          _
      $region12: #{tpu_custom_call.1} parent=5 // pred_fallthru
        _
      %p191 = scmp.lt.s32.totalorder %s21, 2
      // Predicated region
      $region21: #{tpu_custom_call.1} parent=5 // pred_check
        %p192 = pneg %p191
      $region22: #{tpu_custom_call.1} parent=5 // pred_check_branch
        %194 = sbr.rel (%p192) target = $region24
      $region23: #{tpu_custom_call.1} parent=5 // pred_region
        // Predicated region
        $region25: #{tpu_custom_call.1} parent=23 // pred_check
          %p195 = pneg %p55
        $region26: #{tpu_custom_call.1} parent=23 // pred_check_branch
          %197 = sbr.rel (%p195) target = $region28
        $region27: #{tpu_custom_call.1} parent=23 // pred_region
          %s198 = sand.u32 %s45, 1
          %s199 = scalar_lea.sflag [#allocation3], %s198
          %s200 = sand.u32 %s45, 1
          %s201 = smul.addr %s200, 2048
          %s202 = scalar_lea.vmem [#allocation2], %s201
          %204 = vsyncadd %s199, 0
          %s205 = smul.addr %s28, 256
          %s206 = sadd.s32 %s29, %s205
          %s207 = smul.addr %s206, 8
          %s208 = scalar_lea.hbm %s0, %s207
          %s209 = sshll.u32 %s208, 4
          %s210 = int_to_ptr.hbm [resolvable:$true] %s209
          %s211 = sshll.u32 %s202, 4
          %s212 = int_to_ptr.vmem [resolvable:$true] %s211
          %217 = dma.hbm_to_vmem [thread:$0]  %s210, 32768, %s212, %s199, 128, 128, 8
        $region28: #{tpu_custom_call.1} parent=23 // pred_fallthru
          _
      $region24: #{tpu_custom_call.1} parent=5 // pred_fallthru
        _
      %p218 = scmp.le.s32.totalorder 1, %s21
      %p219 = scmp.lt.s32.totalorder %s21, 3
      %p220 = pnand %p218, %p219
      %p221 = pneg %p220
      // Predicated region
      $region29: #{tpu_custom_call.1} parent=5 // pred_check
        _
      $region30: #{tpu_custom_call.1} parent=5 // pred_check_branch
        %223 = sbr.rel (%p220) target = $region32
      $region31: #{tpu_custom_call.1} parent=5 // pred_region
        %s224 = ssub.s32 %s21, 1
        %s225 = sand.u32 %s48, 1
        %s226 = scalar_lea.sflag [#allocation3], %s225
        %s227 = sand.u32 %s48, 1
        %s228 = smul.addr %s227, 2048
        %s229 = scalar_lea.vmem [#allocation2], %s228
        // Predicated region
        $region33: #{tpu_custom_call.1} parent=31 // pred_check
          %p230 = pneg %p61
        $region34: #{tpu_custom_call.1} parent=31 // pred_check_branch
          %232 = sbr.rel (%p230) target = $region36
        $region35: #{tpu_custom_call.1} parent=31 // pred_region
          %234 = dma.done %s226, 32768
        $region36: #{tpu_custom_call.1} parent=31 // pred_fallthru
          _
        // Predicated region
        $region37: #{tpu_custom_call.1} parent=31 // pred_check
          %p235 = pneg %p82
        $region38: #{tpu_custom_call.1} parent=31 // pred_check_branch
          %237 = sbr.rel (%p235) target = $region40
        $region39: #{tpu_custom_call.1} parent=31 // pred_region
          %239 = dma.done [#allocation6], 131072
        $region40: #{tpu_custom_call.1} parent=31 // pred_fallthru
          _
        %s240 = sand.u32 %s48, 1
        %s241 = scalar_lea.sflag [#allocation3], %s240
        %s242 = sand.u32 %s48, 1
        %s243 = smul.addr %s242, 2048
        %s244 = scalar_lea.vmem [#allocation2], %s243
        %p245 = pneg %p61
        %p246 = pneg %p58
        %p247 = pneg %p82
        %p248 = pneg %p79
        %p249 = pneg %p103
        %p250 = pneg %p100
        %p251 = pneg %p131
        %p252 = pneg %p128
        %s253 = sand.u32 %s118, 1
        %s254 = scalar_lea.sflag [#allocation4], %s253
        %s255 = sand.u32 %s118, 1
        %s256 = smul.addr %s255, 512
        %s257 = scalar_lea.vmem [#allocation7], %s256
        %p258 = pneg %p159
        %p259 = pneg %p156
        %s260 = sand.u32 %s146, 1
        %s261 = scalar_lea.sflag [#allocation9], %s260
        %s262 = sand.u32 %s146, 1
        %s263 = smul.addr %s262, 512
        %s264 = scalar_lea.vmem [#allocation8], %s263
        %v265 = vld [vmem:[%s229] sm:$0xff]
        %v266 = vld [vmem:[%s229 + $0x8] sm:$0xff]
        %v267 = vld [vmem:[%s229 + $0x10] sm:$0xff]
        %v268 = vld [vmem:[%s229 + $0x18] sm:$0xff]
        %v269 = vld [vmem:[%s229 + $0x20] sm:$0xff]
        %v270 = vld [vmem:[%s229 + $0x28] sm:$0xff]
        %v271 = vld [vmem:[%s229 + $0x30] sm:$0xff]
        %v272 = vld [vmem:[%s229 + $0x38] sm:$0xff]
        %v273 = vld [vmem:[%s229 + $0x40] sm:$0xff]
        %v274 = vld [vmem:[%s229 + $0x48] sm:$0xff]
        %v275 = vld [vmem:[%s229 + $0x50] sm:$0xff]
        %v276 = vld [vmem:[%s229 + $0x58] sm:$0xff]
        %v277 = vld [vmem:[%s229 + $0x60] sm:$0xff]
        %v278 = vld [vmem:[%s229 + $0x68] sm:$0xff]
        %v279 = vld [vmem:[%s229 + $0x70] sm:$0xff]
        %v280 = vld [vmem:[%s229 + $0x78] sm:$0xff]
        %v281 = vld [vmem:[%s229 + $0x80] sm:$0xff]
        %v282 = vld [vmem:[%s229 + $0x88] sm:$0xff]
        %v283 = vld [vmem:[%s229 + $0x90] sm:$0xff]
        %v284 = vld [vmem:[%s229 + $0x98] sm:$0xff]
        %v285 = vld [vmem:[%s229 + $0xa0] sm:$0xff]
        %v286 = vld [vmem:[%s229 + $0xa8] sm:$0xff]
        %v287 = vld [vmem:[%s229 + $0xb0] sm:$0xff]
        %v288 = vld [vmem:[%s229 + $0xb8] sm:$0xff]
        %v289 = vld [vmem:[%s229 + $0xc0] sm:$0xff]
        %v290 = vld [vmem:[%s229 + $0xc8] sm:$0xff]
        %v291 = vld [vmem:[%s229 + $0xd0] sm:$0xff]
        %v292 = vld [vmem:[%s229 + $0xd8] sm:$0xff]
        %v293 = vld [vmem:[%s229 + $0xe0] sm:$0xff]
        %v294 = vld [vmem:[%s229 + $0xe8] sm:$0xff]
        %v295 = vld [vmem:[%s229 + $0xf0] sm:$0xff]
        %v296 = vld [vmem:[%s229 + $0xf8] sm:$0xff]
        %v297 = vld [vmem:[%s229 + $0x100] sm:$0xff]
        %v298 = vld [vmem:[%s229 + $0x108] sm:$0xff]
        %v299 = vld [vmem:[%s229 + $0x110] sm:$0xff]
        %v300 = vld [vmem:[%s229 + $0x118] sm:$0xff]
        %v301 = vld [vmem:[%s229 + $0x120] sm:$0xff]
        %v302 = vld [vmem:[%s229 + $0x128] sm:$0xff]
        %v303 = vld [vmem:[%s229 + $0x130] sm:$0xff]
        %v304 = vld [vmem:[%s229 + $0x138] sm:$0xff]
        %v305 = vld [vmem:[%s229 + $0x140] sm:$0xff]
        %v306 = vld [vmem:[%s229 + $0x148] sm:$0xff]
        %v307 = vld [vmem:[%s229 + $0x150] sm:$0xff]
        %v308 = vld [vmem:[%s229 + $0x158] sm:$0xff]
        %v309 = vld [vmem:[%s229 + $0x160] sm:$0xff]
        %v310 = vld [vmem:[%s229 + $0x168] sm:$0xff]
        %v311 = vld [vmem:[%s229 + $0x170] sm:$0xff]
        %v312 = vld [vmem:[%s229 + $0x178] sm:$0xff]
        %v313 = vld [vmem:[%s229 + $0x180] sm:$0xff]
        %v314 = vld [vmem:[%s229 + $0x188] sm:$0xff]
        %v315 = vld [vmem:[%s229 + $0x190] sm:$0xff]
        %v316 = vld [vmem:[%s229 + $0x198] sm:$0xff]
        %v317 = vld [vmem:[%s229 + $0x1a0] sm:$0xff]
        %v318 = vld [vmem:[%s229 + $0x1a8] sm:$0xff]
        %v319 = vld [vmem:[%s229 + $0x1b0] sm:$0xff]
        %v320 = vld [vmem:[%s229 + $0x1b8] sm:$0xff]
        %v321 = vld [vmem:[%s229 + $0x1c0] sm:$0xff]
        %v322 = vld [vmem:[%s229 + $0x1c8] sm:$0xff]
        %v323 = vld [vmem:[%s229 + $0x1d0] sm:$0xff]
        %v324 = vld [vmem:[%s229 + $0x1d8] sm:$0xff]
        %v325 = vld [vmem:[%s229 + $0x1e0] sm:$0xff]
        %v326 = vld [vmem:[%s229 + $0x1e8] sm:$0xff]
        %v327 = vld [vmem:[%s229 + $0x1f0] sm:$0xff]
        %v328 = vld [vmem:[%s229 + $0x1f8] sm:$0xff]
        %v329 = vld [vmem:[%s229 + $0x200] sm:$0xff]
        %v330 = vld [vmem:[%s229 + $0x208] sm:$0xff]
        %v331 = vld [vmem:[%s229 + $0x210] sm:$0xff]
        %v332 = vld [vmem:[%s229 + $0x218] sm:$0xff]
        %v333 = vld [vmem:[%s229 + $0x220] sm:$0xff]
        %v334 = vld [vmem:[%s229 + $0x228] sm:$0xff]
        %v335 = vld [vmem:[%s229 + $0x230] sm:$0xff]
        %v336 = vld [vmem:[%s229 + $0x238] sm:$0xff]
        %v337 = vld [vmem:[%s229 + $0x240] sm:$0xff]
        %v338 = vld [vmem:[%s229 + $0x248] sm:$0xff]
        %v339 = vld [vmem:[%s229 + $0x250] sm:$0xff]
        %v340 = vld [vmem:[%s229 + $0x258] sm:$0xff]
        %v341 = vld [vmem:[%s229 + $0x260] sm:$0xff]
        %v342 = vld [vmem:[%s229 + $0x268] sm:$0xff]
        %v343 = vld [vmem:[%s229 + $0x270] sm:$0xff]
        %v344 = vld [vmem:[%s229 + $0x278] sm:$0xff]
        %v345 = vld [vmem:[%s229 + $0x280] sm:$0xff]
        %v346 = vld [vmem:[%s229 + $0x288] sm:$0xff]
        %v347 = vld [vmem:[%s229 + $0x290] sm:$0xff]
        %v348 = vld [vmem:[%s229 + $0x298] sm:$0xff]
        %v349 = vld [vmem:[%s229 + $0x2a0] sm:$0xff]
        %v350 = vld [vmem:[%s229 + $0x2a8] sm:$0xff]
        %v351 = vld [vmem:[%s229 + $0x2b0] sm:$0xff]
        %v352 = vld [vmem:[%s229 + $0x2b8] sm:$0xff]
        %v353 = vld [vmem:[%s229 + $0x2c0] sm:$0xff]
        %v354 = vld [vmem:[%s229 + $0x2c8] sm:$0xff]
        %v355 = vld [vmem:[%s229 + $0x2d0] sm:$0xff]
        %v356 = vld [vmem:[%s229 + $0x2d8] sm:$0xff]
        %v357 = vld [vmem:[%s229 + $0x2e0] sm:$0xff]
        %v358 = vld [vmem:[%s229 + $0x2e8] sm:$0xff]
        %v359 = vld [vmem:[%s229 + $0x2f0] sm:$0xff]
        %v360 = vld [vmem:[%s229 + $0x2f8] sm:$0xff]
        %v361 = vld [vmem:[%s229 + $0x300] sm:$0xff]
        %v362 = vld [vmem:[%s229 + $0x308] sm:$0xff]
        %v363 = vld [vmem:[%s229 + $0x310] sm:$0xff]
        %v364 = vld [vmem:[%s229 + $0x318] sm:$0xff]
        %v365 = vld [vmem:[%s229 + $0x320] sm:$0xff]
        %v366 = vld [vmem:[%s229 + $0x328] sm:$0xff]
        %v367 = vld [vmem:[%s229 + $0x330] sm:$0xff]
        %v368 = vld [vmem:[%s229 + $0x338] sm:$0xff]
        %v369 = vld [vmem:[%s229 + $0x340] sm:$0xff]
        %v370 = vld [vmem:[%s229 + $0x348] sm:$0xff]
        %v371 = vld [vmem:[%s229 + $0x350] sm:$0xff]
        %v372 = vld [vmem:[%s229 + $0x358] sm:$0xff]
        %v373 = vld [vmem:[%s229 + $0x360] sm:$0xff]
        %v374 = vld [vmem:[%s229 + $0x368] sm:$0xff]
        %v375 = vld [vmem:[%s229 + $0x370] sm:$0xff]
        %v376 = vld [vmem:[%s229 + $0x378] sm:$0xff]
        %v377 = vld [vmem:[%s229 + $0x380] sm:$0xff]
        %v378 = vld [vmem:[%s229 + $0x388] sm:$0xff]
        %v379 = vld [vmem:[%s229 + $0x390] sm:$0xff]
        %v380 = vld [vmem:[%s229 + $0x398] sm:$0xff]
        %v381 = vld [vmem:[%s229 + $0x3a0] sm:$0xff]
        %v382 = vld [vmem:[%s229 + $0x3a8] sm:$0xff]
        %v383 = vld [vmem:[%s229 + $0x3b0] sm:$0xff]
        %v384 = vld [vmem:[%s229 + $0x3b8] sm:$0xff]
        %v385 = vld [vmem:[%s229 + $0x3c0] sm:$0xff]
        %v386 = vld [vmem:[%s229 + $0x3c8] sm:$0xff]
        %v387 = vld [vmem:[%s229 + $0x3d0] sm:$0xff]
        %v388 = vld [vmem:[%s229 + $0x3d8] sm:$0xff]
        %v389 = vld [vmem:[%s229 + $0x3e0] sm:$0xff]
        %v390 = vld [vmem:[%s229 + $0x3e8] sm:$0xff]
        %v391 = vld [vmem:[%s229 + $0x3f0] sm:$0xff]
        %v392 = vld [vmem:[%s229 + $0x3f8] sm:$0xff]
        %v393 = vld [vmem:[%s229 + $0x400] sm:$0xff]
        %v394 = vld [vmem:[%s229 + $0x408] sm:$0xff]
        %v395 = vld [vmem:[%s229 + $0x410] sm:$0xff]
        %v396 = vld [vmem:[%s229 + $0x418] sm:$0xff]
        %v397 = vld [vmem:[%s229 + $0x420] sm:$0xff]
        %v398 = vld [vmem:[%s229 + $0x428] sm:$0xff]
        %v399 = vld [vmem:[%s229 + $0x430] sm:$0xff]
        %v400 = vld [vmem:[%s229 + $0x438] sm:$0xff]
        %v401 = vld [vmem:[%s229 + $0x440] sm:$0xff]
        %v402 = vld [vmem:[%s229 + $0x448] sm:$0xff]
        %v403 = vld [vmem:[%s229 + $0x450] sm:$0xff]
        %v404 = vld [vmem:[%s229 + $0x458] sm:$0xff]
        %v405 = vld [vmem:[%s229 + $0x460] sm:$0xff]
        %v406 = vld [vmem:[%s229 + $0x468] sm:$0xff]
        %v407 = vld [vmem:[%s229 + $0x470] sm:$0xff]
        %v408 = vld [vmem:[%s229 + $0x478] sm:$0xff]
        %v409 = vld [vmem:[%s229 + $0x480] sm:$0xff]
        %v410 = vld [vmem:[%s229 + $0x488] sm:$0xff]
        %v411 = vld [vmem:[%s229 + $0x490] sm:$0xff]
        %v412 = vld [vmem:[%s229 + $0x498] sm:$0xff]
        %v413 = vld [vmem:[%s229 + $0x4a0] sm:$0xff]
        %v414 = vld [vmem:[%s229 + $0x4a8] sm:$0xff]
        %v415 = vld [vmem:[%s229 + $0x4b0] sm:$0xff]
        %v416 = vld [vmem:[%s229 + $0x4b8] sm:$0xff]
        %v417 = vld [vmem:[%s229 + $0x4c0] sm:$0xff]
        %v418 = vld [vmem:[%s229 + $0x4c8] sm:$0xff]
        %v419 = vld [vmem:[%s229 + $0x4d0] sm:$0xff]
        %v420 = vld [vmem:[%s229 + $0x4d8] sm:$0xff]
        %v421 = vld [vmem:[%s229 + $0x4e0] sm:$0xff]
        %v422 = vld [vmem:[%s229 + $0x4e8] sm:$0xff]
        %v423 = vld [vmem:[%s229 + $0x4f0] sm:$0xff]
        %v424 = vld [vmem:[%s229 + $0x4f8] sm:$0xff]
        %v425 = vld [vmem:[%s229 + $0x500] sm:$0xff]
        %v426 = vld [vmem:[%s229 + $0x508] sm:$0xff]
        %v427 = vld [vmem:[%s229 + $0x510] sm:$0xff]
        %v428 = vld [vmem:[%s229 + $0x518] sm:$0xff]
        %v429 = vld [vmem:[%s229 + $0x520] sm:$0xff]
        %v430 = vld [vmem:[%s229 + $0x528] sm:$0xff]
        %v431 = vld [vmem:[%s229 + $0x530] sm:$0xff]
        %v432 = vld [vmem:[%s229 + $0x538] sm:$0xff]
        %v433 = vld [vmem:[%s229 + $0x540] sm:$0xff]
        %v434 = vld [vmem:[%s229 + $0x548] sm:$0xff]
        %v435 = vld [vmem:[%s229 + $0x550] sm:$0xff]
        %v436 = vld [vmem:[%s229 + $0x558] sm:$0xff]
        %v437 = vld [vmem:[%s229 + $0x560] sm:$0xff]
        %v438 = vld [vmem:[%s229 + $0x568] sm:$0xff]
        %v439 = vld [vmem:[%s229 + $0x570] sm:$0xff]
        %v440 = vld [vmem:[%s229 + $0x578] sm:$0xff]
        %v441 = vld [vmem:[%s229 + $0x580] sm:$0xff]
        %v442 = vld [vmem:[%s229 + $0x588] sm:$0xff]
        %v443 = vld [vmem:[%s229 + $0x590] sm:$0xff]
        %v444 = vld [vmem:[%s229 + $0x598] sm:$0xff]
        %v445 = vld [vmem:[%s229 + $0x5a0] sm:$0xff]
        %v446 = vld [vmem:[%s229 + $0x5a8] sm:$0xff]
        %v447 = vld [vmem:[%s229 + $0x5b0] sm:$0xff]
        %v448 = vld [vmem:[%s229 + $0x5b8] sm:$0xff]
        %v449 = vld [vmem:[%s229 + $0x5c0] sm:$0xff]
        %v450 = vld [vmem:[%s229 + $0x5c8] sm:$0xff]
        %v451 = vld [vmem:[%s229 + $0x5d0] sm:$0xff]
        %v452 = vld [vmem:[%s229 + $0x5d8] sm:$0xff]
        %v453 = vld [vmem:[%s229 + $0x5e0] sm:$0xff]
        %v454 = vld [vmem:[%s229 + $0x5e8] sm:$0xff]
        %v455 = vld [vmem:[%s229 + $0x5f0] sm:$0xff]
        %v456 = vld [vmem:[%s229 + $0x5f8] sm:$0xff]
        %v457 = vld [vmem:[%s229 + $0x600] sm:$0xff]
        %v458 = vld [vmem:[%s229 + $0x608] sm:$0xff]
        %v459 = vld [vmem:[%s229 + $0x610] sm:$0xff]
        %v460 = vld [vmem:[%s229 + $0x618] sm:$0xff]
        %v461 = vld [vmem:[%s229 + $0x620] sm:$0xff]
        %v462 = vld [vmem:[%s229 + $0x628] sm:$0xff]
        %v463 = vld [vmem:[%s229 + $0x630] sm:$0xff]
        %v464 = vld [vmem:[%s229 + $0x638] sm:$0xff]
        %v465 = vld [vmem:[%s229 + $0x640] sm:$0xff]
        %v466 = vld [vmem:[%s229 + $0x648] sm:$0xff]
        %v467 = vld [vmem:[%s229 + $0x650] sm:$0xff]
        %v468 = vld [vmem:[%s229 + $0x658] sm:$0xff]
        %v469 = vld [vmem:[%s229 + $0x660] sm:$0xff]
        %v470 = vld [vmem:[%s229 + $0x668] sm:$0xff]
        %v471 = vld [vmem:[%s229 + $0x670] sm:$0xff]
        %v472 = vld [vmem:[%s229 + $0x678] sm:$0xff]
        %v473 = vld [vmem:[%s229 + $0x680] sm:$0xff]
        %v474 = vld [vmem:[%s229 + $0x688] sm:$0xff]
        %v475 = vld [vmem:[%s229 + $0x690] sm:$0xff]
        %v476 = vld [vmem:[%s229 + $0x698] sm:$0xff]
        %v477 = vld [vmem:[%s229 + $0x6a0] sm:$0xff]
        %v478 = vld [vmem:[%s229 + $0x6a8] sm:$0xff]
        %v479 = vld [vmem:[%s229 + $0x6b0] sm:$0xff]
        %v480 = vld [vmem:[%s229 + $0x6b8] sm:$0xff]
        %v481 = vld [vmem:[%s229 + $0x6c0] sm:$0xff]
        %v482 = vld [vmem:[%s229 + $0x6c8] sm:$0xff]
        %v483 = vld [vmem:[%s229 + $0x6d0] sm:$0xff]
        %v484 = vld [vmem:[%s229 + $0x6d8] sm:$0xff]
        %v485 = vld [vmem:[%s229 + $0x6e0] sm:$0xff]
        %v486 = vld [vmem:[%s229 + $0x6e8] sm:$0xff]
        %v487 = vld [vmem:[%s229 + $0x6f0] sm:$0xff]
        %v488 = vld [vmem:[%s229 + $0x6f8] sm:$0xff]
        %v489 = vld [vmem:[%s229 + $0x700] sm:$0xff]
        %v490 = vld [vmem:[%s229 + $0x708] sm:$0xff]
        %v491 = vld [vmem:[%s229 + $0x710] sm:$0xff]
        %v492 = vld [vmem:[%s229 + $0x718] sm:$0xff]
        %v493 = vld [vmem:[%s229 + $0x720] sm:$0xff]
        %v494 = vld [vmem:[%s229 + $0x728] sm:$0xff]
        %v495 = vld [vmem:[%s229 + $0x730] sm:$0xff]
        %v496 = vld [vmem:[%s229 + $0x738] sm:$0xff]
        %v497 = vld [vmem:[%s229 + $0x740] sm:$0xff]
        %v498 = vld [vmem:[%s229 + $0x748] sm:$0xff]
        %v499 = vld [vmem:[%s229 + $0x750] sm:$0xff]
        %v500 = vld [vmem:[%s229 + $0x758] sm:$0xff]
        %v501 = vld [vmem:[%s229 + $0x760] sm:$0xff]
        %v502 = vld [vmem:[%s229 + $0x768] sm:$0xff]
        %v503 = vld [vmem:[%s229 + $0x770] sm:$0xff]
        %v504 = vld [vmem:[%s229 + $0x778] sm:$0xff]
        %v505 = vld [vmem:[%s229 + $0x780] sm:$0xff]
        %v506 = vld [vmem:[%s229 + $0x788] sm:$0xff]
        %v507 = vld [vmem:[%s229 + $0x790] sm:$0xff]
        %v508 = vld [vmem:[%s229 + $0x798] sm:$0xff]
        %v509 = vld [vmem:[%s229 + $0x7a0] sm:$0xff]
        %v510 = vld [vmem:[%s229 + $0x7a8] sm:$0xff]
        %v511 = vld [vmem:[%s229 + $0x7b0] sm:$0xff]
        %v512 = vld [vmem:[%s229 + $0x7b8] sm:$0xff]
        %v513 = vld [vmem:[%s229 + $0x7c0] sm:$0xff]
        %v514 = vld [vmem:[%s229 + $0x7c8] sm:$0xff]
        %v515 = vld [vmem:[%s229 + $0x7d0] sm:$0xff]
        %v516 = vld [vmem:[%s229 + $0x7d8] sm:$0xff]
        %v517 = vld [vmem:[%s229 + $0x7e0] sm:$0xff]
        %v518 = vld [vmem:[%s229 + $0x7e8] sm:$0xff]
        %v519 = vld [vmem:[%s229 + $0x7f0] sm:$0xff]
        %v520 = vld [vmem:[%s229 + $0x7f8] sm:$0xff]
        %v521 = vpack.c.bf16 %v266, %v265
        %v522 = vpack.c.bf16 %v268, %v267
        %v523 = vpack.c.bf16 %v270, %v269
        %v524 = vpack.c.bf16 %v272, %v271
        %v525 = vpack.c.bf16 %v274, %v273
        %v526 = vpack.c.bf16 %v276, %v275
        %v527 = vpack.c.bf16 %v278, %v277
        %v528 = vpack.c.bf16 %v280, %v279
        %v529 = vpack.c.bf16 %v282, %v281
        %v530 = vpack.c.bf16 %v284, %v283
        %v531 = vpack.c.bf16 %v286, %v285
        %v532 = vpack.c.bf16 %v288, %v287
        %v533 = vpack.c.bf16 %v290, %v289
        %v534 = vpack.c.bf16 %v292, %v291
        %v535 = vpack.c.bf16 %v294, %v293
        %v536 = vpack.c.bf16 %v296, %v295
        %v537 = vpack.c.bf16 %v298, %v297
        %v538 = vpack.c.bf16 %v300, %v299
        %v539 = vpack.c.bf16 %v302, %v301
        %v540 = vpack.c.bf16 %v304, %v303
        %v541 = vpack.c.bf16 %v306, %v305
        %v542 = vpack.c.bf16 %v308, %v307
        %v543 = vpack.c.bf16 %v310, %v309
        %v544 = vpack.c.bf16 %v312, %v311
        %v545 = vpack.c.bf16 %v314, %v313
        %v546 = vpack.c.bf16 %v316, %v315
        %v547 = vpack.c.bf16 %v318, %v317
        %v548 = vpack.c.bf16 %v320, %v319
        %v549 = vpack.c.bf16 %v322, %v321
        %v550 = vpack.c.bf16 %v324, %v323
        %v551 = vpack.c.bf16 %v326, %v325
        %v552 = vpack.c.bf16 %v328, %v327
        %v553 = vpack.c.bf16 %v330, %v329
        %v554 = vpack.c.bf16 %v332, %v331
        %v555 = vpack.c.bf16 %v334, %v333
        %v556 = vpack.c.bf16 %v336, %v335
        %v557 = vpack.c.bf16 %v338, %v337
        %v558 = vpack.c.bf16 %v340, %v339
        %v559 = vpack.c.bf16 %v342, %v341
        %v560 = vpack.c.bf16 %v344, %v343
        %v561 = vpack.c.bf16 %v346, %v345
        %v562 = vpack.c.bf16 %v348, %v347
        %v563 = vpack.c.bf16 %v350, %v349
        %v564 = vpack.c.bf16 %v352, %v351
        %v565 = vpack.c.bf16 %v354, %v353
        %v566 = vpack.c.bf16 %v356, %v355
        %v567 = vpack.c.bf16 %v358, %v357
        %v568 = vpack.c.bf16 %v360, %v359
        %v569 = vpack.c.bf16 %v362, %v361
        %v570 = vpack.c.bf16 %v364, %v363
        %v571 = vpack.c.bf16 %v366, %v365
        %v572 = vpack.c.bf16 %v368, %v367
        %v573 = vpack.c.bf16 %v370, %v369
        %v574 = vpack.c.bf16 %v372, %v371
        %v575 = vpack.c.bf16 %v374, %v373
        %v576 = vpack.c.bf16 %v376, %v375
        %v577 = vpack.c.bf16 %v378, %v377
        %v578 = vpack.c.bf16 %v380, %v379
        %v579 = vpack.c.bf16 %v382, %v381
        %v580 = vpack.c.bf16 %v384, %v383
        %v581 = vpack.c.bf16 %v386, %v385
        %v582 = vpack.c.bf16 %v388, %v387
        %v583 = vpack.c.bf16 %v390, %v389
        %v584 = vpack.c.bf16 %v392, %v391
        %v585 = vpack.c.bf16 %v394, %v393
        %v586 = vpack.c.bf16 %v396, %v395
        %v587 = vpack.c.bf16 %v398, %v397
        %v588 = vpack.c.bf16 %v400, %v399
        %v589 = vpack.c.bf16 %v402, %v401
        %v590 = vpack.c.bf16 %v404, %v403
        %v591 = vpack.c.bf16 %v406, %v405
        %v592 = vpack.c.bf16 %v408, %v407
        %v593 = vpack.c.bf16 %v410, %v409
        %v594 = vpack.c.bf16 %v412, %v411
        %v595 = vpack.c.bf16 %v414, %v413
        %v596 = vpack.c.bf16 %v416, %v415
        %v597 = vpack.c.bf16 %v418, %v417
        %v598 = vpack.c.bf16 %v420, %v419
        %v599 = vpack.c.bf16 %v422, %v421
        %v600 = vpack.c.bf16 %v424, %v423
        %v601 = vpack.c.bf16 %v426, %v425
        %v602 = vpack.c.bf16 %v428, %v427
        %v603 = vpack.c.bf16 %v430, %v429
        %v604 = vpack.c.bf16 %v432, %v431
        %v605 = vpack.c.bf16 %v434, %v433
        %v606 = vpack.c.bf16 %v436, %v435
        %v607 = vpack.c.bf16 %v438, %v437
        %v608 = vpack.c.bf16 %v440, %v439
        %v609 = vpack.c.bf16 %v442, %v441
        %v610 = vpack.c.bf16 %v444, %v443
        %v611 = vpack.c.bf16 %v446, %v445
        %v612 = vpack.c.bf16 %v448, %v447
        %v613 = vpack.c.bf16 %v450, %v449
        %v614 = vpack.c.bf16 %v452, %v451
        %v615 = vpack.c.bf16 %v454, %v453
        %v616 = vpack.c.bf16 %v456, %v455
        %v617 = vpack.c.bf16 %v458, %v457
        %v618 = vpack.c.bf16 %v460, %v459
        %v619 = vpack.c.bf16 %v462, %v461
        %v620 = vpack.c.bf16 %v464, %v463
        %v621 = vpack.c.bf16 %v466, %v465
        %v622 = vpack.c.bf16 %v468, %v467
        %v623 = vpack.c.bf16 %v470, %v469
        %v624 = vpack.c.bf16 %v472, %v471
        %v625 = vpack.c.bf16 %v474, %v473
        %v626 = vpack.c.bf16 %v476, %v475
        %v627 = vpack.c.bf16 %v478, %v477
        %v628 = vpack.c.bf16 %v480, %v479
        %v629 = vpack.c.bf16 %v482, %v481
        %v630 = vpack.c.bf16 %v484, %v483
        %v631 = vpack.c.bf16 %v486, %v485
        %v632 = vpack.c.bf16 %v488, %v487
        %v633 = vpack.c.bf16 %v490, %v489
        %v634 = vpack.c.bf16 %v492, %v491
        %v635 = vpack.c.bf16 %v494, %v493
        %v636 = vpack.c.bf16 %v496, %v495
        %v637 = vpack.c.bf16 %v498, %v497
        %v638 = vpack.c.bf16 %v500, %v499
        %v639 = vpack.c.bf16 %v502, %v501
        %v640 = vpack.c.bf16 %v504, %v503
        %v641 = vpack.c.bf16 %v506, %v505
        %v642 = vpack.c.bf16 %v508, %v507
        %v643 = vpack.c.bf16 %v510, %v509
        %v644 = vpack.c.bf16 %v512, %v511
        %v645 = vpack.c.bf16 %v514, %v513
        %v646 = vpack.c.bf16 %v516, %v515
        %v647 = vpack.c.bf16 %v518, %v517
        %v648 = vpack.c.bf16 %v520, %v519
        %v649 = vld [vmem:[#allocation5] sm:$0xff]
        %v650 = vld [vmem:[#allocation5 + $0x8] sm:$0xff]
        %v651 = vld [vmem:[#allocation5 + $0x10] sm:$0xff]
        %v652 = vld [vmem:[#allocation5 + $0x18] sm:$0xff]
        %v653 = vld [vmem:[#allocation5 + $0x20] sm:$0xff]
        %v654 = vld [vmem:[#allocation5 + $0x28] sm:$0xff]
        %v655 = vld [vmem:[#allocation5 + $0x30] sm:$0xff]
        %v656 = vld [vmem:[#allocation5 + $0x38] sm:$0xff]
        %v657 = vld [vmem:[#allocation5 + $0x40] sm:$0xff]
        %v658 = vld [vmem:[#allocation5 + $0x48] sm:$0xff]
        %v659 = vld [vmem:[#allocation5 + $0x50] sm:$0xff]
        %v660 = vld [vmem:[#allocation5 + $0x58] sm:$0xff]
        %v661 = vld [vmem:[#allocation5 + $0x60] sm:$0xff]
        %v662 = vld [vmem:[#allocation5 + $0x68] sm:$0xff]
        %v663 = vld [vmem:[#allocation5 + $0x70] sm:$0xff]
        %v664 = vld [vmem:[#allocation5 + $0x78] sm:$0xff]
        %v665 = vld [vmem:[#allocation5 + $0x80] sm:$0xff]
        %v666 = vld [vmem:[#allocation5 + $0x88] sm:$0xff]
        %v667 = vld [vmem:[#allocation5 + $0x90] sm:$0xff]
        %v668 = vld [vmem:[#allocation5 + $0x98] sm:$0xff]
        %v669 = vld [vmem:[#allocation5 + $0xa0] sm:$0xff]
        %v670 = vld [vmem:[#allocation5 + $0xa8] sm:$0xff]
        %v671 = vld [vmem:[#allocation5 + $0xb0] sm:$0xff]
        %v672 = vld [vmem:[#allocation5 + $0xb8] sm:$0xff]
        %v673 = vld [vmem:[#allocation5 + $0xc0] sm:$0xff]
        %v674 = vld [vmem:[#allocation5 + $0xc8] sm:$0xff]
        %v675 = vld [vmem:[#allocation5 + $0xd0] sm:$0xff]
        %v676 = vld [vmem:[#allocation5 + $0xd8] sm:$0xff]
        %v677 = vld [vmem:[#allocation5 + $0xe0] sm:$0xff]
        %v678 = vld [vmem:[#allocation5 + $0xe8] sm:$0xff]
        %v679 = vld [vmem:[#allocation5 + $0xf0] sm:$0xff]
        %v680 = vld [vmem:[#allocation5 + $0xf8] sm:$0xff]
        %v681 = vld [vmem:[#allocation5 + $0x100] sm:$0xff]
        %v682 = vld [vmem:[#allocation5 + $0x108] sm:$0xff]
        %v683 = vld [vmem:[#allocation5 + $0x110] sm:$0xff]
        %v684 = vld [vmem:[#allocation5 + $0x118] sm:$0xff]
        %v685 = vld [vmem:[#allocation5 + $0x120] sm:$0xff]
        %v686 = vld [vmem:[#allocation5 + $0x128] sm:$0xff]
        %v687 = vld [vmem:[#allocation5 + $0x130] sm:$0xff]
        %v688 = vld [vmem:[#allocation5 + $0x138] sm:$0xff]
        %v689 = vld [vmem:[#allocation5 + $0x140] sm:$0xff]
        %v690 = vld [vmem:[#allocation5 + $0x148] sm:$0xff]
        %v691 = vld [vmem:[#allocation5 + $0x150] sm:$0xff]
        %v692 = vld [vmem:[#allocation5 + $0x158] sm:$0xff]
        %v693 = vld [vmem:[#allocation5 + $0x160] sm:$0xff]
        %v694 = vld [vmem:[#allocation5 + $0x168] sm:$0xff]
        %v695 = vld [vmem:[#allocation5 + $0x170] sm:$0xff]
        %v696 = vld [vmem:[#allocation5 + $0x178] sm:$0xff]
        %v697 = vld [vmem:[#allocation5 + $0x180] sm:$0xff]
        %v698 = vld [vmem:[#allocation5 + $0x188] sm:$0xff]
        %v699 = vld [vmem:[#allocation5 + $0x190] sm:$0xff]
        %v700 = vld [vmem:[#allocation5 + $0x198] sm:$0xff]
        %v701 = vld [vmem:[#allocation5 + $0x1a0] sm:$0xff]
        %v702 = vld [vmem:[#allocation5 + $0x1a8] sm:$0xff]
        %v703 = vld [vmem:[#allocation5 + $0x1b0] sm:$0xff]
        %v704 = vld [vmem:[#allocation5 + $0x1b8] sm:$0xff]
        %v705 = vld [vmem:[#allocation5 + $0x1c0] sm:$0xff]
        %v706 = vld [vmem:[#allocation5 + $0x1c8] sm:$0xff]
        %v707 = vld [vmem:[#allocation5 + $0x1d0] sm:$0xff]
        %v708 = vld [vmem:[#allocation5 + $0x1d8] sm:$0xff]
        %v709 = vld [vmem:[#allocation5 + $0x1e0] sm:$0xff]
        %v710 = vld [vmem:[#allocation5 + $0x1e8] sm:$0xff]
        %v711 = vld [vmem:[#allocation5 + $0x1f0] sm:$0xff]
        %v712 = vld [vmem:[#allocation5 + $0x1f8] sm:$0xff]
        %v713 = vld [vmem:[#allocation5 + $0x200] sm:$0xff]
        %v714 = vld [vmem:[#allocation5 + $0x208] sm:$0xff]
        %v715 = vld [vmem:[#allocation5 + $0x210] sm:$0xff]
        %v716 = vld [vmem:[#allocation5 + $0x218] sm:$0xff]
        %v717 = vld [vmem:[#allocation5 + $0x220] sm:$0xff]
        %v718 = vld [vmem:[#allocation5 + $0x228] sm:$0xff]
        %v719 = vld [vmem:[#allocation5 + $0x230] sm:$0xff]
        %v720 = vld [vmem:[#allocation5 + $0x238] sm:$0xff]
        %v721 = vld [vmem:[#allocation5 + $0x240] sm:$0xff]
        %v722 = vld [vmem:[#allocation5 + $0x248] sm:$0xff]
        %v723 = vld [vmem:[#allocation5 + $0x250] sm:$0xff]
        %v724 = vld [vmem:[#allocation5 + $0x258] sm:$0xff]
        %v725 = vld [vmem:[#allocation5 + $0x260] sm:$0xff]
        %v726 = vld [vmem:[#allocation5 + $0x268] sm:$0xff]
        %v727 = vld [vmem:[#allocation5 + $0x270] sm:$0xff]
        %v728 = vld [vmem:[#allocation5 + $0x278] sm:$0xff]
        %v729 = vld [vmem:[#allocation5 + $0x280] sm:$0xff]
        %v730 = vld [vmem:[#allocation5 + $0x288] sm:$0xff]
        %v731 = vld [vmem:[#allocation5 + $0x290] sm:$0xff]
        %v732 = vld [vmem:[#allocation5 + $0x298] sm:$0xff]
        %v733 = vld [vmem:[#allocation5 + $0x2a0] sm:$0xff]
        %v734 = vld [vmem:[#allocation5 + $0x2a8] sm:$0xff]
        %v735 = vld [vmem:[#allocation5 + $0x2b0] sm:$0xff]
        %v736 = vld [vmem:[#allocation5 + $0x2b8] sm:$0xff]
        %v737 = vld [vmem:[#allocation5 + $0x2c0] sm:$0xff]
        %v738 = vld [vmem:[#allocation5 + $0x2c8] sm:$0xff]
        %v739 = vld [vmem:[#allocation5 + $0x2d0] sm:$0xff]
        %v740 = vld [vmem:[#allocation5 + $0x2d8] sm:$0xff]
        %v741 = vld [vmem:[#allocation5 + $0x2e0] sm:$0xff]
        %v742 = vld [vmem:[#allocation5 + $0x2e8] sm:$0xff]
        %v743 = vld [vmem:[#allocation5 + $0x2f0] sm:$0xff]
        %v744 = vld [vmem:[#allocation5 + $0x2f8] sm:$0xff]
        %v745 = vld [vmem:[#allocation5 + $0x300] sm:$0xff]
        %v746 = vld [vmem:[#allocation5 + $0x308] sm:$0xff]
        %v747 = vld [vmem:[#allocation5 + $0x310] sm:$0xff]
        %v748 = vld [vmem:[#allocation5 + $0x318] sm:$0xff]
        %v749 = vld [vmem:[#allocation5 + $0x320] sm:$0xff]
        %v750 = vld [vmem:[#allocation5 + $0x328] sm:$0xff]
        %v751 = vld [vmem:[#allocation5 + $0x330] sm:$0xff]
        %v752 = vld [vmem:[#allocation5 + $0x338] sm:$0xff]
        %v753 = vld [vmem:[#allocation5 + $0x340] sm:$0xff]
        %v754 = vld [vmem:[#allocation5 + $0x348] sm:$0xff]
        %v755 = vld [vmem:[#allocation5 + $0x350] sm:$0xff]
        %v756 = vld [vmem:[#allocation5 + $0x358] sm:$0xff]
        %v757 = vld [vmem:[#allocation5 + $0x360] sm:$0xff]
        %v758 = vld [vmem:[#allocation5 + $0x368] sm:$0xff]
        %v759 = vld [vmem:[#allocation5 + $0x370] sm:$0xff]
        %v760 = vld [vmem:[#allocation5 + $0x378] sm:$0xff]
        %v761 = vld [vmem:[#allocation5 + $0x380] sm:$0xff]
        %v762 = vld [vmem:[#allocation5 + $0x388] sm:$0xff]
        %v763 = vld [vmem:[#allocation5 + $0x390] sm:$0xff]
        %v764 = vld [vmem:[#allocation5 + $0x398] sm:$0xff]
        %v765 = vld [vmem:[#allocation5 + $0x3a0] sm:$0xff]
        %v766 = vld [vmem:[#allocation5 + $0x3a8] sm:$0xff]
        %v767 = vld [vmem:[#allocation5 + $0x3b0] sm:$0xff]
        %v768 = vld [vmem:[#allocation5 + $0x3b8] sm:$0xff]
        %v769 = vld [vmem:[#allocation5 + $0x3c0] sm:$0xff]
        %v770 = vld [vmem:[#allocation5 + $0x3c8] sm:$0xff]
        %v771 = vld [vmem:[#allocation5 + $0x3d0] sm:$0xff]
        %v772 = vld [vmem:[#allocation5 + $0x3d8] sm:$0xff]
        %v773 = vld [vmem:[#allocation5 + $0x3e0] sm:$0xff]
        %v774 = vld [vmem:[#allocation5 + $0x3e8] sm:$0xff]
        %v775 = vld [vmem:[#allocation5 + $0x3f0] sm:$0xff]
        %v776 = vld [vmem:[#allocation5 + $0x3f8] sm:$0xff]
        %v777 = vld [vmem:[#allocation5 + $0x400] sm:$0xff]
        %v778 = vld [vmem:[#allocation5 + $0x408] sm:$0xff]
        %v779 = vld [vmem:[#allocation5 + $0x410] sm:$0xff]
        %v780 = vld [vmem:[#allocation5 + $0x418] sm:$0xff]
        %v781 = vld [vmem:[#allocation5 + $0x420] sm:$0xff]
        %v782 = vld [vmem:[#allocation5 + $0x428] sm:$0xff]
        %v783 = vld [vmem:[#allocation5 + $0x430] sm:$0xff]
        %v784 = vld [vmem:[#allocation5 + $0x438] sm:$0xff]
        %v785 = vld [vmem:[#allocation5 + $0x440] sm:$0xff]
        %v786 = vld [vmem:[#allocation5 + $0x448] sm:$0xff]
        %v787 = vld [vmem:[#allocation5 + $0x450] sm:$0xff]
        %v788 = vld [vmem:[#allocation5 + $0x458] sm:$0xff]
        %v789 = vld [vmem:[#allocation5 + $0x460] sm:$0xff]
        %v790 = vld [vmem:[#allocation5 + $0x468] sm:$0xff]
        %v791 = vld [vmem:[#allocation5 + $0x470] sm:$0xff]
        %v792 = vld [vmem:[#allocation5 + $0x478] sm:$0xff]
        %v793 = vld [vmem:[#allocation5 + $0x480] sm:$0xff]
        %v794 = vld [vmem:[#allocation5 + $0x488] sm:$0xff]
        %v795 = vld [vmem:[#allocation5 + $0x490] sm:$0xff]
        %v796 = vld [vmem:[#allocation5 + $0x498] sm:$0xff]
        %v797 = vld [vmem:[#allocation5 + $0x4a0] sm:$0xff]
        %v798 = vld [vmem:[#allocation5 + $0x4a8] sm:$0xff]
        %v799 = vld [vmem:[#allocation5 + $0x4b0] sm:$0xff]
        %v800 = vld [vmem:[#allocation5 + $0x4b8] sm:$0xff]
        %v801 = vld [vmem:[#allocation5 + $0x4c0] sm:$0xff]
        %v802 = vld [vmem:[#allocation5 + $0x4c8] sm:$0xff]
        %v803 = vld [vmem:[#allocation5 + $0x4d0] sm:$0xff]
        %v804 = vld [vmem:[#allocation5 + $0x4d8] sm:$0xff]
        %v805 = vld [vmem:[#allocation5 + $0x4e0] sm:$0xff]
        %v806 = vld [vmem:[#allocation5 + $0x4e8] sm:$0xff]
        %v807 = vld [vmem:[#allocation5 + $0x4f0] sm:$0xff]
        %v808 = vld [vmem:[#allocation5 + $0x4f8] sm:$0xff]
        %v809 = vld [vmem:[#allocation5 + $0x500] sm:$0xff]
        %v810 = vld [vmem:[#allocation5 + $0x508] sm:$0xff]
        %v811 = vld [vmem:[#allocation5 + $0x510] sm:$0xff]
        %v812 = vld [vmem:[#allocation5 + $0x518] sm:$0xff]
        %v813 = vld [vmem:[#allocation5 + $0x520] sm:$0xff]
        %v814 = vld [vmem:[#allocation5 + $0x528] sm:$0xff]
        %v815 = vld [vmem:[#allocation5 + $0x530] sm:$0xff]
        %v816 = vld [vmem:[#allocation5 + $0x538] sm:$0xff]
        %v817 = vld [vmem:[#allocation5 + $0x540] sm:$0xff]
        %v818 = vld [vmem:[#allocation5 + $0x548] sm:$0xff]
        %v819 = vld [vmem:[#allocation5 + $0x550] sm:$0xff]
        %v820 = vld [vmem:[#allocation5 + $0x558] sm:$0xff]
        %v821 = vld [vmem:[#allocation5 + $0x560] sm:$0xff]
        %v822 = vld [vmem:[#allocation5 + $0x568] sm:$0xff]
        %v823 = vld [vmem:[#allocation5 + $0x570] sm:$0xff]
        %v824 = vld [vmem:[#allocation5 + $0x578] sm:$0xff]
        %v825 = vld [vmem:[#allocation5 + $0x580] sm:$0xff]
        %v826 = vld [vmem:[#allocation5 + $0x588] sm:$0xff]
        %v827 = vld [vmem:[#allocation5 + $0x590] sm:$0xff]
        %v828 = vld [vmem:[#allocation5 + $0x598] sm:$0xff]
        %v829 = vld [vmem:[#allocation5 + $0x5a0] sm:$0xff]
        %v830 = vld [vmem:[#allocation5 + $0x5a8] sm:$0xff]
        %v831 = vld [vmem:[#allocation5 + $0x5b0] sm:$0xff]
        %v832 = vld [vmem:[#allocation5 + $0x5b8] sm:$0xff]
        %v833 = vld [vmem:[#allocation5 + $0x5c0] sm:$0xff]
        %v834 = vld [vmem:[#allocation5 + $0x5c8] sm:$0xff]
        %v835 = vld [vmem:[#allocation5 + $0x5d0] sm:$0xff]
        %v836 = vld [vmem:[#allocation5 + $0x5d8] sm:$0xff]
        %v837 = vld [vmem:[#allocation5 + $0x5e0] sm:$0xff]
        %v838 = vld [vmem:[#allocation5 + $0x5e8] sm:$0xff]
        %v839 = vld [vmem:[#allocation5 + $0x5f0] sm:$0xff]
        %v840 = vld [vmem:[#allocation5 + $0x5f8] sm:$0xff]
        %v841 = vld [vmem:[#allocation5 + $0x600] sm:$0xff]
        %v842 = vld [vmem:[#allocation5 + $0x608] sm:$0xff]
        %v843 = vld [vmem:[#allocation5 + $0x610] sm:$0xff]
        %v844 = vld [vmem:[#allocation5 + $0x618] sm:$0xff]
        %v845 = vld [vmem:[#allocation5 + $0x620] sm:$0xff]
        %v846 = vld [vmem:[#allocation5 + $0x628] sm:$0xff]
        %v847 = vld [vmem:[#allocation5 + $0x630] sm:$0xff]
        %v848 = vld [vmem:[#allocation5 + $0x638] sm:$0xff]
        %v849 = vld [vmem:[#allocation5 + $0x640] sm:$0xff]
        %v850 = vld [vmem:[#allocation5 + $0x648] sm:$0xff]
        %v851 = vld [vmem:[#allocation5 + $0x650] sm:$0xff]
        %v852 = vld [vmem:[#allocation5 + $0x658] sm:$0xff]
        %v853 = vld [vmem:[#allocation5 + $0x660] sm:$0xff]
        %v854 = vld [vmem:[#allocation5 + $0x668] sm:$0xff]
        %v855 = vld [vmem:[#allocation5 + $0x670] sm:$0xff]
        %v856 = vld [vmem:[#allocation5 + $0x678] sm:$0xff]
        %v857 = vld [vmem:[#allocation5 + $0x680] sm:$0xff]
        %v858 = vld [vmem:[#allocation5 + $0x688] sm:$0xff]
        %v859 = vld [vmem:[#allocation5 + $0x690] sm:$0xff]
        %v860 = vld [vmem:[#allocation5 + $0x698] sm:$0xff]
        %v861 = vld [vmem:[#allocation5 + $0x6a0] sm:$0xff]
        %v862 = vld [vmem:[#allocation5 + $0x6a8] sm:$0xff]
        %v863 = vld [vmem:[#allocation5 + $0x6b0] sm:$0xff]
        %v864 = vld [vmem:[#allocation5 + $0x6b8] sm:$0xff]
        %v865 = vld [vmem:[#allocation5 + $0x6c0] sm:$0xff]
        %v866 = vld [vmem:[#allocation5 + $0x6c8] sm:$0xff]
        %v867 = vld [vmem:[#allocation5 + $0x6d0] sm:$0xff]
        %v868 = vld [vmem:[#allocation5 + $0x6d8] sm:$0xff]
        %v869 = vld [vmem:[#allocation5 + $0x6e0] sm:$0xff]
        %v870 = vld [vmem:[#allocation5 + $0x6e8] sm:$0xff]
        %v871 = vld [vmem:[#allocation5 + $0x6f0] sm:$0xff]
        %v872 = vld [vmem:[#allocation5 + $0x6f8] sm:$0xff]
        %v873 = vld [vmem:[#allocation5 + $0x700] sm:$0xff]
        %v874 = vld [vmem:[#allocation5 + $0x708] sm:$0xff]
        %v875 = vld [vmem:[#allocation5 + $0x710] sm:$0xff]
        %v876 = vld [vmem:[#allocation5 + $0x718] sm:$0xff]
        %v877 = vld [vmem:[#allocation5 + $0x720] sm:$0xff]
        %v878 = vld [vmem:[#allocation5 + $0x728] sm:$0xff]
        %v879 = vld [vmem:[#allocation5 + $0x730] sm:$0xff]
        %v880 = vld [vmem:[#allocation5 + $0x738] sm:$0xff]
        %v881 = vld [vmem:[#allocation5 + $0x740] sm:$0xff]
        %v882 = vld [vmem:[#allocation5 + $0x748] sm:$0xff]
        %v883 = vld [vmem:[#allocation5 + $0x750] sm:$0xff]
        %v884 = vld [vmem:[#allocation5 + $0x758] sm:$0xff]
        %v885 = vld [vmem:[#allocation5 + $0x760] sm:$0xff]
        %v886 = vld [vmem:[#allocation5 + $0x768] sm:$0xff]
        %v887 = vld [vmem:[#allocation5 + $0x770] sm:$0xff]
        %v888 = vld [vmem:[#allocation5 + $0x778] sm:$0xff]
        %v889 = vld [vmem:[#allocation5 + $0x780] sm:$0xff]
        %v890 = vld [vmem:[#allocation5 + $0x788] sm:$0xff]
        %v891 = vld [vmem:[#allocation5 + $0x790] sm:$0xff]
        %v892 = vld [vmem:[#allocation5 + $0x798] sm:$0xff]
        %v893 = vld [vmem:[#allocation5 + $0x7a0] sm:$0xff]
        %v894 = vld [vmem:[#allocation5 + $0x7a8] sm:$0xff]
        %v895 = vld [vmem:[#allocation5 + $0x7b0] sm:$0xff]
        %v896 = vld [vmem:[#allocation5 + $0x7b8] sm:$0xff]
        %v897 = vld [vmem:[#allocation5 + $0x7c0] sm:$0xff]
        %v898 = vld [vmem:[#allocation5 + $0x7c8] sm:$0xff]
        %v899 = vld [vmem:[#allocation5 + $0x7d0] sm:$0xff]
        %v900 = vld [vmem:[#allocation5 + $0x7d8] sm:$0xff]
        %v901 = vld [vmem:[#allocation5 + $0x7e0] sm:$0xff]
        %v902 = vld [vmem:[#allocation5 + $0x7e8] sm:$0xff]
        %v903 = vld [vmem:[#allocation5 + $0x7f0] sm:$0xff]
        %v904 = vld [vmem:[#allocation5 + $0x7f8] sm:$0xff]
        %v905 = vld [vmem:[#allocation5 + $0x800] sm:$0xff]
        %v906 = vld [vmem:[#allocation5 + $0x808] sm:$0xff]
        %v907 = vld [vmem:[#allocation5 + $0x810] sm:$0xff]
        %v908 = vld [vmem:[#allocation5 + $0x818] sm:$0xff]
        %v909 = vld [vmem:[#allocation5 + $0x820] sm:$0xff]
        %v910 = vld [vmem:[#allocation5 + $0x828] sm:$0xff]
        %v911 = vld [vmem:[#allocation5 + $0x830] sm:$0xff]
        %v912 = vld [vmem:[#allocation5 + $0x838] sm:$0xff]
        %v913 = vld [vmem:[#allocation5 + $0x840] sm:$0xff]
        %v914 = vld [vmem:[#allocation5 + $0x848] sm:$0xff]
        %v915 = vld [vmem:[#allocation5 + $0x850] sm:$0xff]
        %v916 = vld [vmem:[#allocation5 + $0x858] sm:$0xff]
        %v917 = vld [vmem:[#allocation5 + $0x860] sm:$0xff]
        %v918 = vld [vmem:[#allocation5 + $0x868] sm:$0xff]
        %v919 = vld [vmem:[#allocation5 + $0x870] sm:$0xff]
        %v920 = vld [vmem:[#allocation5 + $0x878] sm:$0xff]
        %v921 = vld [vmem:[#allocation5 + $0x880] sm:$0xff]
        %v922 = vld [vmem:[#allocation5 + $0x888] sm:$0xff]
        %v923 = vld [vmem:[#allocation5 + $0x890] sm:$0xff]
        %v924 = vld [vmem:[#allocation5 + $0x898] sm:$0xff]
        %v925 = vld [vmem:[#allocation5 + $0x8a0] sm:$0xff]
        %v926 = vld [vmem:[#allocation5 + $0x8a8] sm:$0xff]
        %v927 = vld [vmem:[#allocation5 + $0x8b0] sm:$0xff]
        %v928 = vld [vmem:[#allocation5 + $0x8b8] sm:$0xff]
        %v929 = vld [vmem:[#allocation5 + $0x8c0] sm:$0xff]
        %v930 = vld [vmem:[#allocation5 + $0x8c8] sm:$0xff]
        %v931 = vld [vmem:[#allocation5 + $0x8d0] sm:$0xff]
        %v932 = vld [vmem:[#allocation5 + $0x8d8] sm:$0xff]
        %v933 = vld [vmem:[#allocation5 + $0x8e0] sm:$0xff]
        %v934 = vld [vmem:[#allocation5 + $0x8e8] sm:$0xff]
        %v935 = vld [vmem:[#allocation5 + $0x8f0] sm:$0xff]
        %v936 = vld [vmem:[#allocation5 + $0x8f8] sm:$0xff]
        %v937 = vld [vmem:[#allocation5 + $0x900] sm:$0xff]
        %v938 = vld [vmem:[#allocation5 + $0x908] sm:$0xff]
        %v939 = vld [vmem:[#allocation5 + $0x910] sm:$0xff]
        %v940 = vld [vmem:[#allocation5 + $0x918] sm:$0xff]
        %v941 = vld [vmem:[#allocation5 + $0x920] sm:$0xff]
        %v942 = vld [vmem:[#allocation5 + $0x928] sm:$0xff]
        %v943 = vld [vmem:[#allocation5 + $0x930] sm:$0xff]
        %v944 = vld [vmem:[#allocation5 + $0x938] sm:$0xff]
        %v945 = vld [vmem:[#allocation5 + $0x940] sm:$0xff]
        %v946 = vld [vmem:[#allocation5 + $0x948] sm:$0xff]
        %v947 = vld [vmem:[#allocation5 + $0x950] sm:$0xff]
        %v948 = vld [vmem:[#allocation5 + $0x958] sm:$0xff]
        %v949 = vld [vmem:[#allocation5 + $0x960] sm:$0xff]
        %v950 = vld [vmem:[#allocation5 + $0x968] sm:$0xff]
        %v951 = vld [vmem:[#allocation5 + $0x970] sm:$0xff]
        %v952 = vld [vmem:[#allocation5 + $0x978] sm:$0xff]
        %v953 = vld [vmem:[#allocation5 + $0x980] sm:$0xff]
        %v954 = vld [vmem:[#allocation5 + $0x988] sm:$0xff]
        %v955 = vld [vmem:[#allocation5 + $0x990] sm:$0xff]
        %v956 = vld [vmem:[#allocation5 + $0x998] sm:$0xff]
        %v957 = vld [vmem:[#allocation5 + $0x9a0] sm:$0xff]
        %v958 = vld [vmem:[#allocation5 + $0x9a8] sm:$0xff]
        %v959 = vld [vmem:[#allocation5 + $0x9b0] sm:$0xff]
        %v960 = vld [vmem:[#allocation5 + $0x9b8] sm:$0xff]
        %v961 = vld [vmem:[#allocation5 + $0x9c0] sm:$0xff]
        %v962 = vld [vmem:[#allocation5 + $0x9c8] sm:$0xff]
        %v963 = vld [vmem:[#allocation5 + $0x9d0] sm:$0xff]
        %v964 = vld [vmem:[#allocation5 + $0x9d8] sm:$0xff]
        %v965 = vld [vmem:[#allocation5 + $0x9e0] sm:$0xff]
        %v966 = vld [vmem:[#allocation5 + $0x9e8] sm:$0xff]
        %v967 = vld [vmem:[#allocation5 + $0x9f0] sm:$0xff]
        %v968 = vld [vmem:[#allocation5 + $0x9f8] sm:$0xff]
        %v969 = vld [vmem:[#allocation5 + $0xa00] sm:$0xff]
        %v970 = vld [vmem:[#allocation5 + $0xa08] sm:$0xff]
        %v971 = vld [vmem:[#allocation5 + $0xa10] sm:$0xff]
        %v972 = vld [vmem:[#allocation5 + $0xa18] sm:$0xff]
        %v973 = vld [vmem:[#allocation5 + $0xa20] sm:$0xff]
        %v974 = vld [vmem:[#allocation5 + $0xa28] sm:$0xff]
        %v975 = vld [vmem:[#allocation5 + $0xa30] sm:$0xff]
        %v976 = vld [vmem:[#allocation5 + $0xa38] sm:$0xff]
        %v977 = vld [vmem:[#allocation5 + $0xa40] sm:$0xff]
        %v978 = vld [vmem:[#allocation5 + $0xa48] sm:$0xff]
        %v979 = vld [vmem:[#allocation5 + $0xa50] sm:$0xff]
        %v980 = vld [vmem:[#allocation5 + $0xa58] sm:$0xff]
        %v981 = vld [vmem:[#allocation5 + $0xa60] sm:$0xff]
        %v982 = vld [vmem:[#allocation5 + $0xa68] sm:$0xff]
        %v983 = vld [vmem:[#allocation5 + $0xa70] sm:$0xff]
        %v984 = vld [vmem:[#allocation5 + $0xa78] sm:$0xff]
        %v985 = vld [vmem:[#allocation5 + $0xa80] sm:$0xff]
        %v986 = vld [vmem:[#allocation5 + $0xa88] sm:$0xff]
        %v987 = vld [vmem:[#allocation5 + $0xa90] sm:$0xff]
        %v988 = vld [vmem:[#allocation5 + $0xa98] sm:$0xff]
        %v989 = vld [vmem:[#allocation5 + $0xaa0] sm:$0xff]
        %v990 = vld [vmem:[#allocation5 + $0xaa8] sm:$0xff]
        %v991 = vld [vmem:[#allocation5 + $0xab0] sm:$0xff]
        %v992 = vld [vmem:[#allocation5 + $0xab8] sm:$0xff]
        %v993 = vld [vmem:[#allocation5 + $0xac0] sm:$0xff]
        %v994 = vld [vmem:[#allocation5 + $0xac8] sm:$0xff]
        %v995 = vld [vmem:[#allocation5 + $0xad0] sm:$0xff]
        %v996 = vld [vmem:[#allocation5 + $0xad8] sm:$0xff]
        %v997 = vld [vmem:[#allocation5 + $0xae0] sm:$0xff]
        %v998 = vld [vmem:[#allocation5 + $0xae8] sm:$0xff]
        %v999 = vld [vmem:[#allocation5 + $0xaf0] sm:$0xff]
        %v1000 = vld [vmem:[#allocation5 + $0xaf8] sm:$0xff]
        %v1001 = vld [vmem:[#allocation5 + $0xb00] sm:$0xff]
        %v1002 = vld [vmem:[#allocation5 + $0xb08] sm:$0xff]
        %v1003 = vld [vmem:[#allocation5 + $0xb10] sm:$0xff]
        %v1004 = vld [vmem:[#allocation5 + $0xb18] sm:$0xff]
        %v1005 = vld [vmem:[#allocation5 + $0xb20] sm:$0xff]
        %v1006 = vld [vmem:[#allocation5 + $0xb28] sm:$0xff]
        %v1007 = vld [vmem:[#allocation5 + $0xb30] sm:$0xff]
        %v1008 = vld [vmem:[#allocation5 + $0xb38] sm:$0xff]
        %v1009 = vld [vmem:[#allocation5 + $0xb40] sm:$0xff]
        %v1010 = vld [vmem:[#allocation5 + $0xb48] sm:$0xff]
        %v1011 = vld [vmem:[#allocation5 + $0xb50] sm:$0xff]
        %v1012 = vld [vmem:[#allocation5 + $0xb58] sm:$0xff]
        %v1013 = vld [vmem:[#allocation5 + $0xb60] sm:$0xff]
        %v1014 = vld [vmem:[#allocation5 + $0xb68] sm:$0xff]
        %v1015 = vld [vmem:[#allocation5 + $0xb70] sm:$0xff]
        %v1016 = vld [vmem:[#allocation5 + $0xb78] sm:$0xff]
        %v1017 = vld [vmem:[#allocation5 + $0xb80] sm:$0xff]
        %v1018 = vld [vmem:[#allocation5 + $0xb88] sm:$0xff]
        %v1019 = vld [vmem:[#allocation5 + $0xb90] sm:$0xff]
        %v1020 = vld [vmem:[#allocation5 + $0xb98] sm:$0xff]
        %v1021 = vld [vmem:[#allocation5 + $0xba0] sm:$0xff]
        %v1022 = vld [vmem:[#allocation5 + $0xba8] sm:$0xff]
        %v1023 = vld [vmem:[#allocation5 + $0xbb0] sm:$0xff]
        %v1024 = vld [vmem:[#allocation5 + $0xbb8] sm:$0xff]
        %v1025 = vld [vmem:[#allocation5 + $0xbc0] sm:$0xff]
        %v1026 = vld [vmem:[#allocation5 + $0xbc8] sm:$0xff]
        %v1027 = vld [vmem:[#allocation5 + $0xbd0] sm:$0xff]
        %v1028 = vld [vmem:[#allocation5 + $0xbd8] sm:$0xff]
        %v1029 = vld [vmem:[#allocation5 + $0xbe0] sm:$0xff]
        %v1030 = vld [vmem:[#allocation5 + $0xbe8] sm:$0xff]
        %v1031 = vld [vmem:[#allocation5 + $0xbf0] sm:$0xff]
        %v1032 = vld [vmem:[#allocation5 + $0xbf8] sm:$0xff]
        %v1033 = vld [vmem:[#allocation5 + $0xc00] sm:$0xff]
        %v1034 = vld [vmem:[#allocation5 + $0xc08] sm:$0xff]
        %v1035 = vld [vmem:[#allocation5 + $0xc10] sm:$0xff]
        %v1036 = vld [vmem:[#allocation5 + $0xc18] sm:$0xff]
        %v1037 = vld [vmem:[#allocation5 + $0xc20] sm:$0xff]
        %v1038 = vld [vmem:[#allocation5 + $0xc28] sm:$0xff]
        %v1039 = vld [vmem:[#allocation5 + $0xc30] sm:$0xff]
        %v1040 = vld [vmem:[#allocation5 + $0xc38] sm:$0xff]
        %v1041 = vld [vmem:[#allocation5 + $0xc40] sm:$0xff]
        %v1042 = vld [vmem:[#allocation5 + $0xc48] sm:$0xff]
        %v1043 = vld [vmem:[#allocation5 + $0xc50] sm:$0xff]
        %v1044 = vld [vmem:[#allocation5 + $0xc58] sm:$0xff]
        %v1045 = vld [vmem:[#allocation5 + $0xc60] sm:$0xff]
        %v1046 = vld [vmem:[#allocation5 + $0xc68] sm:$0xff]
        %v1047 = vld [vmem:[#allocation5 + $0xc70] sm:$0xff]
        %v1048 = vld [vmem:[#allocation5 + $0xc78] sm:$0xff]
        %v1049 = vld [vmem:[#allocation5 + $0xc80] sm:$0xff]
        %v1050 = vld [vmem:[#allocation5 + $0xc88] sm:$0xff]
        %v1051 = vld [vmem:[#allocation5 + $0xc90] sm:$0xff]
        %v1052 = vld [vmem:[#allocation5 + $0xc98] sm:$0xff]
        %v1053 = vld [vmem:[#allocation5 + $0xca0] sm:$0xff]
        %v1054 = vld [vmem:[#allocation5 + $0xca8] sm:$0xff]
        %v1055 = vld [vmem:[#allocation5 + $0xcb0] sm:$0xff]
        %v1056 = vld [vmem:[#allocation5 + $0xcb8] sm:$0xff]
        %v1057 = vld [vmem:[#allocation5 + $0xcc0] sm:$0xff]
        %v1058 = vld [vmem:[#allocation5 + $0xcc8] sm:$0xff]
        %v1059 = vld [vmem:[#allocation5 + $0xcd0] sm:$0xff]
        %v1060 = vld [vmem:[#allocation5 + $0xcd8] sm:$0xff]
        %v1061 = vld [vmem:[#allocation5 + $0xce0] sm:$0xff]
        %v1062 = vld [vmem:[#allocation5 + $0xce8] sm:$0xff]
        %v1063 = vld [vmem:[#allocation5 + $0xcf0] sm:$0xff]
        %v1064 = vld [vmem:[#allocation5 + $0xcf8] sm:$0xff]
        %v1065 = vld [vmem:[#allocation5 + $0xd00] sm:$0xff]
        %v1066 = vld [vmem:[#allocation5 + $0xd08] sm:$0xff]
        %v1067 = vld [vmem:[#allocation5 + $0xd10] sm:$0xff]
        %v1068 = vld [vmem:[#allocation5 + $0xd18] sm:$0xff]
        %v1069 = vld [vmem:[#allocation5 + $0xd20] sm:$0xff]
        %v1070 = vld [vmem:[#allocation5 + $0xd28] sm:$0xff]
        %v1071 = vld [vmem:[#allocation5 + $0xd30] sm:$0xff]
        %v1072 = vld [vmem:[#allocation5 + $0xd38] sm:$0xff]
        %v1073 = vld [vmem:[#allocation5 + $0xd40] sm:$0xff]
        %v1074 = vld [vmem:[#allocation5 + $0xd48] sm:$0xff]
        %v1075 = vld [vmem:[#allocation5 + $0xd50] sm:$0xff]
        %v1076 = vld [vmem:[#allocation5 + $0xd58] sm:$0xff]
        %v1077 = vld [vmem:[#allocation5 + $0xd60] sm:$0xff]
        %v1078 = vld [vmem:[#allocation5 + $0xd68] sm:$0xff]
        %v1079 = vld [vmem:[#allocation5 + $0xd70] sm:$0xff]
        %v1080 = vld [vmem:[#allocation5 + $0xd78] sm:$0xff]
        %v1081 = vld [vmem:[#allocation5 + $0xd80] sm:$0xff]
        %v1082 = vld [vmem:[#allocation5 + $0xd88] sm:$0xff]
        %v1083 = vld [vmem:[#allocation5 + $0xd90] sm:$0xff]
        %v1084 = vld [vmem:[#allocation5 + $0xd98] sm:$0xff]
        %v1085 = vld [vmem:[#allocation5 + $0xda0] sm:$0xff]
        %v1086 = vld [vmem:[#allocation5 + $0xda8] sm:$0xff]
        %v1087 = vld [vmem:[#allocation5 + $0xdb0] sm:$0xff]
        %v1088 = vld [vmem:[#allocation5 + $0xdb8] sm:$0xff]
        %v1089 = vld [vmem:[#allocation5 + $0xdc0] sm:$0xff]
        %v1090 = vld [vmem:[#allocation5 + $0xdc8] sm:$0xff]
        %v1091 = vld [vmem:[#allocation5 + $0xdd0] sm:$0xff]
        %v1092 = vld [vmem:[#allocation5 + $0xdd8] sm:$0xff]
        %v1093 = vld [vmem:[#allocation5 + $0xde0] sm:$0xff]
        %v1094 = vld [vmem:[#allocation5 + $0xde8] sm:$0xff]
        %v1095 = vld [vmem:[#allocation5 + $0xdf0] sm:$0xff]
        %v1096 = vld [vmem:[#allocation5 + $0xdf8] sm:$0xff]
        %v1097 = vld [vmem:[#allocation5 + $0xe00] sm:$0xff]
        %v1098 = vld [vmem:[#allocation5 + $0xe08] sm:$0xff]
        %v1099 = vld [vmem:[#allocation5 + $0xe10] sm:$0xff]
        %v1100 = vld [vmem:[#allocation5 + $0xe18] sm:$0xff]
        %v1101 = vld [vmem:[#allocation5 + $0xe20] sm:$0xff]
        %v1102 = vld [vmem:[#allocation5 + $0xe28] sm:$0xff]
        %v1103 = vld [vmem:[#allocation5 + $0xe30] sm:$0xff]
        %v1104 = vld [vmem:[#allocation5 + $0xe38] sm:$0xff]
        %v1105 = vld [vmem:[#allocation5 + $0xe40] sm:$0xff]
        %v1106 = vld [vmem:[#allocation5 + $0xe48] sm:$0xff]
        %v1107 = vld [vmem:[#allocation5 + $0xe50] sm:$0xff]
        %v1108 = vld [vmem:[#allocation5 + $0xe58] sm:$0xff]
        %v1109 = vld [vmem:[#allocation5 + $0xe60] sm:$0xff]
        %v1110 = vld [vmem:[#allocation5 + $0xe68] sm:$0xff]
        %v1111 = vld [vmem:[#allocation5 + $0xe70] sm:$0xff]
        %v1112 = vld [vmem:[#allocation5 + $0xe78] sm:$0xff]
        %v1113 = vld [vmem:[#allocation5 + $0xe80] sm:$0xff]
        %v1114 = vld [vmem:[#allocation5 + $0xe88] sm:$0xff]
        %v1115 = vld [vmem:[#allocation5 + $0xe90] sm:$0xff]
        %v1116 = vld [vmem:[#allocation5 + $0xe98] sm:$0xff]
        %v1117 = vld [vmem:[#allocation5 + $0xea0] sm:$0xff]
        %v1118 = vld [vmem:[#allocation5 + $0xea8] sm:$0xff]
        %v1119 = vld [vmem:[#allocation5 + $0xeb0] sm:$0xff]
        %v1120 = vld [vmem:[#allocation5 + $0xeb8] sm:$0xff]
        %v1121 = vld [vmem:[#allocation5 + $0xec0] sm:$0xff]
        %v1122 = vld [vmem:[#allocation5 + $0xec8] sm:$0xff]
        %v1123 = vld [vmem:[#allocation5 + $0xed0] sm:$0xff]
        %v1124 = vld [vmem:[#allocation5 + $0xed8] sm:$0xff]
        %v1125 = vld [vmem:[#allocation5 + $0xee0] sm:$0xff]
        %v1126 = vld [vmem:[#allocation5 + $0xee8] sm:$0xff]
        %v1127 = vld [vmem:[#allocation5 + $0xef0] sm:$0xff]
        %v1128 = vld [vmem:[#allocation5 + $0xef8] sm:$0xff]
        %v1129 = vld [vmem:[#allocation5 + $0xf00] sm:$0xff]
        %v1130 = vld [vmem:[#allocation5 + $0xf08] sm:$0xff]
        %v1131 = vld [vmem:[#allocation5 + $0xf10] sm:$0xff]
        %v1132 = vld [vmem:[#allocation5 + $0xf18] sm:$0xff]
        %v1133 = vld [vmem:[#allocation5 + $0xf20] sm:$0xff]
        %v1134 = vld [vmem:[#allocation5 + $0xf28] sm:$0xff]
        %v1135 = vld [vmem:[#allocation5 + $0xf30] sm:$0xff]
        %v1136 = vld [vmem:[#allocation5 + $0xf38] sm:$0xff]
        %v1137 = vld [vmem:[#allocation5 + $0xf40] sm:$0xff]
        %v1138 = vld [vmem:[#allocation5 + $0xf48] sm:$0xff]
        %v1139 = vld [vmem:[#allocation5 + $0xf50] sm:$0xff]
        %v1140 = vld [vmem:[#allocation5 + $0xf58] sm:$0xff]
        %v1141 = vld [vmem:[#allocation5 + $0xf60] sm:$0xff]
        %v1142 = vld [vmem:[#allocation5 + $0xf68] sm:$0xff]
        %v1143 = vld [vmem:[#allocation5 + $0xf70] sm:$0xff]
        %v1144 = vld [vmem:[#allocation5 + $0xf78] sm:$0xff]
        %v1145 = vld [vmem:[#allocation5 + $0xf80] sm:$0xff]
        %v1146 = vld [vmem:[#allocation5 + $0xf88] sm:$0xff]
        %v1147 = vld [vmem:[#allocation5 + $0xf90] sm:$0xff]
        %v1148 = vld [vmem:[#allocation5 + $0xf98] sm:$0xff]
        %v1149 = vld [vmem:[#allocation5 + $0xfa0] sm:$0xff]
        %v1150 = vld [vmem:[#allocation5 + $0xfa8] sm:$0xff]
        %v1151 = vld [vmem:[#allocation5 + $0xfb0] sm:$0xff]
        %v1152 = vld [vmem:[#allocation5 + $0xfb8] sm:$0xff]
        %v1153 = vld [vmem:[#allocation5 + $0xfc0] sm:$0xff]
        %v1154 = vld [vmem:[#allocation5 + $0xfc8] sm:$0xff]
        %v1155 = vld [vmem:[#allocation5 + $0xfd0] sm:$0xff]
        %v1156 = vld [vmem:[#allocation5 + $0xfd8] sm:$0xff]
        %v1157 = vld [vmem:[#allocation5 + $0xfe0] sm:$0xff]
        %v1158 = vld [vmem:[#allocation5 + $0xfe8] sm:$0xff]
        %v1159 = vld [vmem:[#allocation5 + $0xff0] sm:$0xff]
        %v1160 = vld [vmem:[#allocation5 + $0xff8] sm:$0xff]
        %v1161 = vld [vmem:[#allocation5 + $0x1000] sm:$0xff]
        %v1162 = vld [vmem:[#allocation5 + $0x1008] sm:$0xff]
        %v1163 = vld [vmem:[#allocation5 + $0x1010] sm:$0xff]
        %v1164 = vld [vmem:[#allocation5 + $0x1018] sm:$0xff]
        %v1165 = vld [vmem:[#allocation5 + $0x1020] sm:$0xff]
        %v1166 = vld [vmem:[#allocation5 + $0x1028] sm:$0xff]
        %v1167 = vld [vmem:[#allocation5 + $0x1030] sm:$0xff]
        %v1168 = vld [vmem:[#allocation5 + $0x1038] sm:$0xff]
        %v1169 = vld [vmem:[#allocation5 + $0x1040] sm:$0xff]
        %v1170 = vld [vmem:[#allocation5 + $0x1048] sm:$0xff]
        %v1171 = vld [vmem:[#allocation5 + $0x1050] sm:$0xff]
        %v1172 = vld [vmem:[#allocation5 + $0x1058] sm:$0xff]
        %v1173 = vld [vmem:[#allocation5 + $0x1060] sm:$0xff]
        %v1174 = vld [vmem:[#allocation5 + $0x1068] sm:$0xff]
        %v1175 = vld [vmem:[#allocation5 + $0x1070] sm:$0xff]
        %v1176 = vld [vmem:[#allocation5 + $0x1078] sm:$0xff]
        %v1177 = vld [vmem:[#allocation5 + $0x1080] sm:$0xff]
        %v1178 = vld [vmem:[#allocation5 + $0x1088] sm:$0xff]
        %v1179 = vld [vmem:[#allocation5 + $0x1090] sm:$0xff]
        %v1180 = vld [vmem:[#allocation5 + $0x1098] sm:$0xff]
        %v1181 = vld [vmem:[#allocation5 + $0x10a0] sm:$0xff]
        %v1182 = vld [vmem:[#allocation5 + $0x10a8] sm:$0xff]
        %v1183 = vld [vmem:[#allocation5 + $0x10b0] sm:$0xff]
        %v1184 = vld [vmem:[#allocation5 + $0x10b8] sm:$0xff]
        %v1185 = vld [vmem:[#allocation5 + $0x10c0] sm:$0xff]
        %v1186 = vld [vmem:[#allocation5 + $0x10c8] sm:$0xff]
        %v1187 = vld [vmem:[#allocation5 + $0x10d0] sm:$0xff]
        %v1188 = vld [vmem:[#allocation5 + $0x10d8] sm:$0xff]
        %v1189 = vld [vmem:[#allocation5 + $0x10e0] sm:$0xff]
        %v1190 = vld [vmem:[#allocation5 + $0x10e8] sm:$0xff]
        %v1191 = vld [vmem:[#allocation5 + $0x10f0] sm:$0xff]
        %v1192 = vld [vmem:[#allocation5 + $0x10f8] sm:$0xff]
        %v1193 = vld [vmem:[#allocation5 + $0x1100] sm:$0xff]
        %v1194 = vld [vmem:[#allocation5 + $0x1108] sm:$0xff]
        %v1195 = vld [vmem:[#allocation5 + $0x1110] sm:$0xff]
        %v1196 = vld [vmem:[#allocation5 + $0x1118] sm:$0xff]
        %v1197 = vld [vmem:[#allocation5 + $0x1120] sm:$0xff]
        %v1198 = vld [vmem:[#allocation5 + $0x1128] sm:$0xff]
        %v1199 = vld [vmem:[#allocation5 + $0x1130] sm:$0xff]
        %v1200 = vld [vmem:[#allocation5 + $0x1138] sm:$0xff]
        %v1201 = vld [vmem:[#allocation5 + $0x1140] sm:$0xff]
        %v1202 = vld [vmem:[#allocation5 + $0x1148] sm:$0xff]
        %v1203 = vld [vmem:[#allocation5 + $0x1150] sm:$0xff]
        %v1204 = vld [vmem:[#allocation5 + $0x1158] sm:$0xff]
        %v1205 = vld [vmem:[#allocation5 + $0x1160] sm:$0xff]
        %v1206 = vld [vmem:[#allocation5 + $0x1168] sm:$0xff]
        %v1207 = vld [vmem:[#allocation5 + $0x1170] sm:$0xff]
        %v1208 = vld [vmem:[#allocation5 + $0x1178] sm:$0xff]
        %v1209 = vld [vmem:[#allocation5 + $0x1180] sm:$0xff]
        %v1210 = vld [vmem:[#allocation5 + $0x1188] sm:$0xff]
        %v1211 = vld [vmem:[#allocation5 + $0x1190] sm:$0xff]
        %v1212 = vld [vmem:[#allocation5 + $0x1198] sm:$0xff]
        %v1213 = vld [vmem:[#allocation5 + $0x11a0] sm:$0xff]
        %v1214 = vld [vmem:[#allocation5 + $0x11a8] sm:$0xff]
        %v1215 = vld [vmem:[#allocation5 + $0x11b0] sm:$0xff]
        %v1216 = vld [vmem:[#allocation5 + $0x11b8] sm:$0xff]
        %v1217 = vld [vmem:[#allocation5 + $0x11c0] sm:$0xff]
        %v1218 = vld [vmem:[#allocation5 + $0x11c8] sm:$0xff]
        %v1219 = vld [vmem:[#allocation5 + $0x11d0] sm:$0xff]
        %v1220 = vld [vmem:[#allocation5 + $0x11d8] sm:$0xff]
        %v1221 = vld [vmem:[#allocation5 + $0x11e0] sm:$0xff]
        %v1222 = vld [vmem:[#allocation5 + $0x11e8] sm:$0xff]
        %v1223 = vld [vmem:[#allocation5 + $0x11f0] sm:$0xff]
        %v1224 = vld [vmem:[#allocation5 + $0x11f8] sm:$0xff]
        %v1225 = vld [vmem:[#allocation5 + $0x1200] sm:$0xff]
        %v1226 = vld [vmem:[#allocation5 + $0x1208] sm:$0xff]
        %v1227 = vld [vmem:[#allocation5 + $0x1210] sm:$0xff]
        %v1228 = vld [vmem:[#allocation5 + $0x1218] sm:$0xff]
        %v1229 = vld [vmem:[#allocation5 + $0x1220] sm:$0xff]
        %v1230 = vld [vmem:[#allocation5 + $0x1228] sm:$0xff]
        %v1231 = vld [vmem:[#allocation5 + $0x1230] sm:$0xff]
        %v1232 = vld [vmem:[#allocation5 + $0x1238] sm:$0xff]
        %v1233 = vld [vmem:[#allocation5 + $0x1240] sm:$0xff]
        %v1234 = vld [vmem:[#allocation5 + $0x1248] sm:$0xff]
        %v1235 = vld [vmem:[#allocation5 + $0x1250] sm:$0xff]
        %v1236 = vld [vmem:[#allocation5 + $0x1258] sm:$0xff]
        %v1237 = vld [vmem:[#allocation5 + $0x1260] sm:$0xff]
        %v1238 = vld [vmem:[#allocation5 + $0x1268] sm:$0xff]
        %v1239 = vld [vmem:[#allocation5 + $0x1270] sm:$0xff]
        %v1240 = vld [vmem:[#allocation5 + $0x1278] sm:$0xff]
        %v1241 = vld [vmem:[#allocation5 + $0x1280] sm:$0xff]
        %v1242 = vld [vmem:[#allocation5 + $0x1288] sm:$0xff]
        %v1243 = vld [vmem:[#allocation5 + $0x1290] sm:$0xff]
        %v1244 = vld [vmem:[#allocation5 + $0x1298] sm:$0xff]
        %v1245 = vld [vmem:[#allocation5 + $0x12a0] sm:$0xff]
        %v1246 = vld [vmem:[#allocation5 + $0x12a8] sm:$0xff]
        %v1247 = vld [vmem:[#allocation5 + $0x12b0] sm:$0xff]
        %v1248 = vld [vmem:[#allocation5 + $0x12b8] sm:$0xff]
        %v1249 = vld [vmem:[#allocation5 + $0x12c0] sm:$0xff]
        %v1250 = vld [vmem:[#allocation5 + $0x12c8] sm:$0xff]
        %v1251 = vld [vmem:[#allocation5 + $0x12d0] sm:$0xff]
        %v1252 = vld [vmem:[#allocation5 + $0x12d8] sm:$0xff]
        %v1253 = vld [vmem:[#allocation5 + $0x12e0] sm:$0xff]
        %v1254 = vld [vmem:[#allocation5 + $0x12e8] sm:$0xff]
        %v1255 = vld [vmem:[#allocation5 + $0x12f0] sm:$0xff]
        %v1256 = vld [vmem:[#allocation5 + $0x12f8] sm:$0xff]
        %v1257 = vld [vmem:[#allocation5 + $0x1300] sm:$0xff]
        %v1258 = vld [vmem:[#allocation5 + $0x1308] sm:$0xff]
        %v1259 = vld [vmem:[#allocation5 + $0x1310] sm:$0xff]
        %v1260 = vld [vmem:[#allocation5 + $0x1318] sm:$0xff]
        %v1261 = vld [vmem:[#allocation5 + $0x1320] sm:$0xff]
        %v1262 = vld [vmem:[#allocation5 + $0x1328] sm:$0xff]
        %v1263 = vld [vmem:[#allocation5 + $0x1330] sm:$0xff]
        %v1264 = vld [vmem:[#allocation5 + $0x1338] sm:$0xff]
        %v1265 = vld [vmem:[#allocation5 + $0x1340] sm:$0xff]
        %v1266 = vld [vmem:[#allocation5 + $0x1348] sm:$0xff]
        %v1267 = vld [vmem:[#allocation5 + $0x1350] sm:$0xff]
        %v1268 = vld [vmem:[#allocation5 + $0x1358] sm:$0xff]
        %v1269 = vld [vmem:[#allocation5 + $0x1360] sm:$0xff]
        %v1270 = vld [vmem:[#allocation5 + $0x1368] sm:$0xff]
        %v1271 = vld [vmem:[#allocation5 + $0x1370] sm:$0xff]
        %v1272 = vld [vmem:[#allocation5 + $0x1378] sm:$0xff]
        %v1273 = vld [vmem:[#allocation5 + $0x1380] sm:$0xff]
        %v1274 = vld [vmem:[#allocation5 + $0x1388] sm:$0xff]
        %v1275 = vld [vmem:[#allocation5 + $0x1390] sm:$0xff]
        %v1276 = vld [vmem:[#allocation5 + $0x1398] sm:$0xff]
        %v1277 = vld [vmem:[#allocation5 + $0x13a0] sm:$0xff]
        %v1278 = vld [vmem:[#allocation5 + $0x13a8] sm:$0xff]
        %v1279 = vld [vmem:[#allocation5 + $0x13b0] sm:$0xff]
        %v1280 = vld [vmem:[#allocation5 + $0x13b8] sm:$0xff]
        %v1281 = vld [vmem:[#allocation5 + $0x13c0] sm:$0xff]
        %v1282 = vld [vmem:[#allocation5 + $0x13c8] sm:$0xff]
        %v1283 = vld [vmem:[#allocation5 + $0x13d0] sm:$0xff]
        %v1284 = vld [vmem:[#allocation5 + $0x13d8] sm:$0xff]
        %v1285 = vld [vmem:[#allocation5 + $0x13e0] sm:$0xff]
        %v1286 = vld [vmem:[#allocation5 + $0x13e8] sm:$0xff]
        %v1287 = vld [vmem:[#allocation5 + $0x13f0] sm:$0xff]
        %v1288 = vld [vmem:[#allocation5 + $0x13f8] sm:$0xff]
        %v1289 = vld [vmem:[#allocation5 + $0x1400] sm:$0xff]
        %v1290 = vld [vmem:[#allocation5 + $0x1408] sm:$0xff]
        %v1291 = vld [vmem:[#allocation5 + $0x1410] sm:$0xff]
        %v1292 = vld [vmem:[#allocation5 + $0x1418] sm:$0xff]
        %v1293 = vld [vmem:[#allocation5 + $0x1420] sm:$0xff]
        %v1294 = vld [vmem:[#allocation5 + $0x1428] sm:$0xff]
        %v1295 = vld [vmem:[#allocation5 + $0x1430] sm:$0xff]
        %v1296 = vld [vmem:[#allocation5 + $0x1438] sm:$0xff]
        %v1297 = vld [vmem:[#allocation5 + $0x1440] sm:$0xff]
        %v1298 = vld [vmem:[#allocation5 + $0x1448] sm:$0xff]
        %v1299 = vld [vmem:[#allocation5 + $0x1450] sm:$0xff]
        %v1300 = vld [vmem:[#allocation5 + $0x1458] sm:$0xff]
        %v1301 = vld [vmem:[#allocation5 + $0x1460] sm:$0xff]
        %v1302 = vld [vmem:[#allocation5 + $0x1468] sm:$0xff]
        %v1303 = vld [vmem:[#allocation5 + $0x1470] sm:$0xff]
        %v1304 = vld [vmem:[#allocation5 + $0x1478] sm:$0xff]
        %v1305 = vld [vmem:[#allocation5 + $0x1480] sm:$0xff]
        %v1306 = vld [vmem:[#allocation5 + $0x1488] sm:$0xff]
        %v1307 = vld [vmem:[#allocation5 + $0x1490] sm:$0xff]
        %v1308 = vld [vmem:[#allocation5 + $0x1498] sm:$0xff]
        %v1309 = vld [vmem:[#allocation5 + $0x14a0] sm:$0xff]
        %v1310 = vld [vmem:[#allocation5 + $0x14a8] sm:$0xff]
        %v1311 = vld [vmem:[#allocation5 + $0x14b0] sm:$0xff]
        %v1312 = vld [vmem:[#allocation5 + $0x14b8] sm:$0xff]
        %v1313 = vld [vmem:[#allocation5 + $0x14c0] sm:$0xff]
        %v1314 = vld [vmem:[#allocation5 + $0x14c8] sm:$0xff]
        %v1315 = vld [vmem:[#allocation5 + $0x14d0] sm:$0xff]
        %v1316 = vld [vmem:[#allocation5 + $0x14d8] sm:$0xff]
        %v1317 = vld [vmem:[#allocation5 + $0x14e0] sm:$0xff]
        %v1318 = vld [vmem:[#allocation5 + $0x14e8] sm:$0xff]
        %v1319 = vld [vmem:[#allocation5 + $0x14f0] sm:$0xff]
        %v1320 = vld [vmem:[#allocation5 + $0x14f8] sm:$0xff]
        %v1321 = vld [vmem:[#allocation5 + $0x1500] sm:$0xff]
        %v1322 = vld [vmem:[#allocation5 + $0x1508] sm:$0xff]
        %v1323 = vld [vmem:[#allocation5 + $0x1510] sm:$0xff]
        %v1324 = vld [vmem:[#allocation5 + $0x1518] sm:$0xff]
        %v1325 = vld [vmem:[#allocation5 + $0x1520] sm:$0xff]
        %v1326 = vld [vmem:[#allocation5 + $0x1528] sm:$0xff]
        %v1327 = vld [vmem:[#allocation5 + $0x1530] sm:$0xff]
        %v1328 = vld [vmem:[#allocation5 + $0x1538] sm:$0xff]
        %v1329 = vld [vmem:[#allocation5 + $0x1540] sm:$0xff]
        %v1330 = vld [vmem:[#allocation5 + $0x1548] sm:$0xff]
        %v1331 = vld [vmem:[#allocation5 + $0x1550] sm:$0xff]
        %v1332 = vld [vmem:[#allocation5 + $0x1558] sm:$0xff]
        %v1333 = vld [vmem:[#allocation5 + $0x1560] sm:$0xff]
        %v1334 = vld [vmem:[#allocation5 + $0x1568] sm:$0xff]
        %v1335 = vld [vmem:[#allocation5 + $0x1570] sm:$0xff]
        %v1336 = vld [vmem:[#allocation5 + $0x1578] sm:$0xff]
        %v1337 = vld [vmem:[#allocation5 + $0x1580] sm:$0xff]
        %v1338 = vld [vmem:[#allocation5 + $0x1588] sm:$0xff]
        %v1339 = vld [vmem:[#allocation5 + $0x1590] sm:$0xff]
        %v1340 = vld [vmem:[#allocation5 + $0x1598] sm:$0xff]
        %v1341 = vld [vmem:[#allocation5 + $0x15a0] sm:$0xff]
        %v1342 = vld [vmem:[#allocation5 + $0x15a8] sm:$0xff]
        %v1343 = vld [vmem:[#allocation5 + $0x15b0] sm:$0xff]
        %v1344 = vld [vmem:[#allocation5 + $0x15b8] sm:$0xff]
        %v1345 = vld [vmem:[#allocation5 + $0x15c0] sm:$0xff]
        %v1346 = vld [vmem:[#allocation5 + $0x15c8] sm:$0xff]
        %v1347 = vld [vmem:[#allocation5 + $0x15d0] sm:$0xff]
        %v1348 = vld [vmem:[#allocation5 + $0x15d8] sm:$0xff]
        %v1349 = vld [vmem:[#allocation5 + $0x15e0] sm:$0xff]
        %v1350 = vld [vmem:[#allocation5 + $0x15e8] sm:$0xff]
        %v1351 = vld [vmem:[#allocation5 + $0x15f0] sm:$0xff]
        %v1352 = vld [vmem:[#allocation5 + $0x15f8] sm:$0xff]
        %v1353 = vld [vmem:[#allocation5 + $0x1600] sm:$0xff]
        %v1354 = vld [vmem:[#allocation5 + $0x1608] sm:$0xff]
        %v1355 = vld [vmem:[#allocation5 + $0x1610] sm:$0xff]
        %v1356 = vld [vmem:[#allocation5 + $0x1618] sm:$0xff]
        %v1357 = vld [vmem:[#allocation5 + $0x1620] sm:$0xff]
        %v1358 = vld [vmem:[#allocation5 + $0x1628] sm:$0xff]
        %v1359 = vld [vmem:[#allocation5 + $0x1630] sm:$0xff]
        %v1360 = vld [vmem:[#allocation5 + $0x1638] sm:$0xff]
        %v1361 = vld [vmem:[#allocation5 + $0x1640] sm:$0xff]
        %v1362 = vld [vmem:[#allocation5 + $0x1648] sm:$0xff]
        %v1363 = vld [vmem:[#allocation5 + $0x1650] sm:$0xff]
        %v1364 = vld [vmem:[#allocation5 + $0x1658] sm:$0xff]
        %v1365 = vld [vmem:[#allocation5 + $0x1660] sm:$0xff]
        %v1366 = vld [vmem:[#allocation5 + $0x1668] sm:$0xff]
        %v1367 = vld [vmem:[#allocation5 + $0x1670] sm:$0xff]
        %v1368 = vld [vmem:[#allocation5 + $0x1678] sm:$0xff]
        %v1369 = vld [vmem:[#allocation5 + $0x1680] sm:$0xff]
        %v1370 = vld [vmem:[#allocation5 + $0x1688] sm:$0xff]
        %v1371 = vld [vmem:[#allocation5 + $0x1690] sm:$0xff]
        %v1372 = vld [vmem:[#allocation5 + $0x1698] sm:$0xff]
        %v1373 = vld [vmem:[#allocation5 + $0x16a0] sm:$0xff]
        %v1374 = vld [vmem:[#allocation5 + $0x16a8] sm:$0xff]
        %v1375 = vld [vmem:[#allocation5 + $0x16b0] sm:$0xff]
        %v1376 = vld [vmem:[#allocation5 + $0x16b8] sm:$0xff]
        %v1377 = vld [vmem:[#allocation5 + $0x16c0] sm:$0xff]
        %v1378 = vld [vmem:[#allocation5 + $0x16c8] sm:$0xff]
        %v1379 = vld [vmem:[#allocation5 + $0x16d0] sm:$0xff]
        %v1380 = vld [vmem:[#allocation5 + $0x16d8] sm:$0xff]
        %v1381 = vld [vmem:[#allocation5 + $0x16e0] sm:$0xff]
        %v1382 = vld [vmem:[#allocation5 + $0x16e8] sm:$0xff]
        %v1383 = vld [vmem:[#allocation5 + $0x16f0] sm:$0xff]
        %v1384 = vld [vmem:[#allocation5 + $0x16f8] sm:$0xff]
        %v1385 = vld [vmem:[#allocation5 + $0x1700] sm:$0xff]
        %v1386 = vld [vmem:[#allocation5 + $0x1708] sm:$0xff]
        %v1387 = vld [vmem:[#allocation5 + $0x1710] sm:$0xff]
        %v1388 = vld [vmem:[#allocation5 + $0x1718] sm:$0xff]
        %v1389 = vld [vmem:[#allocation5 + $0x1720] sm:$0xff]
        %v1390 = vld [vmem:[#allocation5 + $0x1728] sm:$0xff]
        %v1391 = vld [vmem:[#allocation5 + $0x1730] sm:$0xff]
        %v1392 = vld [vmem:[#allocation5 + $0x1738] sm:$0xff]
        %v1393 = vld [vmem:[#allocation5 + $0x1740] sm:$0xff]
        %v1394 = vld [vmem:[#allocation5 + $0x1748] sm:$0xff]
        %v1395 = vld [vmem:[#allocation5 + $0x1750] sm:$0xff]
        %v1396 = vld [vmem:[#allocation5 + $0x1758] sm:$0xff]
        %v1397 = vld [vmem:[#allocation5 + $0x1760] sm:$0xff]
        %v1398 = vld [vmem:[#allocation5 + $0x1768] sm:$0xff]
        %v1399 = vld [vmem:[#allocation5 + $0x1770] sm:$0xff]
        %v1400 = vld [vmem:[#allocation5 + $0x1778] sm:$0xff]
        %v1401 = vld [vmem:[#allocation5 + $0x1780] sm:$0xff]
        %v1402 = vld [vmem:[#allocation5 + $0x1788] sm:$0xff]
        %v1403 = vld [vmem:[#allocation5 + $0x1790] sm:$0xff]
        %v1404 = vld [vmem:[#allocation5 + $0x1798] sm:$0xff]
        %v1405 = vld [vmem:[#allocation5 + $0x17a0] sm:$0xff]
        %v1406 = vld [vmem:[#allocation5 + $0x17a8] sm:$0xff]
        %v1407 = vld [vmem:[#allocation5 + $0x17b0] sm:$0xff]
        %v1408 = vld [vmem:[#allocation5 + $0x17b8] sm:$0xff]
        %v1409 = vld [vmem:[#allocation5 + $0x17c0] sm:$0xff]
        %v1410 = vld [vmem:[#allocation5 + $0x17c8] sm:$0xff]
        %v1411 = vld [vmem:[#allocation5 + $0x17d0] sm:$0xff]
        %v1412 = vld [vmem:[#allocation5 + $0x17d8] sm:$0xff]
        %v1413 = vld [vmem:[#allocation5 + $0x17e0] sm:$0xff]
        %v1414 = vld [vmem:[#allocation5 + $0x17e8] sm:$0xff]
        %v1415 = vld [vmem:[#allocation5 + $0x17f0] sm:$0xff]
        %v1416 = vld [vmem:[#allocation5 + $0x17f8] sm:$0xff]
        %v1417 = vld [vmem:[#allocation5 + $0x1800] sm:$0xff]
        %v1418 = vld [vmem:[#allocation5 + $0x1808] sm:$0xff]
        %v1419 = vld [vmem:[#allocation5 + $0x1810] sm:$0xff]
        %v1420 = vld [vmem:[#allocation5 + $0x1818] sm:$0xff]
        %v1421 = vld [vmem:[#allocation5 + $0x1820] sm:$0xff]
        %v1422 = vld [vmem:[#allocation5 + $0x1828] sm:$0xff]
        %v1423 = vld [vmem:[#allocation5 + $0x1830] sm:$0xff]
        %v1424 = vld [vmem:[#allocation5 + $0x1838] sm:$0xff]
        %v1425 = vld [vmem:[#allocation5 + $0x1840] sm:$0xff]
        %v1426 = vld [vmem:[#allocation5 + $0x1848] sm:$0xff]
        %v1427 = vld [vmem:[#allocation5 + $0x1850] sm:$0xff]
        %v1428 = vld [vmem:[#allocation5 + $0x1858] sm:$0xff]
        %v1429 = vld [vmem:[#allocation5 + $0x1860] sm:$0xff]
        %v1430 = vld [vmem:[#allocation5 + $0x1868] sm:$0xff]
        %v1431 = vld [vmem:[#allocation5 + $0x1870] sm:$0xff]
        %v1432 = vld [vmem:[#allocation5 + $0x1878] sm:$0xff]
        %v1433 = vld [vmem:[#allocation5 + $0x1880] sm:$0xff]
        %v1434 = vld [vmem:[#allocation5 + $0x1888] sm:$0xff]
        %v1435 = vld [vmem:[#allocation5 + $0x1890] sm:$0xff]
        %v1436 = vld [vmem:[#allocation5 + $0x1898] sm:$0xff]
        %v1437 = vld [vmem:[#allocation5 + $0x18a0] sm:$0xff]
        %v1438 = vld [vmem:[#allocation5 + $0x18a8] sm:$0xff]
        %v1439 = vld [vmem:[#allocation5 + $0x18b0] sm:$0xff]
        %v1440 = vld [vmem:[#allocation5 + $0x18b8] sm:$0xff]
        %v1441 = vld [vmem:[#allocation5 + $0x18c0] sm:$0xff]
        %v1442 = vld [vmem:[#allocation5 + $0x18c8] sm:$0xff]
        %v1443 = vld [vmem:[#allocation5 + $0x18d0] sm:$0xff]
        %v1444 = vld [vmem:[#allocation5 + $0x18d8] sm:$0xff]
        %v1445 = vld [vmem:[#allocation5 + $0x18e0] sm:$0xff]
        %v1446 = vld [vmem:[#allocation5 + $0x18e8] sm:$0xff]
        %v1447 = vld [vmem:[#allocation5 + $0x18f0] sm:$0xff]
        %v1448 = vld [vmem:[#allocation5 + $0x18f8] sm:$0xff]
        %v1449 = vld [vmem:[#allocation5 + $0x1900] sm:$0xff]
        %v1450 = vld [vmem:[#allocation5 + $0x1908] sm:$0xff]
        %v1451 = vld [vmem:[#allocation5 + $0x1910] sm:$0xff]
        %v1452 = vld [vmem:[#allocation5 + $0x1918] sm:$0xff]
        %v1453 = vld [vmem:[#allocation5 + $0x1920] sm:$0xff]
        %v1454 = vld [vmem:[#allocation5 + $0x1928] sm:$0xff]
        %v1455 = vld [vmem:[#allocation5 + $0x1930] sm:$0xff]
        %v1456 = vld [vmem:[#allocation5 + $0x1938] sm:$0xff]
        %v1457 = vld [vmem:[#allocation5 + $0x1940] sm:$0xff]
        %v1458 = vld [vmem:[#allocation5 + $0x1948] sm:$0xff]
        %v1459 = vld [vmem:[#allocation5 + $0x1950] sm:$0xff]
        %v1460 = vld [vmem:[#allocation5 + $0x1958] sm:$0xff]
        %v1461 = vld [vmem:[#allocation5 + $0x1960] sm:$0xff]
        %v1462 = vld [vmem:[#allocation5 + $0x1968] sm:$0xff]
        %v1463 = vld [vmem:[#allocation5 + $0x1970] sm:$0xff]
        %v1464 = vld [vmem:[#allocation5 + $0x1978] sm:$0xff]
        %v1465 = vld [vmem:[#allocation5 + $0x1980] sm:$0xff]
        %v1466 = vld [vmem:[#allocation5 + $0x1988] sm:$0xff]
        %v1467 = vld [vmem:[#allocation5 + $0x1990] sm:$0xff]
        %v1468 = vld [vmem:[#allocation5 + $0x1998] sm:$0xff]
        %v1469 = vld [vmem:[#allocation5 + $0x19a0] sm:$0xff]
        %v1470 = vld [vmem:[#allocation5 + $0x19a8] sm:$0xff]
        %v1471 = vld [vmem:[#allocation5 + $0x19b0] sm:$0xff]
        %v1472 = vld [vmem:[#allocation5 + $0x19b8] sm:$0xff]
        %v1473 = vld [vmem:[#allocation5 + $0x19c0] sm:$0xff]
        %v1474 = vld [vmem:[#allocation5 + $0x19c8] sm:$0xff]
        %v1475 = vld [vmem:[#allocation5 + $0x19d0] sm:$0xff]
        %v1476 = vld [vmem:[#allocation5 + $0x19d8] sm:$0xff]
        %v1477 = vld [vmem:[#allocation5 + $0x19e0] sm:$0xff]
        %v1478 = vld [vmem:[#allocation5 + $0x19e8] sm:$0xff]
        %v1479 = vld [vmem:[#allocation5 + $0x19f0] sm:$0xff]
        %v1480 = vld [vmem:[#allocation5 + $0x19f8] sm:$0xff]
        %v1481 = vld [vmem:[#allocation5 + $0x1a00] sm:$0xff]
        %v1482 = vld [vmem:[#allocation5 + $0x1a08] sm:$0xff]
        %v1483 = vld [vmem:[#allocation5 + $0x1a10] sm:$0xff]
        %v1484 = vld [vmem:[#allocation5 + $0x1a18] sm:$0xff]
        %v1485 = vld [vmem:[#allocation5 + $0x1a20] sm:$0xff]
        %v1486 = vld [vmem:[#allocation5 + $0x1a28] sm:$0xff]
        %v1487 = vld [vmem:[#allocation5 + $0x1a30] sm:$0xff]
        %v1488 = vld [vmem:[#allocation5 + $0x1a38] sm:$0xff]
        %v1489 = vld [vmem:[#allocation5 + $0x1a40] sm:$0xff]
        %v1490 = vld [vmem:[#allocation5 + $0x1a48] sm:$0xff]
        %v1491 = vld [vmem:[#allocation5 + $0x1a50] sm:$0xff]
        %v1492 = vld [vmem:[#allocation5 + $0x1a58] sm:$0xff]
        %v1493 = vld [vmem:[#allocation5 + $0x1a60] sm:$0xff]
        %v1494 = vld [vmem:[#allocation5 + $0x1a68] sm:$0xff]
        %v1495 = vld [vmem:[#allocation5 + $0x1a70] sm:$0xff]
        %v1496 = vld [vmem:[#allocation5 + $0x1a78] sm:$0xff]
        %v1497 = vld [vmem:[#allocation5 + $0x1a80] sm:$0xff]
        %v1498 = vld [vmem:[#allocation5 + $0x1a88] sm:$0xff]
        %v1499 = vld [vmem:[#allocation5 + $0x1a90] sm:$0xff]
        %v1500 = vld [vmem:[#allocation5 + $0x1a98] sm:$0xff]
        %v1501 = vld [vmem:[#allocation5 + $0x1aa0] sm:$0xff]
        %v1502 = vld [vmem:[#allocation5 + $0x1aa8] sm:$0xff]
        %v1503 = vld [vmem:[#allocation5 + $0x1ab0] sm:$0xff]
        %v1504 = vld [vmem:[#allocation5 + $0x1ab8] sm:$0xff]
        %v1505 = vld [vmem:[#allocation5 + $0x1ac0] sm:$0xff]
        %v1506 = vld [vmem:[#allocation5 + $0x1ac8] sm:$0xff]
        %v1507 = vld [vmem:[#allocation5 + $0x1ad0] sm:$0xff]
        %v1508 = vld [vmem:[#allocation5 + $0x1ad8] sm:$0xff]
        %v1509 = vld [vmem:[#allocation5 + $0x1ae0] sm:$0xff]
        %v1510 = vld [vmem:[#allocation5 + $0x1ae8] sm:$0xff]
        %v1511 = vld [vmem:[#allocation5 + $0x1af0] sm:$0xff]
        %v1512 = vld [vmem:[#allocation5 + $0x1af8] sm:$0xff]
        %v1513 = vld [vmem:[#allocation5 + $0x1b00] sm:$0xff]
        %v1514 = vld [vmem:[#allocation5 + $0x1b08] sm:$0xff]
        %v1515 = vld [vmem:[#allocation5 + $0x1b10] sm:$0xff]
        %v1516 = vld [vmem:[#allocation5 + $0x1b18] sm:$0xff]
        %v1517 = vld [vmem:[#allocation5 + $0x1b20] sm:$0xff]
        %v1518 = vld [vmem:[#allocation5 + $0x1b28] sm:$0xff]
        %v1519 = vld [vmem:[#allocation5 + $0x1b30] sm:$0xff]
        %v1520 = vld [vmem:[#allocation5 + $0x1b38] sm:$0xff]
        %v1521 = vld [vmem:[#allocation5 + $0x1b40] sm:$0xff]
        %v1522 = vld [vmem:[#allocation5 + $0x1b48] sm:$0xff]
        %v1523 = vld [vmem:[#allocation5 + $0x1b50] sm:$0xff]
        %v1524 = vld [vmem:[#allocation5 + $0x1b58] sm:$0xff]
        %v1525 = vld [vmem:[#allocation5 + $0x1b60] sm:$0xff]
        %v1526 = vld [vmem:[#allocation5 + $0x1b68] sm:$0xff]
        %v1527 = vld [vmem:[#allocation5 + $0x1b70] sm:$0xff]
        %v1528 = vld [vmem:[#allocation5 + $0x1b78] sm:$0xff]
        %v1529 = vld [vmem:[#allocation5 + $0x1b80] sm:$0xff]
        %v1530 = vld [vmem:[#allocation5 + $0x1b88] sm:$0xff]
        %v1531 = vld [vmem:[#allocation5 + $0x1b90] sm:$0xff]
        %v1532 = vld [vmem:[#allocation5 + $0x1b98] sm:$0xff]
        %v1533 = vld [vmem:[#allocation5 + $0x1ba0] sm:$0xff]
        %v1534 = vld [vmem:[#allocation5 + $0x1ba8] sm:$0xff]
        %v1535 = vld [vmem:[#allocation5 + $0x1bb0] sm:$0xff]
        %v1536 = vld [vmem:[#allocation5 + $0x1bb8] sm:$0xff]
        %v1537 = vld [vmem:[#allocation5 + $0x1bc0] sm:$0xff]
        %v1538 = vld [vmem:[#allocation5 + $0x1bc8] sm:$0xff]
        %v1539 = vld [vmem:[#allocation5 + $0x1bd0] sm:$0xff]
        %v1540 = vld [vmem:[#allocation5 + $0x1bd8] sm:$0xff]
        %v1541 = vld [vmem:[#allocation5 + $0x1be0] sm:$0xff]
        %v1542 = vld [vmem:[#allocation5 + $0x1be8] sm:$0xff]
        %v1543 = vld [vmem:[#allocation5 + $0x1bf0] sm:$0xff]
        %v1544 = vld [vmem:[#allocation5 + $0x1bf8] sm:$0xff]
        %v1545 = vld [vmem:[#allocation5 + $0x1c00] sm:$0xff]
        %v1546 = vld [vmem:[#allocation5 + $0x1c08] sm:$0xff]
        %v1547 = vld [vmem:[#allocation5 + $0x1c10] sm:$0xff]
        %v1548 = vld [vmem:[#allocation5 + $0x1c18] sm:$0xff]
        %v1549 = vld [vmem:[#allocation5 + $0x1c20] sm:$0xff]
        %v1550 = vld [vmem:[#allocation5 + $0x1c28] sm:$0xff]
        %v1551 = vld [vmem:[#allocation5 + $0x1c30] sm:$0xff]
        %v1552 = vld [vmem:[#allocation5 + $0x1c38] sm:$0xff]
        %v1553 = vld [vmem:[#allocation5 + $0x1c40] sm:$0xff]
        %v1554 = vld [vmem:[#allocation5 + $0x1c48] sm:$0xff]
        %v1555 = vld [vmem:[#allocation5 + $0x1c50] sm:$0xff]
        %v1556 = vld [vmem:[#allocation5 + $0x1c58] sm:$0xff]
        %v1557 = vld [vmem:[#allocation5 + $0x1c60] sm:$0xff]
        %v1558 = vld [vmem:[#allocation5 + $0x1c68] sm:$0xff]
        %v1559 = vld [vmem:[#allocation5 + $0x1c70] sm:$0xff]
        %v1560 = vld [vmem:[#allocation5 + $0x1c78] sm:$0xff]
        %v1561 = vld [vmem:[#allocation5 + $0x1c80] sm:$0xff]
        %v1562 = vld [vmem:[#allocation5 + $0x1c88] sm:$0xff]
        %v1563 = vld [vmem:[#allocation5 + $0x1c90] sm:$0xff]
        %v1564 = vld [vmem:[#allocation5 + $0x1c98] sm:$0xff]
        %v1565 = vld [vmem:[#allocation5 + $0x1ca0] sm:$0xff]
        %v1566 = vld [vmem:[#allocation5 + $0x1ca8] sm:$0xff]
        %v1567 = vld [vmem:[#allocation5 + $0x1cb0] sm:$0xff]
        %v1568 = vld [vmem:[#allocation5 + $0x1cb8] sm:$0xff]
        %v1569 = vld [vmem:[#allocation5 + $0x1cc0] sm:$0xff]
        %v1570 = vld [vmem:[#allocation5 + $0x1cc8] sm:$0xff]
        %v1571 = vld [vmem:[#allocation5 + $0x1cd0] sm:$0xff]
        %v1572 = vld [vmem:[#allocation5 + $0x1cd8] sm:$0xff]
        %v1573 = vld [vmem:[#allocation5 + $0x1ce0] sm:$0xff]
        %v1574 = vld [vmem:[#allocation5 + $0x1ce8] sm:$0xff]
        %v1575 = vld [vmem:[#allocation5 + $0x1cf0] sm:$0xff]
        %v1576 = vld [vmem:[#allocation5 + $0x1cf8] sm:$0xff]
        %v1577 = vld [vmem:[#allocation5 + $0x1d00] sm:$0xff]
        %v1578 = vld [vmem:[#allocation5 + $0x1d08] sm:$0xff]
        %v1579 = vld [vmem:[#allocation5 + $0x1d10] sm:$0xff]
        %v1580 = vld [vmem:[#allocation5 + $0x1d18] sm:$0xff]
        %v1581 = vld [vmem:[#allocation5 + $0x1d20] sm:$0xff]
        %v1582 = vld [vmem:[#allocation5 + $0x1d28] sm:$0xff]
        %v1583 = vld [vmem:[#allocation5 + $0x1d30] sm:$0xff]
        %v1584 = vld [vmem:[#allocation5 + $0x1d38] sm:$0xff]
        %v1585 = vld [vmem:[#allocation5 + $0x1d40] sm:$0xff]
        %v1586 = vld [vmem:[#allocation5 + $0x1d48] sm:$0xff]
        %v1587 = vld [vmem:[#allocation5 + $0x1d50] sm:$0xff]
        %v1588 = vld [vmem:[#allocation5 + $0x1d58] sm:$0xff]
        %v1589 = vld [vmem:[#allocation5 + $0x1d60] sm:$0xff]
        %v1590 = vld [vmem:[#allocation5 + $0x1d68] sm:$0xff]
        %v1591 = vld [vmem:[#allocation5 + $0x1d70] sm:$0xff]
        %v1592 = vld [vmem:[#allocation5 + $0x1d78] sm:$0xff]
        %v1593 = vld [vmem:[#allocation5 + $0x1d80] sm:$0xff]
        %v1594 = vld [vmem:[#allocation5 + $0x1d88] sm:$0xff]
        %v1595 = vld [vmem:[#allocation5 + $0x1d90] sm:$0xff]
        %v1596 = vld [vmem:[#allocation5 + $0x1d98] sm:$0xff]
        %v1597 = vld [vmem:[#allocation5 + $0x1da0] sm:$0xff]
        %v1598 = vld [vmem:[#allocation5 + $0x1da8] sm:$0xff]
        %v1599 = vld [vmem:[#allocation5 + $0x1db0] sm:$0xff]
        %v1600 = vld [vmem:[#allocation5 + $0x1db8] sm:$0xff]
        %v1601 = vld [vmem:[#allocation5 + $0x1dc0] sm:$0xff]
        %v1602 = vld [vmem:[#allocation5 + $0x1dc8] sm:$0xff]
        %v1603 = vld [vmem:[#allocation5 + $0x1dd0] sm:$0xff]
        %v1604 = vld [vmem:[#allocation5 + $0x1dd8] sm:$0xff]
        %v1605 = vld [vmem:[#allocation5 + $0x1de0] sm:$0xff]
        %v1606 = vld [vmem:[#allocation5 + $0x1de8] sm:$0xff]
        %v1607 = vld [vmem:[#allocation5 + $0x1df0] sm:$0xff]
        %v1608 = vld [vmem:[#allocation5 + $0x1df8] sm:$0xff]
        %v1609 = vld [vmem:[#allocation5 + $0x1e00] sm:$0xff]
        %v1610 = vld [vmem:[#allocation5 + $0x1e08] sm:$0xff]
        %v1611 = vld [vmem:[#allocation5 + $0x1e10] sm:$0xff]
        %v1612 = vld [vmem:[#allocation5 + $0x1e18] sm:$0xff]
        %v1613 = vld [vmem:[#allocation5 + $0x1e20] sm:$0xff]
        %v1614 = vld [vmem:[#allocation5 + $0x1e28] sm:$0xff]
        %v1615 = vld [vmem:[#allocation5 + $0x1e30] sm:$0xff]
        %v1616 = vld [vmem:[#allocation5 + $0x1e38] sm:$0xff]
        %v1617 = vld [vmem:[#allocation5 + $0x1e40] sm:$0xff]
        %v1618 = vld [vmem:[#allocation5 + $0x1e48] sm:$0xff]
        %v1619 = vld [vmem:[#allocation5 + $0x1e50] sm:$0xff]
        %v1620 = vld [vmem:[#allocation5 + $0x1e58] sm:$0xff]
        %v1621 = vld [vmem:[#allocation5 + $0x1e60] sm:$0xff]
        %v1622 = vld [vmem:[#allocation5 + $0x1e68] sm:$0xff]
        %v1623 = vld [vmem:[#allocation5 + $0x1e70] sm:$0xff]
        %v1624 = vld [vmem:[#allocation5 + $0x1e78] sm:$0xff]
        %v1625 = vld [vmem:[#allocation5 + $0x1e80] sm:$0xff]
        %v1626 = vld [vmem:[#allocation5 + $0x1e88] sm:$0xff]
        %v1627 = vld [vmem:[#allocation5 + $0x1e90] sm:$0xff]
        %v1628 = vld [vmem:[#allocation5 + $0x1e98] sm:$0xff]
        %v1629 = vld [vmem:[#allocation5 + $0x1ea0] sm:$0xff]
        %v1630 = vld [vmem:[#allocation5 + $0x1ea8] sm:$0xff]
        %v1631 = vld [vmem:[#allocation5 + $0x1eb0] sm:$0xff]
        %v1632 = vld [vmem:[#allocation5 + $0x1eb8] sm:$0xff]
        %v1633 = vld [vmem:[#allocation5 + $0x1ec0] sm:$0xff]
        %v1634 = vld [vmem:[#allocation5 + $0x1ec8] sm:$0xff]
        %v1635 = vld [vmem:[#allocation5 + $0x1ed0] sm:$0xff]
        %v1636 = vld [vmem:[#allocation5 + $0x1ed8] sm:$0xff]
        %v1637 = vld [vmem:[#allocation5 + $0x1ee0] sm:$0xff]
        %v1638 = vld [vmem:[#allocation5 + $0x1ee8] sm:$0xff]
        %v1639 = vld [vmem:[#allocation5 + $0x1ef0] sm:$0xff]
        %v1640 = vld [vmem:[#allocation5 + $0x1ef8] sm:$0xff]
        %v1641 = vld [vmem:[#allocation5 + $0x1f00] sm:$0xff]
        %v1642 = vld [vmem:[#allocation5 + $0x1f08] sm:$0xff]
        %v1643 = vld [vmem:[#allocation5 + $0x1f10] sm:$0xff]
        %v1644 = vld [vmem:[#allocation5 + $0x1f18] sm:$0xff]
        %v1645 = vld [vmem:[#allocation5 + $0x1f20] sm:$0xff]
        %v1646 = vld [vmem:[#allocation5 + $0x1f28] sm:$0xff]
        %v1647 = vld [vmem:[#allocation5 + $0x1f30] sm:$0xff]
        %v1648 = vld [vmem:[#allocation5 + $0x1f38] sm:$0xff]
        %v1649 = vld [vmem:[#allocation5 + $0x1f40] sm:$0xff]
        %v1650 = vld [vmem:[#allocation5 + $0x1f48] sm:$0xff]
        %v1651 = vld [vmem:[#allocation5 + $0x1f50] sm:$0xff]
        %v1652 = vld [vmem:[#allocation5 + $0x1f58] sm:$0xff]
        %v1653 = vld [vmem:[#allocation5 + $0x1f60] sm:$0xff]
        %v1654 = vld [vmem:[#allocation5 + $0x1f68] sm:$0xff]
        %v1655 = vld [vmem:[#allocation5 + $0x1f70] sm:$0xff]
        %v1656 = vld [vmem:[#allocation5 + $0x1f78] sm:$0xff]
        %v1657 = vld [vmem:[#allocation5 + $0x1f80] sm:$0xff]
        %v1658 = vld [vmem:[#allocation5 + $0x1f88] sm:$0xff]
        %v1659 = vld [vmem:[#allocation5 + $0x1f90] sm:$0xff]
        %v1660 = vld [vmem:[#allocation5 + $0x1f98] sm:$0xff]
        %v1661 = vld [vmem:[#allocation5 + $0x1fa0] sm:$0xff]
        %v1662 = vld [vmem:[#allocation5 + $0x1fa8] sm:$0xff]
        %v1663 = vld [vmem:[#allocation5 + $0x1fb0] sm:$0xff]
        %v1664 = vld [vmem:[#allocation5 + $0x1fb8] sm:$0xff]
        %v1665 = vld [vmem:[#allocation5 + $0x1fc0] sm:$0xff]
        %v1666 = vld [vmem:[#allocation5 + $0x1fc8] sm:$0xff]
        %v1667 = vld [vmem:[#allocation5 + $0x1fd0] sm:$0xff]
        %v1668 = vld [vmem:[#allocation5 + $0x1fd8] sm:$0xff]
        %v1669 = vld [vmem:[#allocation5 + $0x1fe0] sm:$0xff]
        %v1670 = vld [vmem:[#allocation5 + $0x1fe8] sm:$0xff]
        %v1671 = vld [vmem:[#allocation5 + $0x1ff0] sm:$0xff]
        %v1672 = vld [vmem:[#allocation5 + $0x1ff8] sm:$0xff]
        %v1673 = vld [vmem:[%s2] sm:$0xff]
        %v1674 = vld [vmem:[%s2 + $0x8] sm:$0xff]
        %v1675 = vld [vmem:[%s2 + $0x10] sm:$0xff]
        %v1676 = vld [vmem:[%s2 + $0x18] sm:$0xff]
        %v1677 = vld [vmem:[%s2 + $0x20] sm:$0xff]
        %v1678 = vld [vmem:[%s2 + $0x28] sm:$0xff]
        %v1679 = vld [vmem:[%s2 + $0x30] sm:$0xff]
        %v1680 = vld [vmem:[%s2 + $0x38] sm:$0xff]
        %v1681 = vld [vmem:[%s2 + $0x40] sm:$0xff]
        %v1682 = vld [vmem:[%s2 + $0x48] sm:$0xff]
        %v1683 = vld [vmem:[%s2 + $0x50] sm:$0xff]
        %v1684 = vld [vmem:[%s2 + $0x58] sm:$0xff]
        %v1685 = vld [vmem:[%s2 + $0x60] sm:$0xff]
        %v1686 = vld [vmem:[%s2 + $0x68] sm:$0xff]
        %v1687 = vld [vmem:[%s2 + $0x70] sm:$0xff]
        %v1688 = vld [vmem:[%s2 + $0x78] sm:$0xff]
        %v1689 = vld [vmem:[%s2 + $0x80] sm:$0xff]
        %v1690 = vld [vmem:[%s2 + $0x88] sm:$0xff]
        %v1691 = vld [vmem:[%s2 + $0x90] sm:$0xff]
        %v1692 = vld [vmem:[%s2 + $0x98] sm:$0xff]
        %v1693 = vld [vmem:[%s2 + $0xa0] sm:$0xff]
        %v1694 = vld [vmem:[%s2 + $0xa8] sm:$0xff]
        %v1695 = vld [vmem:[%s2 + $0xb0] sm:$0xff]
        %v1696 = vld [vmem:[%s2 + $0xb8] sm:$0xff]
        %v1697 = vld [vmem:[%s2 + $0xc0] sm:$0xff]
        %v1698 = vld [vmem:[%s2 + $0xc8] sm:$0xff]
        %v1699 = vld [vmem:[%s2 + $0xd0] sm:$0xff]
        %v1700 = vld [vmem:[%s2 + $0xd8] sm:$0xff]
        %v1701 = vld [vmem:[%s2 + $0xe0] sm:$0xff]
        %v1702 = vld [vmem:[%s2 + $0xe8] sm:$0xff]
        %v1703 = vld [vmem:[%s2 + $0xf0] sm:$0xff]
        %v1704 = vld [vmem:[%s2 + $0xf8] sm:$0xff]
        %v1705 = vld [vmem:[%s2 + $0x100] sm:$0xff]
        %v1706 = vld [vmem:[%s2 + $0x108] sm:$0xff]
        %v1707 = vld [vmem:[%s2 + $0x110] sm:$0xff]
        %v1708 = vld [vmem:[%s2 + $0x118] sm:$0xff]
        %v1709 = vld [vmem:[%s2 + $0x120] sm:$0xff]
        %v1710 = vld [vmem:[%s2 + $0x128] sm:$0xff]
        %v1711 = vld [vmem:[%s2 + $0x130] sm:$0xff]
        %v1712 = vld [vmem:[%s2 + $0x138] sm:$0xff]
        %v1713 = vld [vmem:[%s2 + $0x140] sm:$0xff]
        %v1714 = vld [vmem:[%s2 + $0x148] sm:$0xff]
        %v1715 = vld [vmem:[%s2 + $0x150] sm:$0xff]
        %v1716 = vld [vmem:[%s2 + $0x158] sm:$0xff]
        %v1717 = vld [vmem:[%s2 + $0x160] sm:$0xff]
        %v1718 = vld [vmem:[%s2 + $0x168] sm:$0xff]
        %v1719 = vld [vmem:[%s2 + $0x170] sm:$0xff]
        %v1720 = vld [vmem:[%s2 + $0x178] sm:$0xff]
        %v1721 = vld [vmem:[%s2 + $0x180] sm:$0xff]
        %v1722 = vld [vmem:[%s2 + $0x188] sm:$0xff]
        %v1723 = vld [vmem:[%s2 + $0x190] sm:$0xff]
        %v1724 = vld [vmem:[%s2 + $0x198] sm:$0xff]
        %v1725 = vld [vmem:[%s2 + $0x1a0] sm:$0xff]
        %v1726 = vld [vmem:[%s2 + $0x1a8] sm:$0xff]
        %v1727 = vld [vmem:[%s2 + $0x1b0] sm:$0xff]
        %v1728 = vld [vmem:[%s2 + $0x1b8] sm:$0xff]
        %v1729 = vld [vmem:[%s2 + $0x1c0] sm:$0xff]
        %v1730 = vld [vmem:[%s2 + $0x1c8] sm:$0xff]
        %v1731 = vld [vmem:[%s2 + $0x1d0] sm:$0xff]
        %v1732 = vld [vmem:[%s2 + $0x1d8] sm:$0xff]
        %v1733 = vld [vmem:[%s2 + $0x1e0] sm:$0xff]
        %v1734 = vld [vmem:[%s2 + $0x1e8] sm:$0xff]
        %v1735 = vld [vmem:[%s2 + $0x1f0] sm:$0xff]
        %v1736 = vld [vmem:[%s2 + $0x1f8] sm:$0xff]
        %v1737 = vld [vmem:[%s2 + $0x200] sm:$0xff]
        %v1738 = vld [vmem:[%s2 + $0x208] sm:$0xff]
        %v1739 = vld [vmem:[%s2 + $0x210] sm:$0xff]
        %v1740 = vld [vmem:[%s2 + $0x218] sm:$0xff]
        %v1741 = vld [vmem:[%s2 + $0x220] sm:$0xff]
        %v1742 = vld [vmem:[%s2 + $0x228] sm:$0xff]
        %v1743 = vld [vmem:[%s2 + $0x230] sm:$0xff]
        %v1744 = vld [vmem:[%s2 + $0x238] sm:$0xff]
        %v1745 = vld [vmem:[%s2 + $0x240] sm:$0xff]
        %v1746 = vld [vmem:[%s2 + $0x248] sm:$0xff]
        %v1747 = vld [vmem:[%s2 + $0x250] sm:$0xff]
        %v1748 = vld [vmem:[%s2 + $0x258] sm:$0xff]
        %v1749 = vld [vmem:[%s2 + $0x260] sm:$0xff]
        %v1750 = vld [vmem:[%s2 + $0x268] sm:$0xff]
        %v1751 = vld [vmem:[%s2 + $0x270] sm:$0xff]
        %v1752 = vld [vmem:[%s2 + $0x278] sm:$0xff]
        %v1753 = vld [vmem:[%s2 + $0x280] sm:$0xff]
        %v1754 = vld [vmem:[%s2 + $0x288] sm:$0xff]
        %v1755 = vld [vmem:[%s2 + $0x290] sm:$0xff]
        %v1756 = vld [vmem:[%s2 + $0x298] sm:$0xff]
        %v1757 = vld [vmem:[%s2 + $0x2a0] sm:$0xff]
        %v1758 = vld [vmem:[%s2 + $0x2a8] sm:$0xff]
        %v1759 = vld [vmem:[%s2 + $0x2b0] sm:$0xff]
        %v1760 = vld [vmem:[%s2 + $0x2b8] sm:$0xff]
        %v1761 = vld [vmem:[%s2 + $0x2c0] sm:$0xff]
        %v1762 = vld [vmem:[%s2 + $0x2c8] sm:$0xff]
        %v1763 = vld [vmem:[%s2 + $0x2d0] sm:$0xff]
        %v1764 = vld [vmem:[%s2 + $0x2d8] sm:$0xff]
        %v1765 = vld [vmem:[%s2 + $0x2e0] sm:$0xff]
        %v1766 = vld [vmem:[%s2 + $0x2e8] sm:$0xff]
        %v1767 = vld [vmem:[%s2 + $0x2f0] sm:$0xff]
        %v1768 = vld [vmem:[%s2 + $0x2f8] sm:$0xff]
        %v1769 = vld [vmem:[%s2 + $0x300] sm:$0xff]
        %v1770 = vld [vmem:[%s2 + $0x308] sm:$0xff]
        %v1771 = vld [vmem:[%s2 + $0x310] sm:$0xff]
        %v1772 = vld [vmem:[%s2 + $0x318] sm:$0xff]
        %v1773 = vld [vmem:[%s2 + $0x320] sm:$0xff]
        %v1774 = vld [vmem:[%s2 + $0x328] sm:$0xff]
        %v1775 = vld [vmem:[%s2 + $0x330] sm:$0xff]
        %v1776 = vld [vmem:[%s2 + $0x338] sm:$0xff]
        %v1777 = vld [vmem:[%s2 + $0x340] sm:$0xff]
        %v1778 = vld [vmem:[%s2 + $0x348] sm:$0xff]
        %v1779 = vld [vmem:[%s2 + $0x350] sm:$0xff]
        %v1780 = vld [vmem:[%s2 + $0x358] sm:$0xff]
        %v1781 = vld [vmem:[%s2 + $0x360] sm:$0xff]
        %v1782 = vld [vmem:[%s2 + $0x368] sm:$0xff]
        %v1783 = vld [vmem:[%s2 + $0x370] sm:$0xff]
        %v1784 = vld [vmem:[%s2 + $0x378] sm:$0xff]
        %v1785 = vld [vmem:[%s2 + $0x380] sm:$0xff]
        %v1786 = vld [vmem:[%s2 + $0x388] sm:$0xff]
        %v1787 = vld [vmem:[%s2 + $0x390] sm:$0xff]
        %v1788 = vld [vmem:[%s2 + $0x398] sm:$0xff]
        %v1789 = vld [vmem:[%s2 + $0x3a0] sm:$0xff]
        %v1790 = vld [vmem:[%s2 + $0x3a8] sm:$0xff]
        %v1791 = vld [vmem:[%s2 + $0x3b0] sm:$0xff]
        %v1792 = vld [vmem:[%s2 + $0x3b8] sm:$0xff]
        %v1793 = vld [vmem:[%s2 + $0x3c0] sm:$0xff]
        %v1794 = vld [vmem:[%s2 + $0x3c8] sm:$0xff]
        %v1795 = vld [vmem:[%s2 + $0x3d0] sm:$0xff]
        %v1796 = vld [vmem:[%s2 + $0x3d8] sm:$0xff]
        %v1797 = vld [vmem:[%s2 + $0x3e0] sm:$0xff]
        %v1798 = vld [vmem:[%s2 + $0x3e8] sm:$0xff]
        %v1799 = vld [vmem:[%s2 + $0x3f0] sm:$0xff]
        %v1800 = vld [vmem:[%s2 + $0x3f8] sm:$0xff]
        %1802 = vset.pattern.permute.xlu0 0
        %1803 = vperm.xlu0 %1802, %v1673
        %v1804 = vpop.permute.xlu0 %1803
        %1807 = vset.pattern.permute.xlu0 0
        %1808 = vperm.xlu0 %1807, %v1674
        %v1809 = vpop.permute.xlu0 %1808
        %1812 = vset.pattern.permute.xlu0 0
        %1813 = vperm.xlu0 %1812, %v1675
        %v1814 = vpop.permute.xlu0 %1813
        %1817 = vset.pattern.permute.xlu0 0
        %1818 = vperm.xlu0 %1817, %v1676
        %v1819 = vpop.permute.xlu0 %1818
        %1822 = vset.pattern.permute.xlu0 0
        %1823 = vperm.xlu0 %1822, %v1677
        %v1824 = vpop.permute.xlu0 %1823
        %1827 = vset.pattern.permute.xlu0 0
        %1828 = vperm.xlu0 %1827, %v1678
        %v1829 = vpop.permute.xlu0 %1828
        %1832 = vset.pattern.permute.xlu0 0
        %1833 = vperm.xlu0 %1832, %v1679
        %v1834 = vpop.permute.xlu0 %1833
        %1837 = vset.pattern.permute.xlu0 0
        %1838 = vperm.xlu0 %1837, %v1680
        %v1839 = vpop.permute.xlu0 %1838
        %1842 = vset.pattern.permute.xlu0 0
        %1843 = vperm.xlu0 %1842, %v1681
        %v1844 = vpop.permute.xlu0 %1843
        %1847 = vset.pattern.permute.xlu0 0
        %1848 = vperm.xlu0 %1847, %v1682
        %v1849 = vpop.permute.xlu0 %1848
        %1852 = vset.pattern.permute.xlu0 0
        %1853 = vperm.xlu0 %1852, %v1683
        %v1854 = vpop.permute.xlu0 %1853
        %1857 = vset.pattern.permute.xlu0 0
        %1858 = vperm.xlu0 %1857, %v1684
        %v1859 = vpop.permute.xlu0 %1858
        %1862 = vset.pattern.permute.xlu0 0
        %1863 = vperm.xlu0 %1862, %v1685
        %v1864 = vpop.permute.xlu0 %1863
        %1867 = vset.pattern.permute.xlu0 0
        %1868 = vperm.xlu0 %1867, %v1686
        %v1869 = vpop.permute.xlu0 %1868
        %1872 = vset.pattern.permute.xlu0 0
        %1873 = vperm.xlu0 %1872, %v1687
        %v1874 = vpop.permute.xlu0 %1873
        %1877 = vset.pattern.permute.xlu0 0
        %1878 = vperm.xlu0 %1877, %v1688
        %v1879 = vpop.permute.xlu0 %1878
        %1882 = vset.pattern.permute.xlu0 0
        %1883 = vperm.xlu0 %1882, %v1689
        %v1884 = vpop.permute.xlu0 %1883
        %1887 = vset.pattern.permute.xlu0 0
        %1888 = vperm.xlu0 %1887, %v1690
        %v1889 = vpop.permute.xlu0 %1888
        %1892 = vset.pattern.permute.xlu0 0
        %1893 = vperm.xlu0 %1892, %v1691
        %v1894 = vpop.permute.xlu0 %1893
        %1897 = vset.pattern.permute.xlu0 0
        %1898 = vperm.xlu0 %1897, %v1692
        %v1899 = vpop.permute.xlu0 %1898
        %1902 = vset.pattern.permute.xlu0 0
        %1903 = vperm.xlu0 %1902, %v1693
        %v1904 = vpop.permute.xlu0 %1903
        %1907 = vset.pattern.permute.xlu0 0
        %1908 = vperm.xlu0 %1907, %v1694
        %v1909 = vpop.permute.xlu0 %1908
        %1912 = vset.pattern.permute.xlu0 0
        %1913 = vperm.xlu0 %1912, %v1695
        %v1914 = vpop.permute.xlu0 %1913
        %1917 = vset.pattern.permute.xlu0 0
        %1918 = vperm.xlu0 %1917, %v1696
        %v1919 = vpop.permute.xlu0 %1918
        %1922 = vset.pattern.permute.xlu0 0
        %1923 = vperm.xlu0 %1922, %v1697
        %v1924 = vpop.permute.xlu0 %1923
        %1927 = vset.pattern.permute.xlu0 0
        %1928 = vperm.xlu0 %1927, %v1698
        %v1929 = vpop.permute.xlu0 %1928
        %1932 = vset.pattern.permute.xlu0 0
        %1933 = vperm.xlu0 %1932, %v1699
        %v1934 = vpop.permute.xlu0 %1933
        %1937 = vset.pattern.permute.xlu0 0
        %1938 = vperm.xlu0 %1937, %v1700
        %v1939 = vpop.permute.xlu0 %1938
        %1942 = vset.pattern.permute.xlu0 0
        %1943 = vperm.xlu0 %1942, %v1701
        %v1944 = vpop.permute.xlu0 %1943
        %1947 = vset.pattern.permute.xlu0 0
        %1948 = vperm.xlu0 %1947, %v1702
        %v1949 = vpop.permute.xlu0 %1948
        %1952 = vset.pattern.permute.xlu0 0
        %1953 = vperm.xlu0 %1952, %v1703
        %v1954 = vpop.permute.xlu0 %1953
        %1957 = vset.pattern.permute.xlu0 0
        %1958 = vperm.xlu0 %1957, %v1704
        %v1959 = vpop.permute.xlu0 %1958
        %1962 = vset.pattern.permute.xlu0 0
        %1963 = vperm.xlu0 %1962, %v1705
        %v1964 = vpop.permute.xlu0 %1963
        %1967 = vset.pattern.permute.xlu0 0
        %1968 = vperm.xlu0 %1967, %v1706
        %v1969 = vpop.permute.xlu0 %1968
        %1972 = vset.pattern.permute.xlu0 0
        %1973 = vperm.xlu0 %1972, %v1707
        %v1974 = vpop.permute.xlu0 %1973
        %1977 = vset.pattern.permute.xlu0 0
        %1978 = vperm.xlu0 %1977, %v1708
        %v1979 = vpop.permute.xlu0 %1978
        %1982 = vset.pattern.permute.xlu0 0
        %1983 = vperm.xlu0 %1982, %v1709
        %v1984 = vpop.permute.xlu0 %1983
        %1987 = vset.pattern.permute.xlu0 0
        %1988 = vperm.xlu0 %1987, %v1710
        %v1989 = vpop.permute.xlu0 %1988
        %1992 = vset.pattern.permute.xlu0 0
        %1993 = vperm.xlu0 %1992, %v1711
        %v1994 = vpop.permute.xlu0 %1993
        %1997 = vset.pattern.permute.xlu0 0
        %1998 = vperm.xlu0 %1997, %v1712
        %v1999 = vpop.permute.xlu0 %1998
        %2002 = vset.pattern.permute.xlu0 0
        %2003 = vperm.xlu0 %2002, %v1713
        %v2004 = vpop.permute.xlu0 %2003
        %2007 = vset.pattern.permute.xlu0 0
        %2008 = vperm.xlu0 %2007, %v1714
        %v2009 = vpop.permute.xlu0 %2008
        %2012 = vset.pattern.permute.xlu0 0
        %2013 = vperm.xlu0 %2012, %v1715
        %v2014 = vpop.permute.xlu0 %2013
        %2017 = vset.pattern.permute.xlu0 0
        %2018 = vperm.xlu0 %2017, %v1716
        %v2019 = vpop.permute.xlu0 %2018
        %2022 = vset.pattern.permute.xlu0 0
        %2023 = vperm.xlu0 %2022, %v1717
        %v2024 = vpop.permute.xlu0 %2023
        %2027 = vset.pattern.permute.xlu0 0
        %2028 = vperm.xlu0 %2027, %v1718
        %v2029 = vpop.permute.xlu0 %2028
        %2032 = vset.pattern.permute.xlu0 0
        %2033 = vperm.xlu0 %2032, %v1719
        %v2034 = vpop.permute.xlu0 %2033
        %2037 = vset.pattern.permute.xlu0 0
        %2038 = vperm.xlu0 %2037, %v1720
        %v2039 = vpop.permute.xlu0 %2038
        %2042 = vset.pattern.permute.xlu0 0
        %2043 = vperm.xlu0 %2042, %v1721
        %v2044 = vpop.permute.xlu0 %2043
        %2047 = vset.pattern.permute.xlu0 0
        %2048 = vperm.xlu0 %2047, %v1722
        %v2049 = vpop.permute.xlu0 %2048
        %2052 = vset.pattern.permute.xlu0 0
        %2053 = vperm.xlu0 %2052, %v1723
        %v2054 = vpop.permute.xlu0 %2053
        %2057 = vset.pattern.permute.xlu0 0
        %2058 = vperm.xlu0 %2057, %v1724
        %v2059 = vpop.permute.xlu0 %2058
        %2062 = vset.pattern.permute.xlu0 0
        %2063 = vperm.xlu0 %2062, %v1725
        %v2064 = vpop.permute.xlu0 %2063
        %2067 = vset.pattern.permute.xlu0 0
        %2068 = vperm.xlu0 %2067, %v1726
        %v2069 = vpop.permute.xlu0 %2068
        %2072 = vset.pattern.permute.xlu0 0
        %2073 = vperm.xlu0 %2072, %v1727
        %v2074 = vpop.permute.xlu0 %2073
        %2077 = vset.pattern.permute.xlu0 0
        %2078 = vperm.xlu0 %2077, %v1728
        %v2079 = vpop.permute.xlu0 %2078
        %2082 = vset.pattern.permute.xlu0 0
        %2083 = vperm.xlu0 %2082, %v1729
        %v2084 = vpop.permute.xlu0 %2083
        %2087 = vset.pattern.permute.xlu0 0
        %2088 = vperm.xlu0 %2087, %v1730
        %v2089 = vpop.permute.xlu0 %2088
        %2092 = vset.pattern.permute.xlu0 0
        %2093 = vperm.xlu0 %2092, %v1731
        %v2094 = vpop.permute.xlu0 %2093
        %2097 = vset.pattern.permute.xlu0 0
        %2098 = vperm.xlu0 %2097, %v1732
        %v2099 = vpop.permute.xlu0 %2098
        %2102 = vset.pattern.permute.xlu0 0
        %2103 = vperm.xlu0 %2102, %v1733
        %v2104 = vpop.permute.xlu0 %2103
        %2107 = vset.pattern.permute.xlu0 0
        %2108 = vperm.xlu0 %2107, %v1734
        %v2109 = vpop.permute.xlu0 %2108
        %2112 = vset.pattern.permute.xlu0 0
        %2113 = vperm.xlu0 %2112, %v1735
        %v2114 = vpop.permute.xlu0 %2113
        %2117 = vset.pattern.permute.xlu0 0
        %2118 = vperm.xlu0 %2117, %v1736
        %v2119 = vpop.permute.xlu0 %2118
        %2122 = vset.pattern.permute.xlu0 0
        %2123 = vperm.xlu0 %2122, %v1737
        %v2124 = vpop.permute.xlu0 %2123
        %2127 = vset.pattern.permute.xlu0 0
        %2128 = vperm.xlu0 %2127, %v1738
        %v2129 = vpop.permute.xlu0 %2128
        %2132 = vset.pattern.permute.xlu0 0
        %2133 = vperm.xlu0 %2132, %v1739
        %v2134 = vpop.permute.xlu0 %2133
        %2137 = vset.pattern.permute.xlu0 0
        %2138 = vperm.xlu0 %2137, %v1740
        %v2139 = vpop.permute.xlu0 %2138
        %2142 = vset.pattern.permute.xlu0 0
        %2143 = vperm.xlu0 %2142, %v1741
        %v2144 = vpop.permute.xlu0 %2143
        %2147 = vset.pattern.permute.xlu0 0
        %2148 = vperm.xlu0 %2147, %v1742
        %v2149 = vpop.permute.xlu0 %2148
        %2152 = vset.pattern.permute.xlu0 0
        %2153 = vperm.xlu0 %2152, %v1743
        %v2154 = vpop.permute.xlu0 %2153
        %2157 = vset.pattern.permute.xlu0 0
        %2158 = vperm.xlu0 %2157, %v1744
        %v2159 = vpop.permute.xlu0 %2158
        %2162 = vset.pattern.permute.xlu0 0
        %2163 = vperm.xlu0 %2162, %v1745
        %v2164 = vpop.permute.xlu0 %2163
        %2167 = vset.pattern.permute.xlu0 0
        %2168 = vperm.xlu0 %2167, %v1746
        %v2169 = vpop.permute.xlu0 %2168
        %2172 = vset.pattern.permute.xlu0 0
        %2173 = vperm.xlu0 %2172, %v1747
        %v2174 = vpop.permute.xlu0 %2173
        %2177 = vset.pattern.permute.xlu0 0
        %2178 = vperm.xlu0 %2177, %v1748
        %v2179 = vpop.permute.xlu0 %2178
        %2182 = vset.pattern.permute.xlu0 0
        %2183 = vperm.xlu0 %2182, %v1749
        %v2184 = vpop.permute.xlu0 %2183
        %2187 = vset.pattern.permute.xlu0 0
        %2188 = vperm.xlu0 %2187, %v1750
        %v2189 = vpop.permute.xlu0 %2188
        %2192 = vset.pattern.permute.xlu0 0
        %2193 = vperm.xlu0 %2192, %v1751
        %v2194 = vpop.permute.xlu0 %2193
        %2197 = vset.pattern.permute.xlu0 0
        %2198 = vperm.xlu0 %2197, %v1752
        %v2199 = vpop.permute.xlu0 %2198
        %2202 = vset.pattern.permute.xlu0 0
        %2203 = vperm.xlu0 %2202, %v1753
        %v2204 = vpop.permute.xlu0 %2203
        %2207 = vset.pattern.permute.xlu0 0
        %2208 = vperm.xlu0 %2207, %v1754
        %v2209 = vpop.permute.xlu0 %2208
        %2212 = vset.pattern.permute.xlu0 0
        %2213 = vperm.xlu0 %2212, %v1755
        %v2214 = vpop.permute.xlu0 %2213
        %2217 = vset.pattern.permute.xlu0 0
        %2218 = vperm.xlu0 %2217, %v1756
        %v2219 = vpop.permute.xlu0 %2218
        %2222 = vset.pattern.permute.xlu0 0
        %2223 = vperm.xlu0 %2222, %v1757
        %v2224 = vpop.permute.xlu0 %2223
        %2227 = vset.pattern.permute.xlu0 0
        %2228 = vperm.xlu0 %2227, %v1758
        %v2229 = vpop.permute.xlu0 %2228
        %2232 = vset.pattern.permute.xlu0 0
        %2233 = vperm.xlu0 %2232, %v1759
        %v2234 = vpop.permute.xlu0 %2233
        %2237 = vset.pattern.permute.xlu0 0
        %2238 = vperm.xlu0 %2237, %v1760
        %v2239 = vpop.permute.xlu0 %2238
        %2242 = vset.pattern.permute.xlu0 0
        %2243 = vperm.xlu0 %2242, %v1761
        %v2244 = vpop.permute.xlu0 %2243
        %2247 = vset.pattern.permute.xlu0 0
        %2248 = vperm.xlu0 %2247, %v1762
        %v2249 = vpop.permute.xlu0 %2248
        %2252 = vset.pattern.permute.xlu0 0
        %2253 = vperm.xlu0 %2252, %v1763
        %v2254 = vpop.permute.xlu0 %2253
        %2257 = vset.pattern.permute.xlu0 0
        %2258 = vperm.xlu0 %2257, %v1764
        %v2259 = vpop.permute.xlu0 %2258
        %2262 = vset.pattern.permute.xlu0 0
        %2263 = vperm.xlu0 %2262, %v1765
        %v2264 = vpop.permute.xlu0 %2263
        %2267 = vset.pattern.permute.xlu0 0
        %2268 = vperm.xlu0 %2267, %v1766
        %v2269 = vpop.permute.xlu0 %2268
        %2272 = vset.pattern.permute.xlu0 0
        %2273 = vperm.xlu0 %2272, %v1767
        %v2274 = vpop.permute.xlu0 %2273
        %2277 = vset.pattern.permute.xlu0 0
        %2278 = vperm.xlu0 %2277, %v1768
        %v2279 = vpop.permute.xlu0 %2278
        %2282 = vset.pattern.permute.xlu0 0
        %2283 = vperm.xlu0 %2282, %v1769
        %v2284 = vpop.permute.xlu0 %2283
        %2287 = vset.pattern.permute.xlu0 0
        %2288 = vperm.xlu0 %2287, %v1770
        %v2289 = vpop.permute.xlu0 %2288
        %2292 = vset.pattern.permute.xlu0 0
        %2293 = vperm.xlu0 %2292, %v1771
        %v2294 = vpop.permute.xlu0 %2293
        %2297 = vset.pattern.permute.xlu0 0
        %2298 = vperm.xlu0 %2297, %v1772
        %v2299 = vpop.permute.xlu0 %2298
        %2302 = vset.pattern.permute.xlu0 0
        %2303 = vperm.xlu0 %2302, %v1773
        %v2304 = vpop.permute.xlu0 %2303
        %2307 = vset.pattern.permute.xlu0 0
        %2308 = vperm.xlu0 %2307, %v1774
        %v2309 = vpop.permute.xlu0 %2308
        %2312 = vset.pattern.permute.xlu0 0
        %2313 = vperm.xlu0 %2312, %v1775
        %v2314 = vpop.permute.xlu0 %2313
        %2317 = vset.pattern.permute.xlu0 0
        %2318 = vperm.xlu0 %2317, %v1776
        %v2319 = vpop.permute.xlu0 %2318
        %2322 = vset.pattern.permute.xlu0 0
        %2323 = vperm.xlu0 %2322, %v1777
        %v2324 = vpop.permute.xlu0 %2323
        %2327 = vset.pattern.permute.xlu0 0
        %2328 = vperm.xlu0 %2327, %v1778
        %v2329 = vpop.permute.xlu0 %2328
        %2332 = vset.pattern.permute.xlu0 0
        %2333 = vperm.xlu0 %2332, %v1779
        %v2334 = vpop.permute.xlu0 %2333
        %2337 = vset.pattern.permute.xlu0 0
        %2338 = vperm.xlu0 %2337, %v1780
        %v2339 = vpop.permute.xlu0 %2338
        %2342 = vset.pattern.permute.xlu0 0
        %2343 = vperm.xlu0 %2342, %v1781
        %v2344 = vpop.permute.xlu0 %2343
        %2347 = vset.pattern.permute.xlu0 0
        %2348 = vperm.xlu0 %2347, %v1782
        %v2349 = vpop.permute.xlu0 %2348
        %2352 = vset.pattern.permute.xlu0 0
        %2353 = vperm.xlu0 %2352, %v1783
        %v2354 = vpop.permute.xlu0 %2353
        %2357 = vset.pattern.permute.xlu0 0
        %2358 = vperm.xlu0 %2357, %v1784
        %v2359 = vpop.permute.xlu0 %2358
        %2362 = vset.pattern.permute.xlu0 0
        %2363 = vperm.xlu0 %2362, %v1785
        %v2364 = vpop.permute.xlu0 %2363
        %2367 = vset.pattern.permute.xlu0 0
        %2368 = vperm.xlu0 %2367, %v1786
        %v2369 = vpop.permute.xlu0 %2368
        %2372 = vset.pattern.permute.xlu0 0
        %2373 = vperm.xlu0 %2372, %v1787
        %v2374 = vpop.permute.xlu0 %2373
        %2377 = vset.pattern.permute.xlu0 0
        %2378 = vperm.xlu0 %2377, %v1788
        %v2379 = vpop.permute.xlu0 %2378
        %2382 = vset.pattern.permute.xlu0 0
        %2383 = vperm.xlu0 %2382, %v1789
        %v2384 = vpop.permute.xlu0 %2383
        %2387 = vset.pattern.permute.xlu0 0
        %2388 = vperm.xlu0 %2387, %v1790
        %v2389 = vpop.permute.xlu0 %2388
        %2392 = vset.pattern.permute.xlu0 0
        %2393 = vperm.xlu0 %2392, %v1791
        %v2394 = vpop.permute.xlu0 %2393
        %2397 = vset.pattern.permute.xlu0 0
        %2398 = vperm.xlu0 %2397, %v1792
        %v2399 = vpop.permute.xlu0 %2398
        %2402 = vset.pattern.permute.xlu0 0
        %2403 = vperm.xlu0 %2402, %v1793
        %v2404 = vpop.permute.xlu0 %2403
        %2407 = vset.pattern.permute.xlu0 0
        %2408 = vperm.xlu0 %2407, %v1794
        %v2409 = vpop.permute.xlu0 %2408
        %2412 = vset.pattern.permute.xlu0 0
        %2413 = vperm.xlu0 %2412, %v1795
        %v2414 = vpop.permute.xlu0 %2413
        %2417 = vset.pattern.permute.xlu0 0
        %2418 = vperm.xlu0 %2417, %v1796
        %v2419 = vpop.permute.xlu0 %2418
        %2422 = vset.pattern.permute.xlu0 0
        %2423 = vperm.xlu0 %2422, %v1797
        %v2424 = vpop.permute.xlu0 %2423
        %2427 = vset.pattern.permute.xlu0 0
        %2428 = vperm.xlu0 %2427, %v1798
        %v2429 = vpop.permute.xlu0 %2428
        %2432 = vset.pattern.permute.xlu0 0
        %2433 = vperm.xlu0 %2432, %v1799
        %v2434 = vpop.permute.xlu0 %2433
        %2437 = vset.pattern.permute.xlu0 0
        %2438 = vperm.xlu0 %2437, %v1800
        %v2439 = vpop.permute.xlu0 %2438
        %v3465 = vunpack.c.l.b16 %v649
        %v3466 = vunpack.c.h.b16 %v649
        %v3467 = vunpack.c.l.b16 %v650
        %v3468 = vunpack.c.h.b16 %v650
        %v3469 = vunpack.c.l.b16 %v651
        %v3470 = vunpack.c.h.b16 %v651
        %v3471 = vunpack.c.l.b16 %v652
        %v3472 = vunpack.c.h.b16 %v652
        %v3473 = vunpack.c.l.b16 %v653
        %v3474 = vunpack.c.h.b16 %v653
        %v3475 = vunpack.c.l.b16 %v654
        %v3476 = vunpack.c.h.b16 %v654
        %v3477 = vunpack.c.l.b16 %v655
        %v3478 = vunpack.c.h.b16 %v655
        %v3479 = vunpack.c.l.b16 %v656
        %v3480 = vunpack.c.h.b16 %v656
        %v3481 = vunpack.c.l.b16 %v657
        %v3482 = vunpack.c.h.b16 %v657
        %v3483 = vunpack.c.l.b16 %v658
        %v3484 = vunpack.c.h.b16 %v658
        %v3485 = vunpack.c.l.b16 %v659
        %v3486 = vunpack.c.h.b16 %v659
        %v3487 = vunpack.c.l.b16 %v660
        %v3488 = vunpack.c.h.b16 %v660
        %v3489 = vunpack.c.l.b16 %v661
        %v3490 = vunpack.c.h.b16 %v661
        %v3491 = vunpack.c.l.b16 %v662
        %v3492 = vunpack.c.h.b16 %v662
        %v3493 = vunpack.c.l.b16 %v663
        %v3494 = vunpack.c.h.b16 %v663
        %v3495 = vunpack.c.l.b16 %v664
        %v3496 = vunpack.c.h.b16 %v664
        %v3497 = vunpack.c.l.b16 %v665
        %v3498 = vunpack.c.h.b16 %v665
        %v3499 = vunpack.c.l.b16 %v666
        %v3500 = vunpack.c.h.b16 %v666
        %v3501 = vunpack.c.l.b16 %v667
        %v3502 = vunpack.c.h.b16 %v667
        %v3503 = vunpack.c.l.b16 %v668
        %v3504 = vunpack.c.h.b16 %v668
        %v3505 = vunpack.c.l.b16 %v669
        %v3506 = vunpack.c.h.b16 %v669
        %v3507 = vunpack.c.l.b16 %v670
        %v3508 = vunpack.c.h.b16 %v670
        %v3509 = vunpack.c.l.b16 %v671
        %v3510 = vunpack.c.h.b16 %v671
        %v3511 = vunpack.c.l.b16 %v672
        %v3512 = vunpack.c.h.b16 %v672
        %v3513 = vunpack.c.l.b16 %v673
        %v3514 = vunpack.c.h.b16 %v673
        %v3515 = vunpack.c.l.b16 %v674
        %v3516 = vunpack.c.h.b16 %v674
        %v3517 = vunpack.c.l.b16 %v675
        %v3518 = vunpack.c.h.b16 %v675
        %v3519 = vunpack.c.l.b16 %v676
        %v3520 = vunpack.c.h.b16 %v676
        %v3521 = vunpack.c.l.b16 %v677
        %v3522 = vunpack.c.h.b16 %v677
        %v3523 = vunpack.c.l.b16 %v678
        %v3524 = vunpack.c.h.b16 %v678
        %v3525 = vunpack.c.l.b16 %v679
        %v3526 = vunpack.c.h.b16 %v679
        %v3527 = vunpack.c.l.b16 %v680
        %v3528 = vunpack.c.h.b16 %v680
        %v3529 = vunpack.c.l.b16 %v681
        %v3530 = vunpack.c.h.b16 %v681
        %v3531 = vunpack.c.l.b16 %v682
        %v3532 = vunpack.c.h.b16 %v682
        %v3533 = vunpack.c.l.b16 %v683
        %v3534 = vunpack.c.h.b16 %v683
        %v3535 = vunpack.c.l.b16 %v684
        %v3536 = vunpack.c.h.b16 %v684
        %v3537 = vunpack.c.l.b16 %v685
        %v3538 = vunpack.c.h.b16 %v685
        %v3539 = vunpack.c.l.b16 %v686
        %v3540 = vunpack.c.h.b16 %v686
        %v3541 = vunpack.c.l.b16 %v687
        %v3542 = vunpack.c.h.b16 %v687
        %v3543 = vunpack.c.l.b16 %v688
        %v3544 = vunpack.c.h.b16 %v688
        %v3545 = vunpack.c.l.b16 %v689
        %v3546 = vunpack.c.h.b16 %v689
        %v3547 = vunpack.c.l.b16 %v690
        %v3548 = vunpack.c.h.b16 %v690
        %v3549 = vunpack.c.l.b16 %v691
        %v3550 = vunpack.c.h.b16 %v691
        %v3551 = vunpack.c.l.b16 %v692
        %v3552 = vunpack.c.h.b16 %v692
        %v3553 = vunpack.c.l.b16 %v693
        %v3554 = vunpack.c.h.b16 %v693
        %v3555 = vunpack.c.l.b16 %v694
        %v3556 = vunpack.c.h.b16 %v694
        %v3557 = vunpack.c.l.b16 %v695
        %v3558 = vunpack.c.h.b16 %v695
        %v3559 = vunpack.c.l.b16 %v696
        %v3560 = vunpack.c.h.b16 %v696
        %v3561 = vunpack.c.l.b16 %v697
        %v3562 = vunpack.c.h.b16 %v697
        %v3563 = vunpack.c.l.b16 %v698
        %v3564 = vunpack.c.h.b16 %v698
        %v3565 = vunpack.c.l.b16 %v699
        %v3566 = vunpack.c.h.b16 %v699
        %v3567 = vunpack.c.l.b16 %v700
        %v3568 = vunpack.c.h.b16 %v700
        %v3569 = vunpack.c.l.b16 %v701
        %v3570 = vunpack.c.h.b16 %v701
        %v3571 = vunpack.c.l.b16 %v702
        %v3572 = vunpack.c.h.b16 %v702
        %v3573 = vunpack.c.l.b16 %v703
        %v3574 = vunpack.c.h.b16 %v703
        %v3575 = vunpack.c.l.b16 %v704
        %v3576 = vunpack.c.h.b16 %v704
        %v3577 = vunpack.c.l.b16 %v705
        %v3578 = vunpack.c.h.b16 %v705
        %v3579 = vunpack.c.l.b16 %v706
        %v3580 = vunpack.c.h.b16 %v706
        %v3581 = vunpack.c.l.b16 %v707
        %v3582 = vunpack.c.h.b16 %v707
        %v3583 = vunpack.c.l.b16 %v708
        %v3584 = vunpack.c.h.b16 %v708
        %v3585 = vunpack.c.l.b16 %v709
        %v3586 = vunpack.c.h.b16 %v709
        %v3587 = vunpack.c.l.b16 %v710
        %v3588 = vunpack.c.h.b16 %v710
        %v3589 = vunpack.c.l.b16 %v711
        %v3590 = vunpack.c.h.b16 %v711
        %v3591 = vunpack.c.l.b16 %v712
        %v3592 = vunpack.c.h.b16 %v712
        %v3593 = vunpack.c.l.b16 %v713
        %v3594 = vunpack.c.h.b16 %v713
        %v3595 = vunpack.c.l.b16 %v714
        %v3596 = vunpack.c.h.b16 %v714
        %v3597 = vunpack.c.l.b16 %v715
        %v3598 = vunpack.c.h.b16 %v715
        %v3599 = vunpack.c.l.b16 %v716
        %v3600 = vunpack.c.h.b16 %v716
        %v3601 = vunpack.c.l.b16 %v717
        %v3602 = vunpack.c.h.b16 %v717
        %v3603 = vunpack.c.l.b16 %v718
        %v3604 = vunpack.c.h.b16 %v718
        %v3605 = vunpack.c.l.b16 %v719
        %v3606 = vunpack.c.h.b16 %v719
        %v3607 = vunpack.c.l.b16 %v720
        %v3608 = vunpack.c.h.b16 %v720
        %v3609 = vunpack.c.l.b16 %v721
        %v3610 = vunpack.c.h.b16 %v721
        %v3611 = vunpack.c.l.b16 %v722
        %v3612 = vunpack.c.h.b16 %v722
        %v3613 = vunpack.c.l.b16 %v723
        %v3614 = vunpack.c.h.b16 %v723
        %v3615 = vunpack.c.l.b16 %v724
        %v3616 = vunpack.c.h.b16 %v724
        %v3617 = vunpack.c.l.b16 %v725
        %v3618 = vunpack.c.h.b16 %v725
        %v3619 = vunpack.c.l.b16 %v726
        %v3620 = vunpack.c.h.b16 %v726
        %v3621 = vunpack.c.l.b16 %v727
        %v3622 = vunpack.c.h.b16 %v727
        %v3623 = vunpack.c.l.b16 %v728
        %v3624 = vunpack.c.h.b16 %v728
        %v3625 = vunpack.c.l.b16 %v729
        %v3626 = vunpack.c.h.b16 %v729
        %v3627 = vunpack.c.l.b16 %v730
        %v3628 = vunpack.c.h.b16 %v730
        %v3629 = vunpack.c.l.b16 %v731
        %v3630 = vunpack.c.h.b16 %v731
        %v3631 = vunpack.c.l.b16 %v732
        %v3632 = vunpack.c.h.b16 %v732
        %v3633 = vunpack.c.l.b16 %v733
        %v3634 = vunpack.c.h.b16 %v733
        %v3635 = vunpack.c.l.b16 %v734
        %v3636 = vunpack.c.h.b16 %v734
        %v3637 = vunpack.c.l.b16 %v735
        %v3638 = vunpack.c.h.b16 %v735
        %v3639 = vunpack.c.l.b16 %v736
        %v3640 = vunpack.c.h.b16 %v736
        %v3641 = vunpack.c.l.b16 %v737
        %v3642 = vunpack.c.h.b16 %v737
        %v3643 = vunpack.c.l.b16 %v738
        %v3644 = vunpack.c.h.b16 %v738
        %v3645 = vunpack.c.l.b16 %v739
        %v3646 = vunpack.c.h.b16 %v739
        %v3647 = vunpack.c.l.b16 %v740
        %v3648 = vunpack.c.h.b16 %v740
        %v3649 = vunpack.c.l.b16 %v741
        %v3650 = vunpack.c.h.b16 %v741
        %v3651 = vunpack.c.l.b16 %v742
        %v3652 = vunpack.c.h.b16 %v742
        %v3653 = vunpack.c.l.b16 %v743
        %v3654 = vunpack.c.h.b16 %v743
        %v3655 = vunpack.c.l.b16 %v744
        %v3656 = vunpack.c.h.b16 %v744
        %v3657 = vunpack.c.l.b16 %v745
        %v3658 = vunpack.c.h.b16 %v745
        %v3659 = vunpack.c.l.b16 %v746
        %v3660 = vunpack.c.h.b16 %v746
        %v3661 = vunpack.c.l.b16 %v747
        %v3662 = vunpack.c.h.b16 %v747
        %v3663 = vunpack.c.l.b16 %v748
        %v3664 = vunpack.c.h.b16 %v748
        %v3665 = vunpack.c.l.b16 %v749
        %v3666 = vunpack.c.h.b16 %v749
        %v3667 = vunpack.c.l.b16 %v750
        %v3668 = vunpack.c.h.b16 %v750
        %v3669 = vunpack.c.l.b16 %v751
        %v3670 = vunpack.c.h.b16 %v751
        %v3671 = vunpack.c.l.b16 %v752
        %v3672 = vunpack.c.h.b16 %v752
        %v3673 = vunpack.c.l.b16 %v753
        %v3674 = vunpack.c.h.b16 %v753
        %v3675 = vunpack.c.l.b16 %v754
        %v3676 = vunpack.c.h.b16 %v754
        %v3677 = vunpack.c.l.b16 %v755
        %v3678 = vunpack.c.h.b16 %v755
        %v3679 = vunpack.c.l.b16 %v756
        %v3680 = vunpack.c.h.b16 %v756
        %v3681 = vunpack.c.l.b16 %v757
        %v3682 = vunpack.c.h.b16 %v757
        %v3683 = vunpack.c.l.b16 %v758
        %v3684 = vunpack.c.h.b16 %v758
        %v3685 = vunpack.c.l.b16 %v759
        %v3686 = vunpack.c.h.b16 %v759
        %v3687 = vunpack.c.l.b16 %v760
        %v3688 = vunpack.c.h.b16 %v760
        %v3689 = vunpack.c.l.b16 %v761
        %v3690 = vunpack.c.h.b16 %v761
        %v3691 = vunpack.c.l.b16 %v762
        %v3692 = vunpack.c.h.b16 %v762
        %v3693 = vunpack.c.l.b16 %v763
        %v3694 = vunpack.c.h.b16 %v763
        %v3695 = vunpack.c.l.b16 %v764
        %v3696 = vunpack.c.h.b16 %v764
        %v3697 = vunpack.c.l.b16 %v765
        %v3698 = vunpack.c.h.b16 %v765
        %v3699 = vunpack.c.l.b16 %v766
        %v3700 = vunpack.c.h.b16 %v766
        %v3701 = vunpack.c.l.b16 %v767
        %v3702 = vunpack.c.h.b16 %v767
        %v3703 = vunpack.c.l.b16 %v768
        %v3704 = vunpack.c.h.b16 %v768
        %v3705 = vunpack.c.l.b16 %v769
        %v3706 = vunpack.c.h.b16 %v769
        %v3707 = vunpack.c.l.b16 %v770
        %v3708 = vunpack.c.h.b16 %v770
        %v3709 = vunpack.c.l.b16 %v771
        %v3710 = vunpack.c.h.b16 %v771
        %v3711 = vunpack.c.l.b16 %v772
        %v3712 = vunpack.c.h.b16 %v772
        %v3713 = vunpack.c.l.b16 %v773
        %v3714 = vunpack.c.h.b16 %v773
        %v3715 = vunpack.c.l.b16 %v774
        %v3716 = vunpack.c.h.b16 %v774
        %v3717 = vunpack.c.l.b16 %v775
        %v3718 = vunpack.c.h.b16 %v775
        %v3719 = vunpack.c.l.b16 %v776
        %v3720 = vunpack.c.h.b16 %v776
        %v3721 = vunpack.c.l.b16 %v777
        %v3722 = vunpack.c.h.b16 %v777
        %v3723 = vunpack.c.l.b16 %v778
        %v3724 = vunpack.c.h.b16 %v778
        %v3725 = vunpack.c.l.b16 %v779
        %v3726 = vunpack.c.h.b16 %v779
        %v3727 = vunpack.c.l.b16 %v780
        %v3728 = vunpack.c.h.b16 %v780
        %v3729 = vunpack.c.l.b16 %v781
        %v3730 = vunpack.c.h.b16 %v781
        %v3731 = vunpack.c.l.b16 %v782
        %v3732 = vunpack.c.h.b16 %v782
        %v3733 = vunpack.c.l.b16 %v783
        %v3734 = vunpack.c.h.b16 %v783
        %v3735 = vunpack.c.l.b16 %v784
        %v3736 = vunpack.c.h.b16 %v784
        %v3737 = vunpack.c.l.b16 %v785
        %v3738 = vunpack.c.h.b16 %v785
        %v3739 = vunpack.c.l.b16 %v786
        %v3740 = vunpack.c.h.b16 %v786
        %v3741 = vunpack.c.l.b16 %v787
        %v3742 = vunpack.c.h.b16 %v787
        %v3743 = vunpack.c.l.b16 %v788
        %v3744 = vunpack.c.h.b16 %v788
        %v3745 = vunpack.c.l.b16 %v789
        %v3746 = vunpack.c.h.b16 %v789
        %v3747 = vunpack.c.l.b16 %v790
        %v3748 = vunpack.c.h.b16 %v790
        %v3749 = vunpack.c.l.b16 %v791
        %v3750 = vunpack.c.h.b16 %v791
        %v3751 = vunpack.c.l.b16 %v792
        %v3752 = vunpack.c.h.b16 %v792
        %v3753 = vunpack.c.l.b16 %v793
        %v3754 = vunpack.c.h.b16 %v793
        %v3755 = vunpack.c.l.b16 %v794
        %v3756 = vunpack.c.h.b16 %v794
        %v3757 = vunpack.c.l.b16 %v795
        %v3758 = vunpack.c.h.b16 %v795
        %v3759 = vunpack.c.l.b16 %v796
        %v3760 = vunpack.c.h.b16 %v796
        %v3761 = vunpack.c.l.b16 %v797
        %v3762 = vunpack.c.h.b16 %v797
        %v3763 = vunpack.c.l.b16 %v798
        %v3764 = vunpack.c.h.b16 %v798
        %v3765 = vunpack.c.l.b16 %v799
        %v3766 = vunpack.c.h.b16 %v799
        %v3767 = vunpack.c.l.b16 %v800
        %v3768 = vunpack.c.h.b16 %v800
        %v3769 = vunpack.c.l.b16 %v801
        %v3770 = vunpack.c.h.b16 %v801
        %v3771 = vunpack.c.l.b16 %v802
        %v3772 = vunpack.c.h.b16 %v802
        %v3773 = vunpack.c.l.b16 %v803
        %v3774 = vunpack.c.h.b16 %v803
        %v3775 = vunpack.c.l.b16 %v804
        %v3776 = vunpack.c.h.b16 %v804
        %v3777 = vunpack.c.l.b16 %v805
        %v3778 = vunpack.c.h.b16 %v805
        %v3779 = vunpack.c.l.b16 %v806
        %v3780 = vunpack.c.h.b16 %v806
        %v3781 = vunpack.c.l.b16 %v807
        %v3782 = vunpack.c.h.b16 %v807
        %v3783 = vunpack.c.l.b16 %v808
        %v3784 = vunpack.c.h.b16 %v808
        %v3785 = vunpack.c.l.b16 %v809
        %v3786 = vunpack.c.h.b16 %v809
        %v3787 = vunpack.c.l.b16 %v810
        %v3788 = vunpack.c.h.b16 %v810
        %v3789 = vunpack.c.l.b16 %v811
        %v3790 = vunpack.c.h.b16 %v811
        %v3791 = vunpack.c.l.b16 %v812
        %v3792 = vunpack.c.h.b16 %v812
        %v3793 = vunpack.c.l.b16 %v813
        %v3794 = vunpack.c.h.b16 %v813
        %v3795 = vunpack.c.l.b16 %v814
        %v3796 = vunpack.c.h.b16 %v814
        %v3797 = vunpack.c.l.b16 %v815
        %v3798 = vunpack.c.h.b16 %v815
        %v3799 = vunpack.c.l.b16 %v816
        %v3800 = vunpack.c.h.b16 %v816
        %v3801 = vunpack.c.l.b16 %v817
        %v3802 = vunpack.c.h.b16 %v817
        %v3803 = vunpack.c.l.b16 %v818
        %v3804 = vunpack.c.h.b16 %v818
        %v3805 = vunpack.c.l.b16 %v819
        %v3806 = vunpack.c.h.b16 %v819
        %v3807 = vunpack.c.l.b16 %v820
        %v3808 = vunpack.c.h.b16 %v820
        %v3809 = vunpack.c.l.b16 %v821
        %v3810 = vunpack.c.h.b16 %v821
        %v3811 = vunpack.c.l.b16 %v822
        %v3812 = vunpack.c.h.b16 %v822
        %v3813 = vunpack.c.l.b16 %v823
        %v3814 = vunpack.c.h.b16 %v823
        %v3815 = vunpack.c.l.b16 %v824
        %v3816 = vunpack.c.h.b16 %v824
        %v3817 = vunpack.c.l.b16 %v825
        %v3818 = vunpack.c.h.b16 %v825
        %v3819 = vunpack.c.l.b16 %v826
        %v3820 = vunpack.c.h.b16 %v826
        %v3821 = vunpack.c.l.b16 %v827
        %v3822 = vunpack.c.h.b16 %v827
        %v3823 = vunpack.c.l.b16 %v828
        %v3824 = vunpack.c.h.b16 %v828
        %v3825 = vunpack.c.l.b16 %v829
        %v3826 = vunpack.c.h.b16 %v829
        %v3827 = vunpack.c.l.b16 %v830
        %v3828 = vunpack.c.h.b16 %v830
        %v3829 = vunpack.c.l.b16 %v831
        %v3830 = vunpack.c.h.b16 %v831
        %v3831 = vunpack.c.l.b16 %v832
        %v3832 = vunpack.c.h.b16 %v832
        %v3833 = vunpack.c.l.b16 %v833
        %v3834 = vunpack.c.h.b16 %v833
        %v3835 = vunpack.c.l.b16 %v834
        %v3836 = vunpack.c.h.b16 %v834
        %v3837 = vunpack.c.l.b16 %v835
        %v3838 = vunpack.c.h.b16 %v835
        %v3839 = vunpack.c.l.b16 %v836
        %v3840 = vunpack.c.h.b16 %v836
        %v3841 = vunpack.c.l.b16 %v837
        %v3842 = vunpack.c.h.b16 %v837
        %v3843 = vunpack.c.l.b16 %v838
        %v3844 = vunpack.c.h.b16 %v838
        %v3845 = vunpack.c.l.b16 %v839
        %v3846 = vunpack.c.h.b16 %v839
        %v3847 = vunpack.c.l.b16 %v840
        %v3848 = vunpack.c.h.b16 %v840
        %v3849 = vunpack.c.l.b16 %v841
        %v3850 = vunpack.c.h.b16 %v841
        %v3851 = vunpack.c.l.b16 %v842
        %v3852 = vunpack.c.h.b16 %v842
        %v3853 = vunpack.c.l.b16 %v843
        %v3854 = vunpack.c.h.b16 %v843
        %v3855 = vunpack.c.l.b16 %v844
        %v3856 = vunpack.c.h.b16 %v844
        %v3857 = vunpack.c.l.b16 %v845
        %v3858 = vunpack.c.h.b16 %v845
        %v3859 = vunpack.c.l.b16 %v846
        %v3860 = vunpack.c.h.b16 %v846
        %v3861 = vunpack.c.l.b16 %v847
        %v3862 = vunpack.c.h.b16 %v847
        %v3863 = vunpack.c.l.b16 %v848
        %v3864 = vunpack.c.h.b16 %v848
        %v3865 = vunpack.c.l.b16 %v849
        %v3866 = vunpack.c.h.b16 %v849
        %v3867 = vunpack.c.l.b16 %v850
        %v3868 = vunpack.c.h.b16 %v850
        %v3869 = vunpack.c.l.b16 %v851
        %v3870 = vunpack.c.h.b16 %v851
        %v3871 = vunpack.c.l.b16 %v852
        %v3872 = vunpack.c.h.b16 %v852
        %v3873 = vunpack.c.l.b16 %v853
        %v3874 = vunpack.c.h.b16 %v853
        %v3875 = vunpack.c.l.b16 %v854
        %v3876 = vunpack.c.h.b16 %v854
        %v3877 = vunpack.c.l.b16 %v855
        %v3878 = vunpack.c.h.b16 %v855
        %v3879 = vunpack.c.l.b16 %v856
        %v3880 = vunpack.c.h.b16 %v856
        %v3881 = vunpack.c.l.b16 %v857
        %v3882 = vunpack.c.h.b16 %v857
        %v3883 = vunpack.c.l.b16 %v858
        %v3884 = vunpack.c.h.b16 %v858
        %v3885 = vunpack.c.l.b16 %v859
        %v3886 = vunpack.c.h.b16 %v859
        %v3887 = vunpack.c.l.b16 %v860
        %v3888 = vunpack.c.h.b16 %v860
        %v3889 = vunpack.c.l.b16 %v861
        %v3890 = vunpack.c.h.b16 %v861
        %v3891 = vunpack.c.l.b16 %v862
        %v3892 = vunpack.c.h.b16 %v862
        %v3893 = vunpack.c.l.b16 %v863
        %v3894 = vunpack.c.h.b16 %v863
        %v3895 = vunpack.c.l.b16 %v864
        %v3896 = vunpack.c.h.b16 %v864
        %v3897 = vunpack.c.l.b16 %v865
        %v3898 = vunpack.c.h.b16 %v865
        %v3899 = vunpack.c.l.b16 %v866
        %v3900 = vunpack.c.h.b16 %v866
        %v3901 = vunpack.c.l.b16 %v867
        %v3902 = vunpack.c.h.b16 %v867
        %v3903 = vunpack.c.l.b16 %v868
        %v3904 = vunpack.c.h.b16 %v868
        %v3905 = vunpack.c.l.b16 %v869
        %v3906 = vunpack.c.h.b16 %v869
        %v3907 = vunpack.c.l.b16 %v870
        %v3908 = vunpack.c.h.b16 %v870
        %v3909 = vunpack.c.l.b16 %v871
        %v3910 = vunpack.c.h.b16 %v871
        %v3911 = vunpack.c.l.b16 %v872
        %v3912 = vunpack.c.h.b16 %v872
        %v3913 = vunpack.c.l.b16 %v873
        %v3914 = vunpack.c.h.b16 %v873
        %v3915 = vunpack.c.l.b16 %v874
        %v3916 = vunpack.c.h.b16 %v874
        %v3917 = vunpack.c.l.b16 %v875
        %v3918 = vunpack.c.h.b16 %v875
        %v3919 = vunpack.c.l.b16 %v876
        %v3920 = vunpack.c.h.b16 %v876
        %v3921 = vunpack.c.l.b16 %v877
        %v3922 = vunpack.c.h.b16 %v877
        %v3923 = vunpack.c.l.b16 %v878
        %v3924 = vunpack.c.h.b16 %v878
        %v3925 = vunpack.c.l.b16 %v879
        %v3926 = vunpack.c.h.b16 %v879
        %v3927 = vunpack.c.l.b16 %v880
        %v3928 = vunpack.c.h.b16 %v880
        %v3929 = vunpack.c.l.b16 %v881
        %v3930 = vunpack.c.h.b16 %v881
        %v3931 = vunpack.c.l.b16 %v882
        %v3932 = vunpack.c.h.b16 %v882
        %v3933 = vunpack.c.l.b16 %v883
        %v3934 = vunpack.c.h.b16 %v883
        %v3935 = vunpack.c.l.b16 %v884
        %v3936 = vunpack.c.h.b16 %v884
        %v3937 = vunpack.c.l.b16 %v885
        %v3938 = vunpack.c.h.b16 %v885
        %v3939 = vunpack.c.l.b16 %v886
        %v3940 = vunpack.c.h.b16 %v886
        %v3941 = vunpack.c.l.b16 %v887
        %v3942 = vunpack.c.h.b16 %v887
        %v3943 = vunpack.c.l.b16 %v888
        %v3944 = vunpack.c.h.b16 %v888
        %v3945 = vunpack.c.l.b16 %v889
        %v3946 = vunpack.c.h.b16 %v889
        %v3947 = vunpack.c.l.b16 %v890
        %v3948 = vunpack.c.h.b16 %v890
        %v3949 = vunpack.c.l.b16 %v891
        %v3950 = vunpack.c.h.b16 %v891
        %v3951 = vunpack.c.l.b16 %v892
        %v3952 = vunpack.c.h.b16 %v892
        %v3953 = vunpack.c.l.b16 %v893
        %v3954 = vunpack.c.h.b16 %v893
        %v3955 = vunpack.c.l.b16 %v894
        %v3956 = vunpack.c.h.b16 %v894
        %v3957 = vunpack.c.l.b16 %v895
        %v3958 = vunpack.c.h.b16 %v895
        %v3959 = vunpack.c.l.b16 %v896
        %v3960 = vunpack.c.h.b16 %v896
        %v3961 = vunpack.c.l.b16 %v897
        %v3962 = vunpack.c.h.b16 %v897
        %v3963 = vunpack.c.l.b16 %v898
        %v3964 = vunpack.c.h.b16 %v898
        %v3965 = vunpack.c.l.b16 %v899
        %v3966 = vunpack.c.h.b16 %v899
        %v3967 = vunpack.c.l.b16 %v900
        %v3968 = vunpack.c.h.b16 %v900
        %v3969 = vunpack.c.l.b16 %v901
        %v3970 = vunpack.c.h.b16 %v901
        %v3971 = vunpack.c.l.b16 %v902
        %v3972 = vunpack.c.h.b16 %v902
        %v3973 = vunpack.c.l.b16 %v903
        %v3974 = vunpack.c.h.b16 %v903
        %v3975 = vunpack.c.l.b16 %v904
        %v3976 = vunpack.c.h.b16 %v904
        %v3977 = vunpack.c.l.b16 %v905
        %v3978 = vunpack.c.h.b16 %v905
        %v3979 = vunpack.c.l.b16 %v906
        %v3980 = vunpack.c.h.b16 %v906
        %v3981 = vunpack.c.l.b16 %v907
        %v3982 = vunpack.c.h.b16 %v907
        %v3983 = vunpack.c.l.b16 %v908
        %v3984 = vunpack.c.h.b16 %v908
        %v3985 = vunpack.c.l.b16 %v909
        %v3986 = vunpack.c.h.b16 %v909
        %v3987 = vunpack.c.l.b16 %v910
        %v3988 = vunpack.c.h.b16 %v910
        %v3989 = vunpack.c.l.b16 %v911
        %v3990 = vunpack.c.h.b16 %v911
        %v3991 = vunpack.c.l.b16 %v912
        %v3992 = vunpack.c.h.b16 %v912
        %v3993 = vunpack.c.l.b16 %v913
        %v3994 = vunpack.c.h.b16 %v913
        %v3995 = vunpack.c.l.b16 %v914
        %v3996 = vunpack.c.h.b16 %v914
        %v3997 = vunpack.c.l.b16 %v915
        %v3998 = vunpack.c.h.b16 %v915
        %v3999 = vunpack.c.l.b16 %v916
        %v4000 = vunpack.c.h.b16 %v916
        %v4001 = vunpack.c.l.b16 %v917
        %v4002 = vunpack.c.h.b16 %v917
        %v4003 = vunpack.c.l.b16 %v918
        %v4004 = vunpack.c.h.b16 %v918
        %v4005 = vunpack.c.l.b16 %v919
        %v4006 = vunpack.c.h.b16 %v919
        %v4007 = vunpack.c.l.b16 %v920
        %v4008 = vunpack.c.h.b16 %v920
        %v4009 = vunpack.c.l.b16 %v921
        %v4010 = vunpack.c.h.b16 %v921
        %v4011 = vunpack.c.l.b16 %v922
        %v4012 = vunpack.c.h.b16 %v922
        %v4013 = vunpack.c.l.b16 %v923
        %v4014 = vunpack.c.h.b16 %v923
        %v4015 = vunpack.c.l.b16 %v924
        %v4016 = vunpack.c.h.b16 %v924
        %v4017 = vunpack.c.l.b16 %v925
        %v4018 = vunpack.c.h.b16 %v925
        %v4019 = vunpack.c.l.b16 %v926
        %v4020 = vunpack.c.h.b16 %v926
        %v4021 = vunpack.c.l.b16 %v927
        %v4022 = vunpack.c.h.b16 %v927
        %v4023 = vunpack.c.l.b16 %v928
        %v4024 = vunpack.c.h.b16 %v928
        %v4025 = vunpack.c.l.b16 %v929
        %v4026 = vunpack.c.h.b16 %v929
        %v4027 = vunpack.c.l.b16 %v930
        %v4028 = vunpack.c.h.b16 %v930
        %v4029 = vunpack.c.l.b16 %v931
        %v4030 = vunpack.c.h.b16 %v931
        %v4031 = vunpack.c.l.b16 %v932
        %v4032 = vunpack.c.h.b16 %v932
        %v4033 = vunpack.c.l.b16 %v933
        %v4034 = vunpack.c.h.b16 %v933
        %v4035 = vunpack.c.l.b16 %v934
        %v4036 = vunpack.c.h.b16 %v934
        %v4037 = vunpack.c.l.b16 %v935
        %v4038 = vunpack.c.h.b16 %v935
        %v4039 = vunpack.c.l.b16 %v936
        %v4040 = vunpack.c.h.b16 %v936
        %v4041 = vunpack.c.l.b16 %v937
        %v4042 = vunpack.c.h.b16 %v937
        %v4043 = vunpack.c.l.b16 %v938
        %v4044 = vunpack.c.h.b16 %v938
        %v4045 = vunpack.c.l.b16 %v939
        %v4046 = vunpack.c.h.b16 %v939
        %v4047 = vunpack.c.l.b16 %v940
        %v4048 = vunpack.c.h.b16 %v940
        %v4049 = vunpack.c.l.b16 %v941
        %v4050 = vunpack.c.h.b16 %v941
        %v4051 = vunpack.c.l.b16 %v942
        %v4052 = vunpack.c.h.b16 %v942
        %v4053 = vunpack.c.l.b16 %v943
        %v4054 = vunpack.c.h.b16 %v943
        %v4055 = vunpack.c.l.b16 %v944
        %v4056 = vunpack.c.h.b16 %v944
        %v4057 = vunpack.c.l.b16 %v945
        %v4058 = vunpack.c.h.b16 %v945
        %v4059 = vunpack.c.l.b16 %v946
        %v4060 = vunpack.c.h.b16 %v946
        %v4061 = vunpack.c.l.b16 %v947
        %v4062 = vunpack.c.h.b16 %v947
        %v4063 = vunpack.c.l.b16 %v948
        %v4064 = vunpack.c.h.b16 %v948
        %v4065 = vunpack.c.l.b16 %v949
        %v4066 = vunpack.c.h.b16 %v949
        %v4067 = vunpack.c.l.b16 %v950
        %v4068 = vunpack.c.h.b16 %v950
        %v4069 = vunpack.c.l.b16 %v951
        %v4070 = vunpack.c.h.b16 %v951
        %v4071 = vunpack.c.l.b16 %v952
        %v4072 = vunpack.c.h.b16 %v952
        %v4073 = vunpack.c.l.b16 %v953
        %v4074 = vunpack.c.h.b16 %v953
        %v4075 = vunpack.c.l.b16 %v954
        %v4076 = vunpack.c.h.b16 %v954
        %v4077 = vunpack.c.l.b16 %v955
        %v4078 = vunpack.c.h.b16 %v955
        %v4079 = vunpack.c.l.b16 %v956
        %v4080 = vunpack.c.h.b16 %v956
        %v4081 = vunpack.c.l.b16 %v957
        %v4082 = vunpack.c.h.b16 %v957
        %v4083 = vunpack.c.l.b16 %v958
        %v4084 = vunpack.c.h.b16 %v958
        %v4085 = vunpack.c.l.b16 %v959
        %v4086 = vunpack.c.h.b16 %v959
        %v4087 = vunpack.c.l.b16 %v960
        %v4088 = vunpack.c.h.b16 %v960
        %v4089 = vunpack.c.l.b16 %v961
        %v4090 = vunpack.c.h.b16 %v961
        %v4091 = vunpack.c.l.b16 %v962
        %v4092 = vunpack.c.h.b16 %v962
        %v4093 = vunpack.c.l.b16 %v963
        %v4094 = vunpack.c.h.b16 %v963
        %v4095 = vunpack.c.l.b16 %v964
        %v4096 = vunpack.c.h.b16 %v964
        %v4097 = vunpack.c.l.b16 %v965
        %v4098 = vunpack.c.h.b16 %v965
        %v4099 = vunpack.c.l.b16 %v966
        %v4100 = vunpack.c.h.b16 %v966
        %v4101 = vunpack.c.l.b16 %v967
        %v4102 = vunpack.c.h.b16 %v967
        %v4103 = vunpack.c.l.b16 %v968
        %v4104 = vunpack.c.h.b16 %v968
        %v4105 = vunpack.c.l.b16 %v969
        %v4106 = vunpack.c.h.b16 %v969
        %v4107 = vunpack.c.l.b16 %v970
        %v4108 = vunpack.c.h.b16 %v970
        %v4109 = vunpack.c.l.b16 %v971
        %v4110 = vunpack.c.h.b16 %v971
        %v4111 = vunpack.c.l.b16 %v972
        %v4112 = vunpack.c.h.b16 %v972
        %v4113 = vunpack.c.l.b16 %v973
        %v4114 = vunpack.c.h.b16 %v973
        %v4115 = vunpack.c.l.b16 %v974
        %v4116 = vunpack.c.h.b16 %v974
        %v4117 = vunpack.c.l.b16 %v975
        %v4118 = vunpack.c.h.b16 %v975
        %v4119 = vunpack.c.l.b16 %v976
        %v4120 = vunpack.c.h.b16 %v976
        %v4121 = vunpack.c.l.b16 %v977
        %v4122 = vunpack.c.h.b16 %v977
        %v4123 = vunpack.c.l.b16 %v978
        %v4124 = vunpack.c.h.b16 %v978
        %v4125 = vunpack.c.l.b16 %v979
        %v4126 = vunpack.c.h.b16 %v979
        %v4127 = vunpack.c.l.b16 %v980
        %v4128 = vunpack.c.h.b16 %v980
        %v4129 = vunpack.c.l.b16 %v981
        %v4130 = vunpack.c.h.b16 %v981
        %v4131 = vunpack.c.l.b16 %v982
        %v4132 = vunpack.c.h.b16 %v982
        %v4133 = vunpack.c.l.b16 %v983
        %v4134 = vunpack.c.h.b16 %v983
        %v4135 = vunpack.c.l.b16 %v984
        %v4136 = vunpack.c.h.b16 %v984
        %v4137 = vunpack.c.l.b16 %v985
        %v4138 = vunpack.c.h.b16 %v985
        %v4139 = vunpack.c.l.b16 %v986
        %v4140 = vunpack.c.h.b16 %v986
        %v4141 = vunpack.c.l.b16 %v987
        %v4142 = vunpack.c.h.b16 %v987
        %v4143 = vunpack.c.l.b16 %v988
        %v4144 = vunpack.c.h.b16 %v988
        %v4145 = vunpack.c.l.b16 %v989
        %v4146 = vunpack.c.h.b16 %v989
        %v4147 = vunpack.c.l.b16 %v990
        %v4148 = vunpack.c.h.b16 %v990
        %v4149 = vunpack.c.l.b16 %v991
        %v4150 = vunpack.c.h.b16 %v991
        %v4151 = vunpack.c.l.b16 %v992
        %v4152 = vunpack.c.h.b16 %v992
        %v4153 = vunpack.c.l.b16 %v993
        %v4154 = vunpack.c.h.b16 %v993
        %v4155 = vunpack.c.l.b16 %v994
        %v4156 = vunpack.c.h.b16 %v994
        %v4157 = vunpack.c.l.b16 %v995
        %v4158 = vunpack.c.h.b16 %v995
        %v4159 = vunpack.c.l.b16 %v996
        %v4160 = vunpack.c.h.b16 %v996
        %v4161 = vunpack.c.l.b16 %v997
        %v4162 = vunpack.c.h.b16 %v997
        %v4163 = vunpack.c.l.b16 %v998
        %v4164 = vunpack.c.h.b16 %v998
        %v4165 = vunpack.c.l.b16 %v999
        %v4166 = vunpack.c.h.b16 %v999
        %v4167 = vunpack.c.l.b16 %v1000
        %v4168 = vunpack.c.h.b16 %v1000
        %v4169 = vunpack.c.l.b16 %v1001
        %v4170 = vunpack.c.h.b16 %v1001
        %v4171 = vunpack.c.l.b16 %v1002
        %v4172 = vunpack.c.h.b16 %v1002
        %v4173 = vunpack.c.l.b16 %v1003
        %v4174 = vunpack.c.h.b16 %v1003
        %v4175 = vunpack.c.l.b16 %v1004
        %v4176 = vunpack.c.h.b16 %v1004
        %v4177 = vunpack.c.l.b16 %v1005
        %v4178 = vunpack.c.h.b16 %v1005
        %v4179 = vunpack.c.l.b16 %v1006
        %v4180 = vunpack.c.h.b16 %v1006
        %v4181 = vunpack.c.l.b16 %v1007
        %v4182 = vunpack.c.h.b16 %v1007
        %v4183 = vunpack.c.l.b16 %v1008
        %v4184 = vunpack.c.h.b16 %v1008
        %v4185 = vunpack.c.l.b16 %v1009
        %v4186 = vunpack.c.h.b16 %v1009
        %v4187 = vunpack.c.l.b16 %v1010
        %v4188 = vunpack.c.h.b16 %v1010
        %v4189 = vunpack.c.l.b16 %v1011
        %v4190 = vunpack.c.h.b16 %v1011
        %v4191 = vunpack.c.l.b16 %v1012
        %v4192 = vunpack.c.h.b16 %v1012
        %v4193 = vunpack.c.l.b16 %v1013
        %v4194 = vunpack.c.h.b16 %v1013
        %v4195 = vunpack.c.l.b16 %v1014
        %v4196 = vunpack.c.h.b16 %v1014
        %v4197 = vunpack.c.l.b16 %v1015
        %v4198 = vunpack.c.h.b16 %v1015
        %v4199 = vunpack.c.l.b16 %v1016
        %v4200 = vunpack.c.h.b16 %v1016
        %v4201 = vunpack.c.l.b16 %v1017
        %v4202 = vunpack.c.h.b16 %v1017
        %v4203 = vunpack.c.l.b16 %v1018
        %v4204 = vunpack.c.h.b16 %v1018
        %v4205 = vunpack.c.l.b16 %v1019
        %v4206 = vunpack.c.h.b16 %v1019
        %v4207 = vunpack.c.l.b16 %v1020
        %v4208 = vunpack.c.h.b16 %v1020
        %v4209 = vunpack.c.l.b16 %v1021
        %v4210 = vunpack.c.h.b16 %v1021
        %v4211 = vunpack.c.l.b16 %v1022
        %v4212 = vunpack.c.h.b16 %v1022
        %v4213 = vunpack.c.l.b16 %v1023
        %v4214 = vunpack.c.h.b16 %v1023
        %v4215 = vunpack.c.l.b16 %v1024
        %v4216 = vunpack.c.h.b16 %v1024
        %v4217 = vunpack.c.l.b16 %v1025
        %v4218 = vunpack.c.h.b16 %v1025
        %v4219 = vunpack.c.l.b16 %v1026
        %v4220 = vunpack.c.h.b16 %v1026
        %v4221 = vunpack.c.l.b16 %v1027
        %v4222 = vunpack.c.h.b16 %v1027
        %v4223 = vunpack.c.l.b16 %v1028
        %v4224 = vunpack.c.h.b16 %v1028
        %v4225 = vunpack.c.l.b16 %v1029
        %v4226 = vunpack.c.h.b16 %v1029
        %v4227 = vunpack.c.l.b16 %v1030
        %v4228 = vunpack.c.h.b16 %v1030
        %v4229 = vunpack.c.l.b16 %v1031
        %v4230 = vunpack.c.h.b16 %v1031
        %v4231 = vunpack.c.l.b16 %v1032
        %v4232 = vunpack.c.h.b16 %v1032
        %v4233 = vunpack.c.l.b16 %v1033
        %v4234 = vunpack.c.h.b16 %v1033
        %v4235 = vunpack.c.l.b16 %v1034
        %v4236 = vunpack.c.h.b16 %v1034
        %v4237 = vunpack.c.l.b16 %v1035
        %v4238 = vunpack.c.h.b16 %v1035
        %v4239 = vunpack.c.l.b16 %v1036
        %v4240 = vunpack.c.h.b16 %v1036
        %v4241 = vunpack.c.l.b16 %v1037
        %v4242 = vunpack.c.h.b16 %v1037
        %v4243 = vunpack.c.l.b16 %v1038
        %v4244 = vunpack.c.h.b16 %v1038
        %v4245 = vunpack.c.l.b16 %v1039
        %v4246 = vunpack.c.h.b16 %v1039
        %v4247 = vunpack.c.l.b16 %v1040
        %v4248 = vunpack.c.h.b16 %v1040
        %v4249 = vunpack.c.l.b16 %v1041
        %v4250 = vunpack.c.h.b16 %v1041
        %v4251 = vunpack.c.l.b16 %v1042
        %v4252 = vunpack.c.h.b16 %v1042
        %v4253 = vunpack.c.l.b16 %v1043
        %v4254 = vunpack.c.h.b16 %v1043
        %v4255 = vunpack.c.l.b16 %v1044
        %v4256 = vunpack.c.h.b16 %v1044
        %v4257 = vunpack.c.l.b16 %v1045
        %v4258 = vunpack.c.h.b16 %v1045
        %v4259 = vunpack.c.l.b16 %v1046
        %v4260 = vunpack.c.h.b16 %v1046
        %v4261 = vunpack.c.l.b16 %v1047
        %v4262 = vunpack.c.h.b16 %v1047
        %v4263 = vunpack.c.l.b16 %v1048
        %v4264 = vunpack.c.h.b16 %v1048
        %v4265 = vunpack.c.l.b16 %v1049
        %v4266 = vunpack.c.h.b16 %v1049
        %v4267 = vunpack.c.l.b16 %v1050
        %v4268 = vunpack.c.h.b16 %v1050
        %v4269 = vunpack.c.l.b16 %v1051
        %v4270 = vunpack.c.h.b16 %v1051
        %v4271 = vunpack.c.l.b16 %v1052
        %v4272 = vunpack.c.h.b16 %v1052
        %v4273 = vunpack.c.l.b16 %v1053
        %v4274 = vunpack.c.h.b16 %v1053
        %v4275 = vunpack.c.l.b16 %v1054
        %v4276 = vunpack.c.h.b16 %v1054
        %v4277 = vunpack.c.l.b16 %v1055
        %v4278 = vunpack.c.h.b16 %v1055
        %v4279 = vunpack.c.l.b16 %v1056
        %v4280 = vunpack.c.h.b16 %v1056
        %v4281 = vunpack.c.l.b16 %v1057
        %v4282 = vunpack.c.h.b16 %v1057
        %v4283 = vunpack.c.l.b16 %v1058
        %v4284 = vunpack.c.h.b16 %v1058
        %v4285 = vunpack.c.l.b16 %v1059
        %v4286 = vunpack.c.h.b16 %v1059
        %v4287 = vunpack.c.l.b16 %v1060
        %v4288 = vunpack.c.h.b16 %v1060
        %v4289 = vunpack.c.l.b16 %v1061
        %v4290 = vunpack.c.h.b16 %v1061
        %v4291 = vunpack.c.l.b16 %v1062
        %v4292 = vunpack.c.h.b16 %v1062
        %v4293 = vunpack.c.l.b16 %v1063
        %v4294 = vunpack.c.h.b16 %v1063
        %v4295 = vunpack.c.l.b16 %v1064
        %v4296 = vunpack.c.h.b16 %v1064
        %v4297 = vunpack.c.l.b16 %v1065
        %v4298 = vunpack.c.h.b16 %v1065
        %v4299 = vunpack.c.l.b16 %v1066
        %v4300 = vunpack.c.h.b16 %v1066
        %v4301 = vunpack.c.l.b16 %v1067
        %v4302 = vunpack.c.h.b16 %v1067
        %v4303 = vunpack.c.l.b16 %v1068
        %v4304 = vunpack.c.h.b16 %v1068
        %v4305 = vunpack.c.l.b16 %v1069
        %v4306 = vunpack.c.h.b16 %v1069
        %v4307 = vunpack.c.l.b16 %v1070
        %v4308 = vunpack.c.h.b16 %v1070
        %v4309 = vunpack.c.l.b16 %v1071
        %v4310 = vunpack.c.h.b16 %v1071
        %v4311 = vunpack.c.l.b16 %v1072
        %v4312 = vunpack.c.h.b16 %v1072
        %v4313 = vunpack.c.l.b16 %v1073
        %v4314 = vunpack.c.h.b16 %v1073
        %v4315 = vunpack.c.l.b16 %v1074
        %v4316 = vunpack.c.h.b16 %v1074
        %v4317 = vunpack.c.l.b16 %v1075
        %v4318 = vunpack.c.h.b16 %v1075
        %v4319 = vunpack.c.l.b16 %v1076
        %v4320 = vunpack.c.h.b16 %v1076
        %v4321 = vunpack.c.l.b16 %v1077
        %v4322 = vunpack.c.h.b16 %v1077
        %v4323 = vunpack.c.l.b16 %v1078
        %v4324 = vunpack.c.h.b16 %v1078
        %v4325 = vunpack.c.l.b16 %v1079
        %v4326 = vunpack.c.h.b16 %v1079
        %v4327 = vunpack.c.l.b16 %v1080
        %v4328 = vunpack.c.h.b16 %v1080
        %v4329 = vunpack.c.l.b16 %v1081
        %v4330 = vunpack.c.h.b16 %v1081
        %v4331 = vunpack.c.l.b16 %v1082
        %v4332 = vunpack.c.h.b16 %v1082
        %v4333 = vunpack.c.l.b16 %v1083
        %v4334 = vunpack.c.h.b16 %v1083
        %v4335 = vunpack.c.l.b16 %v1084
        %v4336 = vunpack.c.h.b16 %v1084
        %v4337 = vunpack.c.l.b16 %v1085
        %v4338 = vunpack.c.h.b16 %v1085
        %v4339 = vunpack.c.l.b16 %v1086
        %v4340 = vunpack.c.h.b16 %v1086
        %v4341 = vunpack.c.l.b16 %v1087
        %v4342 = vunpack.c.h.b16 %v1087
        %v4343 = vunpack.c.l.b16 %v1088
        %v4344 = vunpack.c.h.b16 %v1088
        %v4345 = vunpack.c.l.b16 %v1089
        %v4346 = vunpack.c.h.b16 %v1089
        %v4347 = vunpack.c.l.b16 %v1090
        %v4348 = vunpack.c.h.b16 %v1090
        %v4349 = vunpack.c.l.b16 %v1091
        %v4350 = vunpack.c.h.b16 %v1091
        %v4351 = vunpack.c.l.b16 %v1092
        %v4352 = vunpack.c.h.b16 %v1092
        %v4353 = vunpack.c.l.b16 %v1093
        %v4354 = vunpack.c.h.b16 %v1093
        %v4355 = vunpack.c.l.b16 %v1094
        %v4356 = vunpack.c.h.b16 %v1094
        %v4357 = vunpack.c.l.b16 %v1095
        %v4358 = vunpack.c.h.b16 %v1095
        %v4359 = vunpack.c.l.b16 %v1096
        %v4360 = vunpack.c.h.b16 %v1096
        %v4361 = vunpack.c.l.b16 %v1097
        %v4362 = vunpack.c.h.b16 %v1097
        %v4363 = vunpack.c.l.b16 %v1098
        %v4364 = vunpack.c.h.b16 %v1098
        %v4365 = vunpack.c.l.b16 %v1099
        %v4366 = vunpack.c.h.b16 %v1099
        %v4367 = vunpack.c.l.b16 %v1100
        %v4368 = vunpack.c.h.b16 %v1100
        %v4369 = vunpack.c.l.b16 %v1101
        %v4370 = vunpack.c.h.b16 %v1101
        %v4371 = vunpack.c.l.b16 %v1102
        %v4372 = vunpack.c.h.b16 %v1102
        %v4373 = vunpack.c.l.b16 %v1103
        %v4374 = vunpack.c.h.b16 %v1103
        %v4375 = vunpack.c.l.b16 %v1104
        %v4376 = vunpack.c.h.b16 %v1104
        %v4377 = vunpack.c.l.b16 %v1105
        %v4378 = vunpack.c.h.b16 %v1105
        %v4379 = vunpack.c.l.b16 %v1106
        %v4380 = vunpack.c.h.b16 %v1106
        %v4381 = vunpack.c.l.b16 %v1107
        %v4382 = vunpack.c.h.b16 %v1107
        %v4383 = vunpack.c.l.b16 %v1108
        %v4384 = vunpack.c.h.b16 %v1108
        %v4385 = vunpack.c.l.b16 %v1109
        %v4386 = vunpack.c.h.b16 %v1109
        %v4387 = vunpack.c.l.b16 %v1110
        %v4388 = vunpack.c.h.b16 %v1110
        %v4389 = vunpack.c.l.b16 %v1111
        %v4390 = vunpack.c.h.b16 %v1111
        %v4391 = vunpack.c.l.b16 %v1112
        %v4392 = vunpack.c.h.b16 %v1112
        %v4393 = vunpack.c.l.b16 %v1113
        %v4394 = vunpack.c.h.b16 %v1113
        %v4395 = vunpack.c.l.b16 %v1114
        %v4396 = vunpack.c.h.b16 %v1114
        %v4397 = vunpack.c.l.b16 %v1115
        %v4398 = vunpack.c.h.b16 %v1115
        %v4399 = vunpack.c.l.b16 %v1116
        %v4400 = vunpack.c.h.b16 %v1116
        %v4401 = vunpack.c.l.b16 %v1117
        %v4402 = vunpack.c.h.b16 %v1117
        %v4403 = vunpack.c.l.b16 %v1118
        %v4404 = vunpack.c.h.b16 %v1118
        %v4405 = vunpack.c.l.b16 %v1119
        %v4406 = vunpack.c.h.b16 %v1119
        %v4407 = vunpack.c.l.b16 %v1120
        %v4408 = vunpack.c.h.b16 %v1120
        %v4409 = vunpack.c.l.b16 %v1121
        %v4410 = vunpack.c.h.b16 %v1121
        %v4411 = vunpack.c.l.b16 %v1122
        %v4412 = vunpack.c.h.b16 %v1122
        %v4413 = vunpack.c.l.b16 %v1123
        %v4414 = vunpack.c.h.b16 %v1123
        %v4415 = vunpack.c.l.b16 %v1124
        %v4416 = vunpack.c.h.b16 %v1124
        %v4417 = vunpack.c.l.b16 %v1125
        %v4418 = vunpack.c.h.b16 %v1125
        %v4419 = vunpack.c.l.b16 %v1126
        %v4420 = vunpack.c.h.b16 %v1126
        %v4421 = vunpack.c.l.b16 %v1127
        %v4422 = vunpack.c.h.b16 %v1127
        %v4423 = vunpack.c.l.b16 %v1128
        %v4424 = vunpack.c.h.b16 %v1128
        %v4425 = vunpack.c.l.b16 %v1129
        %v4426 = vunpack.c.h.b16 %v1129
        %v4427 = vunpack.c.l.b16 %v1130
        %v4428 = vunpack.c.h.b16 %v1130
        %v4429 = vunpack.c.l.b16 %v1131
        %v4430 = vunpack.c.h.b16 %v1131
        %v4431 = vunpack.c.l.b16 %v1132
        %v4432 = vunpack.c.h.b16 %v1132
        %v4433 = vunpack.c.l.b16 %v1133
        %v4434 = vunpack.c.h.b16 %v1133
        %v4435 = vunpack.c.l.b16 %v1134
        %v4436 = vunpack.c.h.b16 %v1134
        %v4437 = vunpack.c.l.b16 %v1135
        %v4438 = vunpack.c.h.b16 %v1135
        %v4439 = vunpack.c.l.b16 %v1136
        %v4440 = vunpack.c.h.b16 %v1136
        %v4441 = vunpack.c.l.b16 %v1137
        %v4442 = vunpack.c.h.b16 %v1137
        %v4443 = vunpack.c.l.b16 %v1138
        %v4444 = vunpack.c.h.b16 %v1138
        %v4445 = vunpack.c.l.b16 %v1139
        %v4446 = vunpack.c.h.b16 %v1139
        %v4447 = vunpack.c.l.b16 %v1140
        %v4448 = vunpack.c.h.b16 %v1140
        %v4449 = vunpack.c.l.b16 %v1141
        %v4450 = vunpack.c.h.b16 %v1141
        %v4451 = vunpack.c.l.b16 %v1142
        %v4452 = vunpack.c.h.b16 %v1142
        %v4453 = vunpack.c.l.b16 %v1143
        %v4454 = vunpack.c.h.b16 %v1143
        %v4455 = vunpack.c.l.b16 %v1144
        %v4456 = vunpack.c.h.b16 %v1144
        %v4457 = vunpack.c.l.b16 %v1145
        %v4458 = vunpack.c.h.b16 %v1145
        %v4459 = vunpack.c.l.b16 %v1146
        %v4460 = vunpack.c.h.b16 %v1146
        %v4461 = vunpack.c.l.b16 %v1147
        %v4462 = vunpack.c.h.b16 %v1147
        %v4463 = vunpack.c.l.b16 %v1148
        %v4464 = vunpack.c.h.b16 %v1148
        %v4465 = vunpack.c.l.b16 %v1149
        %v4466 = vunpack.c.h.b16 %v1149
        %v4467 = vunpack.c.l.b16 %v1150
        %v4468 = vunpack.c.h.b16 %v1150
        %v4469 = vunpack.c.l.b16 %v1151
        %v4470 = vunpack.c.h.b16 %v1151
        %v4471 = vunpack.c.l.b16 %v1152
        %v4472 = vunpack.c.h.b16 %v1152
        %v4473 = vunpack.c.l.b16 %v1153
        %v4474 = vunpack.c.h.b16 %v1153
        %v4475 = vunpack.c.l.b16 %v1154
        %v4476 = vunpack.c.h.b16 %v1154
        %v4477 = vunpack.c.l.b16 %v1155
        %v4478 = vunpack.c.h.b16 %v1155
        %v4479 = vunpack.c.l.b16 %v1156
        %v4480 = vunpack.c.h.b16 %v1156
        %v4481 = vunpack.c.l.b16 %v1157
        %v4482 = vunpack.c.h.b16 %v1157
        %v4483 = vunpack.c.l.b16 %v1158
        %v4484 = vunpack.c.h.b16 %v1158
        %v4485 = vunpack.c.l.b16 %v1159
        %v4486 = vunpack.c.h.b16 %v1159
        %v4487 = vunpack.c.l.b16 %v1160
        %v4488 = vunpack.c.h.b16 %v1160
        %v4489 = vunpack.c.l.b16 %v1161
        %v4490 = vunpack.c.h.b16 %v1161
        %v4491 = vunpack.c.l.b16 %v1162
        %v4492 = vunpack.c.h.b16 %v1162
        %v4493 = vunpack.c.l.b16 %v1163
        %v4494 = vunpack.c.h.b16 %v1163
        %v4495 = vunpack.c.l.b16 %v1164
        %v4496 = vunpack.c.h.b16 %v1164
        %v4497 = vunpack.c.l.b16 %v1165
        %v4498 = vunpack.c.h.b16 %v1165
        %v4499 = vunpack.c.l.b16 %v1166
        %v4500 = vunpack.c.h.b16 %v1166
        %v4501 = vunpack.c.l.b16 %v1167
        %v4502 = vunpack.c.h.b16 %v1167
        %v4503 = vunpack.c.l.b16 %v1168
        %v4504 = vunpack.c.h.b16 %v1168
        %v4505 = vunpack.c.l.b16 %v1169
        %v4506 = vunpack.c.h.b16 %v1169
        %v4507 = vunpack.c.l.b16 %v1170
        %v4508 = vunpack.c.h.b16 %v1170
        %v4509 = vunpack.c.l.b16 %v1171
        %v4510 = vunpack.c.h.b16 %v1171
        %v4511 = vunpack.c.l.b16 %v1172
        %v4512 = vunpack.c.h.b16 %v1172
        %v4513 = vunpack.c.l.b16 %v1173
        %v4514 = vunpack.c.h.b16 %v1173
        %v4515 = vunpack.c.l.b16 %v1174
        %v4516 = vunpack.c.h.b16 %v1174
        %v4517 = vunpack.c.l.b16 %v1175
        %v4518 = vunpack.c.h.b16 %v1175
        %v4519 = vunpack.c.l.b16 %v1176
        %v4520 = vunpack.c.h.b16 %v1176
        %v4521 = vunpack.c.l.b16 %v1177
        %v4522 = vunpack.c.h.b16 %v1177
        %v4523 = vunpack.c.l.b16 %v1178
        %v4524 = vunpack.c.h.b16 %v1178
        %v4525 = vunpack.c.l.b16 %v1179
        %v4526 = vunpack.c.h.b16 %v1179
        %v4527 = vunpack.c.l.b16 %v1180
        %v4528 = vunpack.c.h.b16 %v1180
        %v4529 = vunpack.c.l.b16 %v1181
        %v4530 = vunpack.c.h.b16 %v1181
        %v4531 = vunpack.c.l.b16 %v1182
        %v4532 = vunpack.c.h.b16 %v1182
        %v4533 = vunpack.c.l.b16 %v1183
        %v4534 = vunpack.c.h.b16 %v1183
        %v4535 = vunpack.c.l.b16 %v1184
        %v4536 = vunpack.c.h.b16 %v1184
        %v4537 = vunpack.c.l.b16 %v1185
        %v4538 = vunpack.c.h.b16 %v1185
        %v4539 = vunpack.c.l.b16 %v1186
        %v4540 = vunpack.c.h.b16 %v1186
        %v4541 = vunpack.c.l.b16 %v1187
        %v4542 = vunpack.c.h.b16 %v1187
        %v4543 = vunpack.c.l.b16 %v1188
        %v4544 = vunpack.c.h.b16 %v1188
        %v4545 = vunpack.c.l.b16 %v1189
        %v4546 = vunpack.c.h.b16 %v1189
        %v4547 = vunpack.c.l.b16 %v1190
        %v4548 = vunpack.c.h.b16 %v1190
        %v4549 = vunpack.c.l.b16 %v1191
        %v4550 = vunpack.c.h.b16 %v1191
        %v4551 = vunpack.c.l.b16 %v1192
        %v4552 = vunpack.c.h.b16 %v1192
        %v4553 = vunpack.c.l.b16 %v1193
        %v4554 = vunpack.c.h.b16 %v1193
        %v4555 = vunpack.c.l.b16 %v1194
        %v4556 = vunpack.c.h.b16 %v1194
        %v4557 = vunpack.c.l.b16 %v1195
        %v4558 = vunpack.c.h.b16 %v1195
        %v4559 = vunpack.c.l.b16 %v1196
        %v4560 = vunpack.c.h.b16 %v1196
        %v4561 = vunpack.c.l.b16 %v1197
        %v4562 = vunpack.c.h.b16 %v1197
        %v4563 = vunpack.c.l.b16 %v1198
        %v4564 = vunpack.c.h.b16 %v1198
        %v4565 = vunpack.c.l.b16 %v1199
        %v4566 = vunpack.c.h.b16 %v1199
        %v4567 = vunpack.c.l.b16 %v1200
        %v4568 = vunpack.c.h.b16 %v1200
        %v4569 = vunpack.c.l.b16 %v1201
        %v4570 = vunpack.c.h.b16 %v1201
        %v4571 = vunpack.c.l.b16 %v1202
        %v4572 = vunpack.c.h.b16 %v1202
        %v4573 = vunpack.c.l.b16 %v1203
        %v4574 = vunpack.c.h.b16 %v1203
        %v4575 = vunpack.c.l.b16 %v1204
        %v4576 = vunpack.c.h.b16 %v1204
        %v4577 = vunpack.c.l.b16 %v1205
        %v4578 = vunpack.c.h.b16 %v1205
        %v4579 = vunpack.c.l.b16 %v1206
        %v4580 = vunpack.c.h.b16 %v1206
        %v4581 = vunpack.c.l.b16 %v1207
        %v4582 = vunpack.c.h.b16 %v1207
        %v4583 = vunpack.c.l.b16 %v1208
        %v4584 = vunpack.c.h.b16 %v1208
        %v4585 = vunpack.c.l.b16 %v1209
        %v4586 = vunpack.c.h.b16 %v1209
        %v4587 = vunpack.c.l.b16 %v1210
        %v4588 = vunpack.c.h.b16 %v1210
        %v4589 = vunpack.c.l.b16 %v1211
        %v4590 = vunpack.c.h.b16 %v1211
        %v4591 = vunpack.c.l.b16 %v1212
        %v4592 = vunpack.c.h.b16 %v1212
        %v4593 = vunpack.c.l.b16 %v1213
        %v4594 = vunpack.c.h.b16 %v1213
        %v4595 = vunpack.c.l.b16 %v1214
        %v4596 = vunpack.c.h.b16 %v1214
        %v4597 = vunpack.c.l.b16 %v1215
        %v4598 = vunpack.c.h.b16 %v1215
        %v4599 = vunpack.c.l.b16 %v1216
        %v4600 = vunpack.c.h.b16 %v1216
        %v4601 = vunpack.c.l.b16 %v1217
        %v4602 = vunpack.c.h.b16 %v1217
        %v4603 = vunpack.c.l.b16 %v1218
        %v4604 = vunpack.c.h.b16 %v1218
        %v4605 = vunpack.c.l.b16 %v1219
        %v4606 = vunpack.c.h.b16 %v1219
        %v4607 = vunpack.c.l.b16 %v1220
        %v4608 = vunpack.c.h.b16 %v1220
        %v4609 = vunpack.c.l.b16 %v1221
        %v4610 = vunpack.c.h.b16 %v1221
        %v4611 = vunpack.c.l.b16 %v1222
        %v4612 = vunpack.c.h.b16 %v1222
        %v4613 = vunpack.c.l.b16 %v1223
        %v4614 = vunpack.c.h.b16 %v1223
        %v4615 = vunpack.c.l.b16 %v1224
        %v4616 = vunpack.c.h.b16 %v1224
        %v4617 = vunpack.c.l.b16 %v1225
        %v4618 = vunpack.c.h.b16 %v1225
        %v4619 = vunpack.c.l.b16 %v1226
        %v4620 = vunpack.c.h.b16 %v1226
        %v4621 = vunpack.c.l.b16 %v1227
        %v4622 = vunpack.c.h.b16 %v1227
        %v4623 = vunpack.c.l.b16 %v1228
        %v4624 = vunpack.c.h.b16 %v1228
        %v4625 = vunpack.c.l.b16 %v1229
        %v4626 = vunpack.c.h.b16 %v1229
        %v4627 = vunpack.c.l.b16 %v1230
        %v4628 = vunpack.c.h.b16 %v1230
        %v4629 = vunpack.c.l.b16 %v1231
        %v4630 = vunpack.c.h.b16 %v1231
        %v4631 = vunpack.c.l.b16 %v1232
        %v4632 = vunpack.c.h.b16 %v1232
        %v4633 = vunpack.c.l.b16 %v1233
        %v4634 = vunpack.c.h.b16 %v1233
        %v4635 = vunpack.c.l.b16 %v1234
        %v4636 = vunpack.c.h.b16 %v1234
        %v4637 = vunpack.c.l.b16 %v1235
        %v4638 = vunpack.c.h.b16 %v1235
        %v4639 = vunpack.c.l.b16 %v1236
        %v4640 = vunpack.c.h.b16 %v1236
        %v4641 = vunpack.c.l.b16 %v1237
        %v4642 = vunpack.c.h.b16 %v1237
        %v4643 = vunpack.c.l.b16 %v1238
        %v4644 = vunpack.c.h.b16 %v1238
        %v4645 = vunpack.c.l.b16 %v1239
        %v4646 = vunpack.c.h.b16 %v1239
        %v4647 = vunpack.c.l.b16 %v1240
        %v4648 = vunpack.c.h.b16 %v1240
        %v4649 = vunpack.c.l.b16 %v1241
        %v4650 = vunpack.c.h.b16 %v1241
        %v4651 = vunpack.c.l.b16 %v1242
        %v4652 = vunpack.c.h.b16 %v1242
        %v4653 = vunpack.c.l.b16 %v1243
        %v4654 = vunpack.c.h.b16 %v1243
        %v4655 = vunpack.c.l.b16 %v1244
        %v4656 = vunpack.c.h.b16 %v1244
        %v4657 = vunpack.c.l.b16 %v1245
        %v4658 = vunpack.c.h.b16 %v1245
        %v4659 = vunpack.c.l.b16 %v1246
        %v4660 = vunpack.c.h.b16 %v1246
        %v4661 = vunpack.c.l.b16 %v1247
        %v4662 = vunpack.c.h.b16 %v1247
        %v4663 = vunpack.c.l.b16 %v1248
        %v4664 = vunpack.c.h.b16 %v1248
        %v4665 = vunpack.c.l.b16 %v1249
        %v4666 = vunpack.c.h.b16 %v1249
        %v4667 = vunpack.c.l.b16 %v1250
        %v4668 = vunpack.c.h.b16 %v1250
        %v4669 = vunpack.c.l.b16 %v1251
        %v4670 = vunpack.c.h.b16 %v1251
        %v4671 = vunpack.c.l.b16 %v1252
        %v4672 = vunpack.c.h.b16 %v1252
        %v4673 = vunpack.c.l.b16 %v1253
        %v4674 = vunpack.c.h.b16 %v1253
        %v4675 = vunpack.c.l.b16 %v1254
        %v4676 = vunpack.c.h.b16 %v1254
        %v4677 = vunpack.c.l.b16 %v1255
        %v4678 = vunpack.c.h.b16 %v1255
        %v4679 = vunpack.c.l.b16 %v1256
        %v4680 = vunpack.c.h.b16 %v1256
        %v4681 = vunpack.c.l.b16 %v1257
        %v4682 = vunpack.c.h.b16 %v1257
        %v4683 = vunpack.c.l.b16 %v1258
        %v4684 = vunpack.c.h.b16 %v1258
        %v4685 = vunpack.c.l.b16 %v1259
        %v4686 = vunpack.c.h.b16 %v1259
        %v4687 = vunpack.c.l.b16 %v1260
        %v4688 = vunpack.c.h.b16 %v1260
        %v4689 = vunpack.c.l.b16 %v1261
        %v4690 = vunpack.c.h.b16 %v1261
        %v4691 = vunpack.c.l.b16 %v1262
        %v4692 = vunpack.c.h.b16 %v1262
        %v4693 = vunpack.c.l.b16 %v1263
        %v4694 = vunpack.c.h.b16 %v1263
        %v4695 = vunpack.c.l.b16 %v1264
        %v4696 = vunpack.c.h.b16 %v1264
        %v4697 = vunpack.c.l.b16 %v1265
        %v4698 = vunpack.c.h.b16 %v1265
        %v4699 = vunpack.c.l.b16 %v1266
        %v4700 = vunpack.c.h.b16 %v1266
        %v4701 = vunpack.c.l.b16 %v1267
        %v4702 = vunpack.c.h.b16 %v1267
        %v4703 = vunpack.c.l.b16 %v1268
        %v4704 = vunpack.c.h.b16 %v1268
        %v4705 = vunpack.c.l.b16 %v1269
        %v4706 = vunpack.c.h.b16 %v1269
        %v4707 = vunpack.c.l.b16 %v1270
        %v4708 = vunpack.c.h.b16 %v1270
        %v4709 = vunpack.c.l.b16 %v1271
        %v4710 = vunpack.c.h.b16 %v1271
        %v4711 = vunpack.c.l.b16 %v1272
        %v4712 = vunpack.c.h.b16 %v1272
        %v4713 = vunpack.c.l.b16 %v1273
        %v4714 = vunpack.c.h.b16 %v1273
        %v4715 = vunpack.c.l.b16 %v1274
        %v4716 = vunpack.c.h.b16 %v1274
        %v4717 = vunpack.c.l.b16 %v1275
        %v4718 = vunpack.c.h.b16 %v1275
        %v4719 = vunpack.c.l.b16 %v1276
        %v4720 = vunpack.c.h.b16 %v1276
        %v4721 = vunpack.c.l.b16 %v1277
        %v4722 = vunpack.c.h.b16 %v1277
        %v4723 = vunpack.c.l.b16 %v1278
        %v4724 = vunpack.c.h.b16 %v1278
        %v4725 = vunpack.c.l.b16 %v1279
        %v4726 = vunpack.c.h.b16 %v1279
        %v4727 = vunpack.c.l.b16 %v1280
        %v4728 = vunpack.c.h.b16 %v1280
        %v4729 = vunpack.c.l.b16 %v1281
        %v4730 = vunpack.c.h.b16 %v1281
        %v4731 = vunpack.c.l.b16 %v1282
        %v4732 = vunpack.c.h.b16 %v1282
        %v4733 = vunpack.c.l.b16 %v1283
        %v4734 = vunpack.c.h.b16 %v1283
        %v4735 = vunpack.c.l.b16 %v1284
        %v4736 = vunpack.c.h.b16 %v1284
        %v4737 = vunpack.c.l.b16 %v1285
        %v4738 = vunpack.c.h.b16 %v1285
        %v4739 = vunpack.c.l.b16 %v1286
        %v4740 = vunpack.c.h.b16 %v1286
        %v4741 = vunpack.c.l.b16 %v1287
        %v4742 = vunpack.c.h.b16 %v1287
        %v4743 = vunpack.c.l.b16 %v1288
        %v4744 = vunpack.c.h.b16 %v1288
        %v4745 = vunpack.c.l.b16 %v1289
        %v4746 = vunpack.c.h.b16 %v1289
        %v4747 = vunpack.c.l.b16 %v1290
        %v4748 = vunpack.c.h.b16 %v1290
        %v4749 = vunpack.c.l.b16 %v1291
        %v4750 = vunpack.c.h.b16 %v1291
        %v4751 = vunpack.c.l.b16 %v1292
        %v4752 = vunpack.c.h.b16 %v1292
        %v4753 = vunpack.c.l.b16 %v1293
        %v4754 = vunpack.c.h.b16 %v1293
        %v4755 = vunpack.c.l.b16 %v1294
        %v4756 = vunpack.c.h.b16 %v1294
        %v4757 = vunpack.c.l.b16 %v1295
        %v4758 = vunpack.c.h.b16 %v1295
        %v4759 = vunpack.c.l.b16 %v1296
        %v4760 = vunpack.c.h.b16 %v1296
        %v4761 = vunpack.c.l.b16 %v1297
        %v4762 = vunpack.c.h.b16 %v1297
        %v4763 = vunpack.c.l.b16 %v1298
        %v4764 = vunpack.c.h.b16 %v1298
        %v4765 = vunpack.c.l.b16 %v1299
        %v4766 = vunpack.c.h.b16 %v1299
        %v4767 = vunpack.c.l.b16 %v1300
        %v4768 = vunpack.c.h.b16 %v1300
        %v4769 = vunpack.c.l.b16 %v1301
        %v4770 = vunpack.c.h.b16 %v1301
        %v4771 = vunpack.c.l.b16 %v1302
        %v4772 = vunpack.c.h.b16 %v1302
        %v4773 = vunpack.c.l.b16 %v1303
        %v4774 = vunpack.c.h.b16 %v1303
        %v4775 = vunpack.c.l.b16 %v1304
        %v4776 = vunpack.c.h.b16 %v1304
        %v4777 = vunpack.c.l.b16 %v1305
        %v4778 = vunpack.c.h.b16 %v1305
        %v4779 = vunpack.c.l.b16 %v1306
        %v4780 = vunpack.c.h.b16 %v1306
        %v4781 = vunpack.c.l.b16 %v1307
        %v4782 = vunpack.c.h.b16 %v1307
        %v4783 = vunpack.c.l.b16 %v1308
        %v4784 = vunpack.c.h.b16 %v1308
        %v4785 = vunpack.c.l.b16 %v1309
        %v4786 = vunpack.c.h.b16 %v1309
        %v4787 = vunpack.c.l.b16 %v1310
        %v4788 = vunpack.c.h.b16 %v1310
        %v4789 = vunpack.c.l.b16 %v1311
        %v4790 = vunpack.c.h.b16 %v1311
        %v4791 = vunpack.c.l.b16 %v1312
        %v4792 = vunpack.c.h.b16 %v1312
        %v4793 = vunpack.c.l.b16 %v1313
        %v4794 = vunpack.c.h.b16 %v1313
        %v4795 = vunpack.c.l.b16 %v1314
        %v4796 = vunpack.c.h.b16 %v1314
        %v4797 = vunpack.c.l.b16 %v1315
        %v4798 = vunpack.c.h.b16 %v1315
        %v4799 = vunpack.c.l.b16 %v1316
        %v4800 = vunpack.c.h.b16 %v1316
        %v4801 = vunpack.c.l.b16 %v1317
        %v4802 = vunpack.c.h.b16 %v1317
        %v4803 = vunpack.c.l.b16 %v1318
        %v4804 = vunpack.c.h.b16 %v1318
        %v4805 = vunpack.c.l.b16 %v1319
        %v4806 = vunpack.c.h.b16 %v1319
        %v4807 = vunpack.c.l.b16 %v1320
        %v4808 = vunpack.c.h.b16 %v1320
        %v4809 = vunpack.c.l.b16 %v1321
        %v4810 = vunpack.c.h.b16 %v1321
        %v4811 = vunpack.c.l.b16 %v1322
        %v4812 = vunpack.c.h.b16 %v1322
        %v4813 = vunpack.c.l.b16 %v1323
        %v4814 = vunpack.c.h.b16 %v1323
        %v4815 = vunpack.c.l.b16 %v1324
        %v4816 = vunpack.c.h.b16 %v1324
        %v4817 = vunpack.c.l.b16 %v1325
        %v4818 = vunpack.c.h.b16 %v1325
        %v4819 = vunpack.c.l.b16 %v1326
        %v4820 = vunpack.c.h.b16 %v1326
        %v4821 = vunpack.c.l.b16 %v1327
        %v4822 = vunpack.c.h.b16 %v1327
        %v4823 = vunpack.c.l.b16 %v1328
        %v4824 = vunpack.c.h.b16 %v1328
        %v4825 = vunpack.c.l.b16 %v1329
        %v4826 = vunpack.c.h.b16 %v1329
        %v4827 = vunpack.c.l.b16 %v1330
        %v4828 = vunpack.c.h.b16 %v1330
        %v4829 = vunpack.c.l.b16 %v1331
        %v4830 = vunpack.c.h.b16 %v1331
        %v4831 = vunpack.c.l.b16 %v1332
        %v4832 = vunpack.c.h.b16 %v1332
        %v4833 = vunpack.c.l.b16 %v1333
        %v4834 = vunpack.c.h.b16 %v1333
        %v4835 = vunpack.c.l.b16 %v1334
        %v4836 = vunpack.c.h.b16 %v1334
        %v4837 = vunpack.c.l.b16 %v1335
        %v4838 = vunpack.c.h.b16 %v1335
        %v4839 = vunpack.c.l.b16 %v1336
        %v4840 = vunpack.c.h.b16 %v1336
        %v4841 = vunpack.c.l.b16 %v1337
        %v4842 = vunpack.c.h.b16 %v1337
        %v4843 = vunpack.c.l.b16 %v1338
        %v4844 = vunpack.c.h.b16 %v1338
        %v4845 = vunpack.c.l.b16 %v1339
        %v4846 = vunpack.c.h.b16 %v1339
        %v4847 = vunpack.c.l.b16 %v1340
        %v4848 = vunpack.c.h.b16 %v1340
        %v4849 = vunpack.c.l.b16 %v1341
        %v4850 = vunpack.c.h.b16 %v1341
        %v4851 = vunpack.c.l.b16 %v1342
        %v4852 = vunpack.c.h.b16 %v1342
        %v4853 = vunpack.c.l.b16 %v1343
        %v4854 = vunpack.c.h.b16 %v1343
        %v4855 = vunpack.c.l.b16 %v1344
        %v4856 = vunpack.c.h.b16 %v1344
        %v4857 = vunpack.c.l.b16 %v1345
        %v4858 = vunpack.c.h.b16 %v1345
        %v4859 = vunpack.c.l.b16 %v1346
        %v4860 = vunpack.c.h.b16 %v1346
        %v4861 = vunpack.c.l.b16 %v1347
        %v4862 = vunpack.c.h.b16 %v1347
        %v4863 = vunpack.c.l.b16 %v1348
        %v4864 = vunpack.c.h.b16 %v1348
        %v4865 = vunpack.c.l.b16 %v1349
        %v4866 = vunpack.c.h.b16 %v1349
        %v4867 = vunpack.c.l.b16 %v1350
        %v4868 = vunpack.c.h.b16 %v1350
        %v4869 = vunpack.c.l.b16 %v1351
        %v4870 = vunpack.c.h.b16 %v1351
        %v4871 = vunpack.c.l.b16 %v1352
        %v4872 = vunpack.c.h.b16 %v1352
        %v4873 = vunpack.c.l.b16 %v1353
        %v4874 = vunpack.c.h.b16 %v1353
        %v4875 = vunpack.c.l.b16 %v1354
        %v4876 = vunpack.c.h.b16 %v1354
        %v4877 = vunpack.c.l.b16 %v1355
        %v4878 = vunpack.c.h.b16 %v1355
        %v4879 = vunpack.c.l.b16 %v1356
        %v4880 = vunpack.c.h.b16 %v1356
        %v4881 = vunpack.c.l.b16 %v1357
        %v4882 = vunpack.c.h.b16 %v1357
        %v4883 = vunpack.c.l.b16 %v1358
        %v4884 = vunpack.c.h.b16 %v1358
        %v4885 = vunpack.c.l.b16 %v1359
        %v4886 = vunpack.c.h.b16 %v1359
        %v4887 = vunpack.c.l.b16 %v1360
        %v4888 = vunpack.c.h.b16 %v1360
        %v4889 = vunpack.c.l.b16 %v1361
        %v4890 = vunpack.c.h.b16 %v1361
        %v4891 = vunpack.c.l.b16 %v1362
        %v4892 = vunpack.c.h.b16 %v1362
        %v4893 = vunpack.c.l.b16 %v1363
        %v4894 = vunpack.c.h.b16 %v1363
        %v4895 = vunpack.c.l.b16 %v1364
        %v4896 = vunpack.c.h.b16 %v1364
        %v4897 = vunpack.c.l.b16 %v1365
        %v4898 = vunpack.c.h.b16 %v1365
        %v4899 = vunpack.c.l.b16 %v1366
        %v4900 = vunpack.c.h.b16 %v1366
        %v4901 = vunpack.c.l.b16 %v1367
        %v4902 = vunpack.c.h.b16 %v1367
        %v4903 = vunpack.c.l.b16 %v1368
        %v4904 = vunpack.c.h.b16 %v1368
        %v4905 = vunpack.c.l.b16 %v1369
        %v4906 = vunpack.c.h.b16 %v1369
        %v4907 = vunpack.c.l.b16 %v1370
        %v4908 = vunpack.c.h.b16 %v1370
        %v4909 = vunpack.c.l.b16 %v1371
        %v4910 = vunpack.c.h.b16 %v1371
        %v4911 = vunpack.c.l.b16 %v1372
        %v4912 = vunpack.c.h.b16 %v1372
        %v4913 = vunpack.c.l.b16 %v1373
        %v4914 = vunpack.c.h.b16 %v1373
        %v4915 = vunpack.c.l.b16 %v1374
        %v4916 = vunpack.c.h.b16 %v1374
        %v4917 = vunpack.c.l.b16 %v1375
        %v4918 = vunpack.c.h.b16 %v1375
        %v4919 = vunpack.c.l.b16 %v1376
        %v4920 = vunpack.c.h.b16 %v1376
        %v4921 = vunpack.c.l.b16 %v1377
        %v4922 = vunpack.c.h.b16 %v1377
        %v4923 = vunpack.c.l.b16 %v1378
        %v4924 = vunpack.c.h.b16 %v1378
        %v4925 = vunpack.c.l.b16 %v1379
        %v4926 = vunpack.c.h.b16 %v1379
        %v4927 = vunpack.c.l.b16 %v1380
        %v4928 = vunpack.c.h.b16 %v1380
        %v4929 = vunpack.c.l.b16 %v1381
        %v4930 = vunpack.c.h.b16 %v1381
        %v4931 = vunpack.c.l.b16 %v1382
        %v4932 = vunpack.c.h.b16 %v1382
        %v4933 = vunpack.c.l.b16 %v1383
        %v4934 = vunpack.c.h.b16 %v1383
        %v4935 = vunpack.c.l.b16 %v1384
        %v4936 = vunpack.c.h.b16 %v1384
        %v4937 = vunpack.c.l.b16 %v1385
        %v4938 = vunpack.c.h.b16 %v1385
        %v4939 = vunpack.c.l.b16 %v1386
        %v4940 = vunpack.c.h.b16 %v1386
        %v4941 = vunpack.c.l.b16 %v1387
        %v4942 = vunpack.c.h.b16 %v1387
        %v4943 = vunpack.c.l.b16 %v1388
        %v4944 = vunpack.c.h.b16 %v1388
        %v4945 = vunpack.c.l.b16 %v1389
        %v4946 = vunpack.c.h.b16 %v1389
        %v4947 = vunpack.c.l.b16 %v1390
        %v4948 = vunpack.c.h.b16 %v1390
        %v4949 = vunpack.c.l.b16 %v1391
        %v4950 = vunpack.c.h.b16 %v1391
        %v4951 = vunpack.c.l.b16 %v1392
        %v4952 = vunpack.c.h.b16 %v1392
        %v4953 = vunpack.c.l.b16 %v1393
        %v4954 = vunpack.c.h.b16 %v1393
        %v4955 = vunpack.c.l.b16 %v1394
        %v4956 = vunpack.c.h.b16 %v1394
        %v4957 = vunpack.c.l.b16 %v1395
        %v4958 = vunpack.c.h.b16 %v1395
        %v4959 = vunpack.c.l.b16 %v1396
        %v4960 = vunpack.c.h.b16 %v1396
        %v4961 = vunpack.c.l.b16 %v1397
        %v4962 = vunpack.c.h.b16 %v1397
        %v4963 = vunpack.c.l.b16 %v1398
        %v4964 = vunpack.c.h.b16 %v1398
        %v4965 = vunpack.c.l.b16 %v1399
        %v4966 = vunpack.c.h.b16 %v1399
        %v4967 = vunpack.c.l.b16 %v1400
        %v4968 = vunpack.c.h.b16 %v1400
        %v4969 = vunpack.c.l.b16 %v1401
        %v4970 = vunpack.c.h.b16 %v1401
        %v4971 = vunpack.c.l.b16 %v1402
        %v4972 = vunpack.c.h.b16 %v1402
        %v4973 = vunpack.c.l.b16 %v1403
        %v4974 = vunpack.c.h.b16 %v1403
        %v4975 = vunpack.c.l.b16 %v1404
        %v4976 = vunpack.c.h.b16 %v1404
        %v4977 = vunpack.c.l.b16 %v1405
        %v4978 = vunpack.c.h.b16 %v1405
        %v4979 = vunpack.c.l.b16 %v1406
        %v4980 = vunpack.c.h.b16 %v1406
        %v4981 = vunpack.c.l.b16 %v1407
        %v4982 = vunpack.c.h.b16 %v1407
        %v4983 = vunpack.c.l.b16 %v1408
        %v4984 = vunpack.c.h.b16 %v1408
        %v4985 = vunpack.c.l.b16 %v1409
        %v4986 = vunpack.c.h.b16 %v1409
        %v4987 = vunpack.c.l.b16 %v1410
        %v4988 = vunpack.c.h.b16 %v1410
        %v4989 = vunpack.c.l.b16 %v1411
        %v4990 = vunpack.c.h.b16 %v1411
        %v4991 = vunpack.c.l.b16 %v1412
        %v4992 = vunpack.c.h.b16 %v1412
        %v4993 = vunpack.c.l.b16 %v1413
        %v4994 = vunpack.c.h.b16 %v1413
        %v4995 = vunpack.c.l.b16 %v1414
        %v4996 = vunpack.c.h.b16 %v1414
        %v4997 = vunpack.c.l.b16 %v1415
        %v4998 = vunpack.c.h.b16 %v1415
        %v4999 = vunpack.c.l.b16 %v1416
        %v5000 = vunpack.c.h.b16 %v1416
        %v5001 = vunpack.c.l.b16 %v1417
        %v5002 = vunpack.c.h.b16 %v1417
        %v5003 = vunpack.c.l.b16 %v1418
        %v5004 = vunpack.c.h.b16 %v1418
        %v5005 = vunpack.c.l.b16 %v1419
        %v5006 = vunpack.c.h.b16 %v1419
        %v5007 = vunpack.c.l.b16 %v1420
        %v5008 = vunpack.c.h.b16 %v1420
        %v5009 = vunpack.c.l.b16 %v1421
        %v5010 = vunpack.c.h.b16 %v1421
        %v5011 = vunpack.c.l.b16 %v1422
        %v5012 = vunpack.c.h.b16 %v1422
        %v5013 = vunpack.c.l.b16 %v1423
        %v5014 = vunpack.c.h.b16 %v1423
        %v5015 = vunpack.c.l.b16 %v1424
        %v5016 = vunpack.c.h.b16 %v1424
        %v5017 = vunpack.c.l.b16 %v1425
        %v5018 = vunpack.c.h.b16 %v1425
        %v5019 = vunpack.c.l.b16 %v1426
        %v5020 = vunpack.c.h.b16 %v1426
        %v5021 = vunpack.c.l.b16 %v1427
        %v5022 = vunpack.c.h.b16 %v1427
        %v5023 = vunpack.c.l.b16 %v1428
        %v5024 = vunpack.c.h.b16 %v1428
        %v5025 = vunpack.c.l.b16 %v1429
        %v5026 = vunpack.c.h.b16 %v1429
        %v5027 = vunpack.c.l.b16 %v1430
        %v5028 = vunpack.c.h.b16 %v1430
        %v5029 = vunpack.c.l.b16 %v1431
        %v5030 = vunpack.c.h.b16 %v1431
        %v5031 = vunpack.c.l.b16 %v1432
        %v5032 = vunpack.c.h.b16 %v1432
        %v5033 = vunpack.c.l.b16 %v1433
        %v5034 = vunpack.c.h.b16 %v1433
        %v5035 = vunpack.c.l.b16 %v1434
        %v5036 = vunpack.c.h.b16 %v1434
        %v5037 = vunpack.c.l.b16 %v1435
        %v5038 = vunpack.c.h.b16 %v1435
        %v5039 = vunpack.c.l.b16 %v1436
        %v5040 = vunpack.c.h.b16 %v1436
        %v5041 = vunpack.c.l.b16 %v1437
        %v5042 = vunpack.c.h.b16 %v1437
        %v5043 = vunpack.c.l.b16 %v1438
        %v5044 = vunpack.c.h.b16 %v1438
        %v5045 = vunpack.c.l.b16 %v1439
        %v5046 = vunpack.c.h.b16 %v1439
        %v5047 = vunpack.c.l.b16 %v1440
        %v5048 = vunpack.c.h.b16 %v1440
        %v5049 = vunpack.c.l.b16 %v1441
        %v5050 = vunpack.c.h.b16 %v1441
        %v5051 = vunpack.c.l.b16 %v1442
        %v5052 = vunpack.c.h.b16 %v1442
        %v5053 = vunpack.c.l.b16 %v1443
        %v5054 = vunpack.c.h.b16 %v1443
        %v5055 = vunpack.c.l.b16 %v1444
        %v5056 = vunpack.c.h.b16 %v1444
        %v5057 = vunpack.c.l.b16 %v1445
        %v5058 = vunpack.c.h.b16 %v1445
        %v5059 = vunpack.c.l.b16 %v1446
        %v5060 = vunpack.c.h.b16 %v1446
        %v5061 = vunpack.c.l.b16 %v1447
        %v5062 = vunpack.c.h.b16 %v1447
        %v5063 = vunpack.c.l.b16 %v1448
        %v5064 = vunpack.c.h.b16 %v1448
        %v5065 = vunpack.c.l.b16 %v1449
        %v5066 = vunpack.c.h.b16 %v1449
        %v5067 = vunpack.c.l.b16 %v1450
        %v5068 = vunpack.c.h.b16 %v1450
        %v5069 = vunpack.c.l.b16 %v1451
        %v5070 = vunpack.c.h.b16 %v1451
        %v5071 = vunpack.c.l.b16 %v1452
        %v5072 = vunpack.c.h.b16 %v1452
        %v5073 = vunpack.c.l.b16 %v1453
        %v5074 = vunpack.c.h.b16 %v1453
        %v5075 = vunpack.c.l.b16 %v1454
        %v5076 = vunpack.c.h.b16 %v1454
        %v5077 = vunpack.c.l.b16 %v1455
        %v5078 = vunpack.c.h.b16 %v1455
        %v5079 = vunpack.c.l.b16 %v1456
        %v5080 = vunpack.c.h.b16 %v1456
        %v5081 = vunpack.c.l.b16 %v1457
        %v5082 = vunpack.c.h.b16 %v1457
        %v5083 = vunpack.c.l.b16 %v1458
        %v5084 = vunpack.c.h.b16 %v1458
        %v5085 = vunpack.c.l.b16 %v1459
        %v5086 = vunpack.c.h.b16 %v1459
        %v5087 = vunpack.c.l.b16 %v1460
        %v5088 = vunpack.c.h.b16 %v1460
        %v5089 = vunpack.c.l.b16 %v1461
        %v5090 = vunpack.c.h.b16 %v1461
        %v5091 = vunpack.c.l.b16 %v1462
        %v5092 = vunpack.c.h.b16 %v1462
        %v5093 = vunpack.c.l.b16 %v1463
        %v5094 = vunpack.c.h.b16 %v1463
        %v5095 = vunpack.c.l.b16 %v1464
        %v5096 = vunpack.c.h.b16 %v1464
        %v5097 = vunpack.c.l.b16 %v1465
        %v5098 = vunpack.c.h.b16 %v1465
        %v5099 = vunpack.c.l.b16 %v1466
        %v5100 = vunpack.c.h.b16 %v1466
        %v5101 = vunpack.c.l.b16 %v1467
        %v5102 = vunpack.c.h.b16 %v1467
        %v5103 = vunpack.c.l.b16 %v1468
        %v5104 = vunpack.c.h.b16 %v1468
        %v5105 = vunpack.c.l.b16 %v1469
        %v5106 = vunpack.c.h.b16 %v1469
        %v5107 = vunpack.c.l.b16 %v1470
        %v5108 = vunpack.c.h.b16 %v1470
        %v5109 = vunpack.c.l.b16 %v1471
        %v5110 = vunpack.c.h.b16 %v1471
        %v5111 = vunpack.c.l.b16 %v1472
        %v5112 = vunpack.c.h.b16 %v1472
        %v5113 = vunpack.c.l.b16 %v1473
        %v5114 = vunpack.c.h.b16 %v1473
        %v5115 = vunpack.c.l.b16 %v1474
        %v5116 = vunpack.c.h.b16 %v1474
        %v5117 = vunpack.c.l.b16 %v1475
        %v5118 = vunpack.c.h.b16 %v1475
        %v5119 = vunpack.c.l.b16 %v1476
        %v5120 = vunpack.c.h.b16 %v1476
        %v5121 = vunpack.c.l.b16 %v1477
        %v5122 = vunpack.c.h.b16 %v1477
        %v5123 = vunpack.c.l.b16 %v1478
        %v5124 = vunpack.c.h.b16 %v1478
        %v5125 = vunpack.c.l.b16 %v1479
        %v5126 = vunpack.c.h.b16 %v1479
        %v5127 = vunpack.c.l.b16 %v1480
        %v5128 = vunpack.c.h.b16 %v1480
        %v5129 = vunpack.c.l.b16 %v1481
        %v5130 = vunpack.c.h.b16 %v1481
        %v5131 = vunpack.c.l.b16 %v1482
        %v5132 = vunpack.c.h.b16 %v1482
        %v5133 = vunpack.c.l.b16 %v1483
        %v5134 = vunpack.c.h.b16 %v1483
        %v5135 = vunpack.c.l.b16 %v1484
        %v5136 = vunpack.c.h.b16 %v1484
        %v5137 = vunpack.c.l.b16 %v1485
        %v5138 = vunpack.c.h.b16 %v1485
        %v5139 = vunpack.c.l.b16 %v1486
        %v5140 = vunpack.c.h.b16 %v1486
        %v5141 = vunpack.c.l.b16 %v1487
        %v5142 = vunpack.c.h.b16 %v1487
        %v5143 = vunpack.c.l.b16 %v1488
        %v5144 = vunpack.c.h.b16 %v1488
        %v5145 = vunpack.c.l.b16 %v1489
        %v5146 = vunpack.c.h.b16 %v1489
        %v5147 = vunpack.c.l.b16 %v1490
        %v5148 = vunpack.c.h.b16 %v1490
        %v5149 = vunpack.c.l.b16 %v1491
        %v5150 = vunpack.c.h.b16 %v1491
        %v5151 = vunpack.c.l.b16 %v1492
        %v5152 = vunpack.c.h.b16 %v1492
        %v5153 = vunpack.c.l.b16 %v1493
        %v5154 = vunpack.c.h.b16 %v1493
        %v5155 = vunpack.c.l.b16 %v1494
        %v5156 = vunpack.c.h.b16 %v1494
        %v5157 = vunpack.c.l.b16 %v1495
        %v5158 = vunpack.c.h.b16 %v1495
        %v5159 = vunpack.c.l.b16 %v1496
        %v5160 = vunpack.c.h.b16 %v1496
        %v5161 = vunpack.c.l.b16 %v1497
        %v5162 = vunpack.c.h.b16 %v1497
        %v5163 = vunpack.c.l.b16 %v1498
        %v5164 = vunpack.c.h.b16 %v1498
        %v5165 = vunpack.c.l.b16 %v1499
        %v5166 = vunpack.c.h.b16 %v1499
        %v5167 = vunpack.c.l.b16 %v1500
        %v5168 = vunpack.c.h.b16 %v1500
        %v5169 = vunpack.c.l.b16 %v1501
        %v5170 = vunpack.c.h.b16 %v1501
        %v5171 = vunpack.c.l.b16 %v1502
        %v5172 = vunpack.c.h.b16 %v1502
        %v5173 = vunpack.c.l.b16 %v1503
        %v5174 = vunpack.c.h.b16 %v1503
        %v5175 = vunpack.c.l.b16 %v1504
        %v5176 = vunpack.c.h.b16 %v1504
        %v5177 = vunpack.c.l.b16 %v1505
        %v5178 = vunpack.c.h.b16 %v1505
        %v5179 = vunpack.c.l.b16 %v1506
        %v5180 = vunpack.c.h.b16 %v1506
        %v5181 = vunpack.c.l.b16 %v1507
        %v5182 = vunpack.c.h.b16 %v1507
        %v5183 = vunpack.c.l.b16 %v1508
        %v5184 = vunpack.c.h.b16 %v1508
        %v5185 = vunpack.c.l.b16 %v1509
        %v5186 = vunpack.c.h.b16 %v1509
        %v5187 = vunpack.c.l.b16 %v1510
        %v5188 = vunpack.c.h.b16 %v1510
        %v5189 = vunpack.c.l.b16 %v1511
        %v5190 = vunpack.c.h.b16 %v1511
        %v5191 = vunpack.c.l.b16 %v1512
        %v5192 = vunpack.c.h.b16 %v1512
        %v5193 = vunpack.c.l.b16 %v1513
        %v5194 = vunpack.c.h.b16 %v1513
        %v5195 = vunpack.c.l.b16 %v1514
        %v5196 = vunpack.c.h.b16 %v1514
        %v5197 = vunpack.c.l.b16 %v1515
        %v5198 = vunpack.c.h.b16 %v1515
        %v5199 = vunpack.c.l.b16 %v1516
        %v5200 = vunpack.c.h.b16 %v1516
        %v5201 = vunpack.c.l.b16 %v1517
        %v5202 = vunpack.c.h.b16 %v1517
        %v5203 = vunpack.c.l.b16 %v1518
        %v5204 = vunpack.c.h.b16 %v1518
        %v5205 = vunpack.c.l.b16 %v1519
        %v5206 = vunpack.c.h.b16 %v1519
        %v5207 = vunpack.c.l.b16 %v1520
        %v5208 = vunpack.c.h.b16 %v1520
        %v5209 = vunpack.c.l.b16 %v1521
        %v5210 = vunpack.c.h.b16 %v1521
        %v5211 = vunpack.c.l.b16 %v1522
        %v5212 = vunpack.c.h.b16 %v1522
        %v5213 = vunpack.c.l.b16 %v1523
        %v5214 = vunpack.c.h.b16 %v1523
        %v5215 = vunpack.c.l.b16 %v1524
        %v5216 = vunpack.c.h.b16 %v1524
        %v5217 = vunpack.c.l.b16 %v1525
        %v5218 = vunpack.c.h.b16 %v1525
        %v5219 = vunpack.c.l.b16 %v1526
        %v5220 = vunpack.c.h.b16 %v1526
        %v5221 = vunpack.c.l.b16 %v1527
        %v5222 = vunpack.c.h.b16 %v1527
        %v5223 = vunpack.c.l.b16 %v1528
        %v5224 = vunpack.c.h.b16 %v1528
        %v5225 = vunpack.c.l.b16 %v1529
        %v5226 = vunpack.c.h.b16 %v1529
        %v5227 = vunpack.c.l.b16 %v1530
        %v5228 = vunpack.c.h.b16 %v1530
        %v5229 = vunpack.c.l.b16 %v1531
        %v5230 = vunpack.c.h.b16 %v1531
        %v5231 = vunpack.c.l.b16 %v1532
        %v5232 = vunpack.c.h.b16 %v1532
        %v5233 = vunpack.c.l.b16 %v1533
        %v5234 = vunpack.c.h.b16 %v1533
        %v5235 = vunpack.c.l.b16 %v1534
        %v5236 = vunpack.c.h.b16 %v1534
        %v5237 = vunpack.c.l.b16 %v1535
        %v5238 = vunpack.c.h.b16 %v1535
        %v5239 = vunpack.c.l.b16 %v1536
        %v5240 = vunpack.c.h.b16 %v1536
        %v5241 = vunpack.c.l.b16 %v1537
        %v5242 = vunpack.c.h.b16 %v1537
        %v5243 = vunpack.c.l.b16 %v1538
        %v5244 = vunpack.c.h.b16 %v1538
        %v5245 = vunpack.c.l.b16 %v1539
        %v5246 = vunpack.c.h.b16 %v1539
        %v5247 = vunpack.c.l.b16 %v1540
        %v5248 = vunpack.c.h.b16 %v1540
        %v5249 = vunpack.c.l.b16 %v1541
        %v5250 = vunpack.c.h.b16 %v1541
        %v5251 = vunpack.c.l.b16 %v1542
        %v5252 = vunpack.c.h.b16 %v1542
        %v5253 = vunpack.c.l.b16 %v1543
        %v5254 = vunpack.c.h.b16 %v1543
        %v5255 = vunpack.c.l.b16 %v1544
        %v5256 = vunpack.c.h.b16 %v1544
        %v5257 = vunpack.c.l.b16 %v1545
        %v5258 = vunpack.c.h.b16 %v1545
        %v5259 = vunpack.c.l.b16 %v1546
        %v5260 = vunpack.c.h.b16 %v1546
        %v5261 = vunpack.c.l.b16 %v1547
        %v5262 = vunpack.c.h.b16 %v1547
        %v5263 = vunpack.c.l.b16 %v1548
        %v5264 = vunpack.c.h.b16 %v1548
        %v5265 = vunpack.c.l.b16 %v1549
        %v5266 = vunpack.c.h.b16 %v1549
        %v5267 = vunpack.c.l.b16 %v1550
        %v5268 = vunpack.c.h.b16 %v1550
        %v5269 = vunpack.c.l.b16 %v1551
        %v5270 = vunpack.c.h.b16 %v1551
        %v5271 = vunpack.c.l.b16 %v1552
        %v5272 = vunpack.c.h.b16 %v1552
        %v5273 = vunpack.c.l.b16 %v1553
        %v5274 = vunpack.c.h.b16 %v1553
        %v5275 = vunpack.c.l.b16 %v1554
        %v5276 = vunpack.c.h.b16 %v1554
        %v5277 = vunpack.c.l.b16 %v1555
        %v5278 = vunpack.c.h.b16 %v1555
        %v5279 = vunpack.c.l.b16 %v1556
        %v5280 = vunpack.c.h.b16 %v1556
        %v5281 = vunpack.c.l.b16 %v1557
        %v5282 = vunpack.c.h.b16 %v1557
        %v5283 = vunpack.c.l.b16 %v1558
        %v5284 = vunpack.c.h.b16 %v1558
        %v5285 = vunpack.c.l.b16 %v1559
        %v5286 = vunpack.c.h.b16 %v1559
        %v5287 = vunpack.c.l.b16 %v1560
        %v5288 = vunpack.c.h.b16 %v1560
        %v5289 = vunpack.c.l.b16 %v1561
        %v5290 = vunpack.c.h.b16 %v1561
        %v5291 = vunpack.c.l.b16 %v1562
        %v5292 = vunpack.c.h.b16 %v1562
        %v5293 = vunpack.c.l.b16 %v1563
        %v5294 = vunpack.c.h.b16 %v1563
        %v5295 = vunpack.c.l.b16 %v1564
        %v5296 = vunpack.c.h.b16 %v1564
        %v5297 = vunpack.c.l.b16 %v1565
        %v5298 = vunpack.c.h.b16 %v1565
        %v5299 = vunpack.c.l.b16 %v1566
        %v5300 = vunpack.c.h.b16 %v1566
        %v5301 = vunpack.c.l.b16 %v1567
        %v5302 = vunpack.c.h.b16 %v1567
        %v5303 = vunpack.c.l.b16 %v1568
        %v5304 = vunpack.c.h.b16 %v1568
        %v5305 = vunpack.c.l.b16 %v1569
        %v5306 = vunpack.c.h.b16 %v1569
        %v5307 = vunpack.c.l.b16 %v1570
        %v5308 = vunpack.c.h.b16 %v1570
        %v5309 = vunpack.c.l.b16 %v1571
        %v5310 = vunpack.c.h.b16 %v1571
        %v5311 = vunpack.c.l.b16 %v1572
        %v5312 = vunpack.c.h.b16 %v1572
        %v5313 = vunpack.c.l.b16 %v1573
        %v5314 = vunpack.c.h.b16 %v1573
        %v5315 = vunpack.c.l.b16 %v1574
        %v5316 = vunpack.c.h.b16 %v1574
        %v5317 = vunpack.c.l.b16 %v1575
        %v5318 = vunpack.c.h.b16 %v1575
        %v5319 = vunpack.c.l.b16 %v1576
        %v5320 = vunpack.c.h.b16 %v1576
        %v5321 = vunpack.c.l.b16 %v1577
        %v5322 = vunpack.c.h.b16 %v1577
        %v5323 = vunpack.c.l.b16 %v1578
        %v5324 = vunpack.c.h.b16 %v1578
        %v5325 = vunpack.c.l.b16 %v1579
        %v5326 = vunpack.c.h.b16 %v1579
        %v5327 = vunpack.c.l.b16 %v1580
        %v5328 = vunpack.c.h.b16 %v1580
        %v5329 = vunpack.c.l.b16 %v1581
        %v5330 = vunpack.c.h.b16 %v1581
        %v5331 = vunpack.c.l.b16 %v1582
        %v5332 = vunpack.c.h.b16 %v1582
        %v5333 = vunpack.c.l.b16 %v1583
        %v5334 = vunpack.c.h.b16 %v1583
        %v5335 = vunpack.c.l.b16 %v1584
        %v5336 = vunpack.c.h.b16 %v1584
        %v5337 = vunpack.c.l.b16 %v1585
        %v5338 = vunpack.c.h.b16 %v1585
        %v5339 = vunpack.c.l.b16 %v1586
        %v5340 = vunpack.c.h.b16 %v1586
        %v5341 = vunpack.c.l.b16 %v1587
        %v5342 = vunpack.c.h.b16 %v1587
        %v5343 = vunpack.c.l.b16 %v1588
        %v5344 = vunpack.c.h.b16 %v1588
        %v5345 = vunpack.c.l.b16 %v1589
        %v5346 = vunpack.c.h.b16 %v1589
        %v5347 = vunpack.c.l.b16 %v1590
        %v5348 = vunpack.c.h.b16 %v1590
        %v5349 = vunpack.c.l.b16 %v1591
        %v5350 = vunpack.c.h.b16 %v1591
        %v5351 = vunpack.c.l.b16 %v1592
        %v5352 = vunpack.c.h.b16 %v1592
        %v5353 = vunpack.c.l.b16 %v1593
        %v5354 = vunpack.c.h.b16 %v1593
        %v5355 = vunpack.c.l.b16 %v1594
        %v5356 = vunpack.c.h.b16 %v1594
        %v5357 = vunpack.c.l.b16 %v1595
        %v5358 = vunpack.c.h.b16 %v1595
        %v5359 = vunpack.c.l.b16 %v1596
        %v5360 = vunpack.c.h.b16 %v1596
        %v5361 = vunpack.c.l.b16 %v1597
        %v5362 = vunpack.c.h.b16 %v1597
        %v5363 = vunpack.c.l.b16 %v1598
        %v5364 = vunpack.c.h.b16 %v1598
        %v5365 = vunpack.c.l.b16 %v1599
        %v5366 = vunpack.c.h.b16 %v1599
        %v5367 = vunpack.c.l.b16 %v1600
        %v5368 = vunpack.c.h.b16 %v1600
        %v5369 = vunpack.c.l.b16 %v1601
        %v5370 = vunpack.c.h.b16 %v1601
        %v5371 = vunpack.c.l.b16 %v1602
        %v5372 = vunpack.c.h.b16 %v1602
        %v5373 = vunpack.c.l.b16 %v1603
        %v5374 = vunpack.c.h.b16 %v1603
        %v5375 = vunpack.c.l.b16 %v1604
        %v5376 = vunpack.c.h.b16 %v1604
        %v5377 = vunpack.c.l.b16 %v1605
        %v5378 = vunpack.c.h.b16 %v1605
        %v5379 = vunpack.c.l.b16 %v1606
        %v5380 = vunpack.c.h.b16 %v1606
        %v5381 = vunpack.c.l.b16 %v1607
        %v5382 = vunpack.c.h.b16 %v1607
        %v5383 = vunpack.c.l.b16 %v1608
        %v5384 = vunpack.c.h.b16 %v1608
        %v5385 = vunpack.c.l.b16 %v1609
        %v5386 = vunpack.c.h.b16 %v1609
        %v5387 = vunpack.c.l.b16 %v1610
        %v5388 = vunpack.c.h.b16 %v1610
        %v5389 = vunpack.c.l.b16 %v1611
        %v5390 = vunpack.c.h.b16 %v1611
        %v5391 = vunpack.c.l.b16 %v1612
        %v5392 = vunpack.c.h.b16 %v1612
        %v5393 = vunpack.c.l.b16 %v1613
        %v5394 = vunpack.c.h.b16 %v1613
        %v5395 = vunpack.c.l.b16 %v1614
        %v5396 = vunpack.c.h.b16 %v1614
        %v5397 = vunpack.c.l.b16 %v1615
        %v5398 = vunpack.c.h.b16 %v1615
        %v5399 = vunpack.c.l.b16 %v1616
        %v5400 = vunpack.c.h.b16 %v1616
        %v5401 = vunpack.c.l.b16 %v1617
        %v5402 = vunpack.c.h.b16 %v1617
        %v5403 = vunpack.c.l.b16 %v1618
        %v5404 = vunpack.c.h.b16 %v1618
        %v5405 = vunpack.c.l.b16 %v1619
        %v5406 = vunpack.c.h.b16 %v1619
        %v5407 = vunpack.c.l.b16 %v1620
        %v5408 = vunpack.c.h.b16 %v1620
        %v5409 = vunpack.c.l.b16 %v1621
        %v5410 = vunpack.c.h.b16 %v1621
        %v5411 = vunpack.c.l.b16 %v1622
        %v5412 = vunpack.c.h.b16 %v1622
        %v5413 = vunpack.c.l.b16 %v1623
        %v5414 = vunpack.c.h.b16 %v1623
        %v5415 = vunpack.c.l.b16 %v1624
        %v5416 = vunpack.c.h.b16 %v1624
        %v5417 = vunpack.c.l.b16 %v1625
        %v5418 = vunpack.c.h.b16 %v1625
        %v5419 = vunpack.c.l.b16 %v1626
        %v5420 = vunpack.c.h.b16 %v1626
        %v5421 = vunpack.c.l.b16 %v1627
        %v5422 = vunpack.c.h.b16 %v1627
        %v5423 = vunpack.c.l.b16 %v1628
        %v5424 = vunpack.c.h.b16 %v1628
        %v5425 = vunpack.c.l.b16 %v1629
        %v5426 = vunpack.c.h.b16 %v1629
        %v5427 = vunpack.c.l.b16 %v1630
        %v5428 = vunpack.c.h.b16 %v1630
        %v5429 = vunpack.c.l.b16 %v1631
        %v5430 = vunpack.c.h.b16 %v1631
        %v5431 = vunpack.c.l.b16 %v1632
        %v5432 = vunpack.c.h.b16 %v1632
        %v5433 = vunpack.c.l.b16 %v1633
        %v5434 = vunpack.c.h.b16 %v1633
        %v5435 = vunpack.c.l.b16 %v1634
        %v5436 = vunpack.c.h.b16 %v1634
        %v5437 = vunpack.c.l.b16 %v1635
        %v5438 = vunpack.c.h.b16 %v1635
        %v5439 = vunpack.c.l.b16 %v1636
        %v5440 = vunpack.c.h.b16 %v1636
        %v5441 = vunpack.c.l.b16 %v1637
        %v5442 = vunpack.c.h.b16 %v1637
        %v5443 = vunpack.c.l.b16 %v1638
        %v5444 = vunpack.c.h.b16 %v1638
        %v5445 = vunpack.c.l.b16 %v1639
        %v5446 = vunpack.c.h.b16 %v1639
        %v5447 = vunpack.c.l.b16 %v1640
        %v5448 = vunpack.c.h.b16 %v1640
        %v5449 = vunpack.c.l.b16 %v1641
        %v5450 = vunpack.c.h.b16 %v1641
        %v5451 = vunpack.c.l.b16 %v1642
        %v5452 = vunpack.c.h.b16 %v1642
        %v5453 = vunpack.c.l.b16 %v1643
        %v5454 = vunpack.c.h.b16 %v1643
        %v5455 = vunpack.c.l.b16 %v1644
        %v5456 = vunpack.c.h.b16 %v1644
        %v5457 = vunpack.c.l.b16 %v1645
        %v5458 = vunpack.c.h.b16 %v1645
        %v5459 = vunpack.c.l.b16 %v1646
        %v5460 = vunpack.c.h.b16 %v1646
        %v5461 = vunpack.c.l.b16 %v1647
        %v5462 = vunpack.c.h.b16 %v1647
        %v5463 = vunpack.c.l.b16 %v1648
        %v5464 = vunpack.c.h.b16 %v1648
        %v5465 = vunpack.c.l.b16 %v1649
        %v5466 = vunpack.c.h.b16 %v1649
        %v5467 = vunpack.c.l.b16 %v1650
        %v5468 = vunpack.c.h.b16 %v1650
        %v5469 = vunpack.c.l.b16 %v1651
        %v5470 = vunpack.c.h.b16 %v1651
        %v5471 = vunpack.c.l.b16 %v1652
        %v5472 = vunpack.c.h.b16 %v1652
        %v5473 = vunpack.c.l.b16 %v1653
        %v5474 = vunpack.c.h.b16 %v1653
        %v5475 = vunpack.c.l.b16 %v1654
        %v5476 = vunpack.c.h.b16 %v1654
        %v5477 = vunpack.c.l.b16 %v1655
        %v5478 = vunpack.c.h.b16 %v1655
        %v5479 = vunpack.c.l.b16 %v1656
        %v5480 = vunpack.c.h.b16 %v1656
        %v5481 = vunpack.c.l.b16 %v1657
        %v5482 = vunpack.c.h.b16 %v1657
        %v5483 = vunpack.c.l.b16 %v1658
        %v5484 = vunpack.c.h.b16 %v1658
        %v5485 = vunpack.c.l.b16 %v1659
        %v5486 = vunpack.c.h.b16 %v1659
        %v5487 = vunpack.c.l.b16 %v1660
        %v5488 = vunpack.c.h.b16 %v1660
        %v5489 = vunpack.c.l.b16 %v1661
        %v5490 = vunpack.c.h.b16 %v1661
        %v5491 = vunpack.c.l.b16 %v1662
        %v5492 = vunpack.c.h.b16 %v1662
        %v5493 = vunpack.c.l.b16 %v1663
        %v5494 = vunpack.c.h.b16 %v1663
        %v5495 = vunpack.c.l.b16 %v1664
        %v5496 = vunpack.c.h.b16 %v1664
        %v5497 = vunpack.c.l.b16 %v1665
        %v5498 = vunpack.c.h.b16 %v1665
        %v5499 = vunpack.c.l.b16 %v1666
        %v5500 = vunpack.c.h.b16 %v1666
        %v5501 = vunpack.c.l.b16 %v1667
        %v5502 = vunpack.c.h.b16 %v1667
        %v5503 = vunpack.c.l.b16 %v1668
        %v5504 = vunpack.c.h.b16 %v1668
        %v5505 = vunpack.c.l.b16 %v1669
        %v5506 = vunpack.c.h.b16 %v1669
        %v5507 = vunpack.c.l.b16 %v1670
        %v5508 = vunpack.c.h.b16 %v1670
        %v5509 = vunpack.c.l.b16 %v1671
        %v5510 = vunpack.c.h.b16 %v1671
        %v5511 = vunpack.c.l.b16 %v1672
        %v5512 = vunpack.c.h.b16 %v1672
        %v5513 = vpack.c.b16 %v3481, %v3465
        %v5514 = vpack.c.b16 %v3482, %v3466
        %v5515 = vpack.c.b16 %v3483, %v3467
        %v5516 = vpack.c.b16 %v3484, %v3468
        %v5517 = vpack.c.b16 %v3485, %v3469
        %v5518 = vpack.c.b16 %v3486, %v3470
        %v5519 = vpack.c.b16 %v3487, %v3471
        %v5520 = vpack.c.b16 %v3488, %v3472
        %v5521 = vpack.c.b16 %v3489, %v3473
        %v5522 = vpack.c.b16 %v3490, %v3474
        %v5523 = vpack.c.b16 %v3491, %v3475
        %v5524 = vpack.c.b16 %v3492, %v3476
        %v5525 = vpack.c.b16 %v3493, %v3477
        %v5526 = vpack.c.b16 %v3494, %v3478
        %v5527 = vpack.c.b16 %v3495, %v3479
        %v5528 = vpack.c.b16 %v3496, %v3480
        %v5529 = vpack.c.b16 %v3513, %v3497
        %v5530 = vpack.c.b16 %v3514, %v3498
        %v5531 = vpack.c.b16 %v3515, %v3499
        %v5532 = vpack.c.b16 %v3516, %v3500
        %v5533 = vpack.c.b16 %v3517, %v3501
        %v5534 = vpack.c.b16 %v3518, %v3502
        %v5535 = vpack.c.b16 %v3519, %v3503
        %v5536 = vpack.c.b16 %v3520, %v3504
        %v5537 = vpack.c.b16 %v3521, %v3505
        %v5538 = vpack.c.b16 %v3522, %v3506
        %v5539 = vpack.c.b16 %v3523, %v3507
        %v5540 = vpack.c.b16 %v3524, %v3508
        %v5541 = vpack.c.b16 %v3525, %v3509
        %v5542 = vpack.c.b16 %v3526, %v3510
        %v5543 = vpack.c.b16 %v3527, %v3511
        %v5544 = vpack.c.b16 %v3528, %v3512
        %v5545 = vpack.c.b16 %v3545, %v3529
        %v5546 = vpack.c.b16 %v3546, %v3530
        %v5547 = vpack.c.b16 %v3547, %v3531
        %v5548 = vpack.c.b16 %v3548, %v3532
        %v5549 = vpack.c.b16 %v3549, %v3533
        %v5550 = vpack.c.b16 %v3550, %v3534
        %v5551 = vpack.c.b16 %v3551, %v3535
        %v5552 = vpack.c.b16 %v3552, %v3536
        %v5553 = vpack.c.b16 %v3553, %v3537
        %v5554 = vpack.c.b16 %v3554, %v3538
        %v5555 = vpack.c.b16 %v3555, %v3539
        %v5556 = vpack.c.b16 %v3556, %v3540
        %v5557 = vpack.c.b16 %v3557, %v3541
        %v5558 = vpack.c.b16 %v3558, %v3542
        %v5559 = vpack.c.b16 %v3559, %v3543
        %v5560 = vpack.c.b16 %v3560, %v3544
        %v5561 = vpack.c.b16 %v3577, %v3561
        %v5562 = vpack.c.b16 %v3578, %v3562
        %v5563 = vpack.c.b16 %v3579, %v3563
        %v5564 = vpack.c.b16 %v3580, %v3564
        %v5565 = vpack.c.b16 %v3581, %v3565
        %v5566 = vpack.c.b16 %v3582, %v3566
        %v5567 = vpack.c.b16 %v3583, %v3567
        %v5568 = vpack.c.b16 %v3584, %v3568
        %v5569 = vpack.c.b16 %v3585, %v3569
        %v5570 = vpack.c.b16 %v3586, %v3570
        %v5571 = vpack.c.b16 %v3587, %v3571
        %v5572 = vpack.c.b16 %v3588, %v3572
        %v5573 = vpack.c.b16 %v3589, %v3573
        %v5574 = vpack.c.b16 %v3590, %v3574
        %v5575 = vpack.c.b16 %v3591, %v3575
        %v5576 = vpack.c.b16 %v3592, %v3576
        %v5577 = vpack.c.b16 %v3609, %v3593
        %v5578 = vpack.c.b16 %v3610, %v3594
        %v5579 = vpack.c.b16 %v3611, %v3595
        %v5580 = vpack.c.b16 %v3612, %v3596
        %v5581 = vpack.c.b16 %v3613, %v3597
        %v5582 = vpack.c.b16 %v3614, %v3598
        %v5583 = vpack.c.b16 %v3615, %v3599
        %v5584 = vpack.c.b16 %v3616, %v3600
        %v5585 = vpack.c.b16 %v3617, %v3601
        %v5586 = vpack.c.b16 %v3618, %v3602
        %v5587 = vpack.c.b16 %v3619, %v3603
        %v5588 = vpack.c.b16 %v3620, %v3604
        %v5589 = vpack.c.b16 %v3621, %v3605
        %v5590 = vpack.c.b16 %v3622, %v3606
        %v5591 = vpack.c.b16 %v3623, %v3607
        %v5592 = vpack.c.b16 %v3624, %v3608
        %v5593 = vpack.c.b16 %v3641, %v3625
        %v5594 = vpack.c.b16 %v3642, %v3626
        %v5595 = vpack.c.b16 %v3643, %v3627
        %v5596 = vpack.c.b16 %v3644, %v3628
        %v5597 = vpack.c.b16 %v3645, %v3629
        %v5598 = vpack.c.b16 %v3646, %v3630
        %v5599 = vpack.c.b16 %v3647, %v3631
        %v5600 = vpack.c.b16 %v3648, %v3632
        %v5601 = vpack.c.b16 %v3649, %v3633
        %v5602 = vpack.c.b16 %v3650, %v3634
        %v5603 = vpack.c.b16 %v3651, %v3635
        %v5604 = vpack.c.b16 %v3652, %v3636
        %v5605 = vpack.c.b16 %v3653, %v3637
        %v5606 = vpack.c.b16 %v3654, %v3638
        %v5607 = vpack.c.b16 %v3655, %v3639
        %v5608 = vpack.c.b16 %v3656, %v3640
        %v5609 = vpack.c.b16 %v3673, %v3657
        %v5610 = vpack.c.b16 %v3674, %v3658
        %v5611 = vpack.c.b16 %v3675, %v3659
        %v5612 = vpack.c.b16 %v3676, %v3660
        %v5613 = vpack.c.b16 %v3677, %v3661
        %v5614 = vpack.c.b16 %v3678, %v3662
        %v5615 = vpack.c.b16 %v3679, %v3663
        %v5616 = vpack.c.b16 %v3680, %v3664
        %v5617 = vpack.c.b16 %v3681, %v3665
        %v5618 = vpack.c.b16 %v3682, %v3666
        %v5619 = vpack.c.b16 %v3683, %v3667
        %v5620 = vpack.c.b16 %v3684, %v3668
        %v5621 = vpack.c.b16 %v3685, %v3669
        %v5622 = vpack.c.b16 %v3686, %v3670
        %v5623 = vpack.c.b16 %v3687, %v3671
        %v5624 = vpack.c.b16 %v3688, %v3672
        %v5625 = vpack.c.b16 %v3705, %v3689
        %v5626 = vpack.c.b16 %v3706, %v3690
        %v5627 = vpack.c.b16 %v3707, %v3691
        %v5628 = vpack.c.b16 %v3708, %v3692
        %v5629 = vpack.c.b16 %v3709, %v3693
        %v5630 = vpack.c.b16 %v3710, %v3694
        %v5631 = vpack.c.b16 %v3711, %v3695
        %v5632 = vpack.c.b16 %v3712, %v3696
        %v5633 = vpack.c.b16 %v3713, %v3697
        %v5634 = vpack.c.b16 %v3714, %v3698
        %v5635 = vpack.c.b16 %v3715, %v3699
        %v5636 = vpack.c.b16 %v3716, %v3700
        %v5637 = vpack.c.b16 %v3717, %v3701
        %v5638 = vpack.c.b16 %v3718, %v3702
        %v5639 = vpack.c.b16 %v3719, %v3703
        %v5640 = vpack.c.b16 %v3720, %v3704
        %v5641 = vpack.c.b16 %v3737, %v3721
        %v5642 = vpack.c.b16 %v3738, %v3722
        %v5643 = vpack.c.b16 %v3739, %v3723
        %v5644 = vpack.c.b16 %v3740, %v3724
        %v5645 = vpack.c.b16 %v3741, %v3725
        %v5646 = vpack.c.b16 %v3742, %v3726
        %v5647 = vpack.c.b16 %v3743, %v3727
        %v5648 = vpack.c.b16 %v3744, %v3728
        %v5649 = vpack.c.b16 %v3745, %v3729
        %v5650 = vpack.c.b16 %v3746, %v3730
        %v5651 = vpack.c.b16 %v3747, %v3731
        %v5652 = vpack.c.b16 %v3748, %v3732
        %v5653 = vpack.c.b16 %v3749, %v3733
        %v5654 = vpack.c.b16 %v3750, %v3734
        %v5655 = vpack.c.b16 %v3751, %v3735
        %v5656 = vpack.c.b16 %v3752, %v3736
        %v5657 = vpack.c.b16 %v3769, %v3753
        %v5658 = vpack.c.b16 %v3770, %v3754
        %v5659 = vpack.c.b16 %v3771, %v3755
        %v5660 = vpack.c.b16 %v3772, %v3756
        %v5661 = vpack.c.b16 %v3773, %v3757
        %v5662 = vpack.c.b16 %v3774, %v3758
        %v5663 = vpack.c.b16 %v3775, %v3759
        %v5664 = vpack.c.b16 %v3776, %v3760
        %v5665 = vpack.c.b16 %v3777, %v3761
        %v5666 = vpack.c.b16 %v3778, %v3762
        %v5667 = vpack.c.b16 %v3779, %v3763
        %v5668 = vpack.c.b16 %v3780, %v3764
        %v5669 = vpack.c.b16 %v3781, %v3765
        %v5670 = vpack.c.b16 %v3782, %v3766
        %v5671 = vpack.c.b16 %v3783, %v3767
        %v5672 = vpack.c.b16 %v3784, %v3768
        %v5673 = vpack.c.b16 %v3801, %v3785
        %v5674 = vpack.c.b16 %v3802, %v3786
        %v5675 = vpack.c.b16 %v3803, %v3787
        %v5676 = vpack.c.b16 %v3804, %v3788
        %v5677 = vpack.c.b16 %v3805, %v3789
        %v5678 = vpack.c.b16 %v3806, %v3790
        %v5679 = vpack.c.b16 %v3807, %v3791
        %v5680 = vpack.c.b16 %v3808, %v3792
        %v5681 = vpack.c.b16 %v3809, %v3793
        %v5682 = vpack.c.b16 %v3810, %v3794
        %v5683 = vpack.c.b16 %v3811, %v3795
        %v5684 = vpack.c.b16 %v3812, %v3796
        %v5685 = vpack.c.b16 %v3813, %v3797
        %v5686 = vpack.c.b16 %v3814, %v3798
        %v5687 = vpack.c.b16 %v3815, %v3799
        %v5688 = vpack.c.b16 %v3816, %v3800
        %v5689 = vpack.c.b16 %v3833, %v3817
        %v5690 = vpack.c.b16 %v3834, %v3818
        %v5691 = vpack.c.b16 %v3835, %v3819
        %v5692 = vpack.c.b16 %v3836, %v3820
        %v5693 = vpack.c.b16 %v3837, %v3821
        %v5694 = vpack.c.b16 %v3838, %v3822
        %v5695 = vpack.c.b16 %v3839, %v3823
        %v5696 = vpack.c.b16 %v3840, %v3824
        %v5697 = vpack.c.b16 %v3841, %v3825
        %v5698 = vpack.c.b16 %v3842, %v3826
        %v5699 = vpack.c.b16 %v3843, %v3827
        %v5700 = vpack.c.b16 %v3844, %v3828
        %v5701 = vpack.c.b16 %v3845, %v3829
        %v5702 = vpack.c.b16 %v3846, %v3830
        %v5703 = vpack.c.b16 %v3847, %v3831
        %v5704 = vpack.c.b16 %v3848, %v3832
        %v5705 = vpack.c.b16 %v3865, %v3849
        %v5706 = vpack.c.b16 %v3866, %v3850
        %v5707 = vpack.c.b16 %v3867, %v3851
        %v5708 = vpack.c.b16 %v3868, %v3852
        %v5709 = vpack.c.b16 %v3869, %v3853
        %v5710 = vpack.c.b16 %v3870, %v3854
        %v5711 = vpack.c.b16 %v3871, %v3855
        %v5712 = vpack.c.b16 %v3872, %v3856
        %v5713 = vpack.c.b16 %v3873, %v3857
        %v5714 = vpack.c.b16 %v3874, %v3858
        %v5715 = vpack.c.b16 %v3875, %v3859
        %v5716 = vpack.c.b16 %v3876, %v3860
        %v5717 = vpack.c.b16 %v3877, %v3861
        %v5718 = vpack.c.b16 %v3878, %v3862
        %v5719 = vpack.c.b16 %v3879, %v3863
        %v5720 = vpack.c.b16 %v3880, %v3864
        %v5721 = vpack.c.b16 %v3897, %v3881
        %v5722 = vpack.c.b16 %v3898, %v3882
        %v5723 = vpack.c.b16 %v3899, %v3883
        %v5724 = vpack.c.b16 %v3900, %v3884
        %v5725 = vpack.c.b16 %v3901, %v3885
        %v5726 = vpack.c.b16 %v3902, %v3886
        %v5727 = vpack.c.b16 %v3903, %v3887
        %v5728 = vpack.c.b16 %v3904, %v3888
        %v5729 = vpack.c.b16 %v3905, %v3889
        %v5730 = vpack.c.b16 %v3906, %v3890
        %v5731 = vpack.c.b16 %v3907, %v3891
        %v5732 = vpack.c.b16 %v3908, %v3892
        %v5733 = vpack.c.b16 %v3909, %v3893
        %v5734 = vpack.c.b16 %v3910, %v3894
        %v5735 = vpack.c.b16 %v3911, %v3895
        %v5736 = vpack.c.b16 %v3912, %v3896
        %v5737 = vpack.c.b16 %v3929, %v3913
        %v5738 = vpack.c.b16 %v3930, %v3914
        %v5739 = vpack.c.b16 %v3931, %v3915
        %v5740 = vpack.c.b16 %v3932, %v3916
        %v5741 = vpack.c.b16 %v3933, %v3917
        %v5742 = vpack.c.b16 %v3934, %v3918
        %v5743 = vpack.c.b16 %v3935, %v3919
        %v5744 = vpack.c.b16 %v3936, %v3920
        %v5745 = vpack.c.b16 %v3937, %v3921
        %v5746 = vpack.c.b16 %v3938, %v3922
        %v5747 = vpack.c.b16 %v3939, %v3923
        %v5748 = vpack.c.b16 %v3940, %v3924
        %v5749 = vpack.c.b16 %v3941, %v3925
        %v5750 = vpack.c.b16 %v3942, %v3926
        %v5751 = vpack.c.b16 %v3943, %v3927
        %v5752 = vpack.c.b16 %v3944, %v3928
        %v5753 = vpack.c.b16 %v3961, %v3945
        %v5754 = vpack.c.b16 %v3962, %v3946
        %v5755 = vpack.c.b16 %v3963, %v3947
        %v5756 = vpack.c.b16 %v3964, %v3948
        %v5757 = vpack.c.b16 %v3965, %v3949
        %v5758 = vpack.c.b16 %v3966, %v3950
        %v5759 = vpack.c.b16 %v3967, %v3951
        %v5760 = vpack.c.b16 %v3968, %v3952
        %v5761 = vpack.c.b16 %v3969, %v3953
        %v5762 = vpack.c.b16 %v3970, %v3954
        %v5763 = vpack.c.b16 %v3971, %v3955
        %v5764 = vpack.c.b16 %v3972, %v3956
        %v5765 = vpack.c.b16 %v3973, %v3957
        %v5766 = vpack.c.b16 %v3974, %v3958
        %v5767 = vpack.c.b16 %v3975, %v3959
        %v5768 = vpack.c.b16 %v3976, %v3960
        %v5769 = vpack.c.b16 %v3993, %v3977
        %v5770 = vpack.c.b16 %v3994, %v3978
        %v5771 = vpack.c.b16 %v3995, %v3979
        %v5772 = vpack.c.b16 %v3996, %v3980
        %v5773 = vpack.c.b16 %v3997, %v3981
        %v5774 = vpack.c.b16 %v3998, %v3982
        %v5775 = vpack.c.b16 %v3999, %v3983
        %v5776 = vpack.c.b16 %v4000, %v3984
        %v5777 = vpack.c.b16 %v4001, %v3985
        %v5778 = vpack.c.b16 %v4002, %v3986
        %v5779 = vpack.c.b16 %v4003, %v3987
        %v5780 = vpack.c.b16 %v4004, %v3988
        %v5781 = vpack.c.b16 %v4005, %v3989
        %v5782 = vpack.c.b16 %v4006, %v3990
        %v5783 = vpack.c.b16 %v4007, %v3991
        %v5784 = vpack.c.b16 %v4008, %v3992
        %v5785 = vpack.c.b16 %v4025, %v4009
        %v5786 = vpack.c.b16 %v4026, %v4010
        %v5787 = vpack.c.b16 %v4027, %v4011
        %v5788 = vpack.c.b16 %v4028, %v4012
        %v5789 = vpack.c.b16 %v4029, %v4013
        %v5790 = vpack.c.b16 %v4030, %v4014
        %v5791 = vpack.c.b16 %v4031, %v4015
        %v5792 = vpack.c.b16 %v4032, %v4016
        %v5793 = vpack.c.b16 %v4033, %v4017
        %v5794 = vpack.c.b16 %v4034, %v4018
        %v5795 = vpack.c.b16 %v4035, %v4019
        %v5796 = vpack.c.b16 %v4036, %v4020
        %v5797 = vpack.c.b16 %v4037, %v4021
        %v5798 = vpack.c.b16 %v4038, %v4022
        %v5799 = vpack.c.b16 %v4039, %v4023
        %v5800 = vpack.c.b16 %v4040, %v4024
        %v5801 = vpack.c.b16 %v4057, %v4041
        %v5802 = vpack.c.b16 %v4058, %v4042
        %v5803 = vpack.c.b16 %v4059, %v4043
        %v5804 = vpack.c.b16 %v4060, %v4044
        %v5805 = vpack.c.b16 %v4061, %v4045
        %v5806 = vpack.c.b16 %v4062, %v4046
        %v5807 = vpack.c.b16 %v4063, %v4047
        %v5808 = vpack.c.b16 %v4064, %v4048
        %v5809 = vpack.c.b16 %v4065, %v4049
        %v5810 = vpack.c.b16 %v4066, %v4050
        %v5811 = vpack.c.b16 %v4067, %v4051
        %v5812 = vpack.c.b16 %v4068, %v4052
        %v5813 = vpack.c.b16 %v4069, %v4053
        %v5814 = vpack.c.b16 %v4070, %v4054
        %v5815 = vpack.c.b16 %v4071, %v4055
        %v5816 = vpack.c.b16 %v4072, %v4056
        %v5817 = vpack.c.b16 %v4089, %v4073
        %v5818 = vpack.c.b16 %v4090, %v4074
        %v5819 = vpack.c.b16 %v4091, %v4075
        %v5820 = vpack.c.b16 %v4092, %v4076
        %v5821 = vpack.c.b16 %v4093, %v4077
        %v5822 = vpack.c.b16 %v4094, %v4078
        %v5823 = vpack.c.b16 %v4095, %v4079
        %v5824 = vpack.c.b16 %v4096, %v4080
        %v5825 = vpack.c.b16 %v4097, %v4081
        %v5826 = vpack.c.b16 %v4098, %v4082
        %v5827 = vpack.c.b16 %v4099, %v4083
        %v5828 = vpack.c.b16 %v4100, %v4084
        %v5829 = vpack.c.b16 %v4101, %v4085
        %v5830 = vpack.c.b16 %v4102, %v4086
        %v5831 = vpack.c.b16 %v4103, %v4087
        %v5832 = vpack.c.b16 %v4104, %v4088
        %v5833 = vpack.c.b16 %v4121, %v4105
        %v5834 = vpack.c.b16 %v4122, %v4106
        %v5835 = vpack.c.b16 %v4123, %v4107
        %v5836 = vpack.c.b16 %v4124, %v4108
        %v5837 = vpack.c.b16 %v4125, %v4109
        %v5838 = vpack.c.b16 %v4126, %v4110
        %v5839 = vpack.c.b16 %v4127, %v4111
        %v5840 = vpack.c.b16 %v4128, %v4112
        %v5841 = vpack.c.b16 %v4129, %v4113
        %v5842 = vpack.c.b16 %v4130, %v4114
        %v5843 = vpack.c.b16 %v4131, %v4115
        %v5844 = vpack.c.b16 %v4132, %v4116
        %v5845 = vpack.c.b16 %v4133, %v4117
        %v5846 = vpack.c.b16 %v4134, %v4118
        %v5847 = vpack.c.b16 %v4135, %v4119
        %v5848 = vpack.c.b16 %v4136, %v4120
        %v5849 = vpack.c.b16 %v4153, %v4137
        %v5850 = vpack.c.b16 %v4154, %v4138
        %v5851 = vpack.c.b16 %v4155, %v4139
        %v5852 = vpack.c.b16 %v4156, %v4140
        %v5853 = vpack.c.b16 %v4157, %v4141
        %v5854 = vpack.c.b16 %v4158, %v4142
        %v5855 = vpack.c.b16 %v4159, %v4143
        %v5856 = vpack.c.b16 %v4160, %v4144
        %v5857 = vpack.c.b16 %v4161, %v4145
        %v5858 = vpack.c.b16 %v4162, %v4146
        %v5859 = vpack.c.b16 %v4163, %v4147
        %v5860 = vpack.c.b16 %v4164, %v4148
        %v5861 = vpack.c.b16 %v4165, %v4149
        %v5862 = vpack.c.b16 %v4166, %v4150
        %v5863 = vpack.c.b16 %v4167, %v4151
        %v5864 = vpack.c.b16 %v4168, %v4152
        %v5865 = vpack.c.b16 %v4185, %v4169
        %v5866 = vpack.c.b16 %v4186, %v4170
        %v5867 = vpack.c.b16 %v4187, %v4171
        %v5868 = vpack.c.b16 %v4188, %v4172
        %v5869 = vpack.c.b16 %v4189, %v4173
        %v5870 = vpack.c.b16 %v4190, %v4174
        %v5871 = vpack.c.b16 %v4191, %v4175
        %v5872 = vpack.c.b16 %v4192, %v4176
        %v5873 = vpack.c.b16 %v4193, %v4177
        %v5874 = vpack.c.b16 %v4194, %v4178
        %v5875 = vpack.c.b16 %v4195, %v4179
        %v5876 = vpack.c.b16 %v4196, %v4180
        %v5877 = vpack.c.b16 %v4197, %v4181
        %v5878 = vpack.c.b16 %v4198, %v4182
        %v5879 = vpack.c.b16 %v4199, %v4183
        %v5880 = vpack.c.b16 %v4200, %v4184
        %v5881 = vpack.c.b16 %v4217, %v4201
        %v5882 = vpack.c.b16 %v4218, %v4202
        %v5883 = vpack.c.b16 %v4219, %v4203
        %v5884 = vpack.c.b16 %v4220, %v4204
        %v5885 = vpack.c.b16 %v4221, %v4205
        %v5886 = vpack.c.b16 %v4222, %v4206
        %v5887 = vpack.c.b16 %v4223, %v4207
        %v5888 = vpack.c.b16 %v4224, %v4208
        %v5889 = vpack.c.b16 %v4225, %v4209
        %v5890 = vpack.c.b16 %v4226, %v4210
        %v5891 = vpack.c.b16 %v4227, %v4211
        %v5892 = vpack.c.b16 %v4228, %v4212
        %v5893 = vpack.c.b16 %v4229, %v4213
        %v5894 = vpack.c.b16 %v4230, %v4214
        %v5895 = vpack.c.b16 %v4231, %v4215
        %v5896 = vpack.c.b16 %v4232, %v4216
        %v5897 = vpack.c.b16 %v4249, %v4233
        %v5898 = vpack.c.b16 %v4250, %v4234
        %v5899 = vpack.c.b16 %v4251, %v4235
        %v5900 = vpack.c.b16 %v4252, %v4236
        %v5901 = vpack.c.b16 %v4253, %v4237
        %v5902 = vpack.c.b16 %v4254, %v4238
        %v5903 = vpack.c.b16 %v4255, %v4239
        %v5904 = vpack.c.b16 %v4256, %v4240
        %v5905 = vpack.c.b16 %v4257, %v4241
        %v5906 = vpack.c.b16 %v4258, %v4242
        %v5907 = vpack.c.b16 %v4259, %v4243
        %v5908 = vpack.c.b16 %v4260, %v4244
        %v5909 = vpack.c.b16 %v4261, %v4245
        %v5910 = vpack.c.b16 %v4262, %v4246
        %v5911 = vpack.c.b16 %v4263, %v4247
        %v5912 = vpack.c.b16 %v4264, %v4248
        %v5913 = vpack.c.b16 %v4281, %v4265
        %v5914 = vpack.c.b16 %v4282, %v4266
        %v5915 = vpack.c.b16 %v4283, %v4267
        %v5916 = vpack.c.b16 %v4284, %v4268
        %v5917 = vpack.c.b16 %v4285, %v4269
        %v5918 = vpack.c.b16 %v4286, %v4270
        %v5919 = vpack.c.b16 %v4287, %v4271
        %v5920 = vpack.c.b16 %v4288, %v4272
        %v5921 = vpack.c.b16 %v4289, %v4273
        %v5922 = vpack.c.b16 %v4290, %v4274
        %v5923 = vpack.c.b16 %v4291, %v4275
        %v5924 = vpack.c.b16 %v4292, %v4276
        %v5925 = vpack.c.b16 %v4293, %v4277
        %v5926 = vpack.c.b16 %v4294, %v4278
        %v5927 = vpack.c.b16 %v4295, %v4279
        %v5928 = vpack.c.b16 %v4296, %v4280
        %v5929 = vpack.c.b16 %v4313, %v4297
        %v5930 = vpack.c.b16 %v4314, %v4298
        %v5931 = vpack.c.b16 %v4315, %v4299
        %v5932 = vpack.c.b16 %v4316, %v4300
        %v5933 = vpack.c.b16 %v4317, %v4301
        %v5934 = vpack.c.b16 %v4318, %v4302
        %v5935 = vpack.c.b16 %v4319, %v4303
        %v5936 = vpack.c.b16 %v4320, %v4304
        %v5937 = vpack.c.b16 %v4321, %v4305
        %v5938 = vpack.c.b16 %v4322, %v4306
        %v5939 = vpack.c.b16 %v4323, %v4307
        %v5940 = vpack.c.b16 %v4324, %v4308
        %v5941 = vpack.c.b16 %v4325, %v4309
        %v5942 = vpack.c.b16 %v4326, %v4310
        %v5943 = vpack.c.b16 %v4327, %v4311
        %v5944 = vpack.c.b16 %v4328, %v4312
        %v5945 = vpack.c.b16 %v4345, %v4329
        %v5946 = vpack.c.b16 %v4346, %v4330
        %v5947 = vpack.c.b16 %v4347, %v4331
        %v5948 = vpack.c.b16 %v4348, %v4332
        %v5949 = vpack.c.b16 %v4349, %v4333
        %v5950 = vpack.c.b16 %v4350, %v4334
        %v5951 = vpack.c.b16 %v4351, %v4335
        %v5952 = vpack.c.b16 %v4352, %v4336
        %v5953 = vpack.c.b16 %v4353, %v4337
        %v5954 = vpack.c.b16 %v4354, %v4338
        %v5955 = vpack.c.b16 %v4355, %v4339
        %v5956 = vpack.c.b16 %v4356, %v4340
        %v5957 = vpack.c.b16 %v4357, %v4341
        %v5958 = vpack.c.b16 %v4358, %v4342
        %v5959 = vpack.c.b16 %v4359, %v4343
        %v5960 = vpack.c.b16 %v4360, %v4344
        %v5961 = vpack.c.b16 %v4377, %v4361
        %v5962 = vpack.c.b16 %v4378, %v4362
        %v5963 = vpack.c.b16 %v4379, %v4363
        %v5964 = vpack.c.b16 %v4380, %v4364
        %v5965 = vpack.c.b16 %v4381, %v4365
        %v5966 = vpack.c.b16 %v4382, %v4366
        %v5967 = vpack.c.b16 %v4383, %v4367
        %v5968 = vpack.c.b16 %v4384, %v4368
        %v5969 = vpack.c.b16 %v4385, %v4369
        %v5970 = vpack.c.b16 %v4386, %v4370
        %v5971 = vpack.c.b16 %v4387, %v4371
        %v5972 = vpack.c.b16 %v4388, %v4372
        %v5973 = vpack.c.b16 %v4389, %v4373
        %v5974 = vpack.c.b16 %v4390, %v4374
        %v5975 = vpack.c.b16 %v4391, %v4375
        %v5976 = vpack.c.b16 %v4392, %v4376
        %v5977 = vpack.c.b16 %v4409, %v4393
        %v5978 = vpack.c.b16 %v4410, %v4394
        %v5979 = vpack.c.b16 %v4411, %v4395
        %v5980 = vpack.c.b16 %v4412, %v4396
        %v5981 = vpack.c.b16 %v4413, %v4397
        %v5982 = vpack.c.b16 %v4414, %v4398
        %v5983 = vpack.c.b16 %v4415, %v4399
        %v5984 = vpack.c.b16 %v4416, %v4400
        %v5985 = vpack.c.b16 %v4417, %v4401
        %v5986 = vpack.c.b16 %v4418, %v4402
        %v5987 = vpack.c.b16 %v4419, %v4403
        %v5988 = vpack.c.b16 %v4420, %v4404
        %v5989 = vpack.c.b16 %v4421, %v4405
        %v5990 = vpack.c.b16 %v4422, %v4406
        %v5991 = vpack.c.b16 %v4423, %v4407
        %v5992 = vpack.c.b16 %v4424, %v4408
        %v5993 = vpack.c.b16 %v4441, %v4425
        %v5994 = vpack.c.b16 %v4442, %v4426
        %v5995 = vpack.c.b16 %v4443, %v4427
        %v5996 = vpack.c.b16 %v4444, %v4428
        %v5997 = vpack.c.b16 %v4445, %v4429
        %v5998 = vpack.c.b16 %v4446, %v4430
        %v5999 = vpack.c.b16 %v4447, %v4431
        %v6000 = vpack.c.b16 %v4448, %v4432
        %v6001 = vpack.c.b16 %v4449, %v4433
        %v6002 = vpack.c.b16 %v4450, %v4434
        %v6003 = vpack.c.b16 %v4451, %v4435
        %v6004 = vpack.c.b16 %v4452, %v4436
        %v6005 = vpack.c.b16 %v4453, %v4437
        %v6006 = vpack.c.b16 %v4454, %v4438
        %v6007 = vpack.c.b16 %v4455, %v4439
        %v6008 = vpack.c.b16 %v4456, %v4440
        %v6009 = vpack.c.b16 %v4473, %v4457
        %v6010 = vpack.c.b16 %v4474, %v4458
        %v6011 = vpack.c.b16 %v4475, %v4459
        %v6012 = vpack.c.b16 %v4476, %v4460
        %v6013 = vpack.c.b16 %v4477, %v4461
        %v6014 = vpack.c.b16 %v4478, %v4462
        %v6015 = vpack.c.b16 %v4479, %v4463
        %v6016 = vpack.c.b16 %v4480, %v4464
        %v6017 = vpack.c.b16 %v4481, %v4465
        %v6018 = vpack.c.b16 %v4482, %v4466
        %v6019 = vpack.c.b16 %v4483, %v4467
        %v6020 = vpack.c.b16 %v4484, %v4468
        %v6021 = vpack.c.b16 %v4485, %v4469
        %v6022 = vpack.c.b16 %v4486, %v4470
        %v6023 = vpack.c.b16 %v4487, %v4471
        %v6024 = vpack.c.b16 %v4488, %v4472
        %v6025 = vpack.c.b16 %v4505, %v4489
        %v6026 = vpack.c.b16 %v4506, %v4490
        %v6027 = vpack.c.b16 %v4507, %v4491
        %v6028 = vpack.c.b16 %v4508, %v4492
        %v6029 = vpack.c.b16 %v4509, %v4493
        %v6030 = vpack.c.b16 %v4510, %v4494
        %v6031 = vpack.c.b16 %v4511, %v4495
        %v6032 = vpack.c.b16 %v4512, %v4496
        %v6033 = vpack.c.b16 %v4513, %v4497
        %v6034 = vpack.c.b16 %v4514, %v4498
        %v6035 = vpack.c.b16 %v4515, %v4499
        %v6036 = vpack.c.b16 %v4516, %v4500
        %v6037 = vpack.c.b16 %v4517, %v4501
        %v6038 = vpack.c.b16 %v4518, %v4502
        %v6039 = vpack.c.b16 %v4519, %v4503
        %v6040 = vpack.c.b16 %v4520, %v4504
        %v6041 = vpack.c.b16 %v4537, %v4521
        %v6042 = vpack.c.b16 %v4538, %v4522
        %v6043 = vpack.c.b16 %v4539, %v4523
        %v6044 = vpack.c.b16 %v4540, %v4524
        %v6045 = vpack.c.b16 %v4541, %v4525
        %v6046 = vpack.c.b16 %v4542, %v4526
        %v6047 = vpack.c.b16 %v4543, %v4527
        %v6048 = vpack.c.b16 %v4544, %v4528
        %v6049 = vpack.c.b16 %v4545, %v4529
        %v6050 = vpack.c.b16 %v4546, %v4530
        %v6051 = vpack.c.b16 %v4547, %v4531
        %v6052 = vpack.c.b16 %v4548, %v4532
        %v6053 = vpack.c.b16 %v4549, %v4533
        %v6054 = vpack.c.b16 %v4550, %v4534
        %v6055 = vpack.c.b16 %v4551, %v4535
        %v6056 = vpack.c.b16 %v4552, %v4536
        %v6057 = vpack.c.b16 %v4569, %v4553
        %v6058 = vpack.c.b16 %v4570, %v4554
        %v6059 = vpack.c.b16 %v4571, %v4555
        %v6060 = vpack.c.b16 %v4572, %v4556
        %v6061 = vpack.c.b16 %v4573, %v4557
        %v6062 = vpack.c.b16 %v4574, %v4558
        %v6063 = vpack.c.b16 %v4575, %v4559
        %v6064 = vpack.c.b16 %v4576, %v4560
        %v6065 = vpack.c.b16 %v4577, %v4561
        %v6066 = vpack.c.b16 %v4578, %v4562
        %v6067 = vpack.c.b16 %v4579, %v4563
        %v6068 = vpack.c.b16 %v4580, %v4564
        %v6069 = vpack.c.b16 %v4581, %v4565
        %v6070 = vpack.c.b16 %v4582, %v4566
        %v6071 = vpack.c.b16 %v4583, %v4567
        %v6072 = vpack.c.b16 %v4584, %v4568
        %v6073 = vpack.c.b16 %v4601, %v4585
        %v6074 = vpack.c.b16 %v4602, %v4586
        %v6075 = vpack.c.b16 %v4603, %v4587
        %v6076 = vpack.c.b16 %v4604, %v4588
        %v6077 = vpack.c.b16 %v4605, %v4589
        %v6078 = vpack.c.b16 %v4606, %v4590
        %v6079 = vpack.c.b16 %v4607, %v4591
        %v6080 = vpack.c.b16 %v4608, %v4592
        %v6081 = vpack.c.b16 %v4609, %v4593
        %v6082 = vpack.c.b16 %v4610, %v4594
        %v6083 = vpack.c.b16 %v4611, %v4595
        %v6084 = vpack.c.b16 %v4612, %v4596
        %v6085 = vpack.c.b16 %v4613, %v4597
        %v6086 = vpack.c.b16 %v4614, %v4598
        %v6087 = vpack.c.b16 %v4615, %v4599
        %v6088 = vpack.c.b16 %v4616, %v4600
        %v6089 = vpack.c.b16 %v4633, %v4617
        %v6090 = vpack.c.b16 %v4634, %v4618
        %v6091 = vpack.c.b16 %v4635, %v4619
        %v6092 = vpack.c.b16 %v4636, %v4620
        %v6093 = vpack.c.b16 %v4637, %v4621
        %v6094 = vpack.c.b16 %v4638, %v4622
        %v6095 = vpack.c.b16 %v4639, %v4623
        %v6096 = vpack.c.b16 %v4640, %v4624
        %v6097 = vpack.c.b16 %v4641, %v4625
        %v6098 = vpack.c.b16 %v4642, %v4626
        %v6099 = vpack.c.b16 %v4643, %v4627
        %v6100 = vpack.c.b16 %v4644, %v4628
        %v6101 = vpack.c.b16 %v4645, %v4629
        %v6102 = vpack.c.b16 %v4646, %v4630
        %v6103 = vpack.c.b16 %v4647, %v4631
        %v6104 = vpack.c.b16 %v4648, %v4632
        %v6105 = vpack.c.b16 %v4665, %v4649
        %v6106 = vpack.c.b16 %v4666, %v4650
        %v6107 = vpack.c.b16 %v4667, %v4651
        %v6108 = vpack.c.b16 %v4668, %v4652
        %v6109 = vpack.c.b16 %v4669, %v4653
        %v6110 = vpack.c.b16 %v4670, %v4654
        %v6111 = vpack.c.b16 %v4671, %v4655
        %v6112 = vpack.c.b16 %v4672, %v4656
        %v6113 = vpack.c.b16 %v4673, %v4657
        %v6114 = vpack.c.b16 %v4674, %v4658
        %v6115 = vpack.c.b16 %v4675, %v4659
        %v6116 = vpack.c.b16 %v4676, %v4660
        %v6117 = vpack.c.b16 %v4677, %v4661
        %v6118 = vpack.c.b16 %v4678, %v4662
        %v6119 = vpack.c.b16 %v4679, %v4663
        %v6120 = vpack.c.b16 %v4680, %v4664
        %v6121 = vpack.c.b16 %v4697, %v4681
        %v6122 = vpack.c.b16 %v4698, %v4682
        %v6123 = vpack.c.b16 %v4699, %v4683
        %v6124 = vpack.c.b16 %v4700, %v4684
        %v6125 = vpack.c.b16 %v4701, %v4685
        %v6126 = vpack.c.b16 %v4702, %v4686
        %v6127 = vpack.c.b16 %v4703, %v4687
        %v6128 = vpack.c.b16 %v4704, %v4688
        %v6129 = vpack.c.b16 %v4705, %v4689
        %v6130 = vpack.c.b16 %v4706, %v4690
        %v6131 = vpack.c.b16 %v4707, %v4691
        %v6132 = vpack.c.b16 %v4708, %v4692
        %v6133 = vpack.c.b16 %v4709, %v4693
        %v6134 = vpack.c.b16 %v4710, %v4694
        %v6135 = vpack.c.b16 %v4711, %v4695
        %v6136 = vpack.c.b16 %v4712, %v4696
        %v6137 = vpack.c.b16 %v4729, %v4713
        %v6138 = vpack.c.b16 %v4730, %v4714
        %v6139 = vpack.c.b16 %v4731, %v4715
        %v6140 = vpack.c.b16 %v4732, %v4716
        %v6141 = vpack.c.b16 %v4733, %v4717
        %v6142 = vpack.c.b16 %v4734, %v4718
        %v6143 = vpack.c.b16 %v4735, %v4719
        %v6144 = vpack.c.b16 %v4736, %v4720
        %v6145 = vpack.c.b16 %v4737, %v4721
        %v6146 = vpack.c.b16 %v4738, %v4722
        %v6147 = vpack.c.b16 %v4739, %v4723
        %v6148 = vpack.c.b16 %v4740, %v4724
        %v6149 = vpack.c.b16 %v4741, %v4725
        %v6150 = vpack.c.b16 %v4742, %v4726
        %v6151 = vpack.c.b16 %v4743, %v4727
        %v6152 = vpack.c.b16 %v4744, %v4728
        %v6153 = vpack.c.b16 %v4761, %v4745
        %v6154 = vpack.c.b16 %v4762, %v4746
        %v6155 = vpack.c.b16 %v4763, %v4747
        %v6156 = vpack.c.b16 %v4764, %v4748
        %v6157 = vpack.c.b16 %v4765, %v4749
        %v6158 = vpack.c.b16 %v4766, %v4750
        %v6159 = vpack.c.b16 %v4767, %v4751
        %v6160 = vpack.c.b16 %v4768, %v4752
        %v6161 = vpack.c.b16 %v4769, %v4753
        %v6162 = vpack.c.b16 %v4770, %v4754
        %v6163 = vpack.c.b16 %v4771, %v4755
        %v6164 = vpack.c.b16 %v4772, %v4756
        %v6165 = vpack.c.b16 %v4773, %v4757
        %v6166 = vpack.c.b16 %v4774, %v4758
        %v6167 = vpack.c.b16 %v4775, %v4759
        %v6168 = vpack.c.b16 %v4776, %v4760
        %v6169 = vpack.c.b16 %v4793, %v4777
        %v6170 = vpack.c.b16 %v4794, %v4778
        %v6171 = vpack.c.b16 %v4795, %v4779
        %v6172 = vpack.c.b16 %v4796, %v4780
        %v6173 = vpack.c.b16 %v4797, %v4781
        %v6174 = vpack.c.b16 %v4798, %v4782
        %v6175 = vpack.c.b16 %v4799, %v4783
        %v6176 = vpack.c.b16 %v4800, %v4784
        %v6177 = vpack.c.b16 %v4801, %v4785
        %v6178 = vpack.c.b16 %v4802, %v4786
        %v6179 = vpack.c.b16 %v4803, %v4787
        %v6180 = vpack.c.b16 %v4804, %v4788
        %v6181 = vpack.c.b16 %v4805, %v4789
        %v6182 = vpack.c.b16 %v4806, %v4790
        %v6183 = vpack.c.b16 %v4807, %v4791
        %v6184 = vpack.c.b16 %v4808, %v4792
        %v6185 = vpack.c.b16 %v4825, %v4809
        %v6186 = vpack.c.b16 %v4826, %v4810
        %v6187 = vpack.c.b16 %v4827, %v4811
        %v6188 = vpack.c.b16 %v4828, %v4812
        %v6189 = vpack.c.b16 %v4829, %v4813
        %v6190 = vpack.c.b16 %v4830, %v4814
        %v6191 = vpack.c.b16 %v4831, %v4815
        %v6192 = vpack.c.b16 %v4832, %v4816
        %v6193 = vpack.c.b16 %v4833, %v4817
        %v6194 = vpack.c.b16 %v4834, %v4818
        %v6195 = vpack.c.b16 %v4835, %v4819
        %v6196 = vpack.c.b16 %v4836, %v4820
        %v6197 = vpack.c.b16 %v4837, %v4821
        %v6198 = vpack.c.b16 %v4838, %v4822
        %v6199 = vpack.c.b16 %v4839, %v4823
        %v6200 = vpack.c.b16 %v4840, %v4824
        %v6201 = vpack.c.b16 %v4857, %v4841
        %v6202 = vpack.c.b16 %v4858, %v4842
        %v6203 = vpack.c.b16 %v4859, %v4843
        %v6204 = vpack.c.b16 %v4860, %v4844
        %v6205 = vpack.c.b16 %v4861, %v4845
        %v6206 = vpack.c.b16 %v4862, %v4846
        %v6207 = vpack.c.b16 %v4863, %v4847
        %v6208 = vpack.c.b16 %v4864, %v4848
        %v6209 = vpack.c.b16 %v4865, %v4849
        %v6210 = vpack.c.b16 %v4866, %v4850
        %v6211 = vpack.c.b16 %v4867, %v4851
        %v6212 = vpack.c.b16 %v4868, %v4852
        %v6213 = vpack.c.b16 %v4869, %v4853
        %v6214 = vpack.c.b16 %v4870, %v4854
        %v6215 = vpack.c.b16 %v4871, %v4855
        %v6216 = vpack.c.b16 %v4872, %v4856
        %v6217 = vpack.c.b16 %v4889, %v4873
        %v6218 = vpack.c.b16 %v4890, %v4874
        %v6219 = vpack.c.b16 %v4891, %v4875
        %v6220 = vpack.c.b16 %v4892, %v4876
        %v6221 = vpack.c.b16 %v4893, %v4877
        %v6222 = vpack.c.b16 %v4894, %v4878
        %v6223 = vpack.c.b16 %v4895, %v4879
        %v6224 = vpack.c.b16 %v4896, %v4880
        %v6225 = vpack.c.b16 %v4897, %v4881
        %v6226 = vpack.c.b16 %v4898, %v4882
        %v6227 = vpack.c.b16 %v4899, %v4883
        %v6228 = vpack.c.b16 %v4900, %v4884
        %v6229 = vpack.c.b16 %v4901, %v4885
        %v6230 = vpack.c.b16 %v4902, %v4886
        %v6231 = vpack.c.b16 %v4903, %v4887
        %v6232 = vpack.c.b16 %v4904, %v4888
        %v6233 = vpack.c.b16 %v4921, %v4905
        %v6234 = vpack.c.b16 %v4922, %v4906
        %v6235 = vpack.c.b16 %v4923, %v4907
        %v6236 = vpack.c.b16 %v4924, %v4908
        %v6237 = vpack.c.b16 %v4925, %v4909
        %v6238 = vpack.c.b16 %v4926, %v4910
        %v6239 = vpack.c.b16 %v4927, %v4911
        %v6240 = vpack.c.b16 %v4928, %v4912
        %v6241 = vpack.c.b16 %v4929, %v4913
        %v6242 = vpack.c.b16 %v4930, %v4914
        %v6243 = vpack.c.b16 %v4931, %v4915
        %v6244 = vpack.c.b16 %v4932, %v4916
        %v6245 = vpack.c.b16 %v4933, %v4917
        %v6246 = vpack.c.b16 %v4934, %v4918
        %v6247 = vpack.c.b16 %v4935, %v4919
        %v6248 = vpack.c.b16 %v4936, %v4920
        %v6249 = vpack.c.b16 %v4953, %v4937
        %v6250 = vpack.c.b16 %v4954, %v4938
        %v6251 = vpack.c.b16 %v4955, %v4939
        %v6252 = vpack.c.b16 %v4956, %v4940
        %v6253 = vpack.c.b16 %v4957, %v4941
        %v6254 = vpack.c.b16 %v4958, %v4942
        %v6255 = vpack.c.b16 %v4959, %v4943
        %v6256 = vpack.c.b16 %v4960, %v4944
        %v6257 = vpack.c.b16 %v4961, %v4945
        %v6258 = vpack.c.b16 %v4962, %v4946
        %v6259 = vpack.c.b16 %v4963, %v4947
        %v6260 = vpack.c.b16 %v4964, %v4948
        %v6261 = vpack.c.b16 %v4965, %v4949
        %v6262 = vpack.c.b16 %v4966, %v4950
        %v6263 = vpack.c.b16 %v4967, %v4951
        %v6264 = vpack.c.b16 %v4968, %v4952
        %v6265 = vpack.c.b16 %v4985, %v4969
        %v6266 = vpack.c.b16 %v4986, %v4970
        %v6267 = vpack.c.b16 %v4987, %v4971
        %v6268 = vpack.c.b16 %v4988, %v4972
        %v6269 = vpack.c.b16 %v4989, %v4973
        %v6270 = vpack.c.b16 %v4990, %v4974
        %v6271 = vpack.c.b16 %v4991, %v4975
        %v6272 = vpack.c.b16 %v4992, %v4976
        %v6273 = vpack.c.b16 %v4993, %v4977
        %v6274 = vpack.c.b16 %v4994, %v4978
        %v6275 = vpack.c.b16 %v4995, %v4979
        %v6276 = vpack.c.b16 %v4996, %v4980
        %v6277 = vpack.c.b16 %v4997, %v4981
        %v6278 = vpack.c.b16 %v4998, %v4982
        %v6279 = vpack.c.b16 %v4999, %v4983
        %v6280 = vpack.c.b16 %v5000, %v4984
        %v6281 = vpack.c.b16 %v5017, %v5001
        %v6282 = vpack.c.b16 %v5018, %v5002
        %v6283 = vpack.c.b16 %v5019, %v5003
        %v6284 = vpack.c.b16 %v5020, %v5004
        %v6285 = vpack.c.b16 %v5021, %v5005
        %v6286 = vpack.c.b16 %v5022, %v5006
        %v6287 = vpack.c.b16 %v5023, %v5007
        %v6288 = vpack.c.b16 %v5024, %v5008
        %v6289 = vpack.c.b16 %v5025, %v5009
        %v6290 = vpack.c.b16 %v5026, %v5010
        %v6291 = vpack.c.b16 %v5027, %v5011
        %v6292 = vpack.c.b16 %v5028, %v5012
        %v6293 = vpack.c.b16 %v5029, %v5013
        %v6294 = vpack.c.b16 %v5030, %v5014
        %v6295 = vpack.c.b16 %v5031, %v5015
        %v6296 = vpack.c.b16 %v5032, %v5016
        %v6297 = vpack.c.b16 %v5049, %v5033
        %v6298 = vpack.c.b16 %v5050, %v5034
        %v6299 = vpack.c.b16 %v5051, %v5035
        %v6300 = vpack.c.b16 %v5052, %v5036
        %v6301 = vpack.c.b16 %v5053, %v5037
        %v6302 = vpack.c.b16 %v5054, %v5038
        %v6303 = vpack.c.b16 %v5055, %v5039
        %v6304 = vpack.c.b16 %v5056, %v5040
        %v6305 = vpack.c.b16 %v5057, %v5041
        %v6306 = vpack.c.b16 %v5058, %v5042
        %v6307 = vpack.c.b16 %v5059, %v5043
        %v6308 = vpack.c.b16 %v5060, %v5044
        %v6309 = vpack.c.b16 %v5061, %v5045
        %v6310 = vpack.c.b16 %v5062, %v5046
        %v6311 = vpack.c.b16 %v5063, %v5047
        %v6312 = vpack.c.b16 %v5064, %v5048
        %v6313 = vpack.c.b16 %v5081, %v5065
        %v6314 = vpack.c.b16 %v5082, %v5066
        %v6315 = vpack.c.b16 %v5083, %v5067
        %v6316 = vpack.c.b16 %v5084, %v5068
        %v6317 = vpack.c.b16 %v5085, %v5069
        %v6318 = vpack.c.b16 %v5086, %v5070
        %v6319 = vpack.c.b16 %v5087, %v5071
        %v6320 = vpack.c.b16 %v5088, %v5072
        %v6321 = vpack.c.b16 %v5089, %v5073
        %v6322 = vpack.c.b16 %v5090, %v5074
        %v6323 = vpack.c.b16 %v5091, %v5075
        %v6324 = vpack.c.b16 %v5092, %v5076
        %v6325 = vpack.c.b16 %v5093, %v5077
        %v6326 = vpack.c.b16 %v5094, %v5078
        %v6327 = vpack.c.b16 %v5095, %v5079
        %v6328 = vpack.c.b16 %v5096, %v5080
        %v6329 = vpack.c.b16 %v5113, %v5097
        %v6330 = vpack.c.b16 %v5114, %v5098
        %v6331 = vpack.c.b16 %v5115, %v5099
        %v6332 = vpack.c.b16 %v5116, %v5100
        %v6333 = vpack.c.b16 %v5117, %v5101
        %v6334 = vpack.c.b16 %v5118, %v5102
        %v6335 = vpack.c.b16 %v5119, %v5103
        %v6336 = vpack.c.b16 %v5120, %v5104
        %v6337 = vpack.c.b16 %v5121, %v5105
        %v6338 = vpack.c.b16 %v5122, %v5106
        %v6339 = vpack.c.b16 %v5123, %v5107
        %v6340 = vpack.c.b16 %v5124, %v5108
        %v6341 = vpack.c.b16 %v5125, %v5109
        %v6342 = vpack.c.b16 %v5126, %v5110
        %v6343 = vpack.c.b16 %v5127, %v5111
        %v6344 = vpack.c.b16 %v5128, %v5112
        %v6345 = vpack.c.b16 %v5145, %v5129
        %v6346 = vpack.c.b16 %v5146, %v5130
        %v6347 = vpack.c.b16 %v5147, %v5131
        %v6348 = vpack.c.b16 %v5148, %v5132
        %v6349 = vpack.c.b16 %v5149, %v5133
        %v6350 = vpack.c.b16 %v5150, %v5134
        %v6351 = vpack.c.b16 %v5151, %v5135
        %v6352 = vpack.c.b16 %v5152, %v5136
        %v6353 = vpack.c.b16 %v5153, %v5137
        %v6354 = vpack.c.b16 %v5154, %v5138
        %v6355 = vpack.c.b16 %v5155, %v5139
        %v6356 = vpack.c.b16 %v5156, %v5140
        %v6357 = vpack.c.b16 %v5157, %v5141
        %v6358 = vpack.c.b16 %v5158, %v5142
        %v6359 = vpack.c.b16 %v5159, %v5143
        %v6360 = vpack.c.b16 %v5160, %v5144
        %v6361 = vpack.c.b16 %v5177, %v5161
        %v6362 = vpack.c.b16 %v5178, %v5162
        %v6363 = vpack.c.b16 %v5179, %v5163
        %v6364 = vpack.c.b16 %v5180, %v5164
        %v6365 = vpack.c.b16 %v5181, %v5165
        %v6366 = vpack.c.b16 %v5182, %v5166
        %v6367 = vpack.c.b16 %v5183, %v5167
        %v6368 = vpack.c.b16 %v5184, %v5168
        %v6369 = vpack.c.b16 %v5185, %v5169
        %v6370 = vpack.c.b16 %v5186, %v5170
        %v6371 = vpack.c.b16 %v5187, %v5171
        %v6372 = vpack.c.b16 %v5188, %v5172
        %v6373 = vpack.c.b16 %v5189, %v5173
        %v6374 = vpack.c.b16 %v5190, %v5174
        %v6375 = vpack.c.b16 %v5191, %v5175
        %v6376 = vpack.c.b16 %v5192, %v5176
        %v6377 = vpack.c.b16 %v5209, %v5193
        %v6378 = vpack.c.b16 %v5210, %v5194
        %v6379 = vpack.c.b16 %v5211, %v5195
        %v6380 = vpack.c.b16 %v5212, %v5196
        %v6381 = vpack.c.b16 %v5213, %v5197
        %v6382 = vpack.c.b16 %v5214, %v5198
        %v6383 = vpack.c.b16 %v5215, %v5199
        %v6384 = vpack.c.b16 %v5216, %v5200
        %v6385 = vpack.c.b16 %v5217, %v5201
        %v6386 = vpack.c.b16 %v5218, %v5202
        %v6387 = vpack.c.b16 %v5219, %v5203
        %v6388 = vpack.c.b16 %v5220, %v5204
        %v6389 = vpack.c.b16 %v5221, %v5205
        %v6390 = vpack.c.b16 %v5222, %v5206
        %v6391 = vpack.c.b16 %v5223, %v5207
        %v6392 = vpack.c.b16 %v5224, %v5208
        %v6393 = vpack.c.b16 %v5241, %v5225
        %v6394 = vpack.c.b16 %v5242, %v5226
        %v6395 = vpack.c.b16 %v5243, %v5227
        %v6396 = vpack.c.b16 %v5244, %v5228
        %v6397 = vpack.c.b16 %v5245, %v5229
        %v6398 = vpack.c.b16 %v5246, %v5230
        %v6399 = vpack.c.b16 %v5247, %v5231
        %v6400 = vpack.c.b16 %v5248, %v5232
        %v6401 = vpack.c.b16 %v5249, %v5233
        %v6402 = vpack.c.b16 %v5250, %v5234
        %v6403 = vpack.c.b16 %v5251, %v5235
        %v6404 = vpack.c.b16 %v5252, %v5236
        %v6405 = vpack.c.b16 %v5253, %v5237
        %v6406 = vpack.c.b16 %v5254, %v5238
        %v6407 = vpack.c.b16 %v5255, %v5239
        %v6408 = vpack.c.b16 %v5256, %v5240
        %v6409 = vpack.c.b16 %v5273, %v5257
        %v6410 = vpack.c.b16 %v5274, %v5258
        %v6411 = vpack.c.b16 %v5275, %v5259
        %v6412 = vpack.c.b16 %v5276, %v5260
        %v6413 = vpack.c.b16 %v5277, %v5261
        %v6414 = vpack.c.b16 %v5278, %v5262
        %v6415 = vpack.c.b16 %v5279, %v5263
        %v6416 = vpack.c.b16 %v5280, %v5264
        %v6417 = vpack.c.b16 %v5281, %v5265
        %v6418 = vpack.c.b16 %v5282, %v5266
        %v6419 = vpack.c.b16 %v5283, %v5267
        %v6420 = vpack.c.b16 %v5284, %v5268
        %v6421 = vpack.c.b16 %v5285, %v5269
        %v6422 = vpack.c.b16 %v5286, %v5270
        %v6423 = vpack.c.b16 %v5287, %v5271
        %v6424 = vpack.c.b16 %v5288, %v5272
        %v6425 = vpack.c.b16 %v5305, %v5289
        %v6426 = vpack.c.b16 %v5306, %v5290
        %v6427 = vpack.c.b16 %v5307, %v5291
        %v6428 = vpack.c.b16 %v5308, %v5292
        %v6429 = vpack.c.b16 %v5309, %v5293
        %v6430 = vpack.c.b16 %v5310, %v5294
        %v6431 = vpack.c.b16 %v5311, %v5295
        %v6432 = vpack.c.b16 %v5312, %v5296
        %v6433 = vpack.c.b16 %v5313, %v5297
        %v6434 = vpack.c.b16 %v5314, %v5298
        %v6435 = vpack.c.b16 %v5315, %v5299
        %v6436 = vpack.c.b16 %v5316, %v5300
        %v6437 = vpack.c.b16 %v5317, %v5301
        %v6438 = vpack.c.b16 %v5318, %v5302
        %v6439 = vpack.c.b16 %v5319, %v5303
        %v6440 = vpack.c.b16 %v5320, %v5304
        %v6441 = vpack.c.b16 %v5337, %v5321
        %v6442 = vpack.c.b16 %v5338, %v5322
        %v6443 = vpack.c.b16 %v5339, %v5323
        %v6444 = vpack.c.b16 %v5340, %v5324
        %v6445 = vpack.c.b16 %v5341, %v5325
        %v6446 = vpack.c.b16 %v5342, %v5326
        %v6447 = vpack.c.b16 %v5343, %v5327
        %v6448 = vpack.c.b16 %v5344, %v5328
        %v6449 = vpack.c.b16 %v5345, %v5329
        %v6450 = vpack.c.b16 %v5346, %v5330
        %v6451 = vpack.c.b16 %v5347, %v5331
        %v6452 = vpack.c.b16 %v5348, %v5332
        %v6453 = vpack.c.b16 %v5349, %v5333
        %v6454 = vpack.c.b16 %v5350, %v5334
        %v6455 = vpack.c.b16 %v5351, %v5335
        %v6456 = vpack.c.b16 %v5352, %v5336
        %v6457 = vpack.c.b16 %v5369, %v5353
        %v6458 = vpack.c.b16 %v5370, %v5354
        %v6459 = vpack.c.b16 %v5371, %v5355
        %v6460 = vpack.c.b16 %v5372, %v5356
        %v6461 = vpack.c.b16 %v5373, %v5357
        %v6462 = vpack.c.b16 %v5374, %v5358
        %v6463 = vpack.c.b16 %v5375, %v5359
        %v6464 = vpack.c.b16 %v5376, %v5360
        %v6465 = vpack.c.b16 %v5377, %v5361
        %v6466 = vpack.c.b16 %v5378, %v5362
        %v6467 = vpack.c.b16 %v5379, %v5363
        %v6468 = vpack.c.b16 %v5380, %v5364
        %v6469 = vpack.c.b16 %v5381, %v5365
        %v6470 = vpack.c.b16 %v5382, %v5366
        %v6471 = vpack.c.b16 %v5383, %v5367
        %v6472 = vpack.c.b16 %v5384, %v5368
        %v6473 = vpack.c.b16 %v5401, %v5385
        %v6474 = vpack.c.b16 %v5402, %v5386
        %v6475 = vpack.c.b16 %v5403, %v5387
        %v6476 = vpack.c.b16 %v5404, %v5388
        %v6477 = vpack.c.b16 %v5405, %v5389
        %v6478 = vpack.c.b16 %v5406, %v5390
        %v6479 = vpack.c.b16 %v5407, %v5391
        %v6480 = vpack.c.b16 %v5408, %v5392
        %v6481 = vpack.c.b16 %v5409, %v5393
        %v6482 = vpack.c.b16 %v5410, %v5394
        %v6483 = vpack.c.b16 %v5411, %v5395
        %v6484 = vpack.c.b16 %v5412, %v5396
        %v6485 = vpack.c.b16 %v5413, %v5397
        %v6486 = vpack.c.b16 %v5414, %v5398
        %v6487 = vpack.c.b16 %v5415, %v5399
        %v6488 = vpack.c.b16 %v5416, %v5400
        %v6489 = vpack.c.b16 %v5433, %v5417
        %v6490 = vpack.c.b16 %v5434, %v5418
        %v6491 = vpack.c.b16 %v5435, %v5419
        %v6492 = vpack.c.b16 %v5436, %v5420
        %v6493 = vpack.c.b16 %v5437, %v5421
        %v6494 = vpack.c.b16 %v5438, %v5422
        %v6495 = vpack.c.b16 %v5439, %v5423
        %v6496 = vpack.c.b16 %v5440, %v5424
        %v6497 = vpack.c.b16 %v5441, %v5425
        %v6498 = vpack.c.b16 %v5442, %v5426
        %v6499 = vpack.c.b16 %v5443, %v5427
        %v6500 = vpack.c.b16 %v5444, %v5428
        %v6501 = vpack.c.b16 %v5445, %v5429
        %v6502 = vpack.c.b16 %v5446, %v5430
        %v6503 = vpack.c.b16 %v5447, %v5431
        %v6504 = vpack.c.b16 %v5448, %v5432
        %v6505 = vpack.c.b16 %v5465, %v5449
        %v6506 = vpack.c.b16 %v5466, %v5450
        %v6507 = vpack.c.b16 %v5467, %v5451
        %v6508 = vpack.c.b16 %v5468, %v5452
        %v6509 = vpack.c.b16 %v5469, %v5453
        %v6510 = vpack.c.b16 %v5470, %v5454
        %v6511 = vpack.c.b16 %v5471, %v5455
        %v6512 = vpack.c.b16 %v5472, %v5456
        %v6513 = vpack.c.b16 %v5473, %v5457
        %v6514 = vpack.c.b16 %v5474, %v5458
        %v6515 = vpack.c.b16 %v5475, %v5459
        %v6516 = vpack.c.b16 %v5476, %v5460
        %v6517 = vpack.c.b16 %v5477, %v5461
        %v6518 = vpack.c.b16 %v5478, %v5462
        %v6519 = vpack.c.b16 %v5479, %v5463
        %v6520 = vpack.c.b16 %v5480, %v5464
        %v6521 = vpack.c.b16 %v5497, %v5481
        %v6522 = vpack.c.b16 %v5498, %v5482
        %v6523 = vpack.c.b16 %v5499, %v5483
        %v6524 = vpack.c.b16 %v5500, %v5484
        %v6525 = vpack.c.b16 %v5501, %v5485
        %v6526 = vpack.c.b16 %v5502, %v5486
        %v6527 = vpack.c.b16 %v5503, %v5487
        %v6528 = vpack.c.b16 %v5504, %v5488
        %v6529 = vpack.c.b16 %v5505, %v5489
        %v6530 = vpack.c.b16 %v5506, %v5490
        %v6531 = vpack.c.b16 %v5507, %v5491
        %v6532 = vpack.c.b16 %v5508, %v5492
        %v6533 = vpack.c.b16 %v5509, %v5493
        %v6534 = vpack.c.b16 %v5510, %v5494
        %v6535 = vpack.c.b16 %v5511, %v5495
        %v6536 = vpack.c.b16 %v5512, %v5496
        %7561 = vmatpush.bf16.msra.mxu0 %v528
        %7562 = vmatpush.bf16.msra.mxu0 %v527
        %7563 = vmatpush.bf16.msra.mxu0 %v526
        %7564 = vmatpush.bf16.msra.mxu0 %v525
        %7565 = vmatpush.bf16.msra.mxu0 %v524
        %7566 = vmatpush.bf16.msra.mxu0 %v523
        %7567 = vmatpush.bf16.msra.mxu0 %v522
        %7568 = vmatpush.bf16.msra.mxu0 %v521
        %7569 = vmatmul.bf16.gmra.mxu0 %v5513
        %v7570 = vpop.f32.mrf.mxu0
        %v7571 = vadd.f32 %v1804, %v7570
        %v7572 = vpop.f32.mrf.mxu0
        %v7573 = vadd.f32 %v1809, %v7572
        %7574 = vmatmul.bf16.gmra.mxu0 %v5529
        %v7575 = vpop.f32.mrf.mxu0
        %v7576 = vadd.f32 %v1814, %v7575
        %v7577 = vpop.f32.mrf.mxu0
        %v7578 = vadd.f32 %v1819, %v7577
        %7579 = vmatmul.bf16.gmra.mxu0 %v5545
        %v7580 = vpop.f32.mrf.mxu0
        %v7581 = vadd.f32 %v1824, %v7580
        %v7582 = vpop.f32.mrf.mxu0
        %v7583 = vadd.f32 %v1829, %v7582
        %7584 = vmatmul.bf16.gmra.mxu0 %v5561
        %v7585 = vpop.f32.mrf.mxu0
        %v7586 = vadd.f32 %v1834, %v7585
        %v7587 = vpop.f32.mrf.mxu0
        %v7588 = vadd.f32 %v1839, %v7587
        %7589 = vmatmul.bf16.gmra.mxu0 %v5577
        %v7590 = vpop.f32.mrf.mxu0
        %v7591 = vadd.f32 %v1844, %v7590
        %v7592 = vpop.f32.mrf.mxu0
        %v7593 = vadd.f32 %v1849, %v7592
        %7594 = vmatmul.bf16.gmra.mxu0 %v5593
        %v7595 = vpop.f32.mrf.mxu0
        %v7596 = vadd.f32 %v1854, %v7595
        %v7597 = vpop.f32.mrf.mxu0
        %v7598 = vadd.f32 %v1859, %v7597
        %7599 = vmatmul.bf16.gmra.mxu0 %v5609
        %v7600 = vpop.f32.mrf.mxu0
        %v7601 = vadd.f32 %v1864, %v7600
        %v7602 = vpop.f32.mrf.mxu0
        %v7603 = vadd.f32 %v1869, %v7602
        %7604 = vmatmul.bf16.gmra.mxu0 %v5625
        %v7605 = vpop.f32.mrf.mxu0
        %v7606 = vadd.f32 %v1874, %v7605
        %v7607 = vpop.f32.mrf.mxu0
        %v7608 = vadd.f32 %v1879, %v7607
        %7609 = vmatmul.bf16.gmra.mxu0 %v5641
        %v7610 = vpop.f32.mrf.mxu0
        %v7611 = vadd.f32 %v1884, %v7610
        %v7612 = vpop.f32.mrf.mxu0
        %v7613 = vadd.f32 %v1889, %v7612
        %7614 = vmatmul.bf16.gmra.mxu0 %v5657
        %v7615 = vpop.f32.mrf.mxu0
        %v7616 = vadd.f32 %v1894, %v7615
        %v7617 = vpop.f32.mrf.mxu0
        %v7618 = vadd.f32 %v1899, %v7617
        %7619 = vmatmul.bf16.gmra.mxu0 %v5673
        %v7620 = vpop.f32.mrf.mxu0
        %v7621 = vadd.f32 %v1904, %v7620
        %v7622 = vpop.f32.mrf.mxu0
        %v7623 = vadd.f32 %v1909, %v7622
        %7624 = vmatmul.bf16.gmra.mxu0 %v5689
        %v7625 = vpop.f32.mrf.mxu0
        %v7626 = vadd.f32 %v1914, %v7625
        %v7627 = vpop.f32.mrf.mxu0
        %v7628 = vadd.f32 %v1919, %v7627
        %7629 = vmatmul.bf16.gmra.mxu0 %v5705
        %v7630 = vpop.f32.mrf.mxu0
        %v7631 = vadd.f32 %v1924, %v7630
        %v7632 = vpop.f32.mrf.mxu0
        %v7633 = vadd.f32 %v1929, %v7632
        %7634 = vmatmul.bf16.gmra.mxu0 %v5721
        %v7635 = vpop.f32.mrf.mxu0
        %v7636 = vadd.f32 %v1934, %v7635
        %v7637 = vpop.f32.mrf.mxu0
        %v7638 = vadd.f32 %v1939, %v7637
        %7639 = vmatmul.bf16.gmra.mxu0 %v5737
        %v7640 = vpop.f32.mrf.mxu0
        %v7641 = vadd.f32 %v1944, %v7640
        %v7642 = vpop.f32.mrf.mxu0
        %v7643 = vadd.f32 %v1949, %v7642
        %7644 = vmatmul.bf16.gmra.mxu0 %v5753
        %v7645 = vpop.f32.mrf.mxu0
        %v7646 = vadd.f32 %v1954, %v7645
        %v7647 = vpop.f32.mrf.mxu0
        %v7648 = vadd.f32 %v1959, %v7647
        %7649 = vmatmul.bf16.gmra.mxu0 %v5769
        %v7650 = vpop.f32.mrf.mxu0
        %v7651 = vadd.f32 %v1964, %v7650
        %v7652 = vpop.f32.mrf.mxu0
        %v7653 = vadd.f32 %v1969, %v7652
        %7654 = vmatmul.bf16.gmra.mxu0 %v5785
        %v7655 = vpop.f32.mrf.mxu0
        %v7656 = vadd.f32 %v1974, %v7655
        %v7657 = vpop.f32.mrf.mxu0
        %v7658 = vadd.f32 %v1979, %v7657
        %7659 = vmatmul.bf16.gmra.mxu0 %v5801
        %v7660 = vpop.f32.mrf.mxu0
        %v7661 = vadd.f32 %v1984, %v7660
        %v7662 = vpop.f32.mrf.mxu0
        %v7663 = vadd.f32 %v1989, %v7662
        %7664 = vmatmul.bf16.gmra.mxu0 %v5817
        %v7665 = vpop.f32.mrf.mxu0
        %v7666 = vadd.f32 %v1994, %v7665
        %v7667 = vpop.f32.mrf.mxu0
        %v7668 = vadd.f32 %v1999, %v7667
        %7669 = vmatmul.bf16.gmra.mxu0 %v5833
        %v7670 = vpop.f32.mrf.mxu0
        %v7671 = vadd.f32 %v2004, %v7670
        %v7672 = vpop.f32.mrf.mxu0
        %v7673 = vadd.f32 %v2009, %v7672
        %7674 = vmatmul.bf16.gmra.mxu0 %v5849
        %v7675 = vpop.f32.mrf.mxu0
        %v7676 = vadd.f32 %v2014, %v7675
        %v7677 = vpop.f32.mrf.mxu0
        %v7678 = vadd.f32 %v2019, %v7677
        %7679 = vmatmul.bf16.gmra.mxu0 %v5865
        %v7680 = vpop.f32.mrf.mxu0
        %v7681 = vadd.f32 %v2024, %v7680
        %v7682 = vpop.f32.mrf.mxu0
        %v7683 = vadd.f32 %v2029, %v7682
        %7684 = vmatmul.bf16.gmra.mxu0 %v5881
        %v7685 = vpop.f32.mrf.mxu0
        %v7686 = vadd.f32 %v2034, %v7685
        %v7687 = vpop.f32.mrf.mxu0
        %v7688 = vadd.f32 %v2039, %v7687
        %7689 = vmatmul.bf16.gmra.mxu0 %v5897
        %v7690 = vpop.f32.mrf.mxu0
        %v7691 = vadd.f32 %v2044, %v7690
        %v7692 = vpop.f32.mrf.mxu0
        %v7693 = vadd.f32 %v2049, %v7692
        %7694 = vmatmul.bf16.gmra.mxu0 %v5913
        %v7695 = vpop.f32.mrf.mxu0
        %v7696 = vadd.f32 %v2054, %v7695
        %v7697 = vpop.f32.mrf.mxu0
        %v7698 = vadd.f32 %v2059, %v7697
        %7699 = vmatmul.bf16.gmra.mxu0 %v5929
        %v7700 = vpop.f32.mrf.mxu0
        %v7701 = vadd.f32 %v2064, %v7700
        %v7702 = vpop.f32.mrf.mxu0
        %v7703 = vadd.f32 %v2069, %v7702
        %7704 = vmatmul.bf16.gmra.mxu0 %v5945
        %v7705 = vpop.f32.mrf.mxu0
        %v7706 = vadd.f32 %v2074, %v7705
        %v7707 = vpop.f32.mrf.mxu0
        %v7708 = vadd.f32 %v2079, %v7707
        %7709 = vmatmul.bf16.gmra.mxu0 %v5961
        %v7710 = vpop.f32.mrf.mxu0
        %v7711 = vadd.f32 %v2084, %v7710
        %v7712 = vpop.f32.mrf.mxu0
        %v7713 = vadd.f32 %v2089, %v7712
        %7714 = vmatmul.bf16.gmra.mxu0 %v5977
        %v7715 = vpop.f32.mrf.mxu0
        %v7716 = vadd.f32 %v2094, %v7715
        %v7717 = vpop.f32.mrf.mxu0
        %v7718 = vadd.f32 %v2099, %v7717
        %7719 = vmatmul.bf16.gmra.mxu0 %v5993
        %v7720 = vpop.f32.mrf.mxu0
        %v7721 = vadd.f32 %v2104, %v7720
        %v7722 = vpop.f32.mrf.mxu0
        %v7723 = vadd.f32 %v2109, %v7722
        %7724 = vmatmul.bf16.gmra.mxu0 %v6009
        %v7725 = vpop.f32.mrf.mxu0
        %v7726 = vadd.f32 %v2114, %v7725
        %v7727 = vpop.f32.mrf.mxu0
        %v7728 = vadd.f32 %v2119, %v7727
        %7729 = vmatmul.bf16.gmra.mxu0 %v6025
        %v7730 = vpop.f32.mrf.mxu0
        %v7731 = vadd.f32 %v2124, %v7730
        %v7732 = vpop.f32.mrf.mxu0
        %v7733 = vadd.f32 %v2129, %v7732
        %7734 = vmatmul.bf16.gmra.mxu0 %v6041
        %v7735 = vpop.f32.mrf.mxu0
        %v7736 = vadd.f32 %v2134, %v7735
        %v7737 = vpop.f32.mrf.mxu0
        %v7738 = vadd.f32 %v2139, %v7737
        %7739 = vmatmul.bf16.gmra.mxu0 %v6057
        %v7740 = vpop.f32.mrf.mxu0
        %v7741 = vadd.f32 %v2144, %v7740
        %v7742 = vpop.f32.mrf.mxu0
        %v7743 = vadd.f32 %v2149, %v7742
        %7744 = vmatmul.bf16.gmra.mxu0 %v6073
        %v7745 = vpop.f32.mrf.mxu0
        %v7746 = vadd.f32 %v2154, %v7745
        %v7747 = vpop.f32.mrf.mxu0
        %v7748 = vadd.f32 %v2159, %v7747
        %7749 = vmatmul.bf16.gmra.mxu0 %v6089
        %v7750 = vpop.f32.mrf.mxu0
        %v7751 = vadd.f32 %v2164, %v7750
        %v7752 = vpop.f32.mrf.mxu0
        %v7753 = vadd.f32 %v2169, %v7752
        %7754 = vmatmul.bf16.gmra.mxu0 %v6105
        %v7755 = vpop.f32.mrf.mxu0
        %v7756 = vadd.f32 %v2174, %v7755
        %v7757 = vpop.f32.mrf.mxu0
        %v7758 = vadd.f32 %v2179, %v7757
        %7759 = vmatmul.bf16.gmra.mxu0 %v6121
        %v7760 = vpop.f32.mrf.mxu0
        %v7761 = vadd.f32 %v2184, %v7760
        %v7762 = vpop.f32.mrf.mxu0
        %v7763 = vadd.f32 %v2189, %v7762
        %7764 = vmatmul.bf16.gmra.mxu0 %v6137
        %v7765 = vpop.f32.mrf.mxu0
        %v7766 = vadd.f32 %v2194, %v7765
        %v7767 = vpop.f32.mrf.mxu0
        %v7768 = vadd.f32 %v2199, %v7767
        %7769 = vmatmul.bf16.gmra.mxu0 %v6153
        %v7770 = vpop.f32.mrf.mxu0
        %v7771 = vadd.f32 %v2204, %v7770
        %v7772 = vpop.f32.mrf.mxu0
        %v7773 = vadd.f32 %v2209, %v7772
        %7774 = vmatmul.bf16.gmra.mxu0 %v6169
        %v7775 = vpop.f32.mrf.mxu0
        %v7776 = vadd.f32 %v2214, %v7775
        %v7777 = vpop.f32.mrf.mxu0
        %v7778 = vadd.f32 %v2219, %v7777
        %7779 = vmatmul.bf16.gmra.mxu0 %v6185
        %v7780 = vpop.f32.mrf.mxu0
        %v7781 = vadd.f32 %v2224, %v7780
        %v7782 = vpop.f32.mrf.mxu0
        %v7783 = vadd.f32 %v2229, %v7782
        %7784 = vmatmul.bf16.gmra.mxu0 %v6201
        %v7785 = vpop.f32.mrf.mxu0
        %v7786 = vadd.f32 %v2234, %v7785
        %v7787 = vpop.f32.mrf.mxu0
        %v7788 = vadd.f32 %v2239, %v7787
        %7789 = vmatmul.bf16.gmra.mxu0 %v6217
        %v7790 = vpop.f32.mrf.mxu0
        %v7791 = vadd.f32 %v2244, %v7790
        %v7792 = vpop.f32.mrf.mxu0
        %v7793 = vadd.f32 %v2249, %v7792
        %7794 = vmatmul.bf16.gmra.mxu0 %v6233
        %v7795 = vpop.f32.mrf.mxu0
        %v7796 = vadd.f32 %v2254, %v7795
        %v7797 = vpop.f32.mrf.mxu0
        %v7798 = vadd.f32 %v2259, %v7797
        %7799 = vmatmul.bf16.gmra.mxu0 %v6249
        %v7800 = vpop.f32.mrf.mxu0
        %v7801 = vadd.f32 %v2264, %v7800
        %v7802 = vpop.f32.mrf.mxu0
        %v7803 = vadd.f32 %v2269, %v7802
        %7804 = vmatmul.bf16.gmra.mxu0 %v6265
        %v7805 = vpop.f32.mrf.mxu0
        %v7806 = vadd.f32 %v2274, %v7805
        %v7807 = vpop.f32.mrf.mxu0
        %v7808 = vadd.f32 %v2279, %v7807
        %7809 = vmatmul.bf16.gmra.mxu0 %v6281
        %v7810 = vpop.f32.mrf.mxu0
        %v7811 = vadd.f32 %v2284, %v7810
        %v7812 = vpop.f32.mrf.mxu0
        %v7813 = vadd.f32 %v2289, %v7812
        %7814 = vmatmul.bf16.gmra.mxu0 %v6297
        %v7815 = vpop.f32.mrf.mxu0
        %v7816 = vadd.f32 %v2294, %v7815
        %v7817 = vpop.f32.mrf.mxu0
        %v7818 = vadd.f32 %v2299, %v7817
        %7819 = vmatmul.bf16.gmra.mxu0 %v6313
        %v7820 = vpop.f32.mrf.mxu0
        %v7821 = vadd.f32 %v2304, %v7820
        %v7822 = vpop.f32.mrf.mxu0
        %v7823 = vadd.f32 %v2309, %v7822
        %7824 = vmatmul.bf16.gmra.mxu0 %v6329
        %v7825 = vpop.f32.mrf.mxu0
        %v7826 = vadd.f32 %v2314, %v7825
        %v7827 = vpop.f32.mrf.mxu0
        %v7828 = vadd.f32 %v2319, %v7827
        %7829 = vmatmul.bf16.gmra.mxu0 %v6345
        %v7830 = vpop.f32.mrf.mxu0
        %v7831 = vadd.f32 %v2324, %v7830
        %v7832 = vpop.f32.mrf.mxu0
        %v7833 = vadd.f32 %v2329, %v7832
        %7834 = vmatmul.bf16.gmra.mxu0 %v6361
        %v7835 = vpop.f32.mrf.mxu0
        %v7836 = vadd.f32 %v2334, %v7835
        %v7837 = vpop.f32.mrf.mxu0
        %v7838 = vadd.f32 %v2339, %v7837
        %7839 = vmatmul.bf16.gmra.mxu0 %v6377
        %v7840 = vpop.f32.mrf.mxu0
        %v7841 = vadd.f32 %v2344, %v7840
        %v7842 = vpop.f32.mrf.mxu0
        %v7843 = vadd.f32 %v2349, %v7842
        %7844 = vmatmul.bf16.gmra.mxu0 %v6393
        %v7845 = vpop.f32.mrf.mxu0
        %v7846 = vadd.f32 %v2354, %v7845
        %v7847 = vpop.f32.mrf.mxu0
        %v7848 = vadd.f32 %v2359, %v7847
        %7849 = vmatmul.bf16.gmra.mxu0 %v6409
        %v7850 = vpop.f32.mrf.mxu0
        %v7851 = vadd.f32 %v2364, %v7850
        %v7852 = vpop.f32.mrf.mxu0
        %v7853 = vadd.f32 %v2369, %v7852
        %7854 = vmatmul.bf16.gmra.mxu0 %v6425
        %v7855 = vpop.f32.mrf.mxu0
        %v7856 = vadd.f32 %v2374, %v7855
        %v7857 = vpop.f32.mrf.mxu0
        %v7858 = vadd.f32 %v2379, %v7857
        %7859 = vmatmul.bf16.gmra.mxu0 %v6441
        %v7860 = vpop.f32.mrf.mxu0
        %v7861 = vadd.f32 %v2384, %v7860
        %v7862 = vpop.f32.mrf.mxu0
        %v7863 = vadd.f32 %v2389, %v7862
        %7864 = vmatmul.bf16.gmra.mxu0 %v6457
        %v7865 = vpop.f32.mrf.mxu0
        %v7866 = vadd.f32 %v2394, %v7865
        %v7867 = vpop.f32.mrf.mxu0
        %v7868 = vadd.f32 %v2399, %v7867
        %7869 = vmatmul.bf16.gmra.mxu0 %v6473
        %v7870 = vpop.f32.mrf.mxu0
        %v7871 = vadd.f32 %v2404, %v7870
        %v7872 = vpop.f32.mrf.mxu0
        %v7873 = vadd.f32 %v2409, %v7872
        %7874 = vmatmul.bf16.gmra.mxu0 %v6489
        %v7875 = vpop.f32.mrf.mxu0
        %v7876 = vadd.f32 %v2414, %v7875
        %v7877 = vpop.f32.mrf.mxu0
        %v7878 = vadd.f32 %v2419, %v7877
        %7879 = vmatmul.bf16.gmra.mxu0 %v6505
        %v7880 = vpop.f32.mrf.mxu0
        %v7881 = vadd.f32 %v2424, %v7880
        %v7882 = vpop.f32.mrf.mxu0
        %v7883 = vadd.f32 %v2429, %v7882
        %7884 = vmatmul.bf16.gmra.mxu0 %v6521
        %v7885 = vpop.f32.mrf.mxu0
        %v7886 = vadd.f32 %v2434, %v7885
        %v7887 = vpop.f32.mrf.mxu0
        %v7888 = vadd.f32 %v2439, %v7887
        %7889 = vdwg.mxu0
        %7890 = vmatpush.bf16.msra.mxu0 %v536
        %7891 = vmatpush.bf16.msra.mxu0 %v535
        %7892 = vmatpush.bf16.msra.mxu0 %v534
        %7893 = vmatpush.bf16.msra.mxu0 %v533
        %7894 = vmatpush.bf16.msra.mxu0 %v532
        %7895 = vmatpush.bf16.msra.mxu0 %v531
        %7896 = vmatpush.bf16.msra.mxu0 %v530
        %7897 = vmatpush.bf16.msra.mxu0 %v529
        %7898 = vmatmul.bf16.gmra.mxu0 %v5514
        %v7899 = vpop.f32.mrf.mxu0
        %v7900 = vadd.f32 %v7571, %v7899
        %v7901 = vpop.f32.mrf.mxu0
        %v7902 = vadd.f32 %v7573, %v7901
        %7903 = vmatmul.bf16.gmra.mxu0 %v5530
        %v7904 = vpop.f32.mrf.mxu0
        %v7905 = vadd.f32 %v7576, %v7904
        %v7906 = vpop.f32.mrf.mxu0
        %v7907 = vadd.f32 %v7578, %v7906
        %7908 = vmatmul.bf16.gmra.mxu0 %v5546
        %v7909 = vpop.f32.mrf.mxu0
        %v7910 = vadd.f32 %v7581, %v7909
        %v7911 = vpop.f32.mrf.mxu0
        %v7912 = vadd.f32 %v7583, %v7911
        %7913 = vmatmul.bf16.gmra.mxu0 %v5562
        %v7914 = vpop.f32.mrf.mxu0
        %v7915 = vadd.f32 %v7586, %v7914
        %v7916 = vpop.f32.mrf.mxu0
        %v7917 = vadd.f32 %v7588, %v7916
        %7918 = vmatmul.bf16.gmra.mxu0 %v5578
        %v7919 = vpop.f32.mrf.mxu0
        %v7920 = vadd.f32 %v7591, %v7919
        %v7921 = vpop.f32.mrf.mxu0
        %v7922 = vadd.f32 %v7593, %v7921
        %7923 = vmatmul.bf16.gmra.mxu0 %v5594
        %v7924 = vpop.f32.mrf.mxu0
        %v7925 = vadd.f32 %v7596, %v7924
        %v7926 = vpop.f32.mrf.mxu0
        %v7927 = vadd.f32 %v7598, %v7926
        %7928 = vmatmul.bf16.gmra.mxu0 %v5610
        %v7929 = vpop.f32.mrf.mxu0
        %v7930 = vadd.f32 %v7601, %v7929
        %v7931 = vpop.f32.mrf.mxu0
        %v7932 = vadd.f32 %v7603, %v7931
        %7933 = vmatmul.bf16.gmra.mxu0 %v5626
        %v7934 = vpop.f32.mrf.mxu0
        %v7935 = vadd.f32 %v7606, %v7934
        %v7936 = vpop.f32.mrf.mxu0
        %v7937 = vadd.f32 %v7608, %v7936
        %7938 = vmatmul.bf16.gmra.mxu0 %v5642
        %v7939 = vpop.f32.mrf.mxu0
        %v7940 = vadd.f32 %v7611, %v7939
        %v7941 = vpop.f32.mrf.mxu0
        %v7942 = vadd.f32 %v7613, %v7941
        %7943 = vmatmul.bf16.gmra.mxu0 %v5658
        %v7944 = vpop.f32.mrf.mxu0
        %v7945 = vadd.f32 %v7616, %v7944
        %v7946 = vpop.f32.mrf.mxu0
        %v7947 = vadd.f32 %v7618, %v7946
        %7948 = vmatmul.bf16.gmra.mxu0 %v5674
        %v7949 = vpop.f32.mrf.mxu0
        %v7950 = vadd.f32 %v7621, %v7949
        %v7951 = vpop.f32.mrf.mxu0
        %v7952 = vadd.f32 %v7623, %v7951
        %7953 = vmatmul.bf16.gmra.mxu0 %v5690
        %v7954 = vpop.f32.mrf.mxu0
        %v7955 = vadd.f32 %v7626, %v7954
        %v7956 = vpop.f32.mrf.mxu0
        %v7957 = vadd.f32 %v7628, %v7956
        %7958 = vmatmul.bf16.gmra.mxu0 %v5706
        %v7959 = vpop.f32.mrf.mxu0
        %v7960 = vadd.f32 %v7631, %v7959
        %v7961 = vpop.f32.mrf.mxu0
        %v7962 = vadd.f32 %v7633, %v7961
        %7963 = vmatmul.bf16.gmra.mxu0 %v5722
        %v7964 = vpop.f32.mrf.mxu0
        %v7965 = vadd.f32 %v7636, %v7964
        %v7966 = vpop.f32.mrf.mxu0
        %v7967 = vadd.f32 %v7638, %v7966
        %7968 = vmatmul.bf16.gmra.mxu0 %v5738
        %v7969 = vpop.f32.mrf.mxu0
        %v7970 = vadd.f32 %v7641, %v7969
        %v7971 = vpop.f32.mrf.mxu0
        %v7972 = vadd.f32 %v7643, %v7971
        %7973 = vmatmul.bf16.gmra.mxu0 %v5754
        %v7974 = vpop.f32.mrf.mxu0
        %v7975 = vadd.f32 %v7646, %v7974
        %v7976 = vpop.f32.mrf.mxu0
        %v7977 = vadd.f32 %v7648, %v7976
        %7978 = vmatmul.bf16.gmra.mxu0 %v5770
        %v7979 = vpop.f32.mrf.mxu0
        %v7980 = vadd.f32 %v7651, %v7979
        %v7981 = vpop.f32.mrf.mxu0
        %v7982 = vadd.f32 %v7653, %v7981
        %7983 = vmatmul.bf16.gmra.mxu0 %v5786
        %v7984 = vpop.f32.mrf.mxu0
        %v7985 = vadd.f32 %v7656, %v7984
        %v7986 = vpop.f32.mrf.mxu0
        %v7987 = vadd.f32 %v7658, %v7986
        %7988 = vmatmul.bf16.gmra.mxu0 %v5802
        %v7989 = vpop.f32.mrf.mxu0
        %v7990 = vadd.f32 %v7661, %v7989
        %v7991 = vpop.f32.mrf.mxu0
        %v7992 = vadd.f32 %v7663, %v7991
        %7993 = vmatmul.bf16.gmra.mxu0 %v5818
        %v7994 = vpop.f32.mrf.mxu0
        %v7995 = vadd.f32 %v7666, %v7994
        %v7996 = vpop.f32.mrf.mxu0
        %v7997 = vadd.f32 %v7668, %v7996
        %7998 = vmatmul.bf16.gmra.mxu0 %v5834
        %v7999 = vpop.f32.mrf.mxu0
        %v8000 = vadd.f32 %v7671, %v7999
        %v8001 = vpop.f32.mrf.mxu0
        %v8002 = vadd.f32 %v7673, %v8001
        %8003 = vmatmul.bf16.gmra.mxu0 %v5850
        %v8004 = vpop.f32.mrf.mxu0
        %v8005 = vadd.f32 %v7676, %v8004
        %v8006 = vpop.f32.mrf.mxu0
        %v8007 = vadd.f32 %v7678, %v8006
        %8008 = vmatmul.bf16.gmra.mxu0 %v5866
        %v8009 = vpop.f32.mrf.mxu0
        %v8010 = vadd.f32 %v7681, %v8009
        %v8011 = vpop.f32.mrf.mxu0
        %v8012 = vadd.f32 %v7683, %v8011
        %8013 = vmatmul.bf16.gmra.mxu0 %v5882
        %v8014 = vpop.f32.mrf.mxu0
        %v8015 = vadd.f32 %v7686, %v8014
        %v8016 = vpop.f32.mrf.mxu0
        %v8017 = vadd.f32 %v7688, %v8016
        %8018 = vmatmul.bf16.gmra.mxu0 %v5898
        %v8019 = vpop.f32.mrf.mxu0
        %v8020 = vadd.f32 %v7691, %v8019
        %v8021 = vpop.f32.mrf.mxu0
        %v8022 = vadd.f32 %v7693, %v8021
        %8023 = vmatmul.bf16.gmra.mxu0 %v5914
        %v8024 = vpop.f32.mrf.mxu0
        %v8025 = vadd.f32 %v7696, %v8024
        %v8026 = vpop.f32.mrf.mxu0
        %v8027 = vadd.f32 %v7698, %v8026
        %8028 = vmatmul.bf16.gmra.mxu0 %v5930
        %v8029 = vpop.f32.mrf.mxu0
        %v8030 = vadd.f32 %v7701, %v8029
        %v8031 = vpop.f32.mrf.mxu0
        %v8032 = vadd.f32 %v7703, %v8031
        %8033 = vmatmul.bf16.gmra.mxu0 %v5946
        %v8034 = vpop.f32.mrf.mxu0
        %v8035 = vadd.f32 %v7706, %v8034
        %v8036 = vpop.f32.mrf.mxu0
        %v8037 = vadd.f32 %v7708, %v8036
        %8038 = vmatmul.bf16.gmra.mxu0 %v5962
        %v8039 = vpop.f32.mrf.mxu0
        %v8040 = vadd.f32 %v7711, %v8039
        %v8041 = vpop.f32.mrf.mxu0
        %v8042 = vadd.f32 %v7713, %v8041
        %8043 = vmatmul.bf16.gmra.mxu0 %v5978
        %v8044 = vpop.f32.mrf.mxu0
        %v8045 = vadd.f32 %v7716, %v8044
        %v8046 = vpop.f32.mrf.mxu0
        %v8047 = vadd.f32 %v7718, %v8046
        %8048 = vmatmul.bf16.gmra.mxu0 %v5994
        %v8049 = vpop.f32.mrf.mxu0
        %v8050 = vadd.f32 %v7721, %v8049
        %v8051 = vpop.f32.mrf.mxu0
        %v8052 = vadd.f32 %v7723, %v8051
        %8053 = vmatmul.bf16.gmra.mxu0 %v6010
        %v8054 = vpop.f32.mrf.mxu0
        %v8055 = vadd.f32 %v7726, %v8054
        %v8056 = vpop.f32.mrf.mxu0
        %v8057 = vadd.f32 %v7728, %v8056
        %8058 = vmatmul.bf16.gmra.mxu0 %v6026
        %v8059 = vpop.f32.mrf.mxu0
        %v8060 = vadd.f32 %v7731, %v8059
        %v8061 = vpop.f32.mrf.mxu0
        %v8062 = vadd.f32 %v7733, %v8061
        %8063 = vmatmul.bf16.gmra.mxu0 %v6042
        %v8064 = vpop.f32.mrf.mxu0
        %v8065 = vadd.f32 %v7736, %v8064
        %v8066 = vpop.f32.mrf.mxu0
        %v8067 = vadd.f32 %v7738, %v8066
        %8068 = vmatmul.bf16.gmra.mxu0 %v6058
        %v8069 = vpop.f32.mrf.mxu0
        %v8070 = vadd.f32 %v7741, %v8069
        %v8071 = vpop.f32.mrf.mxu0
        %v8072 = vadd.f32 %v7743, %v8071
        %8073 = vmatmul.bf16.gmra.mxu0 %v6074
        %v8074 = vpop.f32.mrf.mxu0
        %v8075 = vadd.f32 %v7746, %v8074
        %v8076 = vpop.f32.mrf.mxu0
        %v8077 = vadd.f32 %v7748, %v8076
        %8078 = vmatmul.bf16.gmra.mxu0 %v6090
        %v8079 = vpop.f32.mrf.mxu0
        %v8080 = vadd.f32 %v7751, %v8079
        %v8081 = vpop.f32.mrf.mxu0
        %v8082 = vadd.f32 %v7753, %v8081
        %8083 = vmatmul.bf16.gmra.mxu0 %v6106
        %v8084 = vpop.f32.mrf.mxu0
        %v8085 = vadd.f32 %v7756, %v8084
        %v8086 = vpop.f32.mrf.mxu0
        %v8087 = vadd.f32 %v7758, %v8086
        %8088 = vmatmul.bf16.gmra.mxu0 %v6122
        %v8089 = vpop.f32.mrf.mxu0
        %v8090 = vadd.f32 %v7761, %v8089
        %v8091 = vpop.f32.mrf.mxu0
        %v8092 = vadd.f32 %v7763, %v8091
        %8093 = vmatmul.bf16.gmra.mxu0 %v6138
        %v8094 = vpop.f32.mrf.mxu0
        %v8095 = vadd.f32 %v7766, %v8094
        %v8096 = vpop.f32.mrf.mxu0
        %v8097 = vadd.f32 %v7768, %v8096
        %8098 = vmatmul.bf16.gmra.mxu0 %v6154
        %v8099 = vpop.f32.mrf.mxu0
        %v8100 = vadd.f32 %v7771, %v8099
        %v8101 = vpop.f32.mrf.mxu0
        %v8102 = vadd.f32 %v7773, %v8101
        %8103 = vmatmul.bf16.gmra.mxu0 %v6170
        %v8104 = vpop.f32.mrf.mxu0
        %v8105 = vadd.f32 %v7776, %v8104
        %v8106 = vpop.f32.mrf.mxu0
        %v8107 = vadd.f32 %v7778, %v8106
        %8108 = vmatmul.bf16.gmra.mxu0 %v6186
        %v8109 = vpop.f32.mrf.mxu0
        %v8110 = vadd.f32 %v7781, %v8109
        %v8111 = vpop.f32.mrf.mxu0
        %v8112 = vadd.f32 %v7783, %v8111
        %8113 = vmatmul.bf16.gmra.mxu0 %v6202
        %v8114 = vpop.f32.mrf.mxu0
        %v8115 = vadd.f32 %v7786, %v8114
        %v8116 = vpop.f32.mrf.mxu0
        %v8117 = vadd.f32 %v7788, %v8116
        %8118 = vmatmul.bf16.gmra.mxu0 %v6218
        %v8119 = vpop.f32.mrf.mxu0
        %v8120 = vadd.f32 %v7791, %v8119
        %v8121 = vpop.f32.mrf.mxu0
        %v8122 = vadd.f32 %v7793, %v8121
        %8123 = vmatmul.bf16.gmra.mxu0 %v6234
        %v8124 = vpop.f32.mrf.mxu0
        %v8125 = vadd.f32 %v7796, %v8124
        %v8126 = vpop.f32.mrf.mxu0
        %v8127 = vadd.f32 %v7798, %v8126
        %8128 = vmatmul.bf16.gmra.mxu0 %v6250
        %v8129 = vpop.f32.mrf.mxu0
        %v8130 = vadd.f32 %v7801, %v8129
        %v8131 = vpop.f32.mrf.mxu0
        %v8132 = vadd.f32 %v7803, %v8131
        %8133 = vmatmul.bf16.gmra.mxu0 %v6266
        %v8134 = vpop.f32.mrf.mxu0
        %v8135 = vadd.f32 %v7806, %v8134
        %v8136 = vpop.f32.mrf.mxu0
        %v8137 = vadd.f32 %v7808, %v8136
        %8138 = vmatmul.bf16.gmra.mxu0 %v6282
        %v8139 = vpop.f32.mrf.mxu0
        %v8140 = vadd.f32 %v7811, %v8139
        %v8141 = vpop.f32.mrf.mxu0
        %v8142 = vadd.f32 %v7813, %v8141
        %8143 = vmatmul.bf16.gmra.mxu0 %v6298
        %v8144 = vpop.f32.mrf.mxu0
        %v8145 = vadd.f32 %v7816, %v8144
        %v8146 = vpop.f32.mrf.mxu0
        %v8147 = vadd.f32 %v7818, %v8146
        %8148 = vmatmul.bf16.gmra.mxu0 %v6314
        %v8149 = vpop.f32.mrf.mxu0
        %v8150 = vadd.f32 %v7821, %v8149
        %v8151 = vpop.f32.mrf.mxu0
        %v8152 = vadd.f32 %v7823, %v8151
        %8153 = vmatmul.bf16.gmra.mxu0 %v6330
        %v8154 = vpop.f32.mrf.mxu0
        %v8155 = vadd.f32 %v7826, %v8154
        %v8156 = vpop.f32.mrf.mxu0
        %v8157 = vadd.f32 %v7828, %v8156
        %8158 = vmatmul.bf16.gmra.mxu0 %v6346
        %v8159 = vpop.f32.mrf.mxu0
        %v8160 = vadd.f32 %v7831, %v8159
        %v8161 = vpop.f32.mrf.mxu0
        %v8162 = vadd.f32 %v7833, %v8161
        %8163 = vmatmul.bf16.gmra.mxu0 %v6362
        %v8164 = vpop.f32.mrf.mxu0
        %v8165 = vadd.f32 %v7836, %v8164
        %v8166 = vpop.f32.mrf.mxu0
        %v8167 = vadd.f32 %v7838, %v8166
        %8168 = vmatmul.bf16.gmra.mxu0 %v6378
        %v8169 = vpop.f32.mrf.mxu0
        %v8170 = vadd.f32 %v7841, %v8169
        %v8171 = vpop.f32.mrf.mxu0
        %v8172 = vadd.f32 %v7843, %v8171
        %8173 = vmatmul.bf16.gmra.mxu0 %v6394
        %v8174 = vpop.f32.mrf.mxu0
        %v8175 = vadd.f32 %v7846, %v8174
        %v8176 = vpop.f32.mrf.mxu0
        %v8177 = vadd.f32 %v7848, %v8176
        %8178 = vmatmul.bf16.gmra.mxu0 %v6410
        %v8179 = vpop.f32.mrf.mxu0
        %v8180 = vadd.f32 %v7851, %v8179
        %v8181 = vpop.f32.mrf.mxu0
        %v8182 = vadd.f32 %v7853, %v8181
        %8183 = vmatmul.bf16.gmra.mxu0 %v6426
        %v8184 = vpop.f32.mrf.mxu0
        %v8185 = vadd.f32 %v7856, %v8184
        %v8186 = vpop.f32.mrf.mxu0
        %v8187 = vadd.f32 %v7858, %v8186
        %8188 = vmatmul.bf16.gmra.mxu0 %v6442
        %v8189 = vpop.f32.mrf.mxu0
        %v8190 = vadd.f32 %v7861, %v8189
        %v8191 = vpop.f32.mrf.mxu0
        %v8192 = vadd.f32 %v7863, %v8191
        %8193 = vmatmul.bf16.gmra.mxu0 %v6458
        %v8194 = vpop.f32.mrf.mxu0
        %v8195 = vadd.f32 %v7866, %v8194
        %v8196 = vpop.f32.mrf.mxu0
        %v8197 = vadd.f32 %v7868, %v8196
        %8198 = vmatmul.bf16.gmra.mxu0 %v6474
        %v8199 = vpop.f32.mrf.mxu0
        %v8200 = vadd.f32 %v7871, %v8199
        %v8201 = vpop.f32.mrf.mxu0
        %v8202 = vadd.f32 %v7873, %v8201
        %8203 = vmatmul.bf16.gmra.mxu0 %v6490
        %v8204 = vpop.f32.mrf.mxu0
        %v8205 = vadd.f32 %v7876, %v8204
        %v8206 = vpop.f32.mrf.mxu0
        %v8207 = vadd.f32 %v7878, %v8206
        %8208 = vmatmul.bf16.gmra.mxu0 %v6506
        %v8209 = vpop.f32.mrf.mxu0
        %v8210 = vadd.f32 %v7881, %v8209
        %v8211 = vpop.f32.mrf.mxu0
        %v8212 = vadd.f32 %v7883, %v8211
        %8213 = vmatmul.bf16.gmra.mxu0 %v6522
        %v8214 = vpop.f32.mrf.mxu0
        %v8215 = vadd.f32 %v7886, %v8214
        %v8216 = vpop.f32.mrf.mxu0
        %v8217 = vadd.f32 %v7888, %v8216
        %8218 = vdwg.mxu0
        %8219 = vmatpush.bf16.msra.mxu0 %v544
        %8220 = vmatpush.bf16.msra.mxu0 %v543
        %8221 = vmatpush.bf16.msra.mxu0 %v542
        %8222 = vmatpush.bf16.msra.mxu0 %v541
        %8223 = vmatpush.bf16.msra.mxu0 %v540
        %8224 = vmatpush.bf16.msra.mxu0 %v539
        %8225 = vmatpush.bf16.msra.mxu0 %v538
        %8226 = vmatpush.bf16.msra.mxu0 %v537
        %8227 = vmatmul.bf16.gmra.mxu0 %v5515
        %v8228 = vpop.f32.mrf.mxu0
        %v8229 = vadd.f32 %v7900, %v8228
        %v8230 = vpop.f32.mrf.mxu0
        %v8231 = vadd.f32 %v7902, %v8230
        %8232 = vmatmul.bf16.gmra.mxu0 %v5531
        %v8233 = vpop.f32.mrf.mxu0
        %v8234 = vadd.f32 %v7905, %v8233
        %v8235 = vpop.f32.mrf.mxu0
        %v8236 = vadd.f32 %v7907, %v8235
        %8237 = vmatmul.bf16.gmra.mxu0 %v5547
        %v8238 = vpop.f32.mrf.mxu0
        %v8239 = vadd.f32 %v7910, %v8238
        %v8240 = vpop.f32.mrf.mxu0
        %v8241 = vadd.f32 %v7912, %v8240
        %8242 = vmatmul.bf16.gmra.mxu0 %v5563
        %v8243 = vpop.f32.mrf.mxu0
        %v8244 = vadd.f32 %v7915, %v8243
        %v8245 = vpop.f32.mrf.mxu0
        %v8246 = vadd.f32 %v7917, %v8245
        %8247 = vmatmul.bf16.gmra.mxu0 %v5579
        %v8248 = vpop.f32.mrf.mxu0
        %v8249 = vadd.f32 %v7920, %v8248
        %v8250 = vpop.f32.mrf.mxu0
        %v8251 = vadd.f32 %v7922, %v8250
        %8252 = vmatmul.bf16.gmra.mxu0 %v5595
        %v8253 = vpop.f32.mrf.mxu0
        %v8254 = vadd.f32 %v7925, %v8253
        %v8255 = vpop.f32.mrf.mxu0
        %v8256 = vadd.f32 %v7927, %v8255
        %8257 = vmatmul.bf16.gmra.mxu0 %v5611
        %v8258 = vpop.f32.mrf.mxu0
        %v8259 = vadd.f32 %v7930, %v8258
        %v8260 = vpop.f32.mrf.mxu0
        %v8261 = vadd.f32 %v7932, %v8260
        %8262 = vmatmul.bf16.gmra.mxu0 %v5627
        %v8263 = vpop.f32.mrf.mxu0
        %v8264 = vadd.f32 %v7935, %v8263
        %v8265 = vpop.f32.mrf.mxu0
        %v8266 = vadd.f32 %v7937, %v8265
        %8267 = vmatmul.bf16.gmra.mxu0 %v5643
        %v8268 = vpop.f32.mrf.mxu0
        %v8269 = vadd.f32 %v7940, %v8268
        %v8270 = vpop.f32.mrf.mxu0
        %v8271 = vadd.f32 %v7942, %v8270
        %8272 = vmatmul.bf16.gmra.mxu0 %v5659
        %v8273 = vpop.f32.mrf.mxu0
        %v8274 = vadd.f32 %v7945, %v8273
        %v8275 = vpop.f32.mrf.mxu0
        %v8276 = vadd.f32 %v7947, %v8275
        %8277 = vmatmul.bf16.gmra.mxu0 %v5675
        %v8278 = vpop.f32.mrf.mxu0
        %v8279 = vadd.f32 %v7950, %v8278
        %v8280 = vpop.f32.mrf.mxu0
        %v8281 = vadd.f32 %v7952, %v8280
        %8282 = vmatmul.bf16.gmra.mxu0 %v5691
        %v8283 = vpop.f32.mrf.mxu0
        %v8284 = vadd.f32 %v7955, %v8283
        %v8285 = vpop.f32.mrf.mxu0
        %v8286 = vadd.f32 %v7957, %v8285
        %8287 = vmatmul.bf16.gmra.mxu0 %v5707
        %v8288 = vpop.f32.mrf.mxu0
        %v8289 = vadd.f32 %v7960, %v8288
        %v8290 = vpop.f32.mrf.mxu0
        %v8291 = vadd.f32 %v7962, %v8290
        %8292 = vmatmul.bf16.gmra.mxu0 %v5723
        %v8293 = vpop.f32.mrf.mxu0
        %v8294 = vadd.f32 %v7965, %v8293
        %v8295 = vpop.f32.mrf.mxu0
        %v8296 = vadd.f32 %v7967, %v8295
        %8297 = vmatmul.bf16.gmra.mxu0 %v5739
        %v8298 = vpop.f32.mrf.mxu0
        %v8299 = vadd.f32 %v7970, %v8298
        %v8300 = vpop.f32.mrf.mxu0
        %v8301 = vadd.f32 %v7972, %v8300
        %8302 = vmatmul.bf16.gmra.mxu0 %v5755
        %v8303 = vpop.f32.mrf.mxu0
        %v8304 = vadd.f32 %v7975, %v8303
        %v8305 = vpop.f32.mrf.mxu0
        %v8306 = vadd.f32 %v7977, %v8305
        %8307 = vmatmul.bf16.gmra.mxu0 %v5771
        %v8308 = vpop.f32.mrf.mxu0
        %v8309 = vadd.f32 %v7980, %v8308
        %v8310 = vpop.f32.mrf.mxu0
        %v8311 = vadd.f32 %v7982, %v8310
        %8312 = vmatmul.bf16.gmra.mxu0 %v5787
        %v8313 = vpop.f32.mrf.mxu0
        %v8314 = vadd.f32 %v7985, %v8313
        %v8315 = vpop.f32.mrf.mxu0
        %v8316 = vadd.f32 %v7987, %v8315
        %8317 = vmatmul.bf16.gmra.mxu0 %v5803
        %v8318 = vpop.f32.mrf.mxu0
        %v8319 = vadd.f32 %v7990, %v8318
        %v8320 = vpop.f32.mrf.mxu0
        %v8321 = vadd.f32 %v7992, %v8320
        %8322 = vmatmul.bf16.gmra.mxu0 %v5819
        %v8323 = vpop.f32.mrf.mxu0
        %v8324 = vadd.f32 %v7995, %v8323
        %v8325 = vpop.f32.mrf.mxu0
        %v8326 = vadd.f32 %v7997, %v8325
        %8327 = vmatmul.bf16.gmra.mxu0 %v5835
        %v8328 = vpop.f32.mrf.mxu0
        %v8329 = vadd.f32 %v8000, %v8328
        %v8330 = vpop.f32.mrf.mxu0
        %v8331 = vadd.f32 %v8002, %v8330
        %8332 = vmatmul.bf16.gmra.mxu0 %v5851
        %v8333 = vpop.f32.mrf.mxu0
        %v8334 = vadd.f32 %v8005, %v8333
        %v8335 = vpop.f32.mrf.mxu0
        %v8336 = vadd.f32 %v8007, %v8335
        %8337 = vmatmul.bf16.gmra.mxu0 %v5867
        %v8338 = vpop.f32.mrf.mxu0
        %v8339 = vadd.f32 %v8010, %v8338
        %v8340 = vpop.f32.mrf.mxu0
        %v8341 = vadd.f32 %v8012, %v8340
        %8342 = vmatmul.bf16.gmra.mxu0 %v5883
        %v8343 = vpop.f32.mrf.mxu0
        %v8344 = vadd.f32 %v8015, %v8343
        %v8345 = vpop.f32.mrf.mxu0
        %v8346 = vadd.f32 %v8017, %v8345
        %8347 = vmatmul.bf16.gmra.mxu0 %v5899
        %v8348 = vpop.f32.mrf.mxu0
        %v8349 = vadd.f32 %v8020, %v8348
        %v8350 = vpop.f32.mrf.mxu0
        %v8351 = vadd.f32 %v8022, %v8350
        %8352 = vmatmul.bf16.gmra.mxu0 %v5915
        %v8353 = vpop.f32.mrf.mxu0
        %v8354 = vadd.f32 %v8025, %v8353
        %v8355 = vpop.f32.mrf.mxu0
        %v8356 = vadd.f32 %v8027, %v8355
        %8357 = vmatmul.bf16.gmra.mxu0 %v5931
        %v8358 = vpop.f32.mrf.mxu0
        %v8359 = vadd.f32 %v8030, %v8358
        %v8360 = vpop.f32.mrf.mxu0
        %v8361 = vadd.f32 %v8032, %v8360
        %8362 = vmatmul.bf16.gmra.mxu0 %v5947
        %v8363 = vpop.f32.mrf.mxu0
        %v8364 = vadd.f32 %v8035, %v8363
        %v8365 = vpop.f32.mrf.mxu0
        %v8366 = vadd.f32 %v8037, %v8365
        %8367 = vmatmul.bf16.gmra.mxu0 %v5963
        %v8368 = vpop.f32.mrf.mxu0
        %v8369 = vadd.f32 %v8040, %v8368
        %v8370 = vpop.f32.mrf.mxu0
        %v8371 = vadd.f32 %v8042, %v8370
        %8372 = vmatmul.bf16.gmra.mxu0 %v5979
        %v8373 = vpop.f32.mrf.mxu0
        %v8374 = vadd.f32 %v8045, %v8373
        %v8375 = vpop.f32.mrf.mxu0
        %v8376 = vadd.f32 %v8047, %v8375
        %8377 = vmatmul.bf16.gmra.mxu0 %v5995
        %v8378 = vpop.f32.mrf.mxu0
        %v8379 = vadd.f32 %v8050, %v8378
        %v8380 = vpop.f32.mrf.mxu0
        %v8381 = vadd.f32 %v8052, %v8380
        %8382 = vmatmul.bf16.gmra.mxu0 %v6011
        %v8383 = vpop.f32.mrf.mxu0
        %v8384 = vadd.f32 %v8055, %v8383
        %v8385 = vpop.f32.mrf.mxu0
        %v8386 = vadd.f32 %v8057, %v8385
        %8387 = vmatmul.bf16.gmra.mxu0 %v6027
        %v8388 = vpop.f32.mrf.mxu0
        %v8389 = vadd.f32 %v8060, %v8388
        %v8390 = vpop.f32.mrf.mxu0
        %v8391 = vadd.f32 %v8062, %v8390
        %8392 = vmatmul.bf16.gmra.mxu0 %v6043
        %v8393 = vpop.f32.mrf.mxu0
        %v8394 = vadd.f32 %v8065, %v8393
        %v8395 = vpop.f32.mrf.mxu0
        %v8396 = vadd.f32 %v8067, %v8395
        %8397 = vmatmul.bf16.gmra.mxu0 %v6059
        %v8398 = vpop.f32.mrf.mxu0
        %v8399 = vadd.f32 %v8070, %v8398
        %v8400 = vpop.f32.mrf.mxu0
        %v8401 = vadd.f32 %v8072, %v8400
        %8402 = vmatmul.bf16.gmra.mxu0 %v6075
        %v8403 = vpop.f32.mrf.mxu0
        %v8404 = vadd.f32 %v8075, %v8403
        %v8405 = vpop.f32.mrf.mxu0
        %v8406 = vadd.f32 %v8077, %v8405
        %8407 = vmatmul.bf16.gmra.mxu0 %v6091
        %v8408 = vpop.f32.mrf.mxu0
        %v8409 = vadd.f32 %v8080, %v8408
        %v8410 = vpop.f32.mrf.mxu0
        %v8411 = vadd.f32 %v8082, %v8410
        %8412 = vmatmul.bf16.gmra.mxu0 %v6107
        %v8413 = vpop.f32.mrf.mxu0
        %v8414 = vadd.f32 %v8085, %v8413
        %v8415 = vpop.f32.mrf.mxu0
        %v8416 = vadd.f32 %v8087, %v8415
        %8417 = vmatmul.bf16.gmra.mxu0 %v6123
        %v8418 = vpop.f32.mrf.mxu0
        %v8419 = vadd.f32 %v8090, %v8418
        %v8420 = vpop.f32.mrf.mxu0
        %v8421 = vadd.f32 %v8092, %v8420
        %8422 = vmatmul.bf16.gmra.mxu0 %v6139
        %v8423 = vpop.f32.mrf.mxu0
        %v8424 = vadd.f32 %v8095, %v8423
        %v8425 = vpop.f32.mrf.mxu0
        %v8426 = vadd.f32 %v8097, %v8425
        %8427 = vmatmul.bf16.gmra.mxu0 %v6155
        %v8428 = vpop.f32.mrf.mxu0
        %v8429 = vadd.f32 %v8100, %v8428
        %v8430 = vpop.f32.mrf.mxu0
        %v8431 = vadd.f32 %v8102, %v8430
        %8432 = vmatmul.bf16.gmra.mxu0 %v6171
        %v8433 = vpop.f32.mrf.mxu0
        %v8434 = vadd.f32 %v8105, %v8433
        %v8435 = vpop.f32.mrf.mxu0
        %v8436 = vadd.f32 %v8107, %v8435
        %8437 = vmatmul.bf16.gmra.mxu0 %v6187
        %v8438 = vpop.f32.mrf.mxu0
        %v8439 = vadd.f32 %v8110, %v8438
        %v8440 = vpop.f32.mrf.mxu0
        %v8441 = vadd.f32 %v8112, %v8440
        %8442 = vmatmul.bf16.gmra.mxu0 %v6203
        %v8443 = vpop.f32.mrf.mxu0
        %v8444 = vadd.f32 %v8115, %v8443
        %v8445 = vpop.f32.mrf.mxu0
        %v8446 = vadd.f32 %v8117, %v8445
        %8447 = vmatmul.bf16.gmra.mxu0 %v6219
        %v8448 = vpop.f32.mrf.mxu0
        %v8449 = vadd.f32 %v8120, %v8448
        %v8450 = vpop.f32.mrf.mxu0
        %v8451 = vadd.f32 %v8122, %v8450
        %8452 = vmatmul.bf16.gmra.mxu0 %v6235
        %v8453 = vpop.f32.mrf.mxu0
        %v8454 = vadd.f32 %v8125, %v8453
        %v8455 = vpop.f32.mrf.mxu0
        %v8456 = vadd.f32 %v8127, %v8455
        %8457 = vmatmul.bf16.gmra.mxu0 %v6251
        %v8458 = vpop.f32.mrf.mxu0
        %v8459 = vadd.f32 %v8130, %v8458
        %v8460 = vpop.f32.mrf.mxu0
        %v8461 = vadd.f32 %v8132, %v8460
        %8462 = vmatmul.bf16.gmra.mxu0 %v6267
        %v8463 = vpop.f32.mrf.mxu0
        %v8464 = vadd.f32 %v8135, %v8463
        %v8465 = vpop.f32.mrf.mxu0
        %v8466 = vadd.f32 %v8137, %v8465
        %8467 = vmatmul.bf16.gmra.mxu0 %v6283
        %v8468 = vpop.f32.mrf.mxu0
        %v8469 = vadd.f32 %v8140, %v8468
        %v8470 = vpop.f32.mrf.mxu0
        %v8471 = vadd.f32 %v8142, %v8470
        %8472 = vmatmul.bf16.gmra.mxu0 %v6299
        %v8473 = vpop.f32.mrf.mxu0
        %v8474 = vadd.f32 %v8145, %v8473
        %v8475 = vpop.f32.mrf.mxu0
        %v8476 = vadd.f32 %v8147, %v8475
        %8477 = vmatmul.bf16.gmra.mxu0 %v6315
        %v8478 = vpop.f32.mrf.mxu0
        %v8479 = vadd.f32 %v8150, %v8478
        %v8480 = vpop.f32.mrf.mxu0
        %v8481 = vadd.f32 %v8152, %v8480
        %8482 = vmatmul.bf16.gmra.mxu0 %v6331
        %v8483 = vpop.f32.mrf.mxu0
        %v8484 = vadd.f32 %v8155, %v8483
        %v8485 = vpop.f32.mrf.mxu0
        %v8486 = vadd.f32 %v8157, %v8485
        %8487 = vmatmul.bf16.gmra.mxu0 %v6347
        %v8488 = vpop.f32.mrf.mxu0
        %v8489 = vadd.f32 %v8160, %v8488
        %v8490 = vpop.f32.mrf.mxu0
        %v8491 = vadd.f32 %v8162, %v8490
        %8492 = vmatmul.bf16.gmra.mxu0 %v6363
        %v8493 = vpop.f32.mrf.mxu0
        %v8494 = vadd.f32 %v8165, %v8493
        %v8495 = vpop.f32.mrf.mxu0
        %v8496 = vadd.f32 %v8167, %v8495
        %8497 = vmatmul.bf16.gmra.mxu0 %v6379
        %v8498 = vpop.f32.mrf.mxu0
        %v8499 = vadd.f32 %v8170, %v8498
        %v8500 = vpop.f32.mrf.mxu0
        %v8501 = vadd.f32 %v8172, %v8500
        %8502 = vmatmul.bf16.gmra.mxu0 %v6395
        %v8503 = vpop.f32.mrf.mxu0
        %v8504 = vadd.f32 %v8175, %v8503
        %v8505 = vpop.f32.mrf.mxu0
        %v8506 = vadd.f32 %v8177, %v8505
        %8507 = vmatmul.bf16.gmra.mxu0 %v6411
        %v8508 = vpop.f32.mrf.mxu0
        %v8509 = vadd.f32 %v8180, %v8508
        %v8510 = vpop.f32.mrf.mxu0
        %v8511 = vadd.f32 %v8182, %v8510
        %8512 = vmatmul.bf16.gmra.mxu0 %v6427
        %v8513 = vpop.f32.mrf.mxu0
        %v8514 = vadd.f32 %v8185, %v8513
        %v8515 = vpop.f32.mrf.mxu0
        %v8516 = vadd.f32 %v8187, %v8515
        %8517 = vmatmul.bf16.gmra.mxu0 %v6443
        %v8518 = vpop.f32.mrf.mxu0
        %v8519 = vadd.f32 %v8190, %v8518
        %v8520 = vpop.f32.mrf.mxu0
        %v8521 = vadd.f32 %v8192, %v8520
        %8522 = vmatmul.bf16.gmra.mxu0 %v6459
        %v8523 = vpop.f32.mrf.mxu0
        %v8524 = vadd.f32 %v8195, %v8523
        %v8525 = vpop.f32.mrf.mxu0
        %v8526 = vadd.f32 %v8197, %v8525
        %8527 = vmatmul.bf16.gmra.mxu0 %v6475
        %v8528 = vpop.f32.mrf.mxu0
        %v8529 = vadd.f32 %v8200, %v8528
        %v8530 = vpop.f32.mrf.mxu0
        %v8531 = vadd.f32 %v8202, %v8530
        %8532 = vmatmul.bf16.gmra.mxu0 %v6491
        %v8533 = vpop.f32.mrf.mxu0
        %v8534 = vadd.f32 %v8205, %v8533
        %v8535 = vpop.f32.mrf.mxu0
        %v8536 = vadd.f32 %v8207, %v8535
        %8537 = vmatmul.bf16.gmra.mxu0 %v6507
        %v8538 = vpop.f32.mrf.mxu0
        %v8539 = vadd.f32 %v8210, %v8538
        %v8540 = vpop.f32.mrf.mxu0
        %v8541 = vadd.f32 %v8212, %v8540
        %8542 = vmatmul.bf16.gmra.mxu0 %v6523
        %v8543 = vpop.f32.mrf.mxu0
        %v8544 = vadd.f32 %v8215, %v8543
        %v8545 = vpop.f32.mrf.mxu0
        %v8546 = vadd.f32 %v8217, %v8545
        %8547 = vdwg.mxu0
        %8548 = vmatpush.bf16.msra.mxu0 %v552
        %8549 = vmatpush.bf16.msra.mxu0 %v551
        %8550 = vmatpush.bf16.msra.mxu0 %v550
        %8551 = vmatpush.bf16.msra.mxu0 %v549
        %8552 = vmatpush.bf16.msra.mxu0 %v548
        %8553 = vmatpush.bf16.msra.mxu0 %v547
        %8554 = vmatpush.bf16.msra.mxu0 %v546
        %8555 = vmatpush.bf16.msra.mxu0 %v545
        %8556 = vmatmul.bf16.gmra.mxu0 %v5516
        %v8557 = vpop.f32.mrf.mxu0
        %v8558 = vadd.f32 %v8229, %v8557
        %v8559 = vpop.f32.mrf.mxu0
        %v8560 = vadd.f32 %v8231, %v8559
        %8561 = vmatmul.bf16.gmra.mxu0 %v5532
        %v8562 = vpop.f32.mrf.mxu0
        %v8563 = vadd.f32 %v8234, %v8562
        %v8564 = vpop.f32.mrf.mxu0
        %v8565 = vadd.f32 %v8236, %v8564
        %8566 = vmatmul.bf16.gmra.mxu0 %v5548
        %v8567 = vpop.f32.mrf.mxu0
        %v8568 = vadd.f32 %v8239, %v8567
        %v8569 = vpop.f32.mrf.mxu0
        %v8570 = vadd.f32 %v8241, %v8569
        %8571 = vmatmul.bf16.gmra.mxu0 %v5564
        %v8572 = vpop.f32.mrf.mxu0
        %v8573 = vadd.f32 %v8244, %v8572
        %v8574 = vpop.f32.mrf.mxu0
        %v8575 = vadd.f32 %v8246, %v8574
        %8576 = vmatmul.bf16.gmra.mxu0 %v5580
        %v8577 = vpop.f32.mrf.mxu0
        %v8578 = vadd.f32 %v8249, %v8577
        %v8579 = vpop.f32.mrf.mxu0
        %v8580 = vadd.f32 %v8251, %v8579
        %8581 = vmatmul.bf16.gmra.mxu0 %v5596
        %v8582 = vpop.f32.mrf.mxu0
        %v8583 = vadd.f32 %v8254, %v8582
        %v8584 = vpop.f32.mrf.mxu0
        %v8585 = vadd.f32 %v8256, %v8584
        %8586 = vmatmul.bf16.gmra.mxu0 %v5612
        %v8587 = vpop.f32.mrf.mxu0
        %v8588 = vadd.f32 %v8259, %v8587
        %v8589 = vpop.f32.mrf.mxu0
        %v8590 = vadd.f32 %v8261, %v8589
        %8591 = vmatmul.bf16.gmra.mxu0 %v5628
        %v8592 = vpop.f32.mrf.mxu0
        %v8593 = vadd.f32 %v8264, %v8592
        %v8594 = vpop.f32.mrf.mxu0
        %v8595 = vadd.f32 %v8266, %v8594
        %8596 = vmatmul.bf16.gmra.mxu0 %v5644
        %v8597 = vpop.f32.mrf.mxu0
        %v8598 = vadd.f32 %v8269, %v8597
        %v8599 = vpop.f32.mrf.mxu0
        %v8600 = vadd.f32 %v8271, %v8599
        %8601 = vmatmul.bf16.gmra.mxu0 %v5660
        %v8602 = vpop.f32.mrf.mxu0
        %v8603 = vadd.f32 %v8274, %v8602
        %v8604 = vpop.f32.mrf.mxu0
        %v8605 = vadd.f32 %v8276, %v8604
        %8606 = vmatmul.bf16.gmra.mxu0 %v5676
        %v8607 = vpop.f32.mrf.mxu0
        %v8608 = vadd.f32 %v8279, %v8607
        %v8609 = vpop.f32.mrf.mxu0
        %v8610 = vadd.f32 %v8281, %v8609
        %8611 = vmatmul.bf16.gmra.mxu0 %v5692
        %v8612 = vpop.f32.mrf.mxu0
        %v8613 = vadd.f32 %v8284, %v8612
        %v8614 = vpop.f32.mrf.mxu0
        %v8615 = vadd.f32 %v8286, %v8614
        %8616 = vmatmul.bf16.gmra.mxu0 %v5708
        %v8617 = vpop.f32.mrf.mxu0
        %v8618 = vadd.f32 %v8289, %v8617
        %v8619 = vpop.f32.mrf.mxu0
        %v8620 = vadd.f32 %v8291, %v8619
        %8621 = vmatmul.bf16.gmra.mxu0 %v5724
        %v8622 = vpop.f32.mrf.mxu0
        %v8623 = vadd.f32 %v8294, %v8622
        %v8624 = vpop.f32.mrf.mxu0
        %v8625 = vadd.f32 %v8296, %v8624
        %8626 = vmatmul.bf16.gmra.mxu0 %v5740
        %v8627 = vpop.f32.mrf.mxu0
        %v8628 = vadd.f32 %v8299, %v8627
        %v8629 = vpop.f32.mrf.mxu0
        %v8630 = vadd.f32 %v8301, %v8629
        %8631 = vmatmul.bf16.gmra.mxu0 %v5756
        %v8632 = vpop.f32.mrf.mxu0
        %v8633 = vadd.f32 %v8304, %v8632
        %v8634 = vpop.f32.mrf.mxu0
        %v8635 = vadd.f32 %v8306, %v8634
        %8636 = vmatmul.bf16.gmra.mxu0 %v5772
        %v8637 = vpop.f32.mrf.mxu0
        %v8638 = vadd.f32 %v8309, %v8637
        %v8639 = vpop.f32.mrf.mxu0
        %v8640 = vadd.f32 %v8311, %v8639
        %8641 = vmatmul.bf16.gmra.mxu0 %v5788
        %v8642 = vpop.f32.mrf.mxu0
        %v8643 = vadd.f32 %v8314, %v8642
        %v8644 = vpop.f32.mrf.mxu0
        %v8645 = vadd.f32 %v8316, %v8644
        %8646 = vmatmul.bf16.gmra.mxu0 %v5804
        %v8647 = vpop.f32.mrf.mxu0
        %v8648 = vadd.f32 %v8319, %v8647
        %v8649 = vpop.f32.mrf.mxu0
        %v8650 = vadd.f32 %v8321, %v8649
        %8651 = vmatmul.bf16.gmra.mxu0 %v5820
        %v8652 = vpop.f32.mrf.mxu0
        %v8653 = vadd.f32 %v8324, %v8652
        %v8654 = vpop.f32.mrf.mxu0
        %v8655 = vadd.f32 %v8326, %v8654
        %8656 = vmatmul.bf16.gmra.mxu0 %v5836
        %v8657 = vpop.f32.mrf.mxu0
        %v8658 = vadd.f32 %v8329, %v8657
        %v8659 = vpop.f32.mrf.mxu0
        %v8660 = vadd.f32 %v8331, %v8659
        %8661 = vmatmul.bf16.gmra.mxu0 %v5852
        %v8662 = vpop.f32.mrf.mxu0
        %v8663 = vadd.f32 %v8334, %v8662
        %v8664 = vpop.f32.mrf.mxu0
        %v8665 = vadd.f32 %v8336, %v8664
        %8666 = vmatmul.bf16.gmra.mxu0 %v5868
        %v8667 = vpop.f32.mrf.mxu0
        %v8668 = vadd.f32 %v8339, %v8667
        %v8669 = vpop.f32.mrf.mxu0
        %v8670 = vadd.f32 %v8341, %v8669
        %8671 = vmatmul.bf16.gmra.mxu0 %v5884
        %v8672 = vpop.f32.mrf.mxu0
        %v8673 = vadd.f32 %v8344, %v8672
        %v8674 = vpop.f32.mrf.mxu0
        %v8675 = vadd.f32 %v8346, %v8674
        %8676 = vmatmul.bf16.gmra.mxu0 %v5900
        %v8677 = vpop.f32.mrf.mxu0
        %v8678 = vadd.f32 %v8349, %v8677
        %v8679 = vpop.f32.mrf.mxu0
        %v8680 = vadd.f32 %v8351, %v8679
        %8681 = vmatmul.bf16.gmra.mxu0 %v5916
        %v8682 = vpop.f32.mrf.mxu0
        %v8683 = vadd.f32 %v8354, %v8682
        %v8684 = vpop.f32.mrf.mxu0
        %v8685 = vadd.f32 %v8356, %v8684
        %8686 = vmatmul.bf16.gmra.mxu0 %v5932
        %v8687 = vpop.f32.mrf.mxu0
        %v8688 = vadd.f32 %v8359, %v8687
        %v8689 = vpop.f32.mrf.mxu0
        %v8690 = vadd.f32 %v8361, %v8689
        %8691 = vmatmul.bf16.gmra.mxu0 %v5948
        %v8692 = vpop.f32.mrf.mxu0
        %v8693 = vadd.f32 %v8364, %v8692
        %v8694 = vpop.f32.mrf.mxu0
        %v8695 = vadd.f32 %v8366, %v8694
        %8696 = vmatmul.bf16.gmra.mxu0 %v5964
        %v8697 = vpop.f32.mrf.mxu0
        %v8698 = vadd.f32 %v8369, %v8697
        %v8699 = vpop.f32.mrf.mxu0
        %v8700 = vadd.f32 %v8371, %v8699
        %8701 = vmatmul.bf16.gmra.mxu0 %v5980
        %v8702 = vpop.f32.mrf.mxu0
        %v8703 = vadd.f32 %v8374, %v8702
        %v8704 = vpop.f32.mrf.mxu0
        %v8705 = vadd.f32 %v8376, %v8704
        %8706 = vmatmul.bf16.gmra.mxu0 %v5996
        %v8707 = vpop.f32.mrf.mxu0
        %v8708 = vadd.f32 %v8379, %v8707
        %v8709 = vpop.f32.mrf.mxu0
        %v8710 = vadd.f32 %v8381, %v8709
        %8711 = vmatmul.bf16.gmra.mxu0 %v6012
        %v8712 = vpop.f32.mrf.mxu0
        %v8713 = vadd.f32 %v8384, %v8712
        %v8714 = vpop.f32.mrf.mxu0
        %v8715 = vadd.f32 %v8386, %v8714
        %8716 = vmatmul.bf16.gmra.mxu0 %v6028
        %v8717 = vpop.f32.mrf.mxu0
        %v8718 = vadd.f32 %v8389, %v8717
        %v8719 = vpop.f32.mrf.mxu0
        %v8720 = vadd.f32 %v8391, %v8719
        %8721 = vmatmul.bf16.gmra.mxu0 %v6044
        %v8722 = vpop.f32.mrf.mxu0
        %v8723 = vadd.f32 %v8394, %v8722
        %v8724 = vpop.f32.mrf.mxu0
        %v8725 = vadd.f32 %v8396, %v8724
        %8726 = vmatmul.bf16.gmra.mxu0 %v6060
        %v8727 = vpop.f32.mrf.mxu0
        %v8728 = vadd.f32 %v8399, %v8727
        %v8729 = vpop.f32.mrf.mxu0
        %v8730 = vadd.f32 %v8401, %v8729
        %8731 = vmatmul.bf16.gmra.mxu0 %v6076
        %v8732 = vpop.f32.mrf.mxu0
        %v8733 = vadd.f32 %v8404, %v8732
        %v8734 = vpop.f32.mrf.mxu0
        %v8735 = vadd.f32 %v8406, %v8734
        %8736 = vmatmul.bf16.gmra.mxu0 %v6092
        %v8737 = vpop.f32.mrf.mxu0
        %v8738 = vadd.f32 %v8409, %v8737
        %v8739 = vpop.f32.mrf.mxu0
        %v8740 = vadd.f32 %v8411, %v8739
        %8741 = vmatmul.bf16.gmra.mxu0 %v6108
        %v8742 = vpop.f32.mrf.mxu0
        %v8743 = vadd.f32 %v8414, %v8742
        %v8744 = vpop.f32.mrf.mxu0
        %v8745 = vadd.f32 %v8416, %v8744
        %8746 = vmatmul.bf16.gmra.mxu0 %v6124
        %v8747 = vpop.f32.mrf.mxu0
        %v8748 = vadd.f32 %v8419, %v8747
        %v8749 = vpop.f32.mrf.mxu0
        %v8750 = vadd.f32 %v8421, %v8749
        %8751 = vmatmul.bf16.gmra.mxu0 %v6140
        %v8752 = vpop.f32.mrf.mxu0
        %v8753 = vadd.f32 %v8424, %v8752
        %v8754 = vpop.f32.mrf.mxu0
        %v8755 = vadd.f32 %v8426, %v8754
        %8756 = vmatmul.bf16.gmra.mxu0 %v6156
        %v8757 = vpop.f32.mrf.mxu0
        %v8758 = vadd.f32 %v8429, %v8757
        %v8759 = vpop.f32.mrf.mxu0
        %v8760 = vadd.f32 %v8431, %v8759
        %8761 = vmatmul.bf16.gmra.mxu0 %v6172
        %v8762 = vpop.f32.mrf.mxu0
        %v8763 = vadd.f32 %v8434, %v8762
        %v8764 = vpop.f32.mrf.mxu0
        %v8765 = vadd.f32 %v8436, %v8764
        %8766 = vmatmul.bf16.gmra.mxu0 %v6188
        %v8767 = vpop.f32.mrf.mxu0
        %v8768 = vadd.f32 %v8439, %v8767
        %v8769 = vpop.f32.mrf.mxu0
        %v8770 = vadd.f32 %v8441, %v8769
        %8771 = vmatmul.bf16.gmra.mxu0 %v6204
        %v8772 = vpop.f32.mrf.mxu0
        %v8773 = vadd.f32 %v8444, %v8772
        %v8774 = vpop.f32.mrf.mxu0
        %v8775 = vadd.f32 %v8446, %v8774
        %8776 = vmatmul.bf16.gmra.mxu0 %v6220
        %v8777 = vpop.f32.mrf.mxu0
        %v8778 = vadd.f32 %v8449, %v8777
        %v8779 = vpop.f32.mrf.mxu0
        %v8780 = vadd.f32 %v8451, %v8779
        %8781 = vmatmul.bf16.gmra.mxu0 %v6236
        %v8782 = vpop.f32.mrf.mxu0
        %v8783 = vadd.f32 %v8454, %v8782
        %v8784 = vpop.f32.mrf.mxu0
        %v8785 = vadd.f32 %v8456, %v8784
        %8786 = vmatmul.bf16.gmra.mxu0 %v6252
        %v8787 = vpop.f32.mrf.mxu0
        %v8788 = vadd.f32 %v8459, %v8787
        %v8789 = vpop.f32.mrf.mxu0
        %v8790 = vadd.f32 %v8461, %v8789
        %8791 = vmatmul.bf16.gmra.mxu0 %v6268
        %v8792 = vpop.f32.mrf.mxu0
        %v8793 = vadd.f32 %v8464, %v8792
        %v8794 = vpop.f32.mrf.mxu0
        %v8795 = vadd.f32 %v8466, %v8794
        %8796 = vmatmul.bf16.gmra.mxu0 %v6284
        %v8797 = vpop.f32.mrf.mxu0
        %v8798 = vadd.f32 %v8469, %v8797
        %v8799 = vpop.f32.mrf.mxu0
        %v8800 = vadd.f32 %v8471, %v8799
        %8801 = vmatmul.bf16.gmra.mxu0 %v6300
        %v8802 = vpop.f32.mrf.mxu0
        %v8803 = vadd.f32 %v8474, %v8802
        %v8804 = vpop.f32.mrf.mxu0
        %v8805 = vadd.f32 %v8476, %v8804
        %8806 = vmatmul.bf16.gmra.mxu0 %v6316
        %v8807 = vpop.f32.mrf.mxu0
        %v8808 = vadd.f32 %v8479, %v8807
        %v8809 = vpop.f32.mrf.mxu0
        %v8810 = vadd.f32 %v8481, %v8809
        %8811 = vmatmul.bf16.gmra.mxu0 %v6332
        %v8812 = vpop.f32.mrf.mxu0
        %v8813 = vadd.f32 %v8484, %v8812
        %v8814 = vpop.f32.mrf.mxu0
        %v8815 = vadd.f32 %v8486, %v8814
        %8816 = vmatmul.bf16.gmra.mxu0 %v6348
        %v8817 = vpop.f32.mrf.mxu0
        %v8818 = vadd.f32 %v8489, %v8817
        %v8819 = vpop.f32.mrf.mxu0
        %v8820 = vadd.f32 %v8491, %v8819
        %8821 = vmatmul.bf16.gmra.mxu0 %v6364
        %v8822 = vpop.f32.mrf.mxu0
        %v8823 = vadd.f32 %v8494, %v8822
        %v8824 = vpop.f32.mrf.mxu0
        %v8825 = vadd.f32 %v8496, %v8824
        %8826 = vmatmul.bf16.gmra.mxu0 %v6380
        %v8827 = vpop.f32.mrf.mxu0
        %v8828 = vadd.f32 %v8499, %v8827
        %v8829 = vpop.f32.mrf.mxu0
        %v8830 = vadd.f32 %v8501, %v8829
        %8831 = vmatmul.bf16.gmra.mxu0 %v6396
        %v8832 = vpop.f32.mrf.mxu0
        %v8833 = vadd.f32 %v8504, %v8832
        %v8834 = vpop.f32.mrf.mxu0
        %v8835 = vadd.f32 %v8506, %v8834
        %8836 = vmatmul.bf16.gmra.mxu0 %v6412
        %v8837 = vpop.f32.mrf.mxu0
        %v8838 = vadd.f32 %v8509, %v8837
        %v8839 = vpop.f32.mrf.mxu0
        %v8840 = vadd.f32 %v8511, %v8839
        %8841 = vmatmul.bf16.gmra.mxu0 %v6428
        %v8842 = vpop.f32.mrf.mxu0
        %v8843 = vadd.f32 %v8514, %v8842
        %v8844 = vpop.f32.mrf.mxu0
        %v8845 = vadd.f32 %v8516, %v8844
        %8846 = vmatmul.bf16.gmra.mxu0 %v6444
        %v8847 = vpop.f32.mrf.mxu0
        %v8848 = vadd.f32 %v8519, %v8847
        %v8849 = vpop.f32.mrf.mxu0
        %v8850 = vadd.f32 %v8521, %v8849
        %8851 = vmatmul.bf16.gmra.mxu0 %v6460
        %v8852 = vpop.f32.mrf.mxu0
        %v8853 = vadd.f32 %v8524, %v8852
        %v8854 = vpop.f32.mrf.mxu0
        %v8855 = vadd.f32 %v8526, %v8854
        %8856 = vmatmul.bf16.gmra.mxu0 %v6476
        %v8857 = vpop.f32.mrf.mxu0
        %v8858 = vadd.f32 %v8529, %v8857
        %v8859 = vpop.f32.mrf.mxu0
        %v8860 = vadd.f32 %v8531, %v8859
        %8861 = vmatmul.bf16.gmra.mxu0 %v6492
        %v8862 = vpop.f32.mrf.mxu0
        %v8863 = vadd.f32 %v8534, %v8862
        %v8864 = vpop.f32.mrf.mxu0
        %v8865 = vadd.f32 %v8536, %v8864
        %8866 = vmatmul.bf16.gmra.mxu0 %v6508
        %v8867 = vpop.f32.mrf.mxu0
        %v8868 = vadd.f32 %v8539, %v8867
        %v8869 = vpop.f32.mrf.mxu0
        %v8870 = vadd.f32 %v8541, %v8869
        %8871 = vmatmul.bf16.gmra.mxu0 %v6524
        %v8872 = vpop.f32.mrf.mxu0
        %v8873 = vadd.f32 %v8544, %v8872
        %v8874 = vpop.f32.mrf.mxu0
        %v8875 = vadd.f32 %v8546, %v8874
        %8876 = vdwg.mxu0
        %8877 = vmatpush.bf16.msra.mxu0 %v560
        %8878 = vmatpush.bf16.msra.mxu0 %v559
        %8879 = vmatpush.bf16.msra.mxu0 %v558
        %8880 = vmatpush.bf16.msra.mxu0 %v557
        %8881 = vmatpush.bf16.msra.mxu0 %v556
        %8882 = vmatpush.bf16.msra.mxu0 %v555
        %8883 = vmatpush.bf16.msra.mxu0 %v554
        %8884 = vmatpush.bf16.msra.mxu0 %v553
        %8885 = vmatmul.bf16.gmra.mxu0 %v5517
        %v8886 = vpop.f32.mrf.mxu0
        %v8887 = vadd.f32 %v8558, %v8886
        %v8888 = vpop.f32.mrf.mxu0
        %v8889 = vadd.f32 %v8560, %v8888
        %8890 = vmatmul.bf16.gmra.mxu0 %v5533
        %v8891 = vpop.f32.mrf.mxu0
        %v8892 = vadd.f32 %v8563, %v8891
        %v8893 = vpop.f32.mrf.mxu0
        %v8894 = vadd.f32 %v8565, %v8893
        %8895 = vmatmul.bf16.gmra.mxu0 %v5549
        %v8896 = vpop.f32.mrf.mxu0
        %v8897 = vadd.f32 %v8568, %v8896
        %v8898 = vpop.f32.mrf.mxu0
        %v8899 = vadd.f32 %v8570, %v8898
        %8900 = vmatmul.bf16.gmra.mxu0 %v5565
        %v8901 = vpop.f32.mrf.mxu0
        %v8902 = vadd.f32 %v8573, %v8901
        %v8903 = vpop.f32.mrf.mxu0
        %v8904 = vadd.f32 %v8575, %v8903
        %8905 = vmatmul.bf16.gmra.mxu0 %v5581
        %v8906 = vpop.f32.mrf.mxu0
        %v8907 = vadd.f32 %v8578, %v8906
        %v8908 = vpop.f32.mrf.mxu0
        %v8909 = vadd.f32 %v8580, %v8908
        %8910 = vmatmul.bf16.gmra.mxu0 %v5597
        %v8911 = vpop.f32.mrf.mxu0
        %v8912 = vadd.f32 %v8583, %v8911
        %v8913 = vpop.f32.mrf.mxu0
        %v8914 = vadd.f32 %v8585, %v8913
        %8915 = vmatmul.bf16.gmra.mxu0 %v5613
        %v8916 = vpop.f32.mrf.mxu0
        %v8917 = vadd.f32 %v8588, %v8916
        %v8918 = vpop.f32.mrf.mxu0
        %v8919 = vadd.f32 %v8590, %v8918
        %8920 = vmatmul.bf16.gmra.mxu0 %v5629
        %v8921 = vpop.f32.mrf.mxu0
        %v8922 = vadd.f32 %v8593, %v8921
        %v8923 = vpop.f32.mrf.mxu0
        %v8924 = vadd.f32 %v8595, %v8923
        %8925 = vmatmul.bf16.gmra.mxu0 %v5645
        %v8926 = vpop.f32.mrf.mxu0
        %v8927 = vadd.f32 %v8598, %v8926
        %v8928 = vpop.f32.mrf.mxu0
        %v8929 = vadd.f32 %v8600, %v8928
        %8930 = vmatmul.bf16.gmra.mxu0 %v5661
        %v8931 = vpop.f32.mrf.mxu0
        %v8932 = vadd.f32 %v8603, %v8931
        %v8933 = vpop.f32.mrf.mxu0
        %v8934 = vadd.f32 %v8605, %v8933
        %8935 = vmatmul.bf16.gmra.mxu0 %v5677
        %v8936 = vpop.f32.mrf.mxu0
        %v8937 = vadd.f32 %v8608, %v8936
        %v8938 = vpop.f32.mrf.mxu0
        %v8939 = vadd.f32 %v8610, %v8938
        %8940 = vmatmul.bf16.gmra.mxu0 %v5693
        %v8941 = vpop.f32.mrf.mxu0
        %v8942 = vadd.f32 %v8613, %v8941
        %v8943 = vpop.f32.mrf.mxu0
        %v8944 = vadd.f32 %v8615, %v8943
        %8945 = vmatmul.bf16.gmra.mxu0 %v5709
        %v8946 = vpop.f32.mrf.mxu0
        %v8947 = vadd.f32 %v8618, %v8946
        %v8948 = vpop.f32.mrf.mxu0
        %v8949 = vadd.f32 %v8620, %v8948
        %8950 = vmatmul.bf16.gmra.mxu0 %v5725
        %v8951 = vpop.f32.mrf.mxu0
        %v8952 = vadd.f32 %v8623, %v8951
        %v8953 = vpop.f32.mrf.mxu0
        %v8954 = vadd.f32 %v8625, %v8953
        %8955 = vmatmul.bf16.gmra.mxu0 %v5741
        %v8956 = vpop.f32.mrf.mxu0
        %v8957 = vadd.f32 %v8628, %v8956
        %v8958 = vpop.f32.mrf.mxu0
        %v8959 = vadd.f32 %v8630, %v8958
        %8960 = vmatmul.bf16.gmra.mxu0 %v5757
        %v8961 = vpop.f32.mrf.mxu0
        %v8962 = vadd.f32 %v8633, %v8961
        %v8963 = vpop.f32.mrf.mxu0
        %v8964 = vadd.f32 %v8635, %v8963
        %8965 = vmatmul.bf16.gmra.mxu0 %v5773
        %v8966 = vpop.f32.mrf.mxu0
        %v8967 = vadd.f32 %v8638, %v8966
        %v8968 = vpop.f32.mrf.mxu0
        %v8969 = vadd.f32 %v8640, %v8968
        %8970 = vmatmul.bf16.gmra.mxu0 %v5789
        %v8971 = vpop.f32.mrf.mxu0
        %v8972 = vadd.f32 %v8643, %v8971
        %v8973 = vpop.f32.mrf.mxu0
        %v8974 = vadd.f32 %v8645, %v8973
        %8975 = vmatmul.bf16.gmra.mxu0 %v5805
        %v8976 = vpop.f32.mrf.mxu0
        %v8977 = vadd.f32 %v8648, %v8976
        %v8978 = vpop.f32.mrf.mxu0
        %v8979 = vadd.f32 %v8650, %v8978
        %8980 = vmatmul.bf16.gmra.mxu0 %v5821
        %v8981 = vpop.f32.mrf.mxu0
        %v8982 = vadd.f32 %v8653, %v8981
        %v8983 = vpop.f32.mrf.mxu0
        %v8984 = vadd.f32 %v8655, %v8983
        %8985 = vmatmul.bf16.gmra.mxu0 %v5837
        %v8986 = vpop.f32.mrf.mxu0
        %v8987 = vadd.f32 %v8658, %v8986
        %v8988 = vpop.f32.mrf.mxu0
        %v8989 = vadd.f32 %v8660, %v8988
        %8990 = vmatmul.bf16.gmra.mxu0 %v5853
        %v8991 = vpop.f32.mrf.mxu0
        %v8992 = vadd.f32 %v8663, %v8991
        %v8993 = vpop.f32.mrf.mxu0
        %v8994 = vadd.f32 %v8665, %v8993
        %8995 = vmatmul.bf16.gmra.mxu0 %v5869
        %v8996 = vpop.f32.mrf.mxu0
        %v8997 = vadd.f32 %v8668, %v8996
        %v8998 = vpop.f32.mrf.mxu0
        %v8999 = vadd.f32 %v8670, %v8998
        %9000 = vmatmul.bf16.gmra.mxu0 %v5885
        %v9001 = vpop.f32.mrf.mxu0
        %v9002 = vadd.f32 %v8673, %v9001
        %v9003 = vpop.f32.mrf.mxu0
        %v9004 = vadd.f32 %v8675, %v9003
        %9005 = vmatmul.bf16.gmra.mxu0 %v5901
        %v9006 = vpop.f32.mrf.mxu0
        %v9007 = vadd.f32 %v8678, %v9006
        %v9008 = vpop.f32.mrf.mxu0
        %v9009 = vadd.f32 %v8680, %v9008
        %9010 = vmatmul.bf16.gmra.mxu0 %v5917
        %v9011 = vpop.f32.mrf.mxu0
        %v9012 = vadd.f32 %v8683, %v9011
        %v9013 = vpop.f32.mrf.mxu0
        %v9014 = vadd.f32 %v8685, %v9013
        %9015 = vmatmul.bf16.gmra.mxu0 %v5933
        %v9016 = vpop.f32.mrf.mxu0
        %v9017 = vadd.f32 %v8688, %v9016
        %v9018 = vpop.f32.mrf.mxu0
        %v9019 = vadd.f32 %v8690, %v9018
        %9020 = vmatmul.bf16.gmra.mxu0 %v5949
        %v9021 = vpop.f32.mrf.mxu0
        %v9022 = vadd.f32 %v8693, %v9021
        %v9023 = vpop.f32.mrf.mxu0
        %v9024 = vadd.f32 %v8695, %v9023
        %9025 = vmatmul.bf16.gmra.mxu0 %v5965
        %v9026 = vpop.f32.mrf.mxu0
        %v9027 = vadd.f32 %v8698, %v9026
        %v9028 = vpop.f32.mrf.mxu0
        %v9029 = vadd.f32 %v8700, %v9028
        %9030 = vmatmul.bf16.gmra.mxu0 %v5981
        %v9031 = vpop.f32.mrf.mxu0
        %v9032 = vadd.f32 %v8703, %v9031
        %v9033 = vpop.f32.mrf.mxu0
        %v9034 = vadd.f32 %v8705, %v9033
        %9035 = vmatmul.bf16.gmra.mxu0 %v5997
        %v9036 = vpop.f32.mrf.mxu0
        %v9037 = vadd.f32 %v8708, %v9036
        %v9038 = vpop.f32.mrf.mxu0
        %v9039 = vadd.f32 %v8710, %v9038
        %9040 = vmatmul.bf16.gmra.mxu0 %v6013
        %v9041 = vpop.f32.mrf.mxu0
        %v9042 = vadd.f32 %v8713, %v9041
        %v9043 = vpop.f32.mrf.mxu0
        %v9044 = vadd.f32 %v8715, %v9043
        %9045 = vmatmul.bf16.gmra.mxu0 %v6029
        %v9046 = vpop.f32.mrf.mxu0
        %v9047 = vadd.f32 %v8718, %v9046
        %v9048 = vpop.f32.mrf.mxu0
        %v9049 = vadd.f32 %v8720, %v9048
        %9050 = vmatmul.bf16.gmra.mxu0 %v6045
        %v9051 = vpop.f32.mrf.mxu0
        %v9052 = vadd.f32 %v8723, %v9051
        %v9053 = vpop.f32.mrf.mxu0
        %v9054 = vadd.f32 %v8725, %v9053
        %9055 = vmatmul.bf16.gmra.mxu0 %v6061
        %v9056 = vpop.f32.mrf.mxu0
        %v9057 = vadd.f32 %v8728, %v9056
        %v9058 = vpop.f32.mrf.mxu0
        %v9059 = vadd.f32 %v8730, %v9058
        %9060 = vmatmul.bf16.gmra.mxu0 %v6077
        %v9061 = vpop.f32.mrf.mxu0
        %v9062 = vadd.f32 %v8733, %v9061
        %v9063 = vpop.f32.mrf.mxu0
        %v9064 = vadd.f32 %v8735, %v9063
        %9065 = vmatmul.bf16.gmra.mxu0 %v6093
        %v9066 = vpop.f32.mrf.mxu0
        %v9067 = vadd.f32 %v8738, %v9066
        %v9068 = vpop.f32.mrf.mxu0
        %v9069 = vadd.f32 %v8740, %v9068
        %9070 = vmatmul.bf16.gmra.mxu0 %v6109
        %v9071 = vpop.f32.mrf.mxu0
        %v9072 = vadd.f32 %v8743, %v9071
        %v9073 = vpop.f32.mrf.mxu0
        %v9074 = vadd.f32 %v8745, %v9073
        %9075 = vmatmul.bf16.gmra.mxu0 %v6125
        %v9076 = vpop.f32.mrf.mxu0
        %v9077 = vadd.f32 %v8748, %v9076
        %v9078 = vpop.f32.mrf.mxu0
        %v9079 = vadd.f32 %v8750, %v9078
        %9080 = vmatmul.bf16.gmra.mxu0 %v6141
        %v9081 = vpop.f32.mrf.mxu0
        %v9082 = vadd.f32 %v8753, %v9081
        %v9083 = vpop.f32.mrf.mxu0
        %v9084 = vadd.f32 %v8755, %v9083
        %9085 = vmatmul.bf16.gmra.mxu0 %v6157
        %v9086 = vpop.f32.mrf.mxu0
        %v9087 = vadd.f32 %v8758, %v9086
        %v9088 = vpop.f32.mrf.mxu0
        %v9089 = vadd.f32 %v8760, %v9088
        %9090 = vmatmul.bf16.gmra.mxu0 %v6173
        %v9091 = vpop.f32.mrf.mxu0
        %v9092 = vadd.f32 %v8763, %v9091
        %v9093 = vpop.f32.mrf.mxu0
        %v9094 = vadd.f32 %v8765, %v9093
        %9095 = vmatmul.bf16.gmra.mxu0 %v6189
        %v9096 = vpop.f32.mrf.mxu0
        %v9097 = vadd.f32 %v8768, %v9096
        %v9098 = vpop.f32.mrf.mxu0
        %v9099 = vadd.f32 %v8770, %v9098
        %9100 = vmatmul.bf16.gmra.mxu0 %v6205
        %v9101 = vpop.f32.mrf.mxu0
        %v9102 = vadd.f32 %v8773, %v9101
        %v9103 = vpop.f32.mrf.mxu0
        %v9104 = vadd.f32 %v8775, %v9103
        %9105 = vmatmul.bf16.gmra.mxu0 %v6221
        %v9106 = vpop.f32.mrf.mxu0
        %v9107 = vadd.f32 %v8778, %v9106
        %v9108 = vpop.f32.mrf.mxu0
        %v9109 = vadd.f32 %v8780, %v9108
        %9110 = vmatmul.bf16.gmra.mxu0 %v6237
        %v9111 = vpop.f32.mrf.mxu0
        %v9112 = vadd.f32 %v8783, %v9111
        %v9113 = vpop.f32.mrf.mxu0
        %v9114 = vadd.f32 %v8785, %v9113
        %9115 = vmatmul.bf16.gmra.mxu0 %v6253
        %v9116 = vpop.f32.mrf.mxu0
        %v9117 = vadd.f32 %v8788, %v9116
        %v9118 = vpop.f32.mrf.mxu0
        %v9119 = vadd.f32 %v8790, %v9118
        %9120 = vmatmul.bf16.gmra.mxu0 %v6269
        %v9121 = vpop.f32.mrf.mxu0
        %v9122 = vadd.f32 %v8793, %v9121
        %v9123 = vpop.f32.mrf.mxu0
        %v9124 = vadd.f32 %v8795, %v9123
        %9125 = vmatmul.bf16.gmra.mxu0 %v6285
        %v9126 = vpop.f32.mrf.mxu0
        %v9127 = vadd.f32 %v8798, %v9126
        %v9128 = vpop.f32.mrf.mxu0
        %v9129 = vadd.f32 %v8800, %v9128
        %9130 = vmatmul.bf16.gmra.mxu0 %v6301
        %v9131 = vpop.f32.mrf.mxu0
        %v9132 = vadd.f32 %v8803, %v9131
        %v9133 = vpop.f32.mrf.mxu0
        %v9134 = vadd.f32 %v8805, %v9133
        %9135 = vmatmul.bf16.gmra.mxu0 %v6317
        %v9136 = vpop.f32.mrf.mxu0
        %v9137 = vadd.f32 %v8808, %v9136
        %v9138 = vpop.f32.mrf.mxu0
        %v9139 = vadd.f32 %v8810, %v9138
        %9140 = vmatmul.bf16.gmra.mxu0 %v6333
        %v9141 = vpop.f32.mrf.mxu0
        %v9142 = vadd.f32 %v8813, %v9141
        %v9143 = vpop.f32.mrf.mxu0
        %v9144 = vadd.f32 %v8815, %v9143
        %9145 = vmatmul.bf16.gmra.mxu0 %v6349
        %v9146 = vpop.f32.mrf.mxu0
        %v9147 = vadd.f32 %v8818, %v9146
        %v9148 = vpop.f32.mrf.mxu0
        %v9149 = vadd.f32 %v8820, %v9148
        %9150 = vmatmul.bf16.gmra.mxu0 %v6365
        %v9151 = vpop.f32.mrf.mxu0
        %v9152 = vadd.f32 %v8823, %v9151
        %v9153 = vpop.f32.mrf.mxu0
        %v9154 = vadd.f32 %v8825, %v9153
        %9155 = vmatmul.bf16.gmra.mxu0 %v6381
        %v9156 = vpop.f32.mrf.mxu0
        %v9157 = vadd.f32 %v8828, %v9156
        %v9158 = vpop.f32.mrf.mxu0
        %v9159 = vadd.f32 %v8830, %v9158
        %9160 = vmatmul.bf16.gmra.mxu0 %v6397
        %v9161 = vpop.f32.mrf.mxu0
        %v9162 = vadd.f32 %v8833, %v9161
        %v9163 = vpop.f32.mrf.mxu0
        %v9164 = vadd.f32 %v8835, %v9163
        %9165 = vmatmul.bf16.gmra.mxu0 %v6413
        %v9166 = vpop.f32.mrf.mxu0
        %v9167 = vadd.f32 %v8838, %v9166
        %v9168 = vpop.f32.mrf.mxu0
        %v9169 = vadd.f32 %v8840, %v9168
        %9170 = vmatmul.bf16.gmra.mxu0 %v6429
        %v9171 = vpop.f32.mrf.mxu0
        %v9172 = vadd.f32 %v8843, %v9171
        %v9173 = vpop.f32.mrf.mxu0
        %v9174 = vadd.f32 %v8845, %v9173
        %9175 = vmatmul.bf16.gmra.mxu0 %v6445
        %v9176 = vpop.f32.mrf.mxu0
        %v9177 = vadd.f32 %v8848, %v9176
        %v9178 = vpop.f32.mrf.mxu0
        %v9179 = vadd.f32 %v8850, %v9178
        %9180 = vmatmul.bf16.gmra.mxu0 %v6461
        %v9181 = vpop.f32.mrf.mxu0
        %v9182 = vadd.f32 %v8853, %v9181
        %v9183 = vpop.f32.mrf.mxu0
        %v9184 = vadd.f32 %v8855, %v9183
        %9185 = vmatmul.bf16.gmra.mxu0 %v6477
        %v9186 = vpop.f32.mrf.mxu0
        %v9187 = vadd.f32 %v8858, %v9186
        %v9188 = vpop.f32.mrf.mxu0
        %v9189 = vadd.f32 %v8860, %v9188
        %9190 = vmatmul.bf16.gmra.mxu0 %v6493
        %v9191 = vpop.f32.mrf.mxu0
        %v9192 = vadd.f32 %v8863, %v9191
        %v9193 = vpop.f32.mrf.mxu0
        %v9194 = vadd.f32 %v8865, %v9193
        %9195 = vmatmul.bf16.gmra.mxu0 %v6509
        %v9196 = vpop.f32.mrf.mxu0
        %v9197 = vadd.f32 %v8868, %v9196
        %v9198 = vpop.f32.mrf.mxu0
        %v9199 = vadd.f32 %v8870, %v9198
        %9200 = vmatmul.bf16.gmra.mxu0 %v6525
        %v9201 = vpop.f32.mrf.mxu0
        %v9202 = vadd.f32 %v8873, %v9201
        %v9203 = vpop.f32.mrf.mxu0
        %v9204 = vadd.f32 %v8875, %v9203
        %9205 = vdwg.mxu0
        %9206 = vmatpush.bf16.msra.mxu0 %v568
        %9207 = vmatpush.bf16.msra.mxu0 %v567
        %9208 = vmatpush.bf16.msra.mxu0 %v566
        %9209 = vmatpush.bf16.msra.mxu0 %v565
        %9210 = vmatpush.bf16.msra.mxu0 %v564
        %9211 = vmatpush.bf16.msra.mxu0 %v563
        %9212 = vmatpush.bf16.msra.mxu0 %v562
        %9213 = vmatpush.bf16.msra.mxu0 %v561
        %9214 = vmatmul.bf16.gmra.mxu0 %v5518
        %v9215 = vpop.f32.mrf.mxu0
        %v9216 = vadd.f32 %v8887, %v9215
        %v9217 = vpop.f32.mrf.mxu0
        %v9218 = vadd.f32 %v8889, %v9217
        %9219 = vmatmul.bf16.gmra.mxu0 %v5534
        %v9220 = vpop.f32.mrf.mxu0
        %v9221 = vadd.f32 %v8892, %v9220
        %v9222 = vpop.f32.mrf.mxu0
        %v9223 = vadd.f32 %v8894, %v9222
        %9224 = vmatmul.bf16.gmra.mxu0 %v5550
        %v9225 = vpop.f32.mrf.mxu0
        %v9226 = vadd.f32 %v8897, %v9225
        %v9227 = vpop.f32.mrf.mxu0
        %v9228 = vadd.f32 %v8899, %v9227
        %9229 = vmatmul.bf16.gmra.mxu0 %v5566
        %v9230 = vpop.f32.mrf.mxu0
        %v9231 = vadd.f32 %v8902, %v9230
        %v9232 = vpop.f32.mrf.mxu0
        %v9233 = vadd.f32 %v8904, %v9232
        %9234 = vmatmul.bf16.gmra.mxu0 %v5582
        %v9235 = vpop.f32.mrf.mxu0
        %v9236 = vadd.f32 %v8907, %v9235
        %v9237 = vpop.f32.mrf.mxu0
        %v9238 = vadd.f32 %v8909, %v9237
        %9239 = vmatmul.bf16.gmra.mxu0 %v5598
        %v9240 = vpop.f32.mrf.mxu0
        %v9241 = vadd.f32 %v8912, %v9240
        %v9242 = vpop.f32.mrf.mxu0
        %v9243 = vadd.f32 %v8914, %v9242
        %9244 = vmatmul.bf16.gmra.mxu0 %v5614
        %v9245 = vpop.f32.mrf.mxu0
        %v9246 = vadd.f32 %v8917, %v9245
        %v9247 = vpop.f32.mrf.mxu0
        %v9248 = vadd.f32 %v8919, %v9247
        %9249 = vmatmul.bf16.gmra.mxu0 %v5630
        %v9250 = vpop.f32.mrf.mxu0
        %v9251 = vadd.f32 %v8922, %v9250
        %v9252 = vpop.f32.mrf.mxu0
        %v9253 = vadd.f32 %v8924, %v9252
        %9254 = vmatmul.bf16.gmra.mxu0 %v5646
        %v9255 = vpop.f32.mrf.mxu0
        %v9256 = vadd.f32 %v8927, %v9255
        %v9257 = vpop.f32.mrf.mxu0
        %v9258 = vadd.f32 %v8929, %v9257
        %9259 = vmatmul.bf16.gmra.mxu0 %v5662
        %v9260 = vpop.f32.mrf.mxu0
        %v9261 = vadd.f32 %v8932, %v9260
        %v9262 = vpop.f32.mrf.mxu0
        %v9263 = vadd.f32 %v8934, %v9262
        %9264 = vmatmul.bf16.gmra.mxu0 %v5678
        %v9265 = vpop.f32.mrf.mxu0
        %v9266 = vadd.f32 %v8937, %v9265
        %v9267 = vpop.f32.mrf.mxu0
        %v9268 = vadd.f32 %v8939, %v9267
        %9269 = vmatmul.bf16.gmra.mxu0 %v5694
        %v9270 = vpop.f32.mrf.mxu0
        %v9271 = vadd.f32 %v8942, %v9270
        %v9272 = vpop.f32.mrf.mxu0
        %v9273 = vadd.f32 %v8944, %v9272
        %9274 = vmatmul.bf16.gmra.mxu0 %v5710
        %v9275 = vpop.f32.mrf.mxu0
        %v9276 = vadd.f32 %v8947, %v9275
        %v9277 = vpop.f32.mrf.mxu0
        %v9278 = vadd.f32 %v8949, %v9277
        %9279 = vmatmul.bf16.gmra.mxu0 %v5726
        %v9280 = vpop.f32.mrf.mxu0
        %v9281 = vadd.f32 %v8952, %v9280
        %v9282 = vpop.f32.mrf.mxu0
        %v9283 = vadd.f32 %v8954, %v9282
        %9284 = vmatmul.bf16.gmra.mxu0 %v5742
        %v9285 = vpop.f32.mrf.mxu0
        %v9286 = vadd.f32 %v8957, %v9285
        %v9287 = vpop.f32.mrf.mxu0
        %v9288 = vadd.f32 %v8959, %v9287
        %9289 = vmatmul.bf16.gmra.mxu0 %v5758
        %v9290 = vpop.f32.mrf.mxu0
        %v9291 = vadd.f32 %v8962, %v9290
        %v9292 = vpop.f32.mrf.mxu0
        %v9293 = vadd.f32 %v8964, %v9292
        %9294 = vmatmul.bf16.gmra.mxu0 %v5774
        %v9295 = vpop.f32.mrf.mxu0
        %v9296 = vadd.f32 %v8967, %v9295
        %v9297 = vpop.f32.mrf.mxu0
        %v9298 = vadd.f32 %v8969, %v9297
        %9299 = vmatmul.bf16.gmra.mxu0 %v5790
        %v9300 = vpop.f32.mrf.mxu0
        %v9301 = vadd.f32 %v8972, %v9300
        %v9302 = vpop.f32.mrf.mxu0
        %v9303 = vadd.f32 %v8974, %v9302
        %9304 = vmatmul.bf16.gmra.mxu0 %v5806
        %v9305 = vpop.f32.mrf.mxu0
        %v9306 = vadd.f32 %v8977, %v9305
        %v9307 = vpop.f32.mrf.mxu0
        %v9308 = vadd.f32 %v8979, %v9307
        %9309 = vmatmul.bf16.gmra.mxu0 %v5822
        %v9310 = vpop.f32.mrf.mxu0
        %v9311 = vadd.f32 %v8982, %v9310
        %v9312 = vpop.f32.mrf.mxu0
        %v9313 = vadd.f32 %v8984, %v9312
        %9314 = vmatmul.bf16.gmra.mxu0 %v5838
        %v9315 = vpop.f32.mrf.mxu0
        %v9316 = vadd.f32 %v8987, %v9315
        %v9317 = vpop.f32.mrf.mxu0
        %v9318 = vadd.f32 %v8989, %v9317
        %9319 = vmatmul.bf16.gmra.mxu0 %v5854
        %v9320 = vpop.f32.mrf.mxu0
        %v9321 = vadd.f32 %v8992, %v9320
        %v9322 = vpop.f32.mrf.mxu0
        %v9323 = vadd.f32 %v8994, %v9322
        %9324 = vmatmul.bf16.gmra.mxu0 %v5870
        %v9325 = vpop.f32.mrf.mxu0
        %v9326 = vadd.f32 %v8997, %v9325
        %v9327 = vpop.f32.mrf.mxu0
        %v9328 = vadd.f32 %v8999, %v9327
        %9329 = vmatmul.bf16.gmra.mxu0 %v5886
        %v9330 = vpop.f32.mrf.mxu0
        %v9331 = vadd.f32 %v9002, %v9330
        %v9332 = vpop.f32.mrf.mxu0
        %v9333 = vadd.f32 %v9004, %v9332
        %9334 = vmatmul.bf16.gmra.mxu0 %v5902
        %v9335 = vpop.f32.mrf.mxu0
        %v9336 = vadd.f32 %v9007, %v9335
        %v9337 = vpop.f32.mrf.mxu0
        %v9338 = vadd.f32 %v9009, %v9337
        %9339 = vmatmul.bf16.gmra.mxu0 %v5918
        %v9340 = vpop.f32.mrf.mxu0
        %v9341 = vadd.f32 %v9012, %v9340
        %v9342 = vpop.f32.mrf.mxu0
        %v9343 = vadd.f32 %v9014, %v9342
        %9344 = vmatmul.bf16.gmra.mxu0 %v5934
        %v9345 = vpop.f32.mrf.mxu0
        %v9346 = vadd.f32 %v9017, %v9345
        %v9347 = vpop.f32.mrf.mxu0
        %v9348 = vadd.f32 %v9019, %v9347
        %9349 = vmatmul.bf16.gmra.mxu0 %v5950
        %v9350 = vpop.f32.mrf.mxu0
        %v9351 = vadd.f32 %v9022, %v9350
        %v9352 = vpop.f32.mrf.mxu0
        %v9353 = vadd.f32 %v9024, %v9352
        %9354 = vmatmul.bf16.gmra.mxu0 %v5966
        %v9355 = vpop.f32.mrf.mxu0
        %v9356 = vadd.f32 %v9027, %v9355
        %v9357 = vpop.f32.mrf.mxu0
        %v9358 = vadd.f32 %v9029, %v9357
        %9359 = vmatmul.bf16.gmra.mxu0 %v5982
        %v9360 = vpop.f32.mrf.mxu0
        %v9361 = vadd.f32 %v9032, %v9360
        %v9362 = vpop.f32.mrf.mxu0
        %v9363 = vadd.f32 %v9034, %v9362
        %9364 = vmatmul.bf16.gmra.mxu0 %v5998
        %v9365 = vpop.f32.mrf.mxu0
        %v9366 = vadd.f32 %v9037, %v9365
        %v9367 = vpop.f32.mrf.mxu0
        %v9368 = vadd.f32 %v9039, %v9367
        %9369 = vmatmul.bf16.gmra.mxu0 %v6014
        %v9370 = vpop.f32.mrf.mxu0
        %v9371 = vadd.f32 %v9042, %v9370
        %v9372 = vpop.f32.mrf.mxu0
        %v9373 = vadd.f32 %v9044, %v9372
        %9374 = vmatmul.bf16.gmra.mxu0 %v6030
        %v9375 = vpop.f32.mrf.mxu0
        %v9376 = vadd.f32 %v9047, %v9375
        %v9377 = vpop.f32.mrf.mxu0
        %v9378 = vadd.f32 %v9049, %v9377
        %9379 = vmatmul.bf16.gmra.mxu0 %v6046
        %v9380 = vpop.f32.mrf.mxu0
        %v9381 = vadd.f32 %v9052, %v9380
        %v9382 = vpop.f32.mrf.mxu0
        %v9383 = vadd.f32 %v9054, %v9382
        %9384 = vmatmul.bf16.gmra.mxu0 %v6062
        %v9385 = vpop.f32.mrf.mxu0
        %v9386 = vadd.f32 %v9057, %v9385
        %v9387 = vpop.f32.mrf.mxu0
        %v9388 = vadd.f32 %v9059, %v9387
        %9389 = vmatmul.bf16.gmra.mxu0 %v6078
        %v9390 = vpop.f32.mrf.mxu0
        %v9391 = vadd.f32 %v9062, %v9390
        %v9392 = vpop.f32.mrf.mxu0
        %v9393 = vadd.f32 %v9064, %v9392
        %9394 = vmatmul.bf16.gmra.mxu0 %v6094
        %v9395 = vpop.f32.mrf.mxu0
        %v9396 = vadd.f32 %v9067, %v9395
        %v9397 = vpop.f32.mrf.mxu0
        %v9398 = vadd.f32 %v9069, %v9397
        %9399 = vmatmul.bf16.gmra.mxu0 %v6110
        %v9400 = vpop.f32.mrf.mxu0
        %v9401 = vadd.f32 %v9072, %v9400
        %v9402 = vpop.f32.mrf.mxu0
        %v9403 = vadd.f32 %v9074, %v9402
        %9404 = vmatmul.bf16.gmra.mxu0 %v6126
        %v9405 = vpop.f32.mrf.mxu0
        %v9406 = vadd.f32 %v9077, %v9405
        %v9407 = vpop.f32.mrf.mxu0
        %v9408 = vadd.f32 %v9079, %v9407
        %9409 = vmatmul.bf16.gmra.mxu0 %v6142
        %v9410 = vpop.f32.mrf.mxu0
        %v9411 = vadd.f32 %v9082, %v9410
        %v9412 = vpop.f32.mrf.mxu0
        %v9413 = vadd.f32 %v9084, %v9412
        %9414 = vmatmul.bf16.gmra.mxu0 %v6158
        %v9415 = vpop.f32.mrf.mxu0
        %v9416 = vadd.f32 %v9087, %v9415
        %v9417 = vpop.f32.mrf.mxu0
        %v9418 = vadd.f32 %v9089, %v9417
        %9419 = vmatmul.bf16.gmra.mxu0 %v6174
        %v9420 = vpop.f32.mrf.mxu0
        %v9421 = vadd.f32 %v9092, %v9420
        %v9422 = vpop.f32.mrf.mxu0
        %v9423 = vadd.f32 %v9094, %v9422
        %9424 = vmatmul.bf16.gmra.mxu0 %v6190
        %v9425 = vpop.f32.mrf.mxu0
        %v9426 = vadd.f32 %v9097, %v9425
        %v9427 = vpop.f32.mrf.mxu0
        %v9428 = vadd.f32 %v9099, %v9427
        %9429 = vmatmul.bf16.gmra.mxu0 %v6206
        %v9430 = vpop.f32.mrf.mxu0
        %v9431 = vadd.f32 %v9102, %v9430
        %v9432 = vpop.f32.mrf.mxu0
        %v9433 = vadd.f32 %v9104, %v9432
        %9434 = vmatmul.bf16.gmra.mxu0 %v6222
        %v9435 = vpop.f32.mrf.mxu0
        %v9436 = vadd.f32 %v9107, %v9435
        %v9437 = vpop.f32.mrf.mxu0
        %v9438 = vadd.f32 %v9109, %v9437
        %9439 = vmatmul.bf16.gmra.mxu0 %v6238
        %v9440 = vpop.f32.mrf.mxu0
        %v9441 = vadd.f32 %v9112, %v9440
        %v9442 = vpop.f32.mrf.mxu0
        %v9443 = vadd.f32 %v9114, %v9442
        %9444 = vmatmul.bf16.gmra.mxu0 %v6254
        %v9445 = vpop.f32.mrf.mxu0
        %v9446 = vadd.f32 %v9117, %v9445
        %v9447 = vpop.f32.mrf.mxu0
        %v9448 = vadd.f32 %v9119, %v9447
        %9449 = vmatmul.bf16.gmra.mxu0 %v6270
        %v9450 = vpop.f32.mrf.mxu0
        %v9451 = vadd.f32 %v9122, %v9450
        %v9452 = vpop.f32.mrf.mxu0
        %v9453 = vadd.f32 %v9124, %v9452
        %9454 = vmatmul.bf16.gmra.mxu0 %v6286
        %v9455 = vpop.f32.mrf.mxu0
        %v9456 = vadd.f32 %v9127, %v9455
        %v9457 = vpop.f32.mrf.mxu0
        %v9458 = vadd.f32 %v9129, %v9457
        %9459 = vmatmul.bf16.gmra.mxu0 %v6302
        %v9460 = vpop.f32.mrf.mxu0
        %v9461 = vadd.f32 %v9132, %v9460
        %v9462 = vpop.f32.mrf.mxu0
        %v9463 = vadd.f32 %v9134, %v9462
        %9464 = vmatmul.bf16.gmra.mxu0 %v6318
        %v9465 = vpop.f32.mrf.mxu0
        %v9466 = vadd.f32 %v9137, %v9465
        %v9467 = vpop.f32.mrf.mxu0
        %v9468 = vadd.f32 %v9139, %v9467
        %9469 = vmatmul.bf16.gmra.mxu0 %v6334
        %v9470 = vpop.f32.mrf.mxu0
        %v9471 = vadd.f32 %v9142, %v9470
        %v9472 = vpop.f32.mrf.mxu0
        %v9473 = vadd.f32 %v9144, %v9472
        %9474 = vmatmul.bf16.gmra.mxu0 %v6350
        %v9475 = vpop.f32.mrf.mxu0
        %v9476 = vadd.f32 %v9147, %v9475
        %v9477 = vpop.f32.mrf.mxu0
        %v9478 = vadd.f32 %v9149, %v9477
        %9479 = vmatmul.bf16.gmra.mxu0 %v6366
        %v9480 = vpop.f32.mrf.mxu0
        %v9481 = vadd.f32 %v9152, %v9480
        %v9482 = vpop.f32.mrf.mxu0
        %v9483 = vadd.f32 %v9154, %v9482
        %9484 = vmatmul.bf16.gmra.mxu0 %v6382
        %v9485 = vpop.f32.mrf.mxu0
        %v9486 = vadd.f32 %v9157, %v9485
        %v9487 = vpop.f32.mrf.mxu0
        %v9488 = vadd.f32 %v9159, %v9487
        %9489 = vmatmul.bf16.gmra.mxu0 %v6398
        %v9490 = vpop.f32.mrf.mxu0
        %v9491 = vadd.f32 %v9162, %v9490
        %v9492 = vpop.f32.mrf.mxu0
        %v9493 = vadd.f32 %v9164, %v9492
        %9494 = vmatmul.bf16.gmra.mxu0 %v6414
        %v9495 = vpop.f32.mrf.mxu0
        %v9496 = vadd.f32 %v9167, %v9495
        %v9497 = vpop.f32.mrf.mxu0
        %v9498 = vadd.f32 %v9169, %v9497
        %9499 = vmatmul.bf16.gmra.mxu0 %v6430
        %v9500 = vpop.f32.mrf.mxu0
        %v9501 = vadd.f32 %v9172, %v9500
        %v9502 = vpop.f32.mrf.mxu0
        %v9503 = vadd.f32 %v9174, %v9502
        %9504 = vmatmul.bf16.gmra.mxu0 %v6446
        %v9505 = vpop.f32.mrf.mxu0
        %v9506 = vadd.f32 %v9177, %v9505
        %v9507 = vpop.f32.mrf.mxu0
        %v9508 = vadd.f32 %v9179, %v9507
        %9509 = vmatmul.bf16.gmra.mxu0 %v6462
        %v9510 = vpop.f32.mrf.mxu0
        %v9511 = vadd.f32 %v9182, %v9510
        %v9512 = vpop.f32.mrf.mxu0
        %v9513 = vadd.f32 %v9184, %v9512
        %9514 = vmatmul.bf16.gmra.mxu0 %v6478
        %v9515 = vpop.f32.mrf.mxu0
        %v9516 = vadd.f32 %v9187, %v9515
        %v9517 = vpop.f32.mrf.mxu0
        %v9518 = vadd.f32 %v9189, %v9517
        %9519 = vmatmul.bf16.gmra.mxu0 %v6494
        %v9520 = vpop.f32.mrf.mxu0
        %v9521 = vadd.f32 %v9192, %v9520
        %v9522 = vpop.f32.mrf.mxu0
        %v9523 = vadd.f32 %v9194, %v9522
        %9524 = vmatmul.bf16.gmra.mxu0 %v6510
        %v9525 = vpop.f32.mrf.mxu0
        %v9526 = vadd.f32 %v9197, %v9525
        %v9527 = vpop.f32.mrf.mxu0
        %v9528 = vadd.f32 %v9199, %v9527
        %9529 = vmatmul.bf16.gmra.mxu0 %v6526
        %v9530 = vpop.f32.mrf.mxu0
        %v9531 = vadd.f32 %v9202, %v9530
        %v9532 = vpop.f32.mrf.mxu0
        %v9533 = vadd.f32 %v9204, %v9532
        %9534 = vdwg.mxu0
        %9535 = vmatpush.bf16.msra.mxu0 %v576
        %9536 = vmatpush.bf16.msra.mxu0 %v575
        %9537 = vmatpush.bf16.msra.mxu0 %v574
        %9538 = vmatpush.bf16.msra.mxu0 %v573
        %9539 = vmatpush.bf16.msra.mxu0 %v572
        %9540 = vmatpush.bf16.msra.mxu0 %v571
        %9541 = vmatpush.bf16.msra.mxu0 %v570
        %9542 = vmatpush.bf16.msra.mxu0 %v569
        %9543 = vmatmul.bf16.gmra.mxu0 %v5519
        %v9544 = vpop.f32.mrf.mxu0
        %v9545 = vadd.f32 %v9216, %v9544
        %v9546 = vpop.f32.mrf.mxu0
        %v9547 = vadd.f32 %v9218, %v9546
        %9548 = vmatmul.bf16.gmra.mxu0 %v5535
        %v9549 = vpop.f32.mrf.mxu0
        %v9550 = vadd.f32 %v9221, %v9549
        %v9551 = vpop.f32.mrf.mxu0
        %v9552 = vadd.f32 %v9223, %v9551
        %9553 = vmatmul.bf16.gmra.mxu0 %v5551
        %v9554 = vpop.f32.mrf.mxu0
        %v9555 = vadd.f32 %v9226, %v9554
        %v9556 = vpop.f32.mrf.mxu0
        %v9557 = vadd.f32 %v9228, %v9556
        %9558 = vmatmul.bf16.gmra.mxu0 %v5567
        %v9559 = vpop.f32.mrf.mxu0
        %v9560 = vadd.f32 %v9231, %v9559
        %v9561 = vpop.f32.mrf.mxu0
        %v9562 = vadd.f32 %v9233, %v9561
        %9563 = vmatmul.bf16.gmra.mxu0 %v5583
        %v9564 = vpop.f32.mrf.mxu0
        %v9565 = vadd.f32 %v9236, %v9564
        %v9566 = vpop.f32.mrf.mxu0
        %v9567 = vadd.f32 %v9238, %v9566
        %9568 = vmatmul.bf16.gmra.mxu0 %v5599
        %v9569 = vpop.f32.mrf.mxu0
        %v9570 = vadd.f32 %v9241, %v9569
        %v9571 = vpop.f32.mrf.mxu0
        %v9572 = vadd.f32 %v9243, %v9571
        %9573 = vmatmul.bf16.gmra.mxu0 %v5615
        %v9574 = vpop.f32.mrf.mxu0
        %v9575 = vadd.f32 %v9246, %v9574
        %v9576 = vpop.f32.mrf.mxu0
        %v9577 = vadd.f32 %v9248, %v9576
        %9578 = vmatmul.bf16.gmra.mxu0 %v5631
        %v9579 = vpop.f32.mrf.mxu0
        %v9580 = vadd.f32 %v9251, %v9579
        %v9581 = vpop.f32.mrf.mxu0
        %v9582 = vadd.f32 %v9253, %v9581
        %9583 = vmatmul.bf16.gmra.mxu0 %v5647
        %v9584 = vpop.f32.mrf.mxu0
        %v9585 = vadd.f32 %v9256, %v9584
        %v9586 = vpop.f32.mrf.mxu0
        %v9587 = vadd.f32 %v9258, %v9586
        %9588 = vmatmul.bf16.gmra.mxu0 %v5663
        %v9589 = vpop.f32.mrf.mxu0
        %v9590 = vadd.f32 %v9261, %v9589
        %v9591 = vpop.f32.mrf.mxu0
        %v9592 = vadd.f32 %v9263, %v9591
        %9593 = vmatmul.bf16.gmra.mxu0 %v5679
        %v9594 = vpop.f32.mrf.mxu0
        %v9595 = vadd.f32 %v9266, %v9594
        %v9596 = vpop.f32.mrf.mxu0
        %v9597 = vadd.f32 %v9268, %v9596
        %9598 = vmatmul.bf16.gmra.mxu0 %v5695
        %v9599 = vpop.f32.mrf.mxu0
        %v9600 = vadd.f32 %v9271, %v9599
        %v9601 = vpop.f32.mrf.mxu0
        %v9602 = vadd.f32 %v9273, %v9601
        %9603 = vmatmul.bf16.gmra.mxu0 %v5711
        %v9604 = vpop.f32.mrf.mxu0
        %v9605 = vadd.f32 %v9276, %v9604
        %v9606 = vpop.f32.mrf.mxu0
        %v9607 = vadd.f32 %v9278, %v9606
        %9608 = vmatmul.bf16.gmra.mxu0 %v5727
        %v9609 = vpop.f32.mrf.mxu0
        %v9610 = vadd.f32 %v9281, %v9609
        %v9611 = vpop.f32.mrf.mxu0
        %v9612 = vadd.f32 %v9283, %v9611
        %9613 = vmatmul.bf16.gmra.mxu0 %v5743
        %v9614 = vpop.f32.mrf.mxu0
        %v9615 = vadd.f32 %v9286, %v9614
        %v9616 = vpop.f32.mrf.mxu0
        %v9617 = vadd.f32 %v9288, %v9616
        %9618 = vmatmul.bf16.gmra.mxu0 %v5759
        %v9619 = vpop.f32.mrf.mxu0
        %v9620 = vadd.f32 %v9291, %v9619
        %v9621 = vpop.f32.mrf.mxu0
        %v9622 = vadd.f32 %v9293, %v9621
        %9623 = vmatmul.bf16.gmra.mxu0 %v5775
        %v9624 = vpop.f32.mrf.mxu0
        %v9625 = vadd.f32 %v9296, %v9624
        %v9626 = vpop.f32.mrf.mxu0
        %v9627 = vadd.f32 %v9298, %v9626
        %9628 = vmatmul.bf16.gmra.mxu0 %v5791
        %v9629 = vpop.f32.mrf.mxu0
        %v9630 = vadd.f32 %v9301, %v9629
        %v9631 = vpop.f32.mrf.mxu0
        %v9632 = vadd.f32 %v9303, %v9631
        %9633 = vmatmul.bf16.gmra.mxu0 %v5807
        %v9634 = vpop.f32.mrf.mxu0
        %v9635 = vadd.f32 %v9306, %v9634
        %v9636 = vpop.f32.mrf.mxu0
        %v9637 = vadd.f32 %v9308, %v9636
        %9638 = vmatmul.bf16.gmra.mxu0 %v5823
        %v9639 = vpop.f32.mrf.mxu0
        %v9640 = vadd.f32 %v9311, %v9639
        %v9641 = vpop.f32.mrf.mxu0
        %v9642 = vadd.f32 %v9313, %v9641
        %9643 = vmatmul.bf16.gmra.mxu0 %v5839
        %v9644 = vpop.f32.mrf.mxu0
        %v9645 = vadd.f32 %v9316, %v9644
        %v9646 = vpop.f32.mrf.mxu0
        %v9647 = vadd.f32 %v9318, %v9646
        %9648 = vmatmul.bf16.gmra.mxu0 %v5855
        %v9649 = vpop.f32.mrf.mxu0
        %v9650 = vadd.f32 %v9321, %v9649
        %v9651 = vpop.f32.mrf.mxu0
        %v9652 = vadd.f32 %v9323, %v9651
        %9653 = vmatmul.bf16.gmra.mxu0 %v5871
        %v9654 = vpop.f32.mrf.mxu0
        %v9655 = vadd.f32 %v9326, %v9654
        %v9656 = vpop.f32.mrf.mxu0
        %v9657 = vadd.f32 %v9328, %v9656
        %9658 = vmatmul.bf16.gmra.mxu0 %v5887
        %v9659 = vpop.f32.mrf.mxu0
        %v9660 = vadd.f32 %v9331, %v9659
        %v9661 = vpop.f32.mrf.mxu0
        %v9662 = vadd.f32 %v9333, %v9661
        %9663 = vmatmul.bf16.gmra.mxu0 %v5903
        %v9664 = vpop.f32.mrf.mxu0
        %v9665 = vadd.f32 %v9336, %v9664
        %v9666 = vpop.f32.mrf.mxu0
        %v9667 = vadd.f32 %v9338, %v9666
        %9668 = vmatmul.bf16.gmra.mxu0 %v5919
        %v9669 = vpop.f32.mrf.mxu0
        %v9670 = vadd.f32 %v9341, %v9669
        %v9671 = vpop.f32.mrf.mxu0
        %v9672 = vadd.f32 %v9343, %v9671
        %9673 = vmatmul.bf16.gmra.mxu0 %v5935
        %v9674 = vpop.f32.mrf.mxu0
        %v9675 = vadd.f32 %v9346, %v9674
        %v9676 = vpop.f32.mrf.mxu0
        %v9677 = vadd.f32 %v9348, %v9676
        %9678 = vmatmul.bf16.gmra.mxu0 %v5951
        %v9679 = vpop.f32.mrf.mxu0
        %v9680 = vadd.f32 %v9351, %v9679
        %v9681 = vpop.f32.mrf.mxu0
        %v9682 = vadd.f32 %v9353, %v9681
        %9683 = vmatmul.bf16.gmra.mxu0 %v5967
        %v9684 = vpop.f32.mrf.mxu0
        %v9685 = vadd.f32 %v9356, %v9684
        %v9686 = vpop.f32.mrf.mxu0
        %v9687 = vadd.f32 %v9358, %v9686
        %9688 = vmatmul.bf16.gmra.mxu0 %v5983
        %v9689 = vpop.f32.mrf.mxu0
        %v9690 = vadd.f32 %v9361, %v9689
        %v9691 = vpop.f32.mrf.mxu0
        %v9692 = vadd.f32 %v9363, %v9691
        %9693 = vmatmul.bf16.gmra.mxu0 %v5999
        %v9694 = vpop.f32.mrf.mxu0
        %v9695 = vadd.f32 %v9366, %v9694
        %v9696 = vpop.f32.mrf.mxu0
        %v9697 = vadd.f32 %v9368, %v9696
        %9698 = vmatmul.bf16.gmra.mxu0 %v6015
        %v9699 = vpop.f32.mrf.mxu0
        %v9700 = vadd.f32 %v9371, %v9699
        %v9701 = vpop.f32.mrf.mxu0
        %v9702 = vadd.f32 %v9373, %v9701
        %9703 = vmatmul.bf16.gmra.mxu0 %v6031
        %v9704 = vpop.f32.mrf.mxu0
        %v9705 = vadd.f32 %v9376, %v9704
        %v9706 = vpop.f32.mrf.mxu0
        %v9707 = vadd.f32 %v9378, %v9706
        %9708 = vmatmul.bf16.gmra.mxu0 %v6047
        %v9709 = vpop.f32.mrf.mxu0
        %v9710 = vadd.f32 %v9381, %v9709
        %v9711 = vpop.f32.mrf.mxu0
        %v9712 = vadd.f32 %v9383, %v9711
        %9713 = vmatmul.bf16.gmra.mxu0 %v6063
        %v9714 = vpop.f32.mrf.mxu0
        %v9715 = vadd.f32 %v9386, %v9714
        %v9716 = vpop.f32.mrf.mxu0
        %v9717 = vadd.f32 %v9388, %v9716
        %9718 = vmatmul.bf16.gmra.mxu0 %v6079
        %v9719 = vpop.f32.mrf.mxu0
        %v9720 = vadd.f32 %v9391, %v9719
        %v9721 = vpop.f32.mrf.mxu0
        %v9722 = vadd.f32 %v9393, %v9721
        %9723 = vmatmul.bf16.gmra.mxu0 %v6095
        %v9724 = vpop.f32.mrf.mxu0
        %v9725 = vadd.f32 %v9396, %v9724
        %v9726 = vpop.f32.mrf.mxu0
        %v9727 = vadd.f32 %v9398, %v9726
        %9728 = vmatmul.bf16.gmra.mxu0 %v6111
        %v9729 = vpop.f32.mrf.mxu0
        %v9730 = vadd.f32 %v9401, %v9729
        %v9731 = vpop.f32.mrf.mxu0
        %v9732 = vadd.f32 %v9403, %v9731
        %9733 = vmatmul.bf16.gmra.mxu0 %v6127
        %v9734 = vpop.f32.mrf.mxu0
        %v9735 = vadd.f32 %v9406, %v9734
        %v9736 = vpop.f32.mrf.mxu0
        %v9737 = vadd.f32 %v9408, %v9736
        %9738 = vmatmul.bf16.gmra.mxu0 %v6143
        %v9739 = vpop.f32.mrf.mxu0
        %v9740 = vadd.f32 %v9411, %v9739
        %v9741 = vpop.f32.mrf.mxu0
        %v9742 = vadd.f32 %v9413, %v9741
        %9743 = vmatmul.bf16.gmra.mxu0 %v6159
        %v9744 = vpop.f32.mrf.mxu0
        %v9745 = vadd.f32 %v9416, %v9744
        %v9746 = vpop.f32.mrf.mxu0
        %v9747 = vadd.f32 %v9418, %v9746
        %9748 = vmatmul.bf16.gmra.mxu0 %v6175
        %v9749 = vpop.f32.mrf.mxu0
        %v9750 = vadd.f32 %v9421, %v9749
        %v9751 = vpop.f32.mrf.mxu0
        %v9752 = vadd.f32 %v9423, %v9751
        %9753 = vmatmul.bf16.gmra.mxu0 %v6191
        %v9754 = vpop.f32.mrf.mxu0
        %v9755 = vadd.f32 %v9426, %v9754
        %v9756 = vpop.f32.mrf.mxu0
        %v9757 = vadd.f32 %v9428, %v9756
        %9758 = vmatmul.bf16.gmra.mxu0 %v6207
        %v9759 = vpop.f32.mrf.mxu0
        %v9760 = vadd.f32 %v9431, %v9759
        %v9761 = vpop.f32.mrf.mxu0
        %v9762 = vadd.f32 %v9433, %v9761
        %9763 = vmatmul.bf16.gmra.mxu0 %v6223
        %v9764 = vpop.f32.mrf.mxu0
        %v9765 = vadd.f32 %v9436, %v9764
        %v9766 = vpop.f32.mrf.mxu0
        %v9767 = vadd.f32 %v9438, %v9766
        %9768 = vmatmul.bf16.gmra.mxu0 %v6239
        %v9769 = vpop.f32.mrf.mxu0
        %v9770 = vadd.f32 %v9441, %v9769
        %v9771 = vpop.f32.mrf.mxu0
        %v9772 = vadd.f32 %v9443, %v9771
        %9773 = vmatmul.bf16.gmra.mxu0 %v6255
        %v9774 = vpop.f32.mrf.mxu0
        %v9775 = vadd.f32 %v9446, %v9774
        %v9776 = vpop.f32.mrf.mxu0
        %v9777 = vadd.f32 %v9448, %v9776
        %9778 = vmatmul.bf16.gmra.mxu0 %v6271
        %v9779 = vpop.f32.mrf.mxu0
        %v9780 = vadd.f32 %v9451, %v9779
        %v9781 = vpop.f32.mrf.mxu0
        %v9782 = vadd.f32 %v9453, %v9781
        %9783 = vmatmul.bf16.gmra.mxu0 %v6287
        %v9784 = vpop.f32.mrf.mxu0
        %v9785 = vadd.f32 %v9456, %v9784
        %v9786 = vpop.f32.mrf.mxu0
        %v9787 = vadd.f32 %v9458, %v9786
        %9788 = vmatmul.bf16.gmra.mxu0 %v6303
        %v9789 = vpop.f32.mrf.mxu0
        %v9790 = vadd.f32 %v9461, %v9789
        %v9791 = vpop.f32.mrf.mxu0
        %v9792 = vadd.f32 %v9463, %v9791
        %9793 = vmatmul.bf16.gmra.mxu0 %v6319
        %v9794 = vpop.f32.mrf.mxu0
        %v9795 = vadd.f32 %v9466, %v9794
        %v9796 = vpop.f32.mrf.mxu0
        %v9797 = vadd.f32 %v9468, %v9796
        %9798 = vmatmul.bf16.gmra.mxu0 %v6335
        %v9799 = vpop.f32.mrf.mxu0
        %v9800 = vadd.f32 %v9471, %v9799
        %v9801 = vpop.f32.mrf.mxu0
        %v9802 = vadd.f32 %v9473, %v9801
        %9803 = vmatmul.bf16.gmra.mxu0 %v6351
        %v9804 = vpop.f32.mrf.mxu0
        %v9805 = vadd.f32 %v9476, %v9804
        %v9806 = vpop.f32.mrf.mxu0
        %v9807 = vadd.f32 %v9478, %v9806
        %9808 = vmatmul.bf16.gmra.mxu0 %v6367
        %v9809 = vpop.f32.mrf.mxu0
        %v9810 = vadd.f32 %v9481, %v9809
        %v9811 = vpop.f32.mrf.mxu0
        %v9812 = vadd.f32 %v9483, %v9811
        %9813 = vmatmul.bf16.gmra.mxu0 %v6383
        %v9814 = vpop.f32.mrf.mxu0
        %v9815 = vadd.f32 %v9486, %v9814
        %v9816 = vpop.f32.mrf.mxu0
        %v9817 = vadd.f32 %v9488, %v9816
        %9818 = vmatmul.bf16.gmra.mxu0 %v6399
        %v9819 = vpop.f32.mrf.mxu0
        %v9820 = vadd.f32 %v9491, %v9819
        %v9821 = vpop.f32.mrf.mxu0
        %v9822 = vadd.f32 %v9493, %v9821
        %9823 = vmatmul.bf16.gmra.mxu0 %v6415
        %v9824 = vpop.f32.mrf.mxu0
        %v9825 = vadd.f32 %v9496, %v9824
        %v9826 = vpop.f32.mrf.mxu0
        %v9827 = vadd.f32 %v9498, %v9826
        %9828 = vmatmul.bf16.gmra.mxu0 %v6431
        %v9829 = vpop.f32.mrf.mxu0
        %v9830 = vadd.f32 %v9501, %v9829
        %v9831 = vpop.f32.mrf.mxu0
        %v9832 = vadd.f32 %v9503, %v9831
        %9833 = vmatmul.bf16.gmra.mxu0 %v6447
        %v9834 = vpop.f32.mrf.mxu0
        %v9835 = vadd.f32 %v9506, %v9834
        %v9836 = vpop.f32.mrf.mxu0
        %v9837 = vadd.f32 %v9508, %v9836
        %9838 = vmatmul.bf16.gmra.mxu0 %v6463
        %v9839 = vpop.f32.mrf.mxu0
        %v9840 = vadd.f32 %v9511, %v9839
        %v9841 = vpop.f32.mrf.mxu0
        %v9842 = vadd.f32 %v9513, %v9841
        %9843 = vmatmul.bf16.gmra.mxu0 %v6479
        %v9844 = vpop.f32.mrf.mxu0
        %v9845 = vadd.f32 %v9516, %v9844
        %v9846 = vpop.f32.mrf.mxu0
        %v9847 = vadd.f32 %v9518, %v9846
        %9848 = vmatmul.bf16.gmra.mxu0 %v6495
        %v9849 = vpop.f32.mrf.mxu0
        %v9850 = vadd.f32 %v9521, %v9849
        %v9851 = vpop.f32.mrf.mxu0
        %v9852 = vadd.f32 %v9523, %v9851
        %9853 = vmatmul.bf16.gmra.mxu0 %v6511
        %v9854 = vpop.f32.mrf.mxu0
        %v9855 = vadd.f32 %v9526, %v9854
        %v9856 = vpop.f32.mrf.mxu0
        %v9857 = vadd.f32 %v9528, %v9856
        %9858 = vmatmul.bf16.gmra.mxu0 %v6527
        %v9859 = vpop.f32.mrf.mxu0
        %v9860 = vadd.f32 %v9531, %v9859
        %v9861 = vpop.f32.mrf.mxu0
        %v9862 = vadd.f32 %v9533, %v9861
        %9863 = vdwg.mxu0
        %9864 = vmatpush.bf16.msra.mxu0 %v584
        %9865 = vmatpush.bf16.msra.mxu0 %v583
        %9866 = vmatpush.bf16.msra.mxu0 %v582
        %9867 = vmatpush.bf16.msra.mxu0 %v581
        %9868 = vmatpush.bf16.msra.mxu0 %v580
        %9869 = vmatpush.bf16.msra.mxu0 %v579
        %9870 = vmatpush.bf16.msra.mxu0 %v578
        %9871 = vmatpush.bf16.msra.mxu0 %v577
        %9872 = vmatmul.bf16.gmra.mxu0 %v5520
        %v9873 = vpop.f32.mrf.mxu0
        %v9874 = vadd.f32 %v9545, %v9873
        %v9875 = vpop.f32.mrf.mxu0
        %v9876 = vadd.f32 %v9547, %v9875
        %9877 = vmatmul.bf16.gmra.mxu0 %v5536
        %v9878 = vpop.f32.mrf.mxu0
        %v9879 = vadd.f32 %v9550, %v9878
        %v9880 = vpop.f32.mrf.mxu0
        %v9881 = vadd.f32 %v9552, %v9880
        %9882 = vmatmul.bf16.gmra.mxu0 %v5552
        %v9883 = vpop.f32.mrf.mxu0
        %v9884 = vadd.f32 %v9555, %v9883
        %v9885 = vpop.f32.mrf.mxu0
        %v9886 = vadd.f32 %v9557, %v9885
        %9887 = vmatmul.bf16.gmra.mxu0 %v5568
        %v9888 = vpop.f32.mrf.mxu0
        %v9889 = vadd.f32 %v9560, %v9888
        %v9890 = vpop.f32.mrf.mxu0
        %v9891 = vadd.f32 %v9562, %v9890
        %9892 = vmatmul.bf16.gmra.mxu0 %v5584
        %v9893 = vpop.f32.mrf.mxu0
        %v9894 = vadd.f32 %v9565, %v9893
        %v9895 = vpop.f32.mrf.mxu0
        %v9896 = vadd.f32 %v9567, %v9895
        %9897 = vmatmul.bf16.gmra.mxu0 %v5600
        %v9898 = vpop.f32.mrf.mxu0
        %v9899 = vadd.f32 %v9570, %v9898
        %v9900 = vpop.f32.mrf.mxu0
        %v9901 = vadd.f32 %v9572, %v9900
        %9902 = vmatmul.bf16.gmra.mxu0 %v5616
        %v9903 = vpop.f32.mrf.mxu0
        %v9904 = vadd.f32 %v9575, %v9903
        %v9905 = vpop.f32.mrf.mxu0
        %v9906 = vadd.f32 %v9577, %v9905
        %9907 = vmatmul.bf16.gmra.mxu0 %v5632
        %v9908 = vpop.f32.mrf.mxu0
        %v9909 = vadd.f32 %v9580, %v9908
        %v9910 = vpop.f32.mrf.mxu0
        %v9911 = vadd.f32 %v9582, %v9910
        %9912 = vmatmul.bf16.gmra.mxu0 %v5648
        %v9913 = vpop.f32.mrf.mxu0
        %v9914 = vadd.f32 %v9585, %v9913
        %v9915 = vpop.f32.mrf.mxu0
        %v9916 = vadd.f32 %v9587, %v9915
        %9917 = vmatmul.bf16.gmra.mxu0 %v5664
        %v9918 = vpop.f32.mrf.mxu0
        %v9919 = vadd.f32 %v9590, %v9918
        %v9920 = vpop.f32.mrf.mxu0
        %v9921 = vadd.f32 %v9592, %v9920
        %9922 = vmatmul.bf16.gmra.mxu0 %v5680
        %v9923 = vpop.f32.mrf.mxu0
        %v9924 = vadd.f32 %v9595, %v9923
        %v9925 = vpop.f32.mrf.mxu0
        %v9926 = vadd.f32 %v9597, %v9925
        %9927 = vmatmul.bf16.gmra.mxu0 %v5696
        %v9928 = vpop.f32.mrf.mxu0
        %v9929 = vadd.f32 %v9600, %v9928
        %v9930 = vpop.f32.mrf.mxu0
        %v9931 = vadd.f32 %v9602, %v9930
        %9932 = vmatmul.bf16.gmra.mxu0 %v5712
        %v9933 = vpop.f32.mrf.mxu0
        %v9934 = vadd.f32 %v9605, %v9933
        %v9935 = vpop.f32.mrf.mxu0
        %v9936 = vadd.f32 %v9607, %v9935
        %9937 = vmatmul.bf16.gmra.mxu0 %v5728
        %v9938 = vpop.f32.mrf.mxu0
        %v9939 = vadd.f32 %v9610, %v9938
        %v9940 = vpop.f32.mrf.mxu0
        %v9941 = vadd.f32 %v9612, %v9940
        %9942 = vmatmul.bf16.gmra.mxu0 %v5744
        %v9943 = vpop.f32.mrf.mxu0
        %v9944 = vadd.f32 %v9615, %v9943
        %v9945 = vpop.f32.mrf.mxu0
        %v9946 = vadd.f32 %v9617, %v9945
        %9947 = vmatmul.bf16.gmra.mxu0 %v5760
        %v9948 = vpop.f32.mrf.mxu0
        %v9949 = vadd.f32 %v9620, %v9948
        %v9950 = vpop.f32.mrf.mxu0
        %v9951 = vadd.f32 %v9622, %v9950
        %9952 = vmatmul.bf16.gmra.mxu0 %v5776
        %v9953 = vpop.f32.mrf.mxu0
        %v9954 = vadd.f32 %v9625, %v9953
        %v9955 = vpop.f32.mrf.mxu0
        %v9956 = vadd.f32 %v9627, %v9955
        %9957 = vmatmul.bf16.gmra.mxu0 %v5792
        %v9958 = vpop.f32.mrf.mxu0
        %v9959 = vadd.f32 %v9630, %v9958
        %v9960 = vpop.f32.mrf.mxu0
        %v9961 = vadd.f32 %v9632, %v9960
        %9962 = vmatmul.bf16.gmra.mxu0 %v5808
        %v9963 = vpop.f32.mrf.mxu0
        %v9964 = vadd.f32 %v9635, %v9963
        %v9965 = vpop.f32.mrf.mxu0
        %v9966 = vadd.f32 %v9637, %v9965
        %9967 = vmatmul.bf16.gmra.mxu0 %v5824
        %v9968 = vpop.f32.mrf.mxu0
        %v9969 = vadd.f32 %v9640, %v9968
        %v9970 = vpop.f32.mrf.mxu0
        %v9971 = vadd.f32 %v9642, %v9970
        %9972 = vmatmul.bf16.gmra.mxu0 %v5840
        %v9973 = vpop.f32.mrf.mxu0
        %v9974 = vadd.f32 %v9645, %v9973
        %v9975 = vpop.f32.mrf.mxu0
        %v9976 = vadd.f32 %v9647, %v9975
        %9977 = vmatmul.bf16.gmra.mxu0 %v5856
        %v9978 = vpop.f32.mrf.mxu0
        %v9979 = vadd.f32 %v9650, %v9978
        %v9980 = vpop.f32.mrf.mxu0
        %v9981 = vadd.f32 %v9652, %v9980
        %9982 = vmatmul.bf16.gmra.mxu0 %v5872
        %v9983 = vpop.f32.mrf.mxu0
        %v9984 = vadd.f32 %v9655, %v9983
        %v9985 = vpop.f32.mrf.mxu0
        %v9986 = vadd.f32 %v9657, %v9985
        %9987 = vmatmul.bf16.gmra.mxu0 %v5888
        %v9988 = vpop.f32.mrf.mxu0
        %v9989 = vadd.f32 %v9660, %v9988
        %v9990 = vpop.f32.mrf.mxu0
        %v9991 = vadd.f32 %v9662, %v9990
        %9992 = vmatmul.bf16.gmra.mxu0 %v5904
        %v9993 = vpop.f32.mrf.mxu0
        %v9994 = vadd.f32 %v9665, %v9993
        %v9995 = vpop.f32.mrf.mxu0
        %v9996 = vadd.f32 %v9667, %v9995
        %9997 = vmatmul.bf16.gmra.mxu0 %v5920
        %v9998 = vpop.f32.mrf.mxu0
        %v9999 = vadd.f32 %v9670, %v9998
        %v10000 = vpop.f32.mrf.mxu0
        %v10001 = vadd.f32 %v9672, %v10000
        %10002 = vmatmul.bf16.gmra.mxu0 %v5936
        %v10003 = vpop.f32.mrf.mxu0
        %v10004 = vadd.f32 %v9675, %v10003
        %v10005 = vpop.f32.mrf.mxu0
        %v10006 = vadd.f32 %v9677, %v10005
        %10007 = vmatmul.bf16.gmra.mxu0 %v5952
        %v10008 = vpop.f32.mrf.mxu0
        %v10009 = vadd.f32 %v9680, %v10008
        %v10010 = vpop.f32.mrf.mxu0
        %v10011 = vadd.f32 %v9682, %v10010
        %10012 = vmatmul.bf16.gmra.mxu0 %v5968
        %v10013 = vpop.f32.mrf.mxu0
        %v10014 = vadd.f32 %v9685, %v10013
        %v10015 = vpop.f32.mrf.mxu0
        %v10016 = vadd.f32 %v9687, %v10015
        %10017 = vmatmul.bf16.gmra.mxu0 %v5984
        %v10018 = vpop.f32.mrf.mxu0
        %v10019 = vadd.f32 %v9690, %v10018
        %v10020 = vpop.f32.mrf.mxu0
        %v10021 = vadd.f32 %v9692, %v10020
        %10022 = vmatmul.bf16.gmra.mxu0 %v6000
        %v10023 = vpop.f32.mrf.mxu0
        %v10024 = vadd.f32 %v9695, %v10023
        %v10025 = vpop.f32.mrf.mxu0
        %v10026 = vadd.f32 %v9697, %v10025
        %10027 = vmatmul.bf16.gmra.mxu0 %v6016
        %v10028 = vpop.f32.mrf.mxu0
        %v10029 = vadd.f32 %v9700, %v10028
        %v10030 = vpop.f32.mrf.mxu0
        %v10031 = vadd.f32 %v9702, %v10030
        %10032 = vmatmul.bf16.gmra.mxu0 %v6032
        %v10033 = vpop.f32.mrf.mxu0
        %v10034 = vadd.f32 %v9705, %v10033
        %v10035 = vpop.f32.mrf.mxu0
        %v10036 = vadd.f32 %v9707, %v10035
        %10037 = vmatmul.bf16.gmra.mxu0 %v6048
        %v10038 = vpop.f32.mrf.mxu0
        %v10039 = vadd.f32 %v9710, %v10038
        %v10040 = vpop.f32.mrf.mxu0
        %v10041 = vadd.f32 %v9712, %v10040
        %10042 = vmatmul.bf16.gmra.mxu0 %v6064
        %v10043 = vpop.f32.mrf.mxu0
        %v10044 = vadd.f32 %v9715, %v10043
        %v10045 = vpop.f32.mrf.mxu0
        %v10046 = vadd.f32 %v9717, %v10045
        %10047 = vmatmul.bf16.gmra.mxu0 %v6080
        %v10048 = vpop.f32.mrf.mxu0
        %v10049 = vadd.f32 %v9720, %v10048
        %v10050 = vpop.f32.mrf.mxu0
        %v10051 = vadd.f32 %v9722, %v10050
        %10052 = vmatmul.bf16.gmra.mxu0 %v6096
        %v10053 = vpop.f32.mrf.mxu0
        %v10054 = vadd.f32 %v9725, %v10053
        %v10055 = vpop.f32.mrf.mxu0
        %v10056 = vadd.f32 %v9727, %v10055
        %10057 = vmatmul.bf16.gmra.mxu0 %v6112
        %v10058 = vpop.f32.mrf.mxu0
        %v10059 = vadd.f32 %v9730, %v10058
        %v10060 = vpop.f32.mrf.mxu0
        %v10061 = vadd.f32 %v9732, %v10060
        %10062 = vmatmul.bf16.gmra.mxu0 %v6128
        %v10063 = vpop.f32.mrf.mxu0
        %v10064 = vadd.f32 %v9735, %v10063
        %v10065 = vpop.f32.mrf.mxu0
        %v10066 = vadd.f32 %v9737, %v10065
        %10067 = vmatmul.bf16.gmra.mxu0 %v6144
        %v10068 = vpop.f32.mrf.mxu0
        %v10069 = vadd.f32 %v9740, %v10068
        %v10070 = vpop.f32.mrf.mxu0
        %v10071 = vadd.f32 %v9742, %v10070
        %10072 = vmatmul.bf16.gmra.mxu0 %v6160
        %v10073 = vpop.f32.mrf.mxu0
        %v10074 = vadd.f32 %v9745, %v10073
        %v10075 = vpop.f32.mrf.mxu0
        %v10076 = vadd.f32 %v9747, %v10075
        %10077 = vmatmul.bf16.gmra.mxu0 %v6176
        %v10078 = vpop.f32.mrf.mxu0
        %v10079 = vadd.f32 %v9750, %v10078
        %v10080 = vpop.f32.mrf.mxu0
        %v10081 = vadd.f32 %v9752, %v10080
        %10082 = vmatmul.bf16.gmra.mxu0 %v6192
        %v10083 = vpop.f32.mrf.mxu0
        %v10084 = vadd.f32 %v9755, %v10083
        %v10085 = vpop.f32.mrf.mxu0
        %v10086 = vadd.f32 %v9757, %v10085
        %10087 = vmatmul.bf16.gmra.mxu0 %v6208
        %v10088 = vpop.f32.mrf.mxu0
        %v10089 = vadd.f32 %v9760, %v10088
        %v10090 = vpop.f32.mrf.mxu0
        %v10091 = vadd.f32 %v9762, %v10090
        %10092 = vmatmul.bf16.gmra.mxu0 %v6224
        %v10093 = vpop.f32.mrf.mxu0
        %v10094 = vadd.f32 %v9765, %v10093
        %v10095 = vpop.f32.mrf.mxu0
        %v10096 = vadd.f32 %v9767, %v10095
        %10097 = vmatmul.bf16.gmra.mxu0 %v6240
        %v10098 = vpop.f32.mrf.mxu0
        %v10099 = vadd.f32 %v9770, %v10098
        %v10100 = vpop.f32.mrf.mxu0
        %v10101 = vadd.f32 %v9772, %v10100
        %10102 = vmatmul.bf16.gmra.mxu0 %v6256
        %v10103 = vpop.f32.mrf.mxu0
        %v10104 = vadd.f32 %v9775, %v10103
        %v10105 = vpop.f32.mrf.mxu0
        %v10106 = vadd.f32 %v9777, %v10105
        %10107 = vmatmul.bf16.gmra.mxu0 %v6272
        %v10108 = vpop.f32.mrf.mxu0
        %v10109 = vadd.f32 %v9780, %v10108
        %v10110 = vpop.f32.mrf.mxu0
        %v10111 = vadd.f32 %v9782, %v10110
        %10112 = vmatmul.bf16.gmra.mxu0 %v6288
        %v10113 = vpop.f32.mrf.mxu0
        %v10114 = vadd.f32 %v9785, %v10113
        %v10115 = vpop.f32.mrf.mxu0
        %v10116 = vadd.f32 %v9787, %v10115
        %10117 = vmatmul.bf16.gmra.mxu0 %v6304
        %v10118 = vpop.f32.mrf.mxu0
        %v10119 = vadd.f32 %v9790, %v10118
        %v10120 = vpop.f32.mrf.mxu0
        %v10121 = vadd.f32 %v9792, %v10120
        %10122 = vmatmul.bf16.gmra.mxu0 %v6320
        %v10123 = vpop.f32.mrf.mxu0
        %v10124 = vadd.f32 %v9795, %v10123
        %v10125 = vpop.f32.mrf.mxu0
        %v10126 = vadd.f32 %v9797, %v10125
        %10127 = vmatmul.bf16.gmra.mxu0 %v6336
        %v10128 = vpop.f32.mrf.mxu0
        %v10129 = vadd.f32 %v9800, %v10128
        %v10130 = vpop.f32.mrf.mxu0
        %v10131 = vadd.f32 %v9802, %v10130
        %10132 = vmatmul.bf16.gmra.mxu0 %v6352
        %v10133 = vpop.f32.mrf.mxu0
        %v10134 = vadd.f32 %v9805, %v10133
        %v10135 = vpop.f32.mrf.mxu0
        %v10136 = vadd.f32 %v9807, %v10135
        %10137 = vmatmul.bf16.gmra.mxu0 %v6368
        %v10138 = vpop.f32.mrf.mxu0
        %v10139 = vadd.f32 %v9810, %v10138
        %v10140 = vpop.f32.mrf.mxu0
        %v10141 = vadd.f32 %v9812, %v10140
        %10142 = vmatmul.bf16.gmra.mxu0 %v6384
        %v10143 = vpop.f32.mrf.mxu0
        %v10144 = vadd.f32 %v9815, %v10143
        %v10145 = vpop.f32.mrf.mxu0
        %v10146 = vadd.f32 %v9817, %v10145
        %10147 = vmatmul.bf16.gmra.mxu0 %v6400
        %v10148 = vpop.f32.mrf.mxu0
        %v10149 = vadd.f32 %v9820, %v10148
        %v10150 = vpop.f32.mrf.mxu0
        %v10151 = vadd.f32 %v9822, %v10150
        %10152 = vmatmul.bf16.gmra.mxu0 %v6416
        %v10153 = vpop.f32.mrf.mxu0
        %v10154 = vadd.f32 %v9825, %v10153
        %v10155 = vpop.f32.mrf.mxu0
        %v10156 = vadd.f32 %v9827, %v10155
        %10157 = vmatmul.bf16.gmra.mxu0 %v6432
        %v10158 = vpop.f32.mrf.mxu0
        %v10159 = vadd.f32 %v9830, %v10158
        %v10160 = vpop.f32.mrf.mxu0
        %v10161 = vadd.f32 %v9832, %v10160
        %10162 = vmatmul.bf16.gmra.mxu0 %v6448
        %v10163 = vpop.f32.mrf.mxu0
        %v10164 = vadd.f32 %v9835, %v10163
        %v10165 = vpop.f32.mrf.mxu0
        %v10166 = vadd.f32 %v9837, %v10165
        %10167 = vmatmul.bf16.gmra.mxu0 %v6464
        %v10168 = vpop.f32.mrf.mxu0
        %v10169 = vadd.f32 %v9840, %v10168
        %v10170 = vpop.f32.mrf.mxu0
        %v10171 = vadd.f32 %v9842, %v10170
        %10172 = vmatmul.bf16.gmra.mxu0 %v6480
        %v10173 = vpop.f32.mrf.mxu0
        %v10174 = vadd.f32 %v9845, %v10173
        %v10175 = vpop.f32.mrf.mxu0
        %v10176 = vadd.f32 %v9847, %v10175
        %10177 = vmatmul.bf16.gmra.mxu0 %v6496
        %v10178 = vpop.f32.mrf.mxu0
        %v10179 = vadd.f32 %v9850, %v10178
        %v10180 = vpop.f32.mrf.mxu0
        %v10181 = vadd.f32 %v9852, %v10180
        %10182 = vmatmul.bf16.gmra.mxu0 %v6512
        %v10183 = vpop.f32.mrf.mxu0
        %v10184 = vadd.f32 %v9855, %v10183
        %v10185 = vpop.f32.mrf.mxu0
        %v10186 = vadd.f32 %v9857, %v10185
        %10187 = vmatmul.bf16.gmra.mxu0 %v6528
        %v10188 = vpop.f32.mrf.mxu0
        %v10189 = vadd.f32 %v9860, %v10188
        %v10190 = vpop.f32.mrf.mxu0
        %v10191 = vadd.f32 %v9862, %v10190
        %10192 = vdwg.mxu0
        %10193 = vmatpush.bf16.msra.mxu0 %v592
        %10194 = vmatpush.bf16.msra.mxu0 %v591
        %10195 = vmatpush.bf16.msra.mxu0 %v590
        %10196 = vmatpush.bf16.msra.mxu0 %v589
        %10197 = vmatpush.bf16.msra.mxu0 %v588
        %10198 = vmatpush.bf16.msra.mxu0 %v587
        %10199 = vmatpush.bf16.msra.mxu0 %v586
        %10200 = vmatpush.bf16.msra.mxu0 %v585
        %10201 = vmatmul.bf16.gmra.mxu0 %v5521
        %v10202 = vpop.f32.mrf.mxu0
        %v10203 = vadd.f32 %v9874, %v10202
        %v10204 = vpop.f32.mrf.mxu0
        %v10205 = vadd.f32 %v9876, %v10204
        %10206 = vmatmul.bf16.gmra.mxu0 %v5537
        %v10207 = vpop.f32.mrf.mxu0
        %v10208 = vadd.f32 %v9879, %v10207
        %v10209 = vpop.f32.mrf.mxu0
        %v10210 = vadd.f32 %v9881, %v10209
        %10211 = vmatmul.bf16.gmra.mxu0 %v5553
        %v10212 = vpop.f32.mrf.mxu0
        %v10213 = vadd.f32 %v9884, %v10212
        %v10214 = vpop.f32.mrf.mxu0
        %v10215 = vadd.f32 %v9886, %v10214
        %10216 = vmatmul.bf16.gmra.mxu0 %v5569
        %v10217 = vpop.f32.mrf.mxu0
        %v10218 = vadd.f32 %v9889, %v10217
        %v10219 = vpop.f32.mrf.mxu0
        %v10220 = vadd.f32 %v9891, %v10219
        %10221 = vmatmul.bf16.gmra.mxu0 %v5585
        %v10222 = vpop.f32.mrf.mxu0
        %v10223 = vadd.f32 %v9894, %v10222
        %v10224 = vpop.f32.mrf.mxu0
        %v10225 = vadd.f32 %v9896, %v10224
        %10226 = vmatmul.bf16.gmra.mxu0 %v5601
        %v10227 = vpop.f32.mrf.mxu0
        %v10228 = vadd.f32 %v9899, %v10227
        %v10229 = vpop.f32.mrf.mxu0
        %v10230 = vadd.f32 %v9901, %v10229
        %10231 = vmatmul.bf16.gmra.mxu0 %v5617
        %v10232 = vpop.f32.mrf.mxu0
        %v10233 = vadd.f32 %v9904, %v10232
        %v10234 = vpop.f32.mrf.mxu0
        %v10235 = vadd.f32 %v9906, %v10234
        %10236 = vmatmul.bf16.gmra.mxu0 %v5633
        %v10237 = vpop.f32.mrf.mxu0
        %v10238 = vadd.f32 %v9909, %v10237
        %v10239 = vpop.f32.mrf.mxu0
        %v10240 = vadd.f32 %v9911, %v10239
        %10241 = vmatmul.bf16.gmra.mxu0 %v5649
        %v10242 = vpop.f32.mrf.mxu0
        %v10243 = vadd.f32 %v9914, %v10242
        %v10244 = vpop.f32.mrf.mxu0
        %v10245 = vadd.f32 %v9916, %v10244
        %10246 = vmatmul.bf16.gmra.mxu0 %v5665
        %v10247 = vpop.f32.mrf.mxu0
        %v10248 = vadd.f32 %v9919, %v10247
        %v10249 = vpop.f32.mrf.mxu0
        %v10250 = vadd.f32 %v9921, %v10249
        %10251 = vmatmul.bf16.gmra.mxu0 %v5681
        %v10252 = vpop.f32.mrf.mxu0
        %v10253 = vadd.f32 %v9924, %v10252
        %v10254 = vpop.f32.mrf.mxu0
        %v10255 = vadd.f32 %v9926, %v10254
        %10256 = vmatmul.bf16.gmra.mxu0 %v5697
        %v10257 = vpop.f32.mrf.mxu0
        %v10258 = vadd.f32 %v9929, %v10257
        %v10259 = vpop.f32.mrf.mxu0
        %v10260 = vadd.f32 %v9931, %v10259
        %10261 = vmatmul.bf16.gmra.mxu0 %v5713
        %v10262 = vpop.f32.mrf.mxu0
        %v10263 = vadd.f32 %v9934, %v10262
        %v10264 = vpop.f32.mrf.mxu0
        %v10265 = vadd.f32 %v9936, %v10264
        %10266 = vmatmul.bf16.gmra.mxu0 %v5729
        %v10267 = vpop.f32.mrf.mxu0
        %v10268 = vadd.f32 %v9939, %v10267
        %v10269 = vpop.f32.mrf.mxu0
        %v10270 = vadd.f32 %v9941, %v10269
        %10271 = vmatmul.bf16.gmra.mxu0 %v5745
        %v10272 = vpop.f32.mrf.mxu0
        %v10273 = vadd.f32 %v9944, %v10272
        %v10274 = vpop.f32.mrf.mxu0
        %v10275 = vadd.f32 %v9946, %v10274
        %10276 = vmatmul.bf16.gmra.mxu0 %v5761
        %v10277 = vpop.f32.mrf.mxu0
        %v10278 = vadd.f32 %v9949, %v10277
        %v10279 = vpop.f32.mrf.mxu0
        %v10280 = vadd.f32 %v9951, %v10279
        %10281 = vmatmul.bf16.gmra.mxu0 %v5777
        %v10282 = vpop.f32.mrf.mxu0
        %v10283 = vadd.f32 %v9954, %v10282
        %v10284 = vpop.f32.mrf.mxu0
        %v10285 = vadd.f32 %v9956, %v10284
        %10286 = vmatmul.bf16.gmra.mxu0 %v5793
        %v10287 = vpop.f32.mrf.mxu0
        %v10288 = vadd.f32 %v9959, %v10287
        %v10289 = vpop.f32.mrf.mxu0
        %v10290 = vadd.f32 %v9961, %v10289
        %10291 = vmatmul.bf16.gmra.mxu0 %v5809
        %v10292 = vpop.f32.mrf.mxu0
        %v10293 = vadd.f32 %v9964, %v10292
        %v10294 = vpop.f32.mrf.mxu0
        %v10295 = vadd.f32 %v9966, %v10294
        %10296 = vmatmul.bf16.gmra.mxu0 %v5825
        %v10297 = vpop.f32.mrf.mxu0
        %v10298 = vadd.f32 %v9969, %v10297
        %v10299 = vpop.f32.mrf.mxu0
        %v10300 = vadd.f32 %v9971, %v10299
        %10301 = vmatmul.bf16.gmra.mxu0 %v5841
        %v10302 = vpop.f32.mrf.mxu0
        %v10303 = vadd.f32 %v9974, %v10302
        %v10304 = vpop.f32.mrf.mxu0
        %v10305 = vadd.f32 %v9976, %v10304
        %10306 = vmatmul.bf16.gmra.mxu0 %v5857
        %v10307 = vpop.f32.mrf.mxu0
        %v10308 = vadd.f32 %v9979, %v10307
        %v10309 = vpop.f32.mrf.mxu0
        %v10310 = vadd.f32 %v9981, %v10309
        %10311 = vmatmul.bf16.gmra.mxu0 %v5873
        %v10312 = vpop.f32.mrf.mxu0
        %v10313 = vadd.f32 %v9984, %v10312
        %v10314 = vpop.f32.mrf.mxu0
        %v10315 = vadd.f32 %v9986, %v10314
        %10316 = vmatmul.bf16.gmra.mxu0 %v5889
        %v10317 = vpop.f32.mrf.mxu0
        %v10318 = vadd.f32 %v9989, %v10317
        %v10319 = vpop.f32.mrf.mxu0
        %v10320 = vadd.f32 %v9991, %v10319
        %10321 = vmatmul.bf16.gmra.mxu0 %v5905
        %v10322 = vpop.f32.mrf.mxu0
        %v10323 = vadd.f32 %v9994, %v10322
        %v10324 = vpop.f32.mrf.mxu0
        %v10325 = vadd.f32 %v9996, %v10324
        %10326 = vmatmul.bf16.gmra.mxu0 %v5921
        %v10327 = vpop.f32.mrf.mxu0
        %v10328 = vadd.f32 %v9999, %v10327
        %v10329 = vpop.f32.mrf.mxu0
        %v10330 = vadd.f32 %v10001, %v10329
        %10331 = vmatmul.bf16.gmra.mxu0 %v5937
        %v10332 = vpop.f32.mrf.mxu0
        %v10333 = vadd.f32 %v10004, %v10332
        %v10334 = vpop.f32.mrf.mxu0
        %v10335 = vadd.f32 %v10006, %v10334
        %10336 = vmatmul.bf16.gmra.mxu0 %v5953
        %v10337 = vpop.f32.mrf.mxu0
        %v10338 = vadd.f32 %v10009, %v10337
        %v10339 = vpop.f32.mrf.mxu0
        %v10340 = vadd.f32 %v10011, %v10339
        %10341 = vmatmul.bf16.gmra.mxu0 %v5969
        %v10342 = vpop.f32.mrf.mxu0
        %v10343 = vadd.f32 %v10014, %v10342
        %v10344 = vpop.f32.mrf.mxu0
        %v10345 = vadd.f32 %v10016, %v10344
        %10346 = vmatmul.bf16.gmra.mxu0 %v5985
        %v10347 = vpop.f32.mrf.mxu0
        %v10348 = vadd.f32 %v10019, %v10347
        %v10349 = vpop.f32.mrf.mxu0
        %v10350 = vadd.f32 %v10021, %v10349
        %10351 = vmatmul.bf16.gmra.mxu0 %v6001
        %v10352 = vpop.f32.mrf.mxu0
        %v10353 = vadd.f32 %v10024, %v10352
        %v10354 = vpop.f32.mrf.mxu0
        %v10355 = vadd.f32 %v10026, %v10354
        %10356 = vmatmul.bf16.gmra.mxu0 %v6017
        %v10357 = vpop.f32.mrf.mxu0
        %v10358 = vadd.f32 %v10029, %v10357
        %v10359 = vpop.f32.mrf.mxu0
        %v10360 = vadd.f32 %v10031, %v10359
        %10361 = vmatmul.bf16.gmra.mxu0 %v6033
        %v10362 = vpop.f32.mrf.mxu0
        %v10363 = vadd.f32 %v10034, %v10362
        %v10364 = vpop.f32.mrf.mxu0
        %v10365 = vadd.f32 %v10036, %v10364
        %10366 = vmatmul.bf16.gmra.mxu0 %v6049
        %v10367 = vpop.f32.mrf.mxu0
        %v10368 = vadd.f32 %v10039, %v10367
        %v10369 = vpop.f32.mrf.mxu0
        %v10370 = vadd.f32 %v10041, %v10369
        %10371 = vmatmul.bf16.gmra.mxu0 %v6065
        %v10372 = vpop.f32.mrf.mxu0
        %v10373 = vadd.f32 %v10044, %v10372
        %v10374 = vpop.f32.mrf.mxu0
        %v10375 = vadd.f32 %v10046, %v10374
        %10376 = vmatmul.bf16.gmra.mxu0 %v6081
        %v10377 = vpop.f32.mrf.mxu0
        %v10378 = vadd.f32 %v10049, %v10377
        %v10379 = vpop.f32.mrf.mxu0
        %v10380 = vadd.f32 %v10051, %v10379
        %10381 = vmatmul.bf16.gmra.mxu0 %v6097
        %v10382 = vpop.f32.mrf.mxu0
        %v10383 = vadd.f32 %v10054, %v10382
        %v10384 = vpop.f32.mrf.mxu0
        %v10385 = vadd.f32 %v10056, %v10384
        %10386 = vmatmul.bf16.gmra.mxu0 %v6113
        %v10387 = vpop.f32.mrf.mxu0
        %v10388 = vadd.f32 %v10059, %v10387
        %v10389 = vpop.f32.mrf.mxu0
        %v10390 = vadd.f32 %v10061, %v10389
        %10391 = vmatmul.bf16.gmra.mxu0 %v6129
        %v10392 = vpop.f32.mrf.mxu0
        %v10393 = vadd.f32 %v10064, %v10392
        %v10394 = vpop.f32.mrf.mxu0
        %v10395 = vadd.f32 %v10066, %v10394
        %10396 = vmatmul.bf16.gmra.mxu0 %v6145
        %v10397 = vpop.f32.mrf.mxu0
        %v10398 = vadd.f32 %v10069, %v10397
        %v10399 = vpop.f32.mrf.mxu0
        %v10400 = vadd.f32 %v10071, %v10399
        %10401 = vmatmul.bf16.gmra.mxu0 %v6161
        %v10402 = vpop.f32.mrf.mxu0
        %v10403 = vadd.f32 %v10074, %v10402
        %v10404 = vpop.f32.mrf.mxu0
        %v10405 = vadd.f32 %v10076, %v10404
        %10406 = vmatmul.bf16.gmra.mxu0 %v6177
        %v10407 = vpop.f32.mrf.mxu0
        %v10408 = vadd.f32 %v10079, %v10407
        %v10409 = vpop.f32.mrf.mxu0
        %v10410 = vadd.f32 %v10081, %v10409
        %10411 = vmatmul.bf16.gmra.mxu0 %v6193
        %v10412 = vpop.f32.mrf.mxu0
        %v10413 = vadd.f32 %v10084, %v10412
        %v10414 = vpop.f32.mrf.mxu0
        %v10415 = vadd.f32 %v10086, %v10414
        %10416 = vmatmul.bf16.gmra.mxu0 %v6209
        %v10417 = vpop.f32.mrf.mxu0
        %v10418 = vadd.f32 %v10089, %v10417
        %v10419 = vpop.f32.mrf.mxu0
        %v10420 = vadd.f32 %v10091, %v10419
        %10421 = vmatmul.bf16.gmra.mxu0 %v6225
        %v10422 = vpop.f32.mrf.mxu0
        %v10423 = vadd.f32 %v10094, %v10422
        %v10424 = vpop.f32.mrf.mxu0
        %v10425 = vadd.f32 %v10096, %v10424
        %10426 = vmatmul.bf16.gmra.mxu0 %v6241
        %v10427 = vpop.f32.mrf.mxu0
        %v10428 = vadd.f32 %v10099, %v10427
        %v10429 = vpop.f32.mrf.mxu0
        %v10430 = vadd.f32 %v10101, %v10429
        %10431 = vmatmul.bf16.gmra.mxu0 %v6257
        %v10432 = vpop.f32.mrf.mxu0
        %v10433 = vadd.f32 %v10104, %v10432
        %v10434 = vpop.f32.mrf.mxu0
        %v10435 = vadd.f32 %v10106, %v10434
        %10436 = vmatmul.bf16.gmra.mxu0 %v6273
        %v10437 = vpop.f32.mrf.mxu0
        %v10438 = vadd.f32 %v10109, %v10437
        %v10439 = vpop.f32.mrf.mxu0
        %v10440 = vadd.f32 %v10111, %v10439
        %10441 = vmatmul.bf16.gmra.mxu0 %v6289
        %v10442 = vpop.f32.mrf.mxu0
        %v10443 = vadd.f32 %v10114, %v10442
        %v10444 = vpop.f32.mrf.mxu0
        %v10445 = vadd.f32 %v10116, %v10444
        %10446 = vmatmul.bf16.gmra.mxu0 %v6305
        %v10447 = vpop.f32.mrf.mxu0
        %v10448 = vadd.f32 %v10119, %v10447
        %v10449 = vpop.f32.mrf.mxu0
        %v10450 = vadd.f32 %v10121, %v10449
        %10451 = vmatmul.bf16.gmra.mxu0 %v6321
        %v10452 = vpop.f32.mrf.mxu0
        %v10453 = vadd.f32 %v10124, %v10452
        %v10454 = vpop.f32.mrf.mxu0
        %v10455 = vadd.f32 %v10126, %v10454
        %10456 = vmatmul.bf16.gmra.mxu0 %v6337
        %v10457 = vpop.f32.mrf.mxu0
        %v10458 = vadd.f32 %v10129, %v10457
        %v10459 = vpop.f32.mrf.mxu0
        %v10460 = vadd.f32 %v10131, %v10459
        %10461 = vmatmul.bf16.gmra.mxu0 %v6353
        %v10462 = vpop.f32.mrf.mxu0
        %v10463 = vadd.f32 %v10134, %v10462
        %v10464 = vpop.f32.mrf.mxu0
        %v10465 = vadd.f32 %v10136, %v10464
        %10466 = vmatmul.bf16.gmra.mxu0 %v6369
        %v10467 = vpop.f32.mrf.mxu0
        %v10468 = vadd.f32 %v10139, %v10467
        %v10469 = vpop.f32.mrf.mxu0
        %v10470 = vadd.f32 %v10141, %v10469
        %10471 = vmatmul.bf16.gmra.mxu0 %v6385
        %v10472 = vpop.f32.mrf.mxu0
        %v10473 = vadd.f32 %v10144, %v10472
        %v10474 = vpop.f32.mrf.mxu0
        %v10475 = vadd.f32 %v10146, %v10474
        %10476 = vmatmul.bf16.gmra.mxu0 %v6401
        %v10477 = vpop.f32.mrf.mxu0
        %v10478 = vadd.f32 %v10149, %v10477
        %v10479 = vpop.f32.mrf.mxu0
        %v10480 = vadd.f32 %v10151, %v10479
        %10481 = vmatmul.bf16.gmra.mxu0 %v6417
        %v10482 = vpop.f32.mrf.mxu0
        %v10483 = vadd.f32 %v10154, %v10482
        %v10484 = vpop.f32.mrf.mxu0
        %v10485 = vadd.f32 %v10156, %v10484
        %10486 = vmatmul.bf16.gmra.mxu0 %v6433
        %v10487 = vpop.f32.mrf.mxu0
        %v10488 = vadd.f32 %v10159, %v10487
        %v10489 = vpop.f32.mrf.mxu0
        %v10490 = vadd.f32 %v10161, %v10489
        %10491 = vmatmul.bf16.gmra.mxu0 %v6449
        %v10492 = vpop.f32.mrf.mxu0
        %v10493 = vadd.f32 %v10164, %v10492
        %v10494 = vpop.f32.mrf.mxu0
        %v10495 = vadd.f32 %v10166, %v10494
        %10496 = vmatmul.bf16.gmra.mxu0 %v6465
        %v10497 = vpop.f32.mrf.mxu0
        %v10498 = vadd.f32 %v10169, %v10497
        %v10499 = vpop.f32.mrf.mxu0
        %v10500 = vadd.f32 %v10171, %v10499
        %10501 = vmatmul.bf16.gmra.mxu0 %v6481
        %v10502 = vpop.f32.mrf.mxu0
        %v10503 = vadd.f32 %v10174, %v10502
        %v10504 = vpop.f32.mrf.mxu0
        %v10505 = vadd.f32 %v10176, %v10504
        %10506 = vmatmul.bf16.gmra.mxu0 %v6497
        %v10507 = vpop.f32.mrf.mxu0
        %v10508 = vadd.f32 %v10179, %v10507
        %v10509 = vpop.f32.mrf.mxu0
        %v10510 = vadd.f32 %v10181, %v10509
        %10511 = vmatmul.bf16.gmra.mxu0 %v6513
        %v10512 = vpop.f32.mrf.mxu0
        %v10513 = vadd.f32 %v10184, %v10512
        %v10514 = vpop.f32.mrf.mxu0
        %v10515 = vadd.f32 %v10186, %v10514
        %10516 = vmatmul.bf16.gmra.mxu0 %v6529
        %v10517 = vpop.f32.mrf.mxu0
        %v10518 = vadd.f32 %v10189, %v10517
        %v10519 = vpop.f32.mrf.mxu0
        %v10520 = vadd.f32 %v10191, %v10519
        %10521 = vdwg.mxu0
        %10522 = vmatpush.bf16.msra.mxu0 %v600
        %10523 = vmatpush.bf16.msra.mxu0 %v599
        %10524 = vmatpush.bf16.msra.mxu0 %v598
        %10525 = vmatpush.bf16.msra.mxu0 %v597
        %10526 = vmatpush.bf16.msra.mxu0 %v596
        %10527 = vmatpush.bf16.msra.mxu0 %v595
        %10528 = vmatpush.bf16.msra.mxu0 %v594
        %10529 = vmatpush.bf16.msra.mxu0 %v593
        %10530 = vmatmul.bf16.gmra.mxu0 %v5522
        %v10531 = vpop.f32.mrf.mxu0
        %v10532 = vadd.f32 %v10203, %v10531
        %v10533 = vpop.f32.mrf.mxu0
        %v10534 = vadd.f32 %v10205, %v10533
        %10535 = vmatmul.bf16.gmra.mxu0 %v5538
        %v10536 = vpop.f32.mrf.mxu0
        %v10537 = vadd.f32 %v10208, %v10536
        %v10538 = vpop.f32.mrf.mxu0
        %v10539 = vadd.f32 %v10210, %v10538
        %10540 = vmatmul.bf16.gmra.mxu0 %v5554
        %v10541 = vpop.f32.mrf.mxu0
        %v10542 = vadd.f32 %v10213, %v10541
        %v10543 = vpop.f32.mrf.mxu0
        %v10544 = vadd.f32 %v10215, %v10543
        %10545 = vmatmul.bf16.gmra.mxu0 %v5570
        %v10546 = vpop.f32.mrf.mxu0
        %v10547 = vadd.f32 %v10218, %v10546
        %v10548 = vpop.f32.mrf.mxu0
        %v10549 = vadd.f32 %v10220, %v10548
        %10550 = vmatmul.bf16.gmra.mxu0 %v5586
        %v10551 = vpop.f32.mrf.mxu0
        %v10552 = vadd.f32 %v10223, %v10551
        %v10553 = vpop.f32.mrf.mxu0
        %v10554 = vadd.f32 %v10225, %v10553
        %10555 = vmatmul.bf16.gmra.mxu0 %v5602
        %v10556 = vpop.f32.mrf.mxu0
        %v10557 = vadd.f32 %v10228, %v10556
        %v10558 = vpop.f32.mrf.mxu0
        %v10559 = vadd.f32 %v10230, %v10558
        %10560 = vmatmul.bf16.gmra.mxu0 %v5618
        %v10561 = vpop.f32.mrf.mxu0
        %v10562 = vadd.f32 %v10233, %v10561
        %v10563 = vpop.f32.mrf.mxu0
        %v10564 = vadd.f32 %v10235, %v10563
        %10565 = vmatmul.bf16.gmra.mxu0 %v5634
        %v10566 = vpop.f32.mrf.mxu0
        %v10567 = vadd.f32 %v10238, %v10566
        %v10568 = vpop.f32.mrf.mxu0
        %v10569 = vadd.f32 %v10240, %v10568
        %10570 = vmatmul.bf16.gmra.mxu0 %v5650
        %v10571 = vpop.f32.mrf.mxu0
        %v10572 = vadd.f32 %v10243, %v10571
        %v10573 = vpop.f32.mrf.mxu0
        %v10574 = vadd.f32 %v10245, %v10573
        %10575 = vmatmul.bf16.gmra.mxu0 %v5666
        %v10576 = vpop.f32.mrf.mxu0
        %v10577 = vadd.f32 %v10248, %v10576
        %v10578 = vpop.f32.mrf.mxu0
        %v10579 = vadd.f32 %v10250, %v10578
        %10580 = vmatmul.bf16.gmra.mxu0 %v5682
        %v10581 = vpop.f32.mrf.mxu0
        %v10582 = vadd.f32 %v10253, %v10581
        %v10583 = vpop.f32.mrf.mxu0
        %v10584 = vadd.f32 %v10255, %v10583
        %10585 = vmatmul.bf16.gmra.mxu0 %v5698
        %v10586 = vpop.f32.mrf.mxu0
        %v10587 = vadd.f32 %v10258, %v10586
        %v10588 = vpop.f32.mrf.mxu0
        %v10589 = vadd.f32 %v10260, %v10588
        %10590 = vmatmul.bf16.gmra.mxu0 %v5714
        %v10591 = vpop.f32.mrf.mxu0
        %v10592 = vadd.f32 %v10263, %v10591
        %v10593 = vpop.f32.mrf.mxu0
        %v10594 = vadd.f32 %v10265, %v10593
        %10595 = vmatmul.bf16.gmra.mxu0 %v5730
        %v10596 = vpop.f32.mrf.mxu0
        %v10597 = vadd.f32 %v10268, %v10596
        %v10598 = vpop.f32.mrf.mxu0
        %v10599 = vadd.f32 %v10270, %v10598
        %10600 = vmatmul.bf16.gmra.mxu0 %v5746
        %v10601 = vpop.f32.mrf.mxu0
        %v10602 = vadd.f32 %v10273, %v10601
        %v10603 = vpop.f32.mrf.mxu0
        %v10604 = vadd.f32 %v10275, %v10603
        %10605 = vmatmul.bf16.gmra.mxu0 %v5762
        %v10606 = vpop.f32.mrf.mxu0
        %v10607 = vadd.f32 %v10278, %v10606
        %v10608 = vpop.f32.mrf.mxu0
        %v10609 = vadd.f32 %v10280, %v10608
        %10610 = vmatmul.bf16.gmra.mxu0 %v5778
        %v10611 = vpop.f32.mrf.mxu0
        %v10612 = vadd.f32 %v10283, %v10611
        %v10613 = vpop.f32.mrf.mxu0
        %v10614 = vadd.f32 %v10285, %v10613
        %10615 = vmatmul.bf16.gmra.mxu0 %v5794
        %v10616 = vpop.f32.mrf.mxu0
        %v10617 = vadd.f32 %v10288, %v10616
        %v10618 = vpop.f32.mrf.mxu0
        %v10619 = vadd.f32 %v10290, %v10618
        %10620 = vmatmul.bf16.gmra.mxu0 %v5810
        %v10621 = vpop.f32.mrf.mxu0
        %v10622 = vadd.f32 %v10293, %v10621
        %v10623 = vpop.f32.mrf.mxu0
        %v10624 = vadd.f32 %v10295, %v10623
        %10625 = vmatmul.bf16.gmra.mxu0 %v5826
        %v10626 = vpop.f32.mrf.mxu0
        %v10627 = vadd.f32 %v10298, %v10626
        %v10628 = vpop.f32.mrf.mxu0
        %v10629 = vadd.f32 %v10300, %v10628
        %10630 = vmatmul.bf16.gmra.mxu0 %v5842
        %v10631 = vpop.f32.mrf.mxu0
        %v10632 = vadd.f32 %v10303, %v10631
        %v10633 = vpop.f32.mrf.mxu0
        %v10634 = vadd.f32 %v10305, %v10633
        %10635 = vmatmul.bf16.gmra.mxu0 %v5858
        %v10636 = vpop.f32.mrf.mxu0
        %v10637 = vadd.f32 %v10308, %v10636
        %v10638 = vpop.f32.mrf.mxu0
        %v10639 = vadd.f32 %v10310, %v10638
        %10640 = vmatmul.bf16.gmra.mxu0 %v5874
        %v10641 = vpop.f32.mrf.mxu0
        %v10642 = vadd.f32 %v10313, %v10641
        %v10643 = vpop.f32.mrf.mxu0
        %v10644 = vadd.f32 %v10315, %v10643
        %10645 = vmatmul.bf16.gmra.mxu0 %v5890
        %v10646 = vpop.f32.mrf.mxu0
        %v10647 = vadd.f32 %v10318, %v10646
        %v10648 = vpop.f32.mrf.mxu0
        %v10649 = vadd.f32 %v10320, %v10648
        %10650 = vmatmul.bf16.gmra.mxu0 %v5906
        %v10651 = vpop.f32.mrf.mxu0
        %v10652 = vadd.f32 %v10323, %v10651
        %v10653 = vpop.f32.mrf.mxu0
        %v10654 = vadd.f32 %v10325, %v10653
        %10655 = vmatmul.bf16.gmra.mxu0 %v5922
        %v10656 = vpop.f32.mrf.mxu0
        %v10657 = vadd.f32 %v10328, %v10656
        %v10658 = vpop.f32.mrf.mxu0
        %v10659 = vadd.f32 %v10330, %v10658
        %10660 = vmatmul.bf16.gmra.mxu0 %v5938
        %v10661 = vpop.f32.mrf.mxu0
        %v10662 = vadd.f32 %v10333, %v10661
        %v10663 = vpop.f32.mrf.mxu0
        %v10664 = vadd.f32 %v10335, %v10663
        %10665 = vmatmul.bf16.gmra.mxu0 %v5954
        %v10666 = vpop.f32.mrf.mxu0
        %v10667 = vadd.f32 %v10338, %v10666
        %v10668 = vpop.f32.mrf.mxu0
        %v10669 = vadd.f32 %v10340, %v10668
        %10670 = vmatmul.bf16.gmra.mxu0 %v5970
        %v10671 = vpop.f32.mrf.mxu0
        %v10672 = vadd.f32 %v10343, %v10671
        %v10673 = vpop.f32.mrf.mxu0
        %v10674 = vadd.f32 %v10345, %v10673
        %10675 = vmatmul.bf16.gmra.mxu0 %v5986
        %v10676 = vpop.f32.mrf.mxu0
        %v10677 = vadd.f32 %v10348, %v10676
        %v10678 = vpop.f32.mrf.mxu0
        %v10679 = vadd.f32 %v10350, %v10678
        %10680 = vmatmul.bf16.gmra.mxu0 %v6002
        %v10681 = vpop.f32.mrf.mxu0
        %v10682 = vadd.f32 %v10353, %v10681
        %v10683 = vpop.f32.mrf.mxu0
        %v10684 = vadd.f32 %v10355, %v10683
        %10685 = vmatmul.bf16.gmra.mxu0 %v6018
        %v10686 = vpop.f32.mrf.mxu0
        %v10687 = vadd.f32 %v10358, %v10686
        %v10688 = vpop.f32.mrf.mxu0
        %v10689 = vadd.f32 %v10360, %v10688
        %10690 = vmatmul.bf16.gmra.mxu0 %v6034
        %v10691 = vpop.f32.mrf.mxu0
        %v10692 = vadd.f32 %v10363, %v10691
        %v10693 = vpop.f32.mrf.mxu0
        %v10694 = vadd.f32 %v10365, %v10693
        %10695 = vmatmul.bf16.gmra.mxu0 %v6050
        %v10696 = vpop.f32.mrf.mxu0
        %v10697 = vadd.f32 %v10368, %v10696
        %v10698 = vpop.f32.mrf.mxu0
        %v10699 = vadd.f32 %v10370, %v10698
        %10700 = vmatmul.bf16.gmra.mxu0 %v6066
        %v10701 = vpop.f32.mrf.mxu0
        %v10702 = vadd.f32 %v10373, %v10701
        %v10703 = vpop.f32.mrf.mxu0
        %v10704 = vadd.f32 %v10375, %v10703
        %10705 = vmatmul.bf16.gmra.mxu0 %v6082
        %v10706 = vpop.f32.mrf.mxu0
        %v10707 = vadd.f32 %v10378, %v10706
        %v10708 = vpop.f32.mrf.mxu0
        %v10709 = vadd.f32 %v10380, %v10708
        %10710 = vmatmul.bf16.gmra.mxu0 %v6098
        %v10711 = vpop.f32.mrf.mxu0
        %v10712 = vadd.f32 %v10383, %v10711
        %v10713 = vpop.f32.mrf.mxu0
        %v10714 = vadd.f32 %v10385, %v10713
        %10715 = vmatmul.bf16.gmra.mxu0 %v6114
        %v10716 = vpop.f32.mrf.mxu0
        %v10717 = vadd.f32 %v10388, %v10716
        %v10718 = vpop.f32.mrf.mxu0
        %v10719 = vadd.f32 %v10390, %v10718
        %10720 = vmatmul.bf16.gmra.mxu0 %v6130
        %v10721 = vpop.f32.mrf.mxu0
        %v10722 = vadd.f32 %v10393, %v10721
        %v10723 = vpop.f32.mrf.mxu0
        %v10724 = vadd.f32 %v10395, %v10723
        %10725 = vmatmul.bf16.gmra.mxu0 %v6146
        %v10726 = vpop.f32.mrf.mxu0
        %v10727 = vadd.f32 %v10398, %v10726
        %v10728 = vpop.f32.mrf.mxu0
        %v10729 = vadd.f32 %v10400, %v10728
        %10730 = vmatmul.bf16.gmra.mxu0 %v6162
        %v10731 = vpop.f32.mrf.mxu0
        %v10732 = vadd.f32 %v10403, %v10731
        %v10733 = vpop.f32.mrf.mxu0
        %v10734 = vadd.f32 %v10405, %v10733
        %10735 = vmatmul.bf16.gmra.mxu0 %v6178
        %v10736 = vpop.f32.mrf.mxu0
        %v10737 = vadd.f32 %v10408, %v10736
        %v10738 = vpop.f32.mrf.mxu0
        %v10739 = vadd.f32 %v10410, %v10738
        %10740 = vmatmul.bf16.gmra.mxu0 %v6194
        %v10741 = vpop.f32.mrf.mxu0
        %v10742 = vadd.f32 %v10413, %v10741
        %v10743 = vpop.f32.mrf.mxu0
        %v10744 = vadd.f32 %v10415, %v10743
        %10745 = vmatmul.bf16.gmra.mxu0 %v6210
        %v10746 = vpop.f32.mrf.mxu0
        %v10747 = vadd.f32 %v10418, %v10746
        %v10748 = vpop.f32.mrf.mxu0
        %v10749 = vadd.f32 %v10420, %v10748
        %10750 = vmatmul.bf16.gmra.mxu0 %v6226
        %v10751 = vpop.f32.mrf.mxu0
        %v10752 = vadd.f32 %v10423, %v10751
        %v10753 = vpop.f32.mrf.mxu0
        %v10754 = vadd.f32 %v10425, %v10753
        %10755 = vmatmul.bf16.gmra.mxu0 %v6242
        %v10756 = vpop.f32.mrf.mxu0
        %v10757 = vadd.f32 %v10428, %v10756
        %v10758 = vpop.f32.mrf.mxu0
        %v10759 = vadd.f32 %v10430, %v10758
        %10760 = vmatmul.bf16.gmra.mxu0 %v6258
        %v10761 = vpop.f32.mrf.mxu0
        %v10762 = vadd.f32 %v10433, %v10761
        %v10763 = vpop.f32.mrf.mxu0
        %v10764 = vadd.f32 %v10435, %v10763
        %10765 = vmatmul.bf16.gmra.mxu0 %v6274
        %v10766 = vpop.f32.mrf.mxu0
        %v10767 = vadd.f32 %v10438, %v10766
        %v10768 = vpop.f32.mrf.mxu0
        %v10769 = vadd.f32 %v10440, %v10768
        %10770 = vmatmul.bf16.gmra.mxu0 %v6290
        %v10771 = vpop.f32.mrf.mxu0
        %v10772 = vadd.f32 %v10443, %v10771
        %v10773 = vpop.f32.mrf.mxu0
        %v10774 = vadd.f32 %v10445, %v10773
        %10775 = vmatmul.bf16.gmra.mxu0 %v6306
        %v10776 = vpop.f32.mrf.mxu0
        %v10777 = vadd.f32 %v10448, %v10776
        %v10778 = vpop.f32.mrf.mxu0
        %v10779 = vadd.f32 %v10450, %v10778
        %10780 = vmatmul.bf16.gmra.mxu0 %v6322
        %v10781 = vpop.f32.mrf.mxu0
        %v10782 = vadd.f32 %v10453, %v10781
        %v10783 = vpop.f32.mrf.mxu0
        %v10784 = vadd.f32 %v10455, %v10783
        %10785 = vmatmul.bf16.gmra.mxu0 %v6338
        %v10786 = vpop.f32.mrf.mxu0
        %v10787 = vadd.f32 %v10458, %v10786
        %v10788 = vpop.f32.mrf.mxu0
        %v10789 = vadd.f32 %v10460, %v10788
        %10790 = vmatmul.bf16.gmra.mxu0 %v6354
        %v10791 = vpop.f32.mrf.mxu0
        %v10792 = vadd.f32 %v10463, %v10791
        %v10793 = vpop.f32.mrf.mxu0
        %v10794 = vadd.f32 %v10465, %v10793
        %10795 = vmatmul.bf16.gmra.mxu0 %v6370
        %v10796 = vpop.f32.mrf.mxu0
        %v10797 = vadd.f32 %v10468, %v10796
        %v10798 = vpop.f32.mrf.mxu0
        %v10799 = vadd.f32 %v10470, %v10798
        %10800 = vmatmul.bf16.gmra.mxu0 %v6386
        %v10801 = vpop.f32.mrf.mxu0
        %v10802 = vadd.f32 %v10473, %v10801
        %v10803 = vpop.f32.mrf.mxu0
        %v10804 = vadd.f32 %v10475, %v10803
        %10805 = vmatmul.bf16.gmra.mxu0 %v6402
        %v10806 = vpop.f32.mrf.mxu0
        %v10807 = vadd.f32 %v10478, %v10806
        %v10808 = vpop.f32.mrf.mxu0
        %v10809 = vadd.f32 %v10480, %v10808
        %10810 = vmatmul.bf16.gmra.mxu0 %v6418
        %v10811 = vpop.f32.mrf.mxu0
        %v10812 = vadd.f32 %v10483, %v10811
        %v10813 = vpop.f32.mrf.mxu0
        %v10814 = vadd.f32 %v10485, %v10813
        %10815 = vmatmul.bf16.gmra.mxu0 %v6434
        %v10816 = vpop.f32.mrf.mxu0
        %v10817 = vadd.f32 %v10488, %v10816
        %v10818 = vpop.f32.mrf.mxu0
        %v10819 = vadd.f32 %v10490, %v10818
        %10820 = vmatmul.bf16.gmra.mxu0 %v6450
        %v10821 = vpop.f32.mrf.mxu0
        %v10822 = vadd.f32 %v10493, %v10821
        %v10823 = vpop.f32.mrf.mxu0
        %v10824 = vadd.f32 %v10495, %v10823
        %10825 = vmatmul.bf16.gmra.mxu0 %v6466
        %v10826 = vpop.f32.mrf.mxu0
        %v10827 = vadd.f32 %v10498, %v10826
        %v10828 = vpop.f32.mrf.mxu0
        %v10829 = vadd.f32 %v10500, %v10828
        %10830 = vmatmul.bf16.gmra.mxu0 %v6482
        %v10831 = vpop.f32.mrf.mxu0
        %v10832 = vadd.f32 %v10503, %v10831
        %v10833 = vpop.f32.mrf.mxu0
        %v10834 = vadd.f32 %v10505, %v10833
        %10835 = vmatmul.bf16.gmra.mxu0 %v6498
        %v10836 = vpop.f32.mrf.mxu0
        %v10837 = vadd.f32 %v10508, %v10836
        %v10838 = vpop.f32.mrf.mxu0
        %v10839 = vadd.f32 %v10510, %v10838
        %10840 = vmatmul.bf16.gmra.mxu0 %v6514
        %v10841 = vpop.f32.mrf.mxu0
        %v10842 = vadd.f32 %v10513, %v10841
        %v10843 = vpop.f32.mrf.mxu0
        %v10844 = vadd.f32 %v10515, %v10843
        %10845 = vmatmul.bf16.gmra.mxu0 %v6530
        %v10846 = vpop.f32.mrf.mxu0
        %v10847 = vadd.f32 %v10518, %v10846
        %v10848 = vpop.f32.mrf.mxu0
        %v10849 = vadd.f32 %v10520, %v10848
        %10850 = vdwg.mxu0
        %10851 = vmatpush.bf16.msra.mxu0 %v608
        %10852 = vmatpush.bf16.msra.mxu0 %v607
        %10853 = vmatpush.bf16.msra.mxu0 %v606
        %10854 = vmatpush.bf16.msra.mxu0 %v605
        %10855 = vmatpush.bf16.msra.mxu0 %v604
        %10856 = vmatpush.bf16.msra.mxu0 %v603
        %10857 = vmatpush.bf16.msra.mxu0 %v602
        %10858 = vmatpush.bf16.msra.mxu0 %v601
        %10859 = vmatmul.bf16.gmra.mxu0 %v5523
        %v10860 = vpop.f32.mrf.mxu0
        %v10861 = vadd.f32 %v10532, %v10860
        %v10862 = vpop.f32.mrf.mxu0
        %v10863 = vadd.f32 %v10534, %v10862
        %10864 = vmatmul.bf16.gmra.mxu0 %v5539
        %v10865 = vpop.f32.mrf.mxu0
        %v10866 = vadd.f32 %v10537, %v10865
        %v10867 = vpop.f32.mrf.mxu0
        %v10868 = vadd.f32 %v10539, %v10867
        %10869 = vmatmul.bf16.gmra.mxu0 %v5555
        %v10870 = vpop.f32.mrf.mxu0
        %v10871 = vadd.f32 %v10542, %v10870
        %v10872 = vpop.f32.mrf.mxu0
        %v10873 = vadd.f32 %v10544, %v10872
        %10874 = vmatmul.bf16.gmra.mxu0 %v5571
        %v10875 = vpop.f32.mrf.mxu0
        %v10876 = vadd.f32 %v10547, %v10875
        %v10877 = vpop.f32.mrf.mxu0
        %v10878 = vadd.f32 %v10549, %v10877
        %10879 = vmatmul.bf16.gmra.mxu0 %v5587
        %v10880 = vpop.f32.mrf.mxu0
        %v10881 = vadd.f32 %v10552, %v10880
        %v10882 = vpop.f32.mrf.mxu0
        %v10883 = vadd.f32 %v10554, %v10882
        %10884 = vmatmul.bf16.gmra.mxu0 %v5603
        %v10885 = vpop.f32.mrf.mxu0
        %v10886 = vadd.f32 %v10557, %v10885
        %v10887 = vpop.f32.mrf.mxu0
        %v10888 = vadd.f32 %v10559, %v10887
        %10889 = vmatmul.bf16.gmra.mxu0 %v5619
        %v10890 = vpop.f32.mrf.mxu0
        %v10891 = vadd.f32 %v10562, %v10890
        %v10892 = vpop.f32.mrf.mxu0
        %v10893 = vadd.f32 %v10564, %v10892
        %10894 = vmatmul.bf16.gmra.mxu0 %v5635
        %v10895 = vpop.f32.mrf.mxu0
        %v10896 = vadd.f32 %v10567, %v10895
        %v10897 = vpop.f32.mrf.mxu0
        %v10898 = vadd.f32 %v10569, %v10897
        %10899 = vmatmul.bf16.gmra.mxu0 %v5651
        %v10900 = vpop.f32.mrf.mxu0
        %v10901 = vadd.f32 %v10572, %v10900
        %v10902 = vpop.f32.mrf.mxu0
        %v10903 = vadd.f32 %v10574, %v10902
        %10904 = vmatmul.bf16.gmra.mxu0 %v5667
        %v10905 = vpop.f32.mrf.mxu0
        %v10906 = vadd.f32 %v10577, %v10905
        %v10907 = vpop.f32.mrf.mxu0
        %v10908 = vadd.f32 %v10579, %v10907
        %10909 = vmatmul.bf16.gmra.mxu0 %v5683
        %v10910 = vpop.f32.mrf.mxu0
        %v10911 = vadd.f32 %v10582, %v10910
        %v10912 = vpop.f32.mrf.mxu0
        %v10913 = vadd.f32 %v10584, %v10912
        %10914 = vmatmul.bf16.gmra.mxu0 %v5699
        %v10915 = vpop.f32.mrf.mxu0
        %v10916 = vadd.f32 %v10587, %v10915
        %v10917 = vpop.f32.mrf.mxu0
        %v10918 = vadd.f32 %v10589, %v10917
        %10919 = vmatmul.bf16.gmra.mxu0 %v5715
        %v10920 = vpop.f32.mrf.mxu0
        %v10921 = vadd.f32 %v10592, %v10920
        %v10922 = vpop.f32.mrf.mxu0
        %v10923 = vadd.f32 %v10594, %v10922
        %10924 = vmatmul.bf16.gmra.mxu0 %v5731
        %v10925 = vpop.f32.mrf.mxu0
        %v10926 = vadd.f32 %v10597, %v10925
        %v10927 = vpop.f32.mrf.mxu0
        %v10928 = vadd.f32 %v10599, %v10927
        %10929 = vmatmul.bf16.gmra.mxu0 %v5747
        %v10930 = vpop.f32.mrf.mxu0
        %v10931 = vadd.f32 %v10602, %v10930
        %v10932 = vpop.f32.mrf.mxu0
        %v10933 = vadd.f32 %v10604, %v10932
        %10934 = vmatmul.bf16.gmra.mxu0 %v5763
        %v10935 = vpop.f32.mrf.mxu0
        %v10936 = vadd.f32 %v10607, %v10935
        %v10937 = vpop.f32.mrf.mxu0
        %v10938 = vadd.f32 %v10609, %v10937
        %10939 = vmatmul.bf16.gmra.mxu0 %v5779
        %v10940 = vpop.f32.mrf.mxu0
        %v10941 = vadd.f32 %v10612, %v10940
        %v10942 = vpop.f32.mrf.mxu0
        %v10943 = vadd.f32 %v10614, %v10942
        %10944 = vmatmul.bf16.gmra.mxu0 %v5795
        %v10945 = vpop.f32.mrf.mxu0
        %v10946 = vadd.f32 %v10617, %v10945
        %v10947 = vpop.f32.mrf.mxu0
        %v10948 = vadd.f32 %v10619, %v10947
        %10949 = vmatmul.bf16.gmra.mxu0 %v5811
        %v10950 = vpop.f32.mrf.mxu0
        %v10951 = vadd.f32 %v10622, %v10950
        %v10952 = vpop.f32.mrf.mxu0
        %v10953 = vadd.f32 %v10624, %v10952
        %10954 = vmatmul.bf16.gmra.mxu0 %v5827
        %v10955 = vpop.f32.mrf.mxu0
        %v10956 = vadd.f32 %v10627, %v10955
        %v10957 = vpop.f32.mrf.mxu0
        %v10958 = vadd.f32 %v10629, %v10957
        %10959 = vmatmul.bf16.gmra.mxu0 %v5843
        %v10960 = vpop.f32.mrf.mxu0
        %v10961 = vadd.f32 %v10632, %v10960
        %v10962 = vpop.f32.mrf.mxu0
        %v10963 = vadd.f32 %v10634, %v10962
        %10964 = vmatmul.bf16.gmra.mxu0 %v5859
        %v10965 = vpop.f32.mrf.mxu0
        %v10966 = vadd.f32 %v10637, %v10965
        %v10967 = vpop.f32.mrf.mxu0
        %v10968 = vadd.f32 %v10639, %v10967
        %10969 = vmatmul.bf16.gmra.mxu0 %v5875
        %v10970 = vpop.f32.mrf.mxu0
        %v10971 = vadd.f32 %v10642, %v10970
        %v10972 = vpop.f32.mrf.mxu0
        %v10973 = vadd.f32 %v10644, %v10972
        %10974 = vmatmul.bf16.gmra.mxu0 %v5891
        %v10975 = vpop.f32.mrf.mxu0
        %v10976 = vadd.f32 %v10647, %v10975
        %v10977 = vpop.f32.mrf.mxu0
        %v10978 = vadd.f32 %v10649, %v10977
        %10979 = vmatmul.bf16.gmra.mxu0 %v5907
        %v10980 = vpop.f32.mrf.mxu0
        %v10981 = vadd.f32 %v10652, %v10980
        %v10982 = vpop.f32.mrf.mxu0
        %v10983 = vadd.f32 %v10654, %v10982
        %10984 = vmatmul.bf16.gmra.mxu0 %v5923
        %v10985 = vpop.f32.mrf.mxu0
        %v10986 = vadd.f32 %v10657, %v10985
        %v10987 = vpop.f32.mrf.mxu0
        %v10988 = vadd.f32 %v10659, %v10987
        %10989 = vmatmul.bf16.gmra.mxu0 %v5939
        %v10990 = vpop.f32.mrf.mxu0
        %v10991 = vadd.f32 %v10662, %v10990
        %v10992 = vpop.f32.mrf.mxu0
        %v10993 = vadd.f32 %v10664, %v10992
        %10994 = vmatmul.bf16.gmra.mxu0 %v5955
        %v10995 = vpop.f32.mrf.mxu0
        %v10996 = vadd.f32 %v10667, %v10995
        %v10997 = vpop.f32.mrf.mxu0
        %v10998 = vadd.f32 %v10669, %v10997
        %10999 = vmatmul.bf16.gmra.mxu0 %v5971
        %v11000 = vpop.f32.mrf.mxu0
        %v11001 = vadd.f32 %v10672, %v11000
        %v11002 = vpop.f32.mrf.mxu0
        %v11003 = vadd.f32 %v10674, %v11002
        %11004 = vmatmul.bf16.gmra.mxu0 %v5987
        %v11005 = vpop.f32.mrf.mxu0
        %v11006 = vadd.f32 %v10677, %v11005
        %v11007 = vpop.f32.mrf.mxu0
        %v11008 = vadd.f32 %v10679, %v11007
        %11009 = vmatmul.bf16.gmra.mxu0 %v6003
        %v11010 = vpop.f32.mrf.mxu0
        %v11011 = vadd.f32 %v10682, %v11010
        %v11012 = vpop.f32.mrf.mxu0
        %v11013 = vadd.f32 %v10684, %v11012
        %11014 = vmatmul.bf16.gmra.mxu0 %v6019
        %v11015 = vpop.f32.mrf.mxu0
        %v11016 = vadd.f32 %v10687, %v11015
        %v11017 = vpop.f32.mrf.mxu0
        %v11018 = vadd.f32 %v10689, %v11017
        %11019 = vmatmul.bf16.gmra.mxu0 %v6035
        %v11020 = vpop.f32.mrf.mxu0
        %v11021 = vadd.f32 %v10692, %v11020
        %v11022 = vpop.f32.mrf.mxu0
        %v11023 = vadd.f32 %v10694, %v11022
        %11024 = vmatmul.bf16.gmra.mxu0 %v6051
        %v11025 = vpop.f32.mrf.mxu0
        %v11026 = vadd.f32 %v10697, %v11025
        %v11027 = vpop.f32.mrf.mxu0
        %v11028 = vadd.f32 %v10699, %v11027
        %11029 = vmatmul.bf16.gmra.mxu0 %v6067
        %v11030 = vpop.f32.mrf.mxu0
        %v11031 = vadd.f32 %v10702, %v11030
        %v11032 = vpop.f32.mrf.mxu0
        %v11033 = vadd.f32 %v10704, %v11032
        %11034 = vmatmul.bf16.gmra.mxu0 %v6083
        %v11035 = vpop.f32.mrf.mxu0
        %v11036 = vadd.f32 %v10707, %v11035
        %v11037 = vpop.f32.mrf.mxu0
        %v11038 = vadd.f32 %v10709, %v11037
        %11039 = vmatmul.bf16.gmra.mxu0 %v6099
        %v11040 = vpop.f32.mrf.mxu0
        %v11041 = vadd.f32 %v10712, %v11040
        %v11042 = vpop.f32.mrf.mxu0
        %v11043 = vadd.f32 %v10714, %v11042
        %11044 = vmatmul.bf16.gmra.mxu0 %v6115
        %v11045 = vpop.f32.mrf.mxu0
        %v11046 = vadd.f32 %v10717, %v11045
        %v11047 = vpop.f32.mrf.mxu0
        %v11048 = vadd.f32 %v10719, %v11047
        %11049 = vmatmul.bf16.gmra.mxu0 %v6131
        %v11050 = vpop.f32.mrf.mxu0
        %v11051 = vadd.f32 %v10722, %v11050
        %v11052 = vpop.f32.mrf.mxu0
        %v11053 = vadd.f32 %v10724, %v11052
        %11054 = vmatmul.bf16.gmra.mxu0 %v6147
        %v11055 = vpop.f32.mrf.mxu0
        %v11056 = vadd.f32 %v10727, %v11055
        %v11057 = vpop.f32.mrf.mxu0
        %v11058 = vadd.f32 %v10729, %v11057
        %11059 = vmatmul.bf16.gmra.mxu0 %v6163
        %v11060 = vpop.f32.mrf.mxu0
        %v11061 = vadd.f32 %v10732, %v11060
        %v11062 = vpop.f32.mrf.mxu0
        %v11063 = vadd.f32 %v10734, %v11062
        %11064 = vmatmul.bf16.gmra.mxu0 %v6179
        %v11065 = vpop.f32.mrf.mxu0
        %v11066 = vadd.f32 %v10737, %v11065
        %v11067 = vpop.f32.mrf.mxu0
        %v11068 = vadd.f32 %v10739, %v11067
        %11069 = vmatmul.bf16.gmra.mxu0 %v6195
        %v11070 = vpop.f32.mrf.mxu0
        %v11071 = vadd.f32 %v10742, %v11070
        %v11072 = vpop.f32.mrf.mxu0
        %v11073 = vadd.f32 %v10744, %v11072
        %11074 = vmatmul.bf16.gmra.mxu0 %v6211
        %v11075 = vpop.f32.mrf.mxu0
        %v11076 = vadd.f32 %v10747, %v11075
        %v11077 = vpop.f32.mrf.mxu0
        %v11078 = vadd.f32 %v10749, %v11077
        %11079 = vmatmul.bf16.gmra.mxu0 %v6227
        %v11080 = vpop.f32.mrf.mxu0
        %v11081 = vadd.f32 %v10752, %v11080
        %v11082 = vpop.f32.mrf.mxu0
        %v11083 = vadd.f32 %v10754, %v11082
        %11084 = vmatmul.bf16.gmra.mxu0 %v6243
        %v11085 = vpop.f32.mrf.mxu0
        %v11086 = vadd.f32 %v10757, %v11085
        %v11087 = vpop.f32.mrf.mxu0
        %v11088 = vadd.f32 %v10759, %v11087
        %11089 = vmatmul.bf16.gmra.mxu0 %v6259
        %v11090 = vpop.f32.mrf.mxu0
        %v11091 = vadd.f32 %v10762, %v11090
        %v11092 = vpop.f32.mrf.mxu0
        %v11093 = vadd.f32 %v10764, %v11092
        %11094 = vmatmul.bf16.gmra.mxu0 %v6275
        %v11095 = vpop.f32.mrf.mxu0
        %v11096 = vadd.f32 %v10767, %v11095
        %v11097 = vpop.f32.mrf.mxu0
        %v11098 = vadd.f32 %v10769, %v11097
        %11099 = vmatmul.bf16.gmra.mxu0 %v6291
        %v11100 = vpop.f32.mrf.mxu0
        %v11101 = vadd.f32 %v10772, %v11100
        %v11102 = vpop.f32.mrf.mxu0
        %v11103 = vadd.f32 %v10774, %v11102
        %11104 = vmatmul.bf16.gmra.mxu0 %v6307
        %v11105 = vpop.f32.mrf.mxu0
        %v11106 = vadd.f32 %v10777, %v11105
        %v11107 = vpop.f32.mrf.mxu0
        %v11108 = vadd.f32 %v10779, %v11107
        %11109 = vmatmul.bf16.gmra.mxu0 %v6323
        %v11110 = vpop.f32.mrf.mxu0
        %v11111 = vadd.f32 %v10782, %v11110
        %v11112 = vpop.f32.mrf.mxu0
        %v11113 = vadd.f32 %v10784, %v11112
        %11114 = vmatmul.bf16.gmra.mxu0 %v6339
        %v11115 = vpop.f32.mrf.mxu0
        %v11116 = vadd.f32 %v10787, %v11115
        %v11117 = vpop.f32.mrf.mxu0
        %v11118 = vadd.f32 %v10789, %v11117
        %11119 = vmatmul.bf16.gmra.mxu0 %v6355
        %v11120 = vpop.f32.mrf.mxu0
        %v11121 = vadd.f32 %v10792, %v11120
        %v11122 = vpop.f32.mrf.mxu0
        %v11123 = vadd.f32 %v10794, %v11122
        %11124 = vmatmul.bf16.gmra.mxu0 %v6371
        %v11125 = vpop.f32.mrf.mxu0
        %v11126 = vadd.f32 %v10797, %v11125
        %v11127 = vpop.f32.mrf.mxu0
        %v11128 = vadd.f32 %v10799, %v11127
        %11129 = vmatmul.bf16.gmra.mxu0 %v6387
        %v11130 = vpop.f32.mrf.mxu0
        %v11131 = vadd.f32 %v10802, %v11130
        %v11132 = vpop.f32.mrf.mxu0
        %v11133 = vadd.f32 %v10804, %v11132
        %11134 = vmatmul.bf16.gmra.mxu0 %v6403
        %v11135 = vpop.f32.mrf.mxu0
        %v11136 = vadd.f32 %v10807, %v11135
        %v11137 = vpop.f32.mrf.mxu0
        %v11138 = vadd.f32 %v10809, %v11137
        %11139 = vmatmul.bf16.gmra.mxu0 %v6419
        %v11140 = vpop.f32.mrf.mxu0
        %v11141 = vadd.f32 %v10812, %v11140
        %v11142 = vpop.f32.mrf.mxu0
        %v11143 = vadd.f32 %v10814, %v11142
        %11144 = vmatmul.bf16.gmra.mxu0 %v6435
        %v11145 = vpop.f32.mrf.mxu0
        %v11146 = vadd.f32 %v10817, %v11145
        %v11147 = vpop.f32.mrf.mxu0
        %v11148 = vadd.f32 %v10819, %v11147
        %11149 = vmatmul.bf16.gmra.mxu0 %v6451
        %v11150 = vpop.f32.mrf.mxu0
        %v11151 = vadd.f32 %v10822, %v11150
        %v11152 = vpop.f32.mrf.mxu0
        %v11153 = vadd.f32 %v10824, %v11152
        %11154 = vmatmul.bf16.gmra.mxu0 %v6467
        %v11155 = vpop.f32.mrf.mxu0
        %v11156 = vadd.f32 %v10827, %v11155
        %v11157 = vpop.f32.mrf.mxu0
        %v11158 = vadd.f32 %v10829, %v11157
        %11159 = vmatmul.bf16.gmra.mxu0 %v6483
        %v11160 = vpop.f32.mrf.mxu0
        %v11161 = vadd.f32 %v10832, %v11160
        %v11162 = vpop.f32.mrf.mxu0
        %v11163 = vadd.f32 %v10834, %v11162
        %11164 = vmatmul.bf16.gmra.mxu0 %v6499
        %v11165 = vpop.f32.mrf.mxu0
        %v11166 = vadd.f32 %v10837, %v11165
        %v11167 = vpop.f32.mrf.mxu0
        %v11168 = vadd.f32 %v10839, %v11167
        %11169 = vmatmul.bf16.gmra.mxu0 %v6515
        %v11170 = vpop.f32.mrf.mxu0
        %v11171 = vadd.f32 %v10842, %v11170
        %v11172 = vpop.f32.mrf.mxu0
        %v11173 = vadd.f32 %v10844, %v11172
        %11174 = vmatmul.bf16.gmra.mxu0 %v6531
        %v11175 = vpop.f32.mrf.mxu0
        %v11176 = vadd.f32 %v10847, %v11175
        %v11177 = vpop.f32.mrf.mxu0
        %v11178 = vadd.f32 %v10849, %v11177
        %11179 = vdwg.mxu0
        %11180 = vmatpush.bf16.msra.mxu0 %v616
        %11181 = vmatpush.bf16.msra.mxu0 %v615
        %11182 = vmatpush.bf16.msra.mxu0 %v614
        %11183 = vmatpush.bf16.msra.mxu0 %v613
        %11184 = vmatpush.bf16.msra.mxu0 %v612
        %11185 = vmatpush.bf16.msra.mxu0 %v611
        %11186 = vmatpush.bf16.msra.mxu0 %v610
        %11187 = vmatpush.bf16.msra.mxu0 %v609
        %11188 = vmatmul.bf16.gmra.mxu0 %v5524
        %v11189 = vpop.f32.mrf.mxu0
        %v11190 = vadd.f32 %v10861, %v11189
        %v11191 = vpop.f32.mrf.mxu0
        %v11192 = vadd.f32 %v10863, %v11191
        %11193 = vmatmul.bf16.gmra.mxu0 %v5540
        %v11194 = vpop.f32.mrf.mxu0
        %v11195 = vadd.f32 %v10866, %v11194
        %v11196 = vpop.f32.mrf.mxu0
        %v11197 = vadd.f32 %v10868, %v11196
        %11198 = vmatmul.bf16.gmra.mxu0 %v5556
        %v11199 = vpop.f32.mrf.mxu0
        %v11200 = vadd.f32 %v10871, %v11199
        %v11201 = vpop.f32.mrf.mxu0
        %v11202 = vadd.f32 %v10873, %v11201
        %11203 = vmatmul.bf16.gmra.mxu0 %v5572
        %v11204 = vpop.f32.mrf.mxu0
        %v11205 = vadd.f32 %v10876, %v11204
        %v11206 = vpop.f32.mrf.mxu0
        %v11207 = vadd.f32 %v10878, %v11206
        %11208 = vmatmul.bf16.gmra.mxu0 %v5588
        %v11209 = vpop.f32.mrf.mxu0
        %v11210 = vadd.f32 %v10881, %v11209
        %v11211 = vpop.f32.mrf.mxu0
        %v11212 = vadd.f32 %v10883, %v11211
        %11213 = vmatmul.bf16.gmra.mxu0 %v5604
        %v11214 = vpop.f32.mrf.mxu0
        %v11215 = vadd.f32 %v10886, %v11214
        %v11216 = vpop.f32.mrf.mxu0
        %v11217 = vadd.f32 %v10888, %v11216
        %11218 = vmatmul.bf16.gmra.mxu0 %v5620
        %v11219 = vpop.f32.mrf.mxu0
        %v11220 = vadd.f32 %v10891, %v11219
        %v11221 = vpop.f32.mrf.mxu0
        %v11222 = vadd.f32 %v10893, %v11221
        %11223 = vmatmul.bf16.gmra.mxu0 %v5636
        %v11224 = vpop.f32.mrf.mxu0
        %v11225 = vadd.f32 %v10896, %v11224
        %v11226 = vpop.f32.mrf.mxu0
        %v11227 = vadd.f32 %v10898, %v11226
        %11228 = vmatmul.bf16.gmra.mxu0 %v5652
        %v11229 = vpop.f32.mrf.mxu0
        %v11230 = vadd.f32 %v10901, %v11229
        %v11231 = vpop.f32.mrf.mxu0
        %v11232 = vadd.f32 %v10903, %v11231
        %11233 = vmatmul.bf16.gmra.mxu0 %v5668
        %v11234 = vpop.f32.mrf.mxu0
        %v11235 = vadd.f32 %v10906, %v11234
        %v11236 = vpop.f32.mrf.mxu0
        %v11237 = vadd.f32 %v10908, %v11236
        %11238 = vmatmul.bf16.gmra.mxu0 %v5684
        %v11239 = vpop.f32.mrf.mxu0
        %v11240 = vadd.f32 %v10911, %v11239
        %v11241 = vpop.f32.mrf.mxu0
        %v11242 = vadd.f32 %v10913, %v11241
        %11243 = vmatmul.bf16.gmra.mxu0 %v5700
        %v11244 = vpop.f32.mrf.mxu0
        %v11245 = vadd.f32 %v10916, %v11244
        %v11246 = vpop.f32.mrf.mxu0
        %v11247 = vadd.f32 %v10918, %v11246
        %11248 = vmatmul.bf16.gmra.mxu0 %v5716
        %v11249 = vpop.f32.mrf.mxu0
        %v11250 = vadd.f32 %v10921, %v11249
        %v11251 = vpop.f32.mrf.mxu0
        %v11252 = vadd.f32 %v10923, %v11251
        %11253 = vmatmul.bf16.gmra.mxu0 %v5732
        %v11254 = vpop.f32.mrf.mxu0
        %v11255 = vadd.f32 %v10926, %v11254
        %v11256 = vpop.f32.mrf.mxu0
        %v11257 = vadd.f32 %v10928, %v11256
        %11258 = vmatmul.bf16.gmra.mxu0 %v5748
        %v11259 = vpop.f32.mrf.mxu0
        %v11260 = vadd.f32 %v10931, %v11259
        %v11261 = vpop.f32.mrf.mxu0
        %v11262 = vadd.f32 %v10933, %v11261
        %11263 = vmatmul.bf16.gmra.mxu0 %v5764
        %v11264 = vpop.f32.mrf.mxu0
        %v11265 = vadd.f32 %v10936, %v11264
        %v11266 = vpop.f32.mrf.mxu0
        %v11267 = vadd.f32 %v10938, %v11266
        %11268 = vmatmul.bf16.gmra.mxu0 %v5780
        %v11269 = vpop.f32.mrf.mxu0
        %v11270 = vadd.f32 %v10941, %v11269
        %v11271 = vpop.f32.mrf.mxu0
        %v11272 = vadd.f32 %v10943, %v11271
        %11273 = vmatmul.bf16.gmra.mxu0 %v5796
        %v11274 = vpop.f32.mrf.mxu0
        %v11275 = vadd.f32 %v10946, %v11274
        %v11276 = vpop.f32.mrf.mxu0
        %v11277 = vadd.f32 %v10948, %v11276
        %11278 = vmatmul.bf16.gmra.mxu0 %v5812
        %v11279 = vpop.f32.mrf.mxu0
        %v11280 = vadd.f32 %v10951, %v11279
        %v11281 = vpop.f32.mrf.mxu0
        %v11282 = vadd.f32 %v10953, %v11281
        %11283 = vmatmul.bf16.gmra.mxu0 %v5828
        %v11284 = vpop.f32.mrf.mxu0
        %v11285 = vadd.f32 %v10956, %v11284
        %v11286 = vpop.f32.mrf.mxu0
        %v11287 = vadd.f32 %v10958, %v11286
        %11288 = vmatmul.bf16.gmra.mxu0 %v5844
        %v11289 = vpop.f32.mrf.mxu0
        %v11290 = vadd.f32 %v10961, %v11289
        %v11291 = vpop.f32.mrf.mxu0
        %v11292 = vadd.f32 %v10963, %v11291
        %11293 = vmatmul.bf16.gmra.mxu0 %v5860
        %v11294 = vpop.f32.mrf.mxu0
        %v11295 = vadd.f32 %v10966, %v11294
        %v11296 = vpop.f32.mrf.mxu0
        %v11297 = vadd.f32 %v10968, %v11296
        %11298 = vmatmul.bf16.gmra.mxu0 %v5876
        %v11299 = vpop.f32.mrf.mxu0
        %v11300 = vadd.f32 %v10971, %v11299
        %v11301 = vpop.f32.mrf.mxu0
        %v11302 = vadd.f32 %v10973, %v11301
        %11303 = vmatmul.bf16.gmra.mxu0 %v5892
        %v11304 = vpop.f32.mrf.mxu0
        %v11305 = vadd.f32 %v10976, %v11304
        %v11306 = vpop.f32.mrf.mxu0
        %v11307 = vadd.f32 %v10978, %v11306
        %11308 = vmatmul.bf16.gmra.mxu0 %v5908
        %v11309 = vpop.f32.mrf.mxu0
        %v11310 = vadd.f32 %v10981, %v11309
        %v11311 = vpop.f32.mrf.mxu0
        %v11312 = vadd.f32 %v10983, %v11311
        %11313 = vmatmul.bf16.gmra.mxu0 %v5924
        %v11314 = vpop.f32.mrf.mxu0
        %v11315 = vadd.f32 %v10986, %v11314
        %v11316 = vpop.f32.mrf.mxu0
        %v11317 = vadd.f32 %v10988, %v11316
        %11318 = vmatmul.bf16.gmra.mxu0 %v5940
        %v11319 = vpop.f32.mrf.mxu0
        %v11320 = vadd.f32 %v10991, %v11319
        %v11321 = vpop.f32.mrf.mxu0
        %v11322 = vadd.f32 %v10993, %v11321
        %11323 = vmatmul.bf16.gmra.mxu0 %v5956
        %v11324 = vpop.f32.mrf.mxu0
        %v11325 = vadd.f32 %v10996, %v11324
        %v11326 = vpop.f32.mrf.mxu0
        %v11327 = vadd.f32 %v10998, %v11326
        %11328 = vmatmul.bf16.gmra.mxu0 %v5972
        %v11329 = vpop.f32.mrf.mxu0
        %v11330 = vadd.f32 %v11001, %v11329
        %v11331 = vpop.f32.mrf.mxu0
        %v11332 = vadd.f32 %v11003, %v11331
        %11333 = vmatmul.bf16.gmra.mxu0 %v5988
        %v11334 = vpop.f32.mrf.mxu0
        %v11335 = vadd.f32 %v11006, %v11334
        %v11336 = vpop.f32.mrf.mxu0
        %v11337 = vadd.f32 %v11008, %v11336
        %11338 = vmatmul.bf16.gmra.mxu0 %v6004
        %v11339 = vpop.f32.mrf.mxu0
        %v11340 = vadd.f32 %v11011, %v11339
        %v11341 = vpop.f32.mrf.mxu0
        %v11342 = vadd.f32 %v11013, %v11341
        %11343 = vmatmul.bf16.gmra.mxu0 %v6020
        %v11344 = vpop.f32.mrf.mxu0
        %v11345 = vadd.f32 %v11016, %v11344
        %v11346 = vpop.f32.mrf.mxu0
        %v11347 = vadd.f32 %v11018, %v11346
        %11348 = vmatmul.bf16.gmra.mxu0 %v6036
        %v11349 = vpop.f32.mrf.mxu0
        %v11350 = vadd.f32 %v11021, %v11349
        %v11351 = vpop.f32.mrf.mxu0
        %v11352 = vadd.f32 %v11023, %v11351
        %11353 = vmatmul.bf16.gmra.mxu0 %v6052
        %v11354 = vpop.f32.mrf.mxu0
        %v11355 = vadd.f32 %v11026, %v11354
        %v11356 = vpop.f32.mrf.mxu0
        %v11357 = vadd.f32 %v11028, %v11356
        %11358 = vmatmul.bf16.gmra.mxu0 %v6068
        %v11359 = vpop.f32.mrf.mxu0
        %v11360 = vadd.f32 %v11031, %v11359
        %v11361 = vpop.f32.mrf.mxu0
        %v11362 = vadd.f32 %v11033, %v11361
        %11363 = vmatmul.bf16.gmra.mxu0 %v6084
        %v11364 = vpop.f32.mrf.mxu0
        %v11365 = vadd.f32 %v11036, %v11364
        %v11366 = vpop.f32.mrf.mxu0
        %v11367 = vadd.f32 %v11038, %v11366
        %11368 = vmatmul.bf16.gmra.mxu0 %v6100
        %v11369 = vpop.f32.mrf.mxu0
        %v11370 = vadd.f32 %v11041, %v11369
        %v11371 = vpop.f32.mrf.mxu0
        %v11372 = vadd.f32 %v11043, %v11371
        %11373 = vmatmul.bf16.gmra.mxu0 %v6116
        %v11374 = vpop.f32.mrf.mxu0
        %v11375 = vadd.f32 %v11046, %v11374
        %v11376 = vpop.f32.mrf.mxu0
        %v11377 = vadd.f32 %v11048, %v11376
        %11378 = vmatmul.bf16.gmra.mxu0 %v6132
        %v11379 = vpop.f32.mrf.mxu0
        %v11380 = vadd.f32 %v11051, %v11379
        %v11381 = vpop.f32.mrf.mxu0
        %v11382 = vadd.f32 %v11053, %v11381
        %11383 = vmatmul.bf16.gmra.mxu0 %v6148
        %v11384 = vpop.f32.mrf.mxu0
        %v11385 = vadd.f32 %v11056, %v11384
        %v11386 = vpop.f32.mrf.mxu0
        %v11387 = vadd.f32 %v11058, %v11386
        %11388 = vmatmul.bf16.gmra.mxu0 %v6164
        %v11389 = vpop.f32.mrf.mxu0
        %v11390 = vadd.f32 %v11061, %v11389
        %v11391 = vpop.f32.mrf.mxu0
        %v11392 = vadd.f32 %v11063, %v11391
        %11393 = vmatmul.bf16.gmra.mxu0 %v6180
        %v11394 = vpop.f32.mrf.mxu0
        %v11395 = vadd.f32 %v11066, %v11394
        %v11396 = vpop.f32.mrf.mxu0
        %v11397 = vadd.f32 %v11068, %v11396
        %11398 = vmatmul.bf16.gmra.mxu0 %v6196
        %v11399 = vpop.f32.mrf.mxu0
        %v11400 = vadd.f32 %v11071, %v11399
        %v11401 = vpop.f32.mrf.mxu0
        %v11402 = vadd.f32 %v11073, %v11401
        %11403 = vmatmul.bf16.gmra.mxu0 %v6212
        %v11404 = vpop.f32.mrf.mxu0
        %v11405 = vadd.f32 %v11076, %v11404
        %v11406 = vpop.f32.mrf.mxu0
        %v11407 = vadd.f32 %v11078, %v11406
        %11408 = vmatmul.bf16.gmra.mxu0 %v6228
        %v11409 = vpop.f32.mrf.mxu0
        %v11410 = vadd.f32 %v11081, %v11409
        %v11411 = vpop.f32.mrf.mxu0
        %v11412 = vadd.f32 %v11083, %v11411
        %11413 = vmatmul.bf16.gmra.mxu0 %v6244
        %v11414 = vpop.f32.mrf.mxu0
        %v11415 = vadd.f32 %v11086, %v11414
        %v11416 = vpop.f32.mrf.mxu0
        %v11417 = vadd.f32 %v11088, %v11416
        %11418 = vmatmul.bf16.gmra.mxu0 %v6260
        %v11419 = vpop.f32.mrf.mxu0
        %v11420 = vadd.f32 %v11091, %v11419
        %v11421 = vpop.f32.mrf.mxu0
        %v11422 = vadd.f32 %v11093, %v11421
        %11423 = vmatmul.bf16.gmra.mxu0 %v6276
        %v11424 = vpop.f32.mrf.mxu0
        %v11425 = vadd.f32 %v11096, %v11424
        %v11426 = vpop.f32.mrf.mxu0
        %v11427 = vadd.f32 %v11098, %v11426
        %11428 = vmatmul.bf16.gmra.mxu0 %v6292
        %v11429 = vpop.f32.mrf.mxu0
        %v11430 = vadd.f32 %v11101, %v11429
        %v11431 = vpop.f32.mrf.mxu0
        %v11432 = vadd.f32 %v11103, %v11431
        %11433 = vmatmul.bf16.gmra.mxu0 %v6308
        %v11434 = vpop.f32.mrf.mxu0
        %v11435 = vadd.f32 %v11106, %v11434
        %v11436 = vpop.f32.mrf.mxu0
        %v11437 = vadd.f32 %v11108, %v11436
        %11438 = vmatmul.bf16.gmra.mxu0 %v6324
        %v11439 = vpop.f32.mrf.mxu0
        %v11440 = vadd.f32 %v11111, %v11439
        %v11441 = vpop.f32.mrf.mxu0
        %v11442 = vadd.f32 %v11113, %v11441
        %11443 = vmatmul.bf16.gmra.mxu0 %v6340
        %v11444 = vpop.f32.mrf.mxu0
        %v11445 = vadd.f32 %v11116, %v11444
        %v11446 = vpop.f32.mrf.mxu0
        %v11447 = vadd.f32 %v11118, %v11446
        %11448 = vmatmul.bf16.gmra.mxu0 %v6356
        %v11449 = vpop.f32.mrf.mxu0
        %v11450 = vadd.f32 %v11121, %v11449
        %v11451 = vpop.f32.mrf.mxu0
        %v11452 = vadd.f32 %v11123, %v11451
        %11453 = vmatmul.bf16.gmra.mxu0 %v6372
        %v11454 = vpop.f32.mrf.mxu0
        %v11455 = vadd.f32 %v11126, %v11454
        %v11456 = vpop.f32.mrf.mxu0
        %v11457 = vadd.f32 %v11128, %v11456
        %11458 = vmatmul.bf16.gmra.mxu0 %v6388
        %v11459 = vpop.f32.mrf.mxu0
        %v11460 = vadd.f32 %v11131, %v11459
        %v11461 = vpop.f32.mrf.mxu0
        %v11462 = vadd.f32 %v11133, %v11461
        %11463 = vmatmul.bf16.gmra.mxu0 %v6404
        %v11464 = vpop.f32.mrf.mxu0
        %v11465 = vadd.f32 %v11136, %v11464
        %v11466 = vpop.f32.mrf.mxu0
        %v11467 = vadd.f32 %v11138, %v11466
        %11468 = vmatmul.bf16.gmra.mxu0 %v6420
        %v11469 = vpop.f32.mrf.mxu0
        %v11470 = vadd.f32 %v11141, %v11469
        %v11471 = vpop.f32.mrf.mxu0
        %v11472 = vadd.f32 %v11143, %v11471
        %11473 = vmatmul.bf16.gmra.mxu0 %v6436
        %v11474 = vpop.f32.mrf.mxu0
        %v11475 = vadd.f32 %v11146, %v11474
        %v11476 = vpop.f32.mrf.mxu0
        %v11477 = vadd.f32 %v11148, %v11476
        %11478 = vmatmul.bf16.gmra.mxu0 %v6452
        %v11479 = vpop.f32.mrf.mxu0
        %v11480 = vadd.f32 %v11151, %v11479
        %v11481 = vpop.f32.mrf.mxu0
        %v11482 = vadd.f32 %v11153, %v11481
        %11483 = vmatmul.bf16.gmra.mxu0 %v6468
        %v11484 = vpop.f32.mrf.mxu0
        %v11485 = vadd.f32 %v11156, %v11484
        %v11486 = vpop.f32.mrf.mxu0
        %v11487 = vadd.f32 %v11158, %v11486
        %11488 = vmatmul.bf16.gmra.mxu0 %v6484
        %v11489 = vpop.f32.mrf.mxu0
        %v11490 = vadd.f32 %v11161, %v11489
        %v11491 = vpop.f32.mrf.mxu0
        %v11492 = vadd.f32 %v11163, %v11491
        %11493 = vmatmul.bf16.gmra.mxu0 %v6500
        %v11494 = vpop.f32.mrf.mxu0
        %v11495 = vadd.f32 %v11166, %v11494
        %v11496 = vpop.f32.mrf.mxu0
        %v11497 = vadd.f32 %v11168, %v11496
        %11498 = vmatmul.bf16.gmra.mxu0 %v6516
        %v11499 = vpop.f32.mrf.mxu0
        %v11500 = vadd.f32 %v11171, %v11499
        %v11501 = vpop.f32.mrf.mxu0
        %v11502 = vadd.f32 %v11173, %v11501
        %11503 = vmatmul.bf16.gmra.mxu0 %v6532
        %v11504 = vpop.f32.mrf.mxu0
        %v11505 = vadd.f32 %v11176, %v11504
        %v11506 = vpop.f32.mrf.mxu0
        %v11507 = vadd.f32 %v11178, %v11506
        %11508 = vdwg.mxu0
        %11509 = vmatpush.bf16.msra.mxu0 %v624
        %11510 = vmatpush.bf16.msra.mxu0 %v623
        %11511 = vmatpush.bf16.msra.mxu0 %v622
        %11512 = vmatpush.bf16.msra.mxu0 %v621
        %11513 = vmatpush.bf16.msra.mxu0 %v620
        %11514 = vmatpush.bf16.msra.mxu0 %v619
        %11515 = vmatpush.bf16.msra.mxu0 %v618
        %11516 = vmatpush.bf16.msra.mxu0 %v617
        %11517 = vmatmul.bf16.gmra.mxu0 %v5525
        %v11518 = vpop.f32.mrf.mxu0
        %v11519 = vadd.f32 %v11190, %v11518
        %v11520 = vpop.f32.mrf.mxu0
        %v11521 = vadd.f32 %v11192, %v11520
        %11522 = vmatmul.bf16.gmra.mxu0 %v5541
        %v11523 = vpop.f32.mrf.mxu0
        %v11524 = vadd.f32 %v11195, %v11523
        %v11525 = vpop.f32.mrf.mxu0
        %v11526 = vadd.f32 %v11197, %v11525
        %11527 = vmatmul.bf16.gmra.mxu0 %v5557
        %v11528 = vpop.f32.mrf.mxu0
        %v11529 = vadd.f32 %v11200, %v11528
        %v11530 = vpop.f32.mrf.mxu0
        %v11531 = vadd.f32 %v11202, %v11530
        %11532 = vmatmul.bf16.gmra.mxu0 %v5573
        %v11533 = vpop.f32.mrf.mxu0
        %v11534 = vadd.f32 %v11205, %v11533
        %v11535 = vpop.f32.mrf.mxu0
        %v11536 = vadd.f32 %v11207, %v11535
        %11537 = vmatmul.bf16.gmra.mxu0 %v5589
        %v11538 = vpop.f32.mrf.mxu0
        %v11539 = vadd.f32 %v11210, %v11538
        %v11540 = vpop.f32.mrf.mxu0
        %v11541 = vadd.f32 %v11212, %v11540
        %11542 = vmatmul.bf16.gmra.mxu0 %v5605
        %v11543 = vpop.f32.mrf.mxu0
        %v11544 = vadd.f32 %v11215, %v11543
        %v11545 = vpop.f32.mrf.mxu0
        %v11546 = vadd.f32 %v11217, %v11545
        %11547 = vmatmul.bf16.gmra.mxu0 %v5621
        %v11548 = vpop.f32.mrf.mxu0
        %v11549 = vadd.f32 %v11220, %v11548
        %v11550 = vpop.f32.mrf.mxu0
        %v11551 = vadd.f32 %v11222, %v11550
        %11552 = vmatmul.bf16.gmra.mxu0 %v5637
        %v11553 = vpop.f32.mrf.mxu0
        %v11554 = vadd.f32 %v11225, %v11553
        %v11555 = vpop.f32.mrf.mxu0
        %v11556 = vadd.f32 %v11227, %v11555
        %11557 = vmatmul.bf16.gmra.mxu0 %v5653
        %v11558 = vpop.f32.mrf.mxu0
        %v11559 = vadd.f32 %v11230, %v11558
        %v11560 = vpop.f32.mrf.mxu0
        %v11561 = vadd.f32 %v11232, %v11560
        %11562 = vmatmul.bf16.gmra.mxu0 %v5669
        %v11563 = vpop.f32.mrf.mxu0
        %v11564 = vadd.f32 %v11235, %v11563
        %v11565 = vpop.f32.mrf.mxu0
        %v11566 = vadd.f32 %v11237, %v11565
        %11567 = vmatmul.bf16.gmra.mxu0 %v5685
        %v11568 = vpop.f32.mrf.mxu0
        %v11569 = vadd.f32 %v11240, %v11568
        %v11570 = vpop.f32.mrf.mxu0
        %v11571 = vadd.f32 %v11242, %v11570
        %11572 = vmatmul.bf16.gmra.mxu0 %v5701
        %v11573 = vpop.f32.mrf.mxu0
        %v11574 = vadd.f32 %v11245, %v11573
        %v11575 = vpop.f32.mrf.mxu0
        %v11576 = vadd.f32 %v11247, %v11575
        %11577 = vmatmul.bf16.gmra.mxu0 %v5717
        %v11578 = vpop.f32.mrf.mxu0
        %v11579 = vadd.f32 %v11250, %v11578
        %v11580 = vpop.f32.mrf.mxu0
        %v11581 = vadd.f32 %v11252, %v11580
        %11582 = vmatmul.bf16.gmra.mxu0 %v5733
        %v11583 = vpop.f32.mrf.mxu0
        %v11584 = vadd.f32 %v11255, %v11583
        %v11585 = vpop.f32.mrf.mxu0
        %v11586 = vadd.f32 %v11257, %v11585
        %11587 = vmatmul.bf16.gmra.mxu0 %v5749
        %v11588 = vpop.f32.mrf.mxu0
        %v11589 = vadd.f32 %v11260, %v11588
        %v11590 = vpop.f32.mrf.mxu0
        %v11591 = vadd.f32 %v11262, %v11590
        %11592 = vmatmul.bf16.gmra.mxu0 %v5765
        %v11593 = vpop.f32.mrf.mxu0
        %v11594 = vadd.f32 %v11265, %v11593
        %v11595 = vpop.f32.mrf.mxu0
        %v11596 = vadd.f32 %v11267, %v11595
        %11597 = vmatmul.bf16.gmra.mxu0 %v5781
        %v11598 = vpop.f32.mrf.mxu0
        %v11599 = vadd.f32 %v11270, %v11598
        %v11600 = vpop.f32.mrf.mxu0
        %v11601 = vadd.f32 %v11272, %v11600
        %11602 = vmatmul.bf16.gmra.mxu0 %v5797
        %v11603 = vpop.f32.mrf.mxu0
        %v11604 = vadd.f32 %v11275, %v11603
        %v11605 = vpop.f32.mrf.mxu0
        %v11606 = vadd.f32 %v11277, %v11605
        %11607 = vmatmul.bf16.gmra.mxu0 %v5813
        %v11608 = vpop.f32.mrf.mxu0
        %v11609 = vadd.f32 %v11280, %v11608
        %v11610 = vpop.f32.mrf.mxu0
        %v11611 = vadd.f32 %v11282, %v11610
        %11612 = vmatmul.bf16.gmra.mxu0 %v5829
        %v11613 = vpop.f32.mrf.mxu0
        %v11614 = vadd.f32 %v11285, %v11613
        %v11615 = vpop.f32.mrf.mxu0
        %v11616 = vadd.f32 %v11287, %v11615
        %11617 = vmatmul.bf16.gmra.mxu0 %v5845
        %v11618 = vpop.f32.mrf.mxu0
        %v11619 = vadd.f32 %v11290, %v11618
        %v11620 = vpop.f32.mrf.mxu0
        %v11621 = vadd.f32 %v11292, %v11620
        %11622 = vmatmul.bf16.gmra.mxu0 %v5861
        %v11623 = vpop.f32.mrf.mxu0
        %v11624 = vadd.f32 %v11295, %v11623
        %v11625 = vpop.f32.mrf.mxu0
        %v11626 = vadd.f32 %v11297, %v11625
        %11627 = vmatmul.bf16.gmra.mxu0 %v5877
        %v11628 = vpop.f32.mrf.mxu0
        %v11629 = vadd.f32 %v11300, %v11628
        %v11630 = vpop.f32.mrf.mxu0
        %v11631 = vadd.f32 %v11302, %v11630
        %11632 = vmatmul.bf16.gmra.mxu0 %v5893
        %v11633 = vpop.f32.mrf.mxu0
        %v11634 = vadd.f32 %v11305, %v11633
        %v11635 = vpop.f32.mrf.mxu0
        %v11636 = vadd.f32 %v11307, %v11635
        %11637 = vmatmul.bf16.gmra.mxu0 %v5909
        %v11638 = vpop.f32.mrf.mxu0
        %v11639 = vadd.f32 %v11310, %v11638
        %v11640 = vpop.f32.mrf.mxu0
        %v11641 = vadd.f32 %v11312, %v11640
        %11642 = vmatmul.bf16.gmra.mxu0 %v5925
        %v11643 = vpop.f32.mrf.mxu0
        %v11644 = vadd.f32 %v11315, %v11643
        %v11645 = vpop.f32.mrf.mxu0
        %v11646 = vadd.f32 %v11317, %v11645
        %11647 = vmatmul.bf16.gmra.mxu0 %v5941
        %v11648 = vpop.f32.mrf.mxu0
        %v11649 = vadd.f32 %v11320, %v11648
        %v11650 = vpop.f32.mrf.mxu0
        %v11651 = vadd.f32 %v11322, %v11650
        %11652 = vmatmul.bf16.gmra.mxu0 %v5957
        %v11653 = vpop.f32.mrf.mxu0
        %v11654 = vadd.f32 %v11325, %v11653
        %v11655 = vpop.f32.mrf.mxu0
        %v11656 = vadd.f32 %v11327, %v11655
        %11657 = vmatmul.bf16.gmra.mxu0 %v5973
        %v11658 = vpop.f32.mrf.mxu0
        %v11659 = vadd.f32 %v11330, %v11658
        %v11660 = vpop.f32.mrf.mxu0
        %v11661 = vadd.f32 %v11332, %v11660
        %11662 = vmatmul.bf16.gmra.mxu0 %v5989
        %v11663 = vpop.f32.mrf.mxu0
        %v11664 = vadd.f32 %v11335, %v11663
        %v11665 = vpop.f32.mrf.mxu0
        %v11666 = vadd.f32 %v11337, %v11665
        %11667 = vmatmul.bf16.gmra.mxu0 %v6005
        %v11668 = vpop.f32.mrf.mxu0
        %v11669 = vadd.f32 %v11340, %v11668
        %v11670 = vpop.f32.mrf.mxu0
        %v11671 = vadd.f32 %v11342, %v11670
        %11672 = vmatmul.bf16.gmra.mxu0 %v6021
        %v11673 = vpop.f32.mrf.mxu0
        %v11674 = vadd.f32 %v11345, %v11673
        %v11675 = vpop.f32.mrf.mxu0
        %v11676 = vadd.f32 %v11347, %v11675
        %11677 = vmatmul.bf16.gmra.mxu0 %v6037
        %v11678 = vpop.f32.mrf.mxu0
        %v11679 = vadd.f32 %v11350, %v11678
        %v11680 = vpop.f32.mrf.mxu0
        %v11681 = vadd.f32 %v11352, %v11680
        %11682 = vmatmul.bf16.gmra.mxu0 %v6053
        %v11683 = vpop.f32.mrf.mxu0
        %v11684 = vadd.f32 %v11355, %v11683
        %v11685 = vpop.f32.mrf.mxu0
        %v11686 = vadd.f32 %v11357, %v11685
        %11687 = vmatmul.bf16.gmra.mxu0 %v6069
        %v11688 = vpop.f32.mrf.mxu0
        %v11689 = vadd.f32 %v11360, %v11688
        %v11690 = vpop.f32.mrf.mxu0
        %v11691 = vadd.f32 %v11362, %v11690
        %11692 = vmatmul.bf16.gmra.mxu0 %v6085
        %v11693 = vpop.f32.mrf.mxu0
        %v11694 = vadd.f32 %v11365, %v11693
        %v11695 = vpop.f32.mrf.mxu0
        %v11696 = vadd.f32 %v11367, %v11695
        %11697 = vmatmul.bf16.gmra.mxu0 %v6101
        %v11698 = vpop.f32.mrf.mxu0
        %v11699 = vadd.f32 %v11370, %v11698
        %v11700 = vpop.f32.mrf.mxu0
        %v11701 = vadd.f32 %v11372, %v11700
        %11702 = vmatmul.bf16.gmra.mxu0 %v6117
        %v11703 = vpop.f32.mrf.mxu0
        %v11704 = vadd.f32 %v11375, %v11703
        %v11705 = vpop.f32.mrf.mxu0
        %v11706 = vadd.f32 %v11377, %v11705
        %11707 = vmatmul.bf16.gmra.mxu0 %v6133
        %v11708 = vpop.f32.mrf.mxu0
        %v11709 = vadd.f32 %v11380, %v11708
        %v11710 = vpop.f32.mrf.mxu0
        %v11711 = vadd.f32 %v11382, %v11710
        %11712 = vmatmul.bf16.gmra.mxu0 %v6149
        %v11713 = vpop.f32.mrf.mxu0
        %v11714 = vadd.f32 %v11385, %v11713
        %v11715 = vpop.f32.mrf.mxu0
        %v11716 = vadd.f32 %v11387, %v11715
        %11717 = vmatmul.bf16.gmra.mxu0 %v6165
        %v11718 = vpop.f32.mrf.mxu0
        %v11719 = vadd.f32 %v11390, %v11718
        %v11720 = vpop.f32.mrf.mxu0
        %v11721 = vadd.f32 %v11392, %v11720
        %11722 = vmatmul.bf16.gmra.mxu0 %v6181
        %v11723 = vpop.f32.mrf.mxu0
        %v11724 = vadd.f32 %v11395, %v11723
        %v11725 = vpop.f32.mrf.mxu0
        %v11726 = vadd.f32 %v11397, %v11725
        %11727 = vmatmul.bf16.gmra.mxu0 %v6197
        %v11728 = vpop.f32.mrf.mxu0
        %v11729 = vadd.f32 %v11400, %v11728
        %v11730 = vpop.f32.mrf.mxu0
        %v11731 = vadd.f32 %v11402, %v11730
        %11732 = vmatmul.bf16.gmra.mxu0 %v6213
        %v11733 = vpop.f32.mrf.mxu0
        %v11734 = vadd.f32 %v11405, %v11733
        %v11735 = vpop.f32.mrf.mxu0
        %v11736 = vadd.f32 %v11407, %v11735
        %11737 = vmatmul.bf16.gmra.mxu0 %v6229
        %v11738 = vpop.f32.mrf.mxu0
        %v11739 = vadd.f32 %v11410, %v11738
        %v11740 = vpop.f32.mrf.mxu0
        %v11741 = vadd.f32 %v11412, %v11740
        %11742 = vmatmul.bf16.gmra.mxu0 %v6245
        %v11743 = vpop.f32.mrf.mxu0
        %v11744 = vadd.f32 %v11415, %v11743
        %v11745 = vpop.f32.mrf.mxu0
        %v11746 = vadd.f32 %v11417, %v11745
        %11747 = vmatmul.bf16.gmra.mxu0 %v6261
        %v11748 = vpop.f32.mrf.mxu0
        %v11749 = vadd.f32 %v11420, %v11748
        %v11750 = vpop.f32.mrf.mxu0
        %v11751 = vadd.f32 %v11422, %v11750
        %11752 = vmatmul.bf16.gmra.mxu0 %v6277
        %v11753 = vpop.f32.mrf.mxu0
        %v11754 = vadd.f32 %v11425, %v11753
        %v11755 = vpop.f32.mrf.mxu0
        %v11756 = vadd.f32 %v11427, %v11755
        %11757 = vmatmul.bf16.gmra.mxu0 %v6293
        %v11758 = vpop.f32.mrf.mxu0
        %v11759 = vadd.f32 %v11430, %v11758
        %v11760 = vpop.f32.mrf.mxu0
        %v11761 = vadd.f32 %v11432, %v11760
        %11762 = vmatmul.bf16.gmra.mxu0 %v6309
        %v11763 = vpop.f32.mrf.mxu0
        %v11764 = vadd.f32 %v11435, %v11763
        %v11765 = vpop.f32.mrf.mxu0
        %v11766 = vadd.f32 %v11437, %v11765
        %11767 = vmatmul.bf16.gmra.mxu0 %v6325
        %v11768 = vpop.f32.mrf.mxu0
        %v11769 = vadd.f32 %v11440, %v11768
        %v11770 = vpop.f32.mrf.mxu0
        %v11771 = vadd.f32 %v11442, %v11770
        %11772 = vmatmul.bf16.gmra.mxu0 %v6341
        %v11773 = vpop.f32.mrf.mxu0
        %v11774 = vadd.f32 %v11445, %v11773
        %v11775 = vpop.f32.mrf.mxu0
        %v11776 = vadd.f32 %v11447, %v11775
        %11777 = vmatmul.bf16.gmra.mxu0 %v6357
        %v11778 = vpop.f32.mrf.mxu0
        %v11779 = vadd.f32 %v11450, %v11778
        %v11780 = vpop.f32.mrf.mxu0
        %v11781 = vadd.f32 %v11452, %v11780
        %11782 = vmatmul.bf16.gmra.mxu0 %v6373
        %v11783 = vpop.f32.mrf.mxu0
        %v11784 = vadd.f32 %v11455, %v11783
        %v11785 = vpop.f32.mrf.mxu0
        %v11786 = vadd.f32 %v11457, %v11785
        %11787 = vmatmul.bf16.gmra.mxu0 %v6389
        %v11788 = vpop.f32.mrf.mxu0
        %v11789 = vadd.f32 %v11460, %v11788
        %v11790 = vpop.f32.mrf.mxu0
        %v11791 = vadd.f32 %v11462, %v11790
        %11792 = vmatmul.bf16.gmra.mxu0 %v6405
        %v11793 = vpop.f32.mrf.mxu0
        %v11794 = vadd.f32 %v11465, %v11793
        %v11795 = vpop.f32.mrf.mxu0
        %v11796 = vadd.f32 %v11467, %v11795
        %11797 = vmatmul.bf16.gmra.mxu0 %v6421
        %v11798 = vpop.f32.mrf.mxu0
        %v11799 = vadd.f32 %v11470, %v11798
        %v11800 = vpop.f32.mrf.mxu0
        %v11801 = vadd.f32 %v11472, %v11800
        %11802 = vmatmul.bf16.gmra.mxu0 %v6437
        %v11803 = vpop.f32.mrf.mxu0
        %v11804 = vadd.f32 %v11475, %v11803
        %v11805 = vpop.f32.mrf.mxu0
        %v11806 = vadd.f32 %v11477, %v11805
        %11807 = vmatmul.bf16.gmra.mxu0 %v6453
        %v11808 = vpop.f32.mrf.mxu0
        %v11809 = vadd.f32 %v11480, %v11808
        %v11810 = vpop.f32.mrf.mxu0
        %v11811 = vadd.f32 %v11482, %v11810
        %11812 = vmatmul.bf16.gmra.mxu0 %v6469
        %v11813 = vpop.f32.mrf.mxu0
        %v11814 = vadd.f32 %v11485, %v11813
        %v11815 = vpop.f32.mrf.mxu0
        %v11816 = vadd.f32 %v11487, %v11815
        %11817 = vmatmul.bf16.gmra.mxu0 %v6485
        %v11818 = vpop.f32.mrf.mxu0
        %v11819 = vadd.f32 %v11490, %v11818
        %v11820 = vpop.f32.mrf.mxu0
        %v11821 = vadd.f32 %v11492, %v11820
        %11822 = vmatmul.bf16.gmra.mxu0 %v6501
        %v11823 = vpop.f32.mrf.mxu0
        %v11824 = vadd.f32 %v11495, %v11823
        %v11825 = vpop.f32.mrf.mxu0
        %v11826 = vadd.f32 %v11497, %v11825
        %11827 = vmatmul.bf16.gmra.mxu0 %v6517
        %v11828 = vpop.f32.mrf.mxu0
        %v11829 = vadd.f32 %v11500, %v11828
        %v11830 = vpop.f32.mrf.mxu0
        %v11831 = vadd.f32 %v11502, %v11830
        %11832 = vmatmul.bf16.gmra.mxu0 %v6533
        %v11833 = vpop.f32.mrf.mxu0
        %v11834 = vadd.f32 %v11505, %v11833
        %v11835 = vpop.f32.mrf.mxu0
        %v11836 = vadd.f32 %v11507, %v11835
        %11837 = vdwg.mxu0
        %11838 = vmatpush.bf16.msra.mxu0 %v632
        %11839 = vmatpush.bf16.msra.mxu0 %v631
        %11840 = vmatpush.bf16.msra.mxu0 %v630
        %11841 = vmatpush.bf16.msra.mxu0 %v629
        %11842 = vmatpush.bf16.msra.mxu0 %v628
        %11843 = vmatpush.bf16.msra.mxu0 %v627
        %11844 = vmatpush.bf16.msra.mxu0 %v626
        %11845 = vmatpush.bf16.msra.mxu0 %v625
        %11846 = vmatmul.bf16.gmra.mxu0 %v5526
        %v11847 = vpop.f32.mrf.mxu0
        %v11848 = vadd.f32 %v11519, %v11847
        %v11849 = vpop.f32.mrf.mxu0
        %v11850 = vadd.f32 %v11521, %v11849
        %11851 = vmatmul.bf16.gmra.mxu0 %v5542
        %v11852 = vpop.f32.mrf.mxu0
        %v11853 = vadd.f32 %v11524, %v11852
        %v11854 = vpop.f32.mrf.mxu0
        %v11855 = vadd.f32 %v11526, %v11854
        %11856 = vmatmul.bf16.gmra.mxu0 %v5558
        %v11857 = vpop.f32.mrf.mxu0
        %v11858 = vadd.f32 %v11529, %v11857
        %v11859 = vpop.f32.mrf.mxu0
        %v11860 = vadd.f32 %v11531, %v11859
        %11861 = vmatmul.bf16.gmra.mxu0 %v5574
        %v11862 = vpop.f32.mrf.mxu0
        %v11863 = vadd.f32 %v11534, %v11862
        %v11864 = vpop.f32.mrf.mxu0
        %v11865 = vadd.f32 %v11536, %v11864
        %11866 = vmatmul.bf16.gmra.mxu0 %v5590
        %v11867 = vpop.f32.mrf.mxu0
        %v11868 = vadd.f32 %v11539, %v11867
        %v11869 = vpop.f32.mrf.mxu0
        %v11870 = vadd.f32 %v11541, %v11869
        %11871 = vmatmul.bf16.gmra.mxu0 %v5606
        %v11872 = vpop.f32.mrf.mxu0
        %v11873 = vadd.f32 %v11544, %v11872
        %v11874 = vpop.f32.mrf.mxu0
        %v11875 = vadd.f32 %v11546, %v11874
        %11876 = vmatmul.bf16.gmra.mxu0 %v5622
        %v11877 = vpop.f32.mrf.mxu0
        %v11878 = vadd.f32 %v11549, %v11877
        %v11879 = vpop.f32.mrf.mxu0
        %v11880 = vadd.f32 %v11551, %v11879
        %11881 = vmatmul.bf16.gmra.mxu0 %v5638
        %v11882 = vpop.f32.mrf.mxu0
        %v11883 = vadd.f32 %v11554, %v11882
        %v11884 = vpop.f32.mrf.mxu0
        %v11885 = vadd.f32 %v11556, %v11884
        %11886 = vmatmul.bf16.gmra.mxu0 %v5654
        %v11887 = vpop.f32.mrf.mxu0
        %v11888 = vadd.f32 %v11559, %v11887
        %v11889 = vpop.f32.mrf.mxu0
        %v11890 = vadd.f32 %v11561, %v11889
        %11891 = vmatmul.bf16.gmra.mxu0 %v5670
        %v11892 = vpop.f32.mrf.mxu0
        %v11893 = vadd.f32 %v11564, %v11892
        %v11894 = vpop.f32.mrf.mxu0
        %v11895 = vadd.f32 %v11566, %v11894
        %11896 = vmatmul.bf16.gmra.mxu0 %v5686
        %v11897 = vpop.f32.mrf.mxu0
        %v11898 = vadd.f32 %v11569, %v11897
        %v11899 = vpop.f32.mrf.mxu0
        %v11900 = vadd.f32 %v11571, %v11899
        %11901 = vmatmul.bf16.gmra.mxu0 %v5702
        %v11902 = vpop.f32.mrf.mxu0
        %v11903 = vadd.f32 %v11574, %v11902
        %v11904 = vpop.f32.mrf.mxu0
        %v11905 = vadd.f32 %v11576, %v11904
        %11906 = vmatmul.bf16.gmra.mxu0 %v5718
        %v11907 = vpop.f32.mrf.mxu0
        %v11908 = vadd.f32 %v11579, %v11907
        %v11909 = vpop.f32.mrf.mxu0
        %v11910 = vadd.f32 %v11581, %v11909
        %11911 = vmatmul.bf16.gmra.mxu0 %v5734
        %v11912 = vpop.f32.mrf.mxu0
        %v11913 = vadd.f32 %v11584, %v11912
        %v11914 = vpop.f32.mrf.mxu0
        %v11915 = vadd.f32 %v11586, %v11914
        %11916 = vmatmul.bf16.gmra.mxu0 %v5750
        %v11917 = vpop.f32.mrf.mxu0
        %v11918 = vadd.f32 %v11589, %v11917
        %v11919 = vpop.f32.mrf.mxu0
        %v11920 = vadd.f32 %v11591, %v11919
        %11921 = vmatmul.bf16.gmra.mxu0 %v5766
        %v11922 = vpop.f32.mrf.mxu0
        %v11923 = vadd.f32 %v11594, %v11922
        %v11924 = vpop.f32.mrf.mxu0
        %v11925 = vadd.f32 %v11596, %v11924
        %11926 = vmatmul.bf16.gmra.mxu0 %v5782
        %v11927 = vpop.f32.mrf.mxu0
        %v11928 = vadd.f32 %v11599, %v11927
        %v11929 = vpop.f32.mrf.mxu0
        %v11930 = vadd.f32 %v11601, %v11929
        %11931 = vmatmul.bf16.gmra.mxu0 %v5798
        %v11932 = vpop.f32.mrf.mxu0
        %v11933 = vadd.f32 %v11604, %v11932
        %v11934 = vpop.f32.mrf.mxu0
        %v11935 = vadd.f32 %v11606, %v11934
        %11936 = vmatmul.bf16.gmra.mxu0 %v5814
        %v11937 = vpop.f32.mrf.mxu0
        %v11938 = vadd.f32 %v11609, %v11937
        %v11939 = vpop.f32.mrf.mxu0
        %v11940 = vadd.f32 %v11611, %v11939
        %11941 = vmatmul.bf16.gmra.mxu0 %v5830
        %v11942 = vpop.f32.mrf.mxu0
        %v11943 = vadd.f32 %v11614, %v11942
        %v11944 = vpop.f32.mrf.mxu0
        %v11945 = vadd.f32 %v11616, %v11944
        %11946 = vmatmul.bf16.gmra.mxu0 %v5846
        %v11947 = vpop.f32.mrf.mxu0
        %v11948 = vadd.f32 %v11619, %v11947
        %v11949 = vpop.f32.mrf.mxu0
        %v11950 = vadd.f32 %v11621, %v11949
        %11951 = vmatmul.bf16.gmra.mxu0 %v5862
        %v11952 = vpop.f32.mrf.mxu0
        %v11953 = vadd.f32 %v11624, %v11952
        %v11954 = vpop.f32.mrf.mxu0
        %v11955 = vadd.f32 %v11626, %v11954
        %11956 = vmatmul.bf16.gmra.mxu0 %v5878
        %v11957 = vpop.f32.mrf.mxu0
        %v11958 = vadd.f32 %v11629, %v11957
        %v11959 = vpop.f32.mrf.mxu0
        %v11960 = vadd.f32 %v11631, %v11959
        %11961 = vmatmul.bf16.gmra.mxu0 %v5894
        %v11962 = vpop.f32.mrf.mxu0
        %v11963 = vadd.f32 %v11634, %v11962
        %v11964 = vpop.f32.mrf.mxu0
        %v11965 = vadd.f32 %v11636, %v11964
        %11966 = vmatmul.bf16.gmra.mxu0 %v5910
        %v11967 = vpop.f32.mrf.mxu0
        %v11968 = vadd.f32 %v11639, %v11967
        %v11969 = vpop.f32.mrf.mxu0
        %v11970 = vadd.f32 %v11641, %v11969
        %11971 = vmatmul.bf16.gmra.mxu0 %v5926
        %v11972 = vpop.f32.mrf.mxu0
        %v11973 = vadd.f32 %v11644, %v11972
        %v11974 = vpop.f32.mrf.mxu0
        %v11975 = vadd.f32 %v11646, %v11974
        %11976 = vmatmul.bf16.gmra.mxu0 %v5942
        %v11977 = vpop.f32.mrf.mxu0
        %v11978 = vadd.f32 %v11649, %v11977
        %v11979 = vpop.f32.mrf.mxu0
        %v11980 = vadd.f32 %v11651, %v11979
        %11981 = vmatmul.bf16.gmra.mxu0 %v5958
        %v11982 = vpop.f32.mrf.mxu0
        %v11983 = vadd.f32 %v11654, %v11982
        %v11984 = vpop.f32.mrf.mxu0
        %v11985 = vadd.f32 %v11656, %v11984
        %11986 = vmatmul.bf16.gmra.mxu0 %v5974
        %v11987 = vpop.f32.mrf.mxu0
        %v11988 = vadd.f32 %v11659, %v11987
        %v11989 = vpop.f32.mrf.mxu0
        %v11990 = vadd.f32 %v11661, %v11989
        %11991 = vmatmul.bf16.gmra.mxu0 %v5990
        %v11992 = vpop.f32.mrf.mxu0
        %v11993 = vadd.f32 %v11664, %v11992
        %v11994 = vpop.f32.mrf.mxu0
        %v11995 = vadd.f32 %v11666, %v11994
        %11996 = vmatmul.bf16.gmra.mxu0 %v6006
        %v11997 = vpop.f32.mrf.mxu0
        %v11998 = vadd.f32 %v11669, %v11997
        %v11999 = vpop.f32.mrf.mxu0
        %v12000 = vadd.f32 %v11671, %v11999
        %12001 = vmatmul.bf16.gmra.mxu0 %v6022
        %v12002 = vpop.f32.mrf.mxu0
        %v12003 = vadd.f32 %v11674, %v12002
        %v12004 = vpop.f32.mrf.mxu0
        %v12005 = vadd.f32 %v11676, %v12004
        %12006 = vmatmul.bf16.gmra.mxu0 %v6038
        %v12007 = vpop.f32.mrf.mxu0
        %v12008 = vadd.f32 %v11679, %v12007
        %v12009 = vpop.f32.mrf.mxu0
        %v12010 = vadd.f32 %v11681, %v12009
        %12011 = vmatmul.bf16.gmra.mxu0 %v6054
        %v12012 = vpop.f32.mrf.mxu0
        %v12013 = vadd.f32 %v11684, %v12012
        %v12014 = vpop.f32.mrf.mxu0
        %v12015 = vadd.f32 %v11686, %v12014
        %12016 = vmatmul.bf16.gmra.mxu0 %v6070
        %v12017 = vpop.f32.mrf.mxu0
        %v12018 = vadd.f32 %v11689, %v12017
        %v12019 = vpop.f32.mrf.mxu0
        %v12020 = vadd.f32 %v11691, %v12019
        %12021 = vmatmul.bf16.gmra.mxu0 %v6086
        %v12022 = vpop.f32.mrf.mxu0
        %v12023 = vadd.f32 %v11694, %v12022
        %v12024 = vpop.f32.mrf.mxu0
        %v12025 = vadd.f32 %v11696, %v12024
        %12026 = vmatmul.bf16.gmra.mxu0 %v6102
        %v12027 = vpop.f32.mrf.mxu0
        %v12028 = vadd.f32 %v11699, %v12027
        %v12029 = vpop.f32.mrf.mxu0
        %v12030 = vadd.f32 %v11701, %v12029
        %12031 = vmatmul.bf16.gmra.mxu0 %v6118
        %v12032 = vpop.f32.mrf.mxu0
        %v12033 = vadd.f32 %v11704, %v12032
        %v12034 = vpop.f32.mrf.mxu0
        %v12035 = vadd.f32 %v11706, %v12034
        %12036 = vmatmul.bf16.gmra.mxu0 %v6134
        %v12037 = vpop.f32.mrf.mxu0
        %v12038 = vadd.f32 %v11709, %v12037
        %v12039 = vpop.f32.mrf.mxu0
        %v12040 = vadd.f32 %v11711, %v12039
        %12041 = vmatmul.bf16.gmra.mxu0 %v6150
        %v12042 = vpop.f32.mrf.mxu0
        %v12043 = vadd.f32 %v11714, %v12042
        %v12044 = vpop.f32.mrf.mxu0
        %v12045 = vadd.f32 %v11716, %v12044
        %12046 = vmatmul.bf16.gmra.mxu0 %v6166
        %v12047 = vpop.f32.mrf.mxu0
        %v12048 = vadd.f32 %v11719, %v12047
        %v12049 = vpop.f32.mrf.mxu0
        %v12050 = vadd.f32 %v11721, %v12049
        %12051 = vmatmul.bf16.gmra.mxu0 %v6182
        %v12052 = vpop.f32.mrf.mxu0
        %v12053 = vadd.f32 %v11724, %v12052
        %v12054 = vpop.f32.mrf.mxu0
        %v12055 = vadd.f32 %v11726, %v12054
        %12056 = vmatmul.bf16.gmra.mxu0 %v6198
        %v12057 = vpop.f32.mrf.mxu0
        %v12058 = vadd.f32 %v11729, %v12057
        %v12059 = vpop.f32.mrf.mxu0
        %v12060 = vadd.f32 %v11731, %v12059
        %12061 = vmatmul.bf16.gmra.mxu0 %v6214
        %v12062 = vpop.f32.mrf.mxu0
        %v12063 = vadd.f32 %v11734, %v12062
        %v12064 = vpop.f32.mrf.mxu0
        %v12065 = vadd.f32 %v11736, %v12064
        %12066 = vmatmul.bf16.gmra.mxu0 %v6230
        %v12067 = vpop.f32.mrf.mxu0
        %v12068 = vadd.f32 %v11739, %v12067
        %v12069 = vpop.f32.mrf.mxu0
        %v12070 = vadd.f32 %v11741, %v12069
        %12071 = vmatmul.bf16.gmra.mxu0 %v6246
        %v12072 = vpop.f32.mrf.mxu0
        %v12073 = vadd.f32 %v11744, %v12072
        %v12074 = vpop.f32.mrf.mxu0
        %v12075 = vadd.f32 %v11746, %v12074
        %12076 = vmatmul.bf16.gmra.mxu0 %v6262
        %v12077 = vpop.f32.mrf.mxu0
        %v12078 = vadd.f32 %v11749, %v12077
        %v12079 = vpop.f32.mrf.mxu0
        %v12080 = vadd.f32 %v11751, %v12079
        %12081 = vmatmul.bf16.gmra.mxu0 %v6278
        %v12082 = vpop.f32.mrf.mxu0
        %v12083 = vadd.f32 %v11754, %v12082
        %v12084 = vpop.f32.mrf.mxu0
        %v12085 = vadd.f32 %v11756, %v12084
        %12086 = vmatmul.bf16.gmra.mxu0 %v6294
        %v12087 = vpop.f32.mrf.mxu0
        %v12088 = vadd.f32 %v11759, %v12087
        %v12089 = vpop.f32.mrf.mxu0
        %v12090 = vadd.f32 %v11761, %v12089
        %12091 = vmatmul.bf16.gmra.mxu0 %v6310
        %v12092 = vpop.f32.mrf.mxu0
        %v12093 = vadd.f32 %v11764, %v12092
        %v12094 = vpop.f32.mrf.mxu0
        %v12095 = vadd.f32 %v11766, %v12094
        %12096 = vmatmul.bf16.gmra.mxu0 %v6326
        %v12097 = vpop.f32.mrf.mxu0
        %v12098 = vadd.f32 %v11769, %v12097
        %v12099 = vpop.f32.mrf.mxu0
        %v12100 = vadd.f32 %v11771, %v12099
        %12101 = vmatmul.bf16.gmra.mxu0 %v6342
        %v12102 = vpop.f32.mrf.mxu0
        %v12103 = vadd.f32 %v11774, %v12102
        %v12104 = vpop.f32.mrf.mxu0
        %v12105 = vadd.f32 %v11776, %v12104
        %12106 = vmatmul.bf16.gmra.mxu0 %v6358
        %v12107 = vpop.f32.mrf.mxu0
        %v12108 = vadd.f32 %v11779, %v12107
        %v12109 = vpop.f32.mrf.mxu0
        %v12110 = vadd.f32 %v11781, %v12109
        %12111 = vmatmul.bf16.gmra.mxu0 %v6374
        %v12112 = vpop.f32.mrf.mxu0
        %v12113 = vadd.f32 %v11784, %v12112
        %v12114 = vpop.f32.mrf.mxu0
        %v12115 = vadd.f32 %v11786, %v12114
        %12116 = vmatmul.bf16.gmra.mxu0 %v6390
        %v12117 = vpop.f32.mrf.mxu0
        %v12118 = vadd.f32 %v11789, %v12117
        %v12119 = vpop.f32.mrf.mxu0
        %v12120 = vadd.f32 %v11791, %v12119
        %12121 = vmatmul.bf16.gmra.mxu0 %v6406
        %v12122 = vpop.f32.mrf.mxu0
        %v12123 = vadd.f32 %v11794, %v12122
        %v12124 = vpop.f32.mrf.mxu0
        %v12125 = vadd.f32 %v11796, %v12124
        %12126 = vmatmul.bf16.gmra.mxu0 %v6422
        %v12127 = vpop.f32.mrf.mxu0
        %v12128 = vadd.f32 %v11799, %v12127
        %v12129 = vpop.f32.mrf.mxu0
        %v12130 = vadd.f32 %v11801, %v12129
        %12131 = vmatmul.bf16.gmra.mxu0 %v6438
        %v12132 = vpop.f32.mrf.mxu0
        %v12133 = vadd.f32 %v11804, %v12132
        %v12134 = vpop.f32.mrf.mxu0
        %v12135 = vadd.f32 %v11806, %v12134
        %12136 = vmatmul.bf16.gmra.mxu0 %v6454
        %v12137 = vpop.f32.mrf.mxu0
        %v12138 = vadd.f32 %v11809, %v12137
        %v12139 = vpop.f32.mrf.mxu0
        %v12140 = vadd.f32 %v11811, %v12139
        %12141 = vmatmul.bf16.gmra.mxu0 %v6470
        %v12142 = vpop.f32.mrf.mxu0
        %v12143 = vadd.f32 %v11814, %v12142
        %v12144 = vpop.f32.mrf.mxu0
        %v12145 = vadd.f32 %v11816, %v12144
        %12146 = vmatmul.bf16.gmra.mxu0 %v6486
        %v12147 = vpop.f32.mrf.mxu0
        %v12148 = vadd.f32 %v11819, %v12147
        %v12149 = vpop.f32.mrf.mxu0
        %v12150 = vadd.f32 %v11821, %v12149
        %12151 = vmatmul.bf16.gmra.mxu0 %v6502
        %v12152 = vpop.f32.mrf.mxu0
        %v12153 = vadd.f32 %v11824, %v12152
        %v12154 = vpop.f32.mrf.mxu0
        %v12155 = vadd.f32 %v11826, %v12154
        %12156 = vmatmul.bf16.gmra.mxu0 %v6518
        %v12157 = vpop.f32.mrf.mxu0
        %v12158 = vadd.f32 %v11829, %v12157
        %v12159 = vpop.f32.mrf.mxu0
        %v12160 = vadd.f32 %v11831, %v12159
        %12161 = vmatmul.bf16.gmra.mxu0 %v6534
        %v12162 = vpop.f32.mrf.mxu0
        %v12163 = vadd.f32 %v11834, %v12162
        %v12164 = vpop.f32.mrf.mxu0
        %v12165 = vadd.f32 %v11836, %v12164
        %12166 = vdwg.mxu0
        %12167 = vmatpush.bf16.msra.mxu0 %v640
        %12168 = vmatpush.bf16.msra.mxu0 %v639
        %12169 = vmatpush.bf16.msra.mxu0 %v638
        %12170 = vmatpush.bf16.msra.mxu0 %v637
        %12171 = vmatpush.bf16.msra.mxu0 %v636
        %12172 = vmatpush.bf16.msra.mxu0 %v635
        %12173 = vmatpush.bf16.msra.mxu0 %v634
        %12174 = vmatpush.bf16.msra.mxu0 %v633
        %12175 = vmatmul.bf16.gmra.mxu0 %v5527
        %v12176 = vpop.f32.mrf.mxu0
        %v12177 = vadd.f32 %v11848, %v12176
        %v12178 = vpop.f32.mrf.mxu0
        %v12179 = vadd.f32 %v11850, %v12178
        %12180 = vmatmul.bf16.gmra.mxu0 %v5543
        %v12181 = vpop.f32.mrf.mxu0
        %v12182 = vadd.f32 %v11853, %v12181
        %v12183 = vpop.f32.mrf.mxu0
        %v12184 = vadd.f32 %v11855, %v12183
        %12185 = vmatmul.bf16.gmra.mxu0 %v5559
        %v12186 = vpop.f32.mrf.mxu0
        %v12187 = vadd.f32 %v11858, %v12186
        %v12188 = vpop.f32.mrf.mxu0
        %v12189 = vadd.f32 %v11860, %v12188
        %12190 = vmatmul.bf16.gmra.mxu0 %v5575
        %v12191 = vpop.f32.mrf.mxu0
        %v12192 = vadd.f32 %v11863, %v12191
        %v12193 = vpop.f32.mrf.mxu0
        %v12194 = vadd.f32 %v11865, %v12193
        %12195 = vmatmul.bf16.gmra.mxu0 %v5591
        %v12196 = vpop.f32.mrf.mxu0
        %v12197 = vadd.f32 %v11868, %v12196
        %v12198 = vpop.f32.mrf.mxu0
        %v12199 = vadd.f32 %v11870, %v12198
        %12200 = vmatmul.bf16.gmra.mxu0 %v5607
        %v12201 = vpop.f32.mrf.mxu0
        %v12202 = vadd.f32 %v11873, %v12201
        %v12203 = vpop.f32.mrf.mxu0
        %v12204 = vadd.f32 %v11875, %v12203
        %12205 = vmatmul.bf16.gmra.mxu0 %v5623
        %v12206 = vpop.f32.mrf.mxu0
        %v12207 = vadd.f32 %v11878, %v12206
        %v12208 = vpop.f32.mrf.mxu0
        %v12209 = vadd.f32 %v11880, %v12208
        %12210 = vmatmul.bf16.gmra.mxu0 %v5639
        %v12211 = vpop.f32.mrf.mxu0
        %v12212 = vadd.f32 %v11883, %v12211
        %v12213 = vpop.f32.mrf.mxu0
        %v12214 = vadd.f32 %v11885, %v12213
        %12215 = vmatmul.bf16.gmra.mxu0 %v5655
        %v12216 = vpop.f32.mrf.mxu0
        %v12217 = vadd.f32 %v11888, %v12216
        %v12218 = vpop.f32.mrf.mxu0
        %v12219 = vadd.f32 %v11890, %v12218
        %12220 = vmatmul.bf16.gmra.mxu0 %v5671
        %v12221 = vpop.f32.mrf.mxu0
        %v12222 = vadd.f32 %v11893, %v12221
        %v12223 = vpop.f32.mrf.mxu0
        %v12224 = vadd.f32 %v11895, %v12223
        %12225 = vmatmul.bf16.gmra.mxu0 %v5687
        %v12226 = vpop.f32.mrf.mxu0
        %v12227 = vadd.f32 %v11898, %v12226
        %v12228 = vpop.f32.mrf.mxu0
        %v12229 = vadd.f32 %v11900, %v12228
        %12230 = vmatmul.bf16.gmra.mxu0 %v5703
        %v12231 = vpop.f32.mrf.mxu0
        %v12232 = vadd.f32 %v11903, %v12231
        %v12233 = vpop.f32.mrf.mxu0
        %v12234 = vadd.f32 %v11905, %v12233
        %12235 = vmatmul.bf16.gmra.mxu0 %v5719
        %v12236 = vpop.f32.mrf.mxu0
        %v12237 = vadd.f32 %v11908, %v12236
        %v12238 = vpop.f32.mrf.mxu0
        %v12239 = vadd.f32 %v11910, %v12238
        %12240 = vmatmul.bf16.gmra.mxu0 %v5735
        %v12241 = vpop.f32.mrf.mxu0
        %v12242 = vadd.f32 %v11913, %v12241
        %v12243 = vpop.f32.mrf.mxu0
        %v12244 = vadd.f32 %v11915, %v12243
        %12245 = vmatmul.bf16.gmra.mxu0 %v5751
        %v12246 = vpop.f32.mrf.mxu0
        %v12247 = vadd.f32 %v11918, %v12246
        %v12248 = vpop.f32.mrf.mxu0
        %v12249 = vadd.f32 %v11920, %v12248
        %12250 = vmatmul.bf16.gmra.mxu0 %v5767
        %v12251 = vpop.f32.mrf.mxu0
        %v12252 = vadd.f32 %v11923, %v12251
        %v12253 = vpop.f32.mrf.mxu0
        %v12254 = vadd.f32 %v11925, %v12253
        %12255 = vmatmul.bf16.gmra.mxu0 %v5783
        %v12256 = vpop.f32.mrf.mxu0
        %v12257 = vadd.f32 %v11928, %v12256
        %v12258 = vpop.f32.mrf.mxu0
        %v12259 = vadd.f32 %v11930, %v12258
        %12260 = vmatmul.bf16.gmra.mxu0 %v5799
        %v12261 = vpop.f32.mrf.mxu0
        %v12262 = vadd.f32 %v11933, %v12261
        %v12263 = vpop.f32.mrf.mxu0
        %v12264 = vadd.f32 %v11935, %v12263
        %12265 = vmatmul.bf16.gmra.mxu0 %v5815
        %v12266 = vpop.f32.mrf.mxu0
        %v12267 = vadd.f32 %v11938, %v12266
        %v12268 = vpop.f32.mrf.mxu0
        %v12269 = vadd.f32 %v11940, %v12268
        %12270 = vmatmul.bf16.gmra.mxu0 %v5831
        %v12271 = vpop.f32.mrf.mxu0
        %v12272 = vadd.f32 %v11943, %v12271
        %v12273 = vpop.f32.mrf.mxu0
        %v12274 = vadd.f32 %v11945, %v12273
        %12275 = vmatmul.bf16.gmra.mxu0 %v5847
        %v12276 = vpop.f32.mrf.mxu0
        %v12277 = vadd.f32 %v11948, %v12276
        %v12278 = vpop.f32.mrf.mxu0
        %v12279 = vadd.f32 %v11950, %v12278
        %12280 = vmatmul.bf16.gmra.mxu0 %v5863
        %v12281 = vpop.f32.mrf.mxu0
        %v12282 = vadd.f32 %v11953, %v12281
        %v12283 = vpop.f32.mrf.mxu0
        %v12284 = vadd.f32 %v11955, %v12283
        %12285 = vmatmul.bf16.gmra.mxu0 %v5879
        %v12286 = vpop.f32.mrf.mxu0
        %v12287 = vadd.f32 %v11958, %v12286
        %v12288 = vpop.f32.mrf.mxu0
        %v12289 = vadd.f32 %v11960, %v12288
        %12290 = vmatmul.bf16.gmra.mxu0 %v5895
        %v12291 = vpop.f32.mrf.mxu0
        %v12292 = vadd.f32 %v11963, %v12291
        %v12293 = vpop.f32.mrf.mxu0
        %v12294 = vadd.f32 %v11965, %v12293
        %12295 = vmatmul.bf16.gmra.mxu0 %v5911
        %v12296 = vpop.f32.mrf.mxu0
        %v12297 = vadd.f32 %v11968, %v12296
        %v12298 = vpop.f32.mrf.mxu0
        %v12299 = vadd.f32 %v11970, %v12298
        %12300 = vmatmul.bf16.gmra.mxu0 %v5927
        %v12301 = vpop.f32.mrf.mxu0
        %v12302 = vadd.f32 %v11973, %v12301
        %v12303 = vpop.f32.mrf.mxu0
        %v12304 = vadd.f32 %v11975, %v12303
        %12305 = vmatmul.bf16.gmra.mxu0 %v5943
        %v12306 = vpop.f32.mrf.mxu0
        %v12307 = vadd.f32 %v11978, %v12306
        %v12308 = vpop.f32.mrf.mxu0
        %v12309 = vadd.f32 %v11980, %v12308
        %12310 = vmatmul.bf16.gmra.mxu0 %v5959
        %v12311 = vpop.f32.mrf.mxu0
        %v12312 = vadd.f32 %v11983, %v12311
        %v12313 = vpop.f32.mrf.mxu0
        %v12314 = vadd.f32 %v11985, %v12313
        %12315 = vmatmul.bf16.gmra.mxu0 %v5975
        %v12316 = vpop.f32.mrf.mxu0
        %v12317 = vadd.f32 %v11988, %v12316
        %v12318 = vpop.f32.mrf.mxu0
        %v12319 = vadd.f32 %v11990, %v12318
        %12320 = vmatmul.bf16.gmra.mxu0 %v5991
        %v12321 = vpop.f32.mrf.mxu0
        %v12322 = vadd.f32 %v11993, %v12321
        %v12323 = vpop.f32.mrf.mxu0
        %v12324 = vadd.f32 %v11995, %v12323
        %12325 = vmatmul.bf16.gmra.mxu0 %v6007
        %v12326 = vpop.f32.mrf.mxu0
        %v12327 = vadd.f32 %v11998, %v12326
        %v12328 = vpop.f32.mrf.mxu0
        %v12329 = vadd.f32 %v12000, %v12328
        %12330 = vmatmul.bf16.gmra.mxu0 %v6023
        %v12331 = vpop.f32.mrf.mxu0
        %v12332 = vadd.f32 %v12003, %v12331
        %v12333 = vpop.f32.mrf.mxu0
        %v12334 = vadd.f32 %v12005, %v12333
        %12335 = vmatmul.bf16.gmra.mxu0 %v6039
        %v12336 = vpop.f32.mrf.mxu0
        %v12337 = vadd.f32 %v12008, %v12336
        %v12338 = vpop.f32.mrf.mxu0
        %v12339 = vadd.f32 %v12010, %v12338
        %12340 = vmatmul.bf16.gmra.mxu0 %v6055
        %v12341 = vpop.f32.mrf.mxu0
        %v12342 = vadd.f32 %v12013, %v12341
        %v12343 = vpop.f32.mrf.mxu0
        %v12344 = vadd.f32 %v12015, %v12343
        %12345 = vmatmul.bf16.gmra.mxu0 %v6071
        %v12346 = vpop.f32.mrf.mxu0
        %v12347 = vadd.f32 %v12018, %v12346
        %v12348 = vpop.f32.mrf.mxu0
        %v12349 = vadd.f32 %v12020, %v12348
        %12350 = vmatmul.bf16.gmra.mxu0 %v6087
        %v12351 = vpop.f32.mrf.mxu0
        %v12352 = vadd.f32 %v12023, %v12351
        %v12353 = vpop.f32.mrf.mxu0
        %v12354 = vadd.f32 %v12025, %v12353
        %12355 = vmatmul.bf16.gmra.mxu0 %v6103
        %v12356 = vpop.f32.mrf.mxu0
        %v12357 = vadd.f32 %v12028, %v12356
        %v12358 = vpop.f32.mrf.mxu0
        %v12359 = vadd.f32 %v12030, %v12358
        %12360 = vmatmul.bf16.gmra.mxu0 %v6119
        %v12361 = vpop.f32.mrf.mxu0
        %v12362 = vadd.f32 %v12033, %v12361
        %v12363 = vpop.f32.mrf.mxu0
        %v12364 = vadd.f32 %v12035, %v12363
        %12365 = vmatmul.bf16.gmra.mxu0 %v6135
        %v12366 = vpop.f32.mrf.mxu0
        %v12367 = vadd.f32 %v12038, %v12366
        %v12368 = vpop.f32.mrf.mxu0
        %v12369 = vadd.f32 %v12040, %v12368
        %12370 = vmatmul.bf16.gmra.mxu0 %v6151
        %v12371 = vpop.f32.mrf.mxu0
        %v12372 = vadd.f32 %v12043, %v12371
        %v12373 = vpop.f32.mrf.mxu0
        %v12374 = vadd.f32 %v12045, %v12373
        %12375 = vmatmul.bf16.gmra.mxu0 %v6167
        %v12376 = vpop.f32.mrf.mxu0
        %v12377 = vadd.f32 %v12048, %v12376
        %v12378 = vpop.f32.mrf.mxu0
        %v12379 = vadd.f32 %v12050, %v12378
        %12380 = vmatmul.bf16.gmra.mxu0 %v6183
        %v12381 = vpop.f32.mrf.mxu0
        %v12382 = vadd.f32 %v12053, %v12381
        %v12383 = vpop.f32.mrf.mxu0
        %v12384 = vadd.f32 %v12055, %v12383
        %12385 = vmatmul.bf16.gmra.mxu0 %v6199
        %v12386 = vpop.f32.mrf.mxu0
        %v12387 = vadd.f32 %v12058, %v12386
        %v12388 = vpop.f32.mrf.mxu0
        %v12389 = vadd.f32 %v12060, %v12388
        %12390 = vmatmul.bf16.gmra.mxu0 %v6215
        %v12391 = vpop.f32.mrf.mxu0
        %v12392 = vadd.f32 %v12063, %v12391
        %v12393 = vpop.f32.mrf.mxu0
        %v12394 = vadd.f32 %v12065, %v12393
        %12395 = vmatmul.bf16.gmra.mxu0 %v6231
        %v12396 = vpop.f32.mrf.mxu0
        %v12397 = vadd.f32 %v12068, %v12396
        %v12398 = vpop.f32.mrf.mxu0
        %v12399 = vadd.f32 %v12070, %v12398
        %12400 = vmatmul.bf16.gmra.mxu0 %v6247
        %v12401 = vpop.f32.mrf.mxu0
        %v12402 = vadd.f32 %v12073, %v12401
        %v12403 = vpop.f32.mrf.mxu0
        %v12404 = vadd.f32 %v12075, %v12403
        %12405 = vmatmul.bf16.gmra.mxu0 %v6263
        %v12406 = vpop.f32.mrf.mxu0
        %v12407 = vadd.f32 %v12078, %v12406
        %v12408 = vpop.f32.mrf.mxu0
        %v12409 = vadd.f32 %v12080, %v12408
        %12410 = vmatmul.bf16.gmra.mxu0 %v6279
        %v12411 = vpop.f32.mrf.mxu0
        %v12412 = vadd.f32 %v12083, %v12411
        %v12413 = vpop.f32.mrf.mxu0
        %v12414 = vadd.f32 %v12085, %v12413
        %12415 = vmatmul.bf16.gmra.mxu0 %v6295
        %v12416 = vpop.f32.mrf.mxu0
        %v12417 = vadd.f32 %v12088, %v12416
        %v12418 = vpop.f32.mrf.mxu0
        %v12419 = vadd.f32 %v12090, %v12418
        %12420 = vmatmul.bf16.gmra.mxu0 %v6311
        %v12421 = vpop.f32.mrf.mxu0
        %v12422 = vadd.f32 %v12093, %v12421
        %v12423 = vpop.f32.mrf.mxu0
        %v12424 = vadd.f32 %v12095, %v12423
        %12425 = vmatmul.bf16.gmra.mxu0 %v6327
        %v12426 = vpop.f32.mrf.mxu0
        %v12427 = vadd.f32 %v12098, %v12426
        %v12428 = vpop.f32.mrf.mxu0
        %v12429 = vadd.f32 %v12100, %v12428
        %12430 = vmatmul.bf16.gmra.mxu0 %v6343
        %v12431 = vpop.f32.mrf.mxu0
        %v12432 = vadd.f32 %v12103, %v12431
        %v12433 = vpop.f32.mrf.mxu0
        %v12434 = vadd.f32 %v12105, %v12433
        %12435 = vmatmul.bf16.gmra.mxu0 %v6359
        %v12436 = vpop.f32.mrf.mxu0
        %v12437 = vadd.f32 %v12108, %v12436
        %v12438 = vpop.f32.mrf.mxu0
        %v12439 = vadd.f32 %v12110, %v12438
        %12440 = vmatmul.bf16.gmra.mxu0 %v6375
        %v12441 = vpop.f32.mrf.mxu0
        %v12442 = vadd.f32 %v12113, %v12441
        %v12443 = vpop.f32.mrf.mxu0
        %v12444 = vadd.f32 %v12115, %v12443
        %12445 = vmatmul.bf16.gmra.mxu0 %v6391
        %v12446 = vpop.f32.mrf.mxu0
        %v12447 = vadd.f32 %v12118, %v12446
        %v12448 = vpop.f32.mrf.mxu0
        %v12449 = vadd.f32 %v12120, %v12448
        %12450 = vmatmul.bf16.gmra.mxu0 %v6407
        %v12451 = vpop.f32.mrf.mxu0
        %v12452 = vadd.f32 %v12123, %v12451
        %v12453 = vpop.f32.mrf.mxu0
        %v12454 = vadd.f32 %v12125, %v12453
        %12455 = vmatmul.bf16.gmra.mxu0 %v6423
        %v12456 = vpop.f32.mrf.mxu0
        %v12457 = vadd.f32 %v12128, %v12456
        %v12458 = vpop.f32.mrf.mxu0
        %v12459 = vadd.f32 %v12130, %v12458
        %12460 = vmatmul.bf16.gmra.mxu0 %v6439
        %v12461 = vpop.f32.mrf.mxu0
        %v12462 = vadd.f32 %v12133, %v12461
        %v12463 = vpop.f32.mrf.mxu0
        %v12464 = vadd.f32 %v12135, %v12463
        %12465 = vmatmul.bf16.gmra.mxu0 %v6455
        %v12466 = vpop.f32.mrf.mxu0
        %v12467 = vadd.f32 %v12138, %v12466
        %v12468 = vpop.f32.mrf.mxu0
        %v12469 = vadd.f32 %v12140, %v12468
        %12470 = vmatmul.bf16.gmra.mxu0 %v6471
        %v12471 = vpop.f32.mrf.mxu0
        %v12472 = vadd.f32 %v12143, %v12471
        %v12473 = vpop.f32.mrf.mxu0
        %v12474 = vadd.f32 %v12145, %v12473
        %12475 = vmatmul.bf16.gmra.mxu0 %v6487
        %v12476 = vpop.f32.mrf.mxu0
        %v12477 = vadd.f32 %v12148, %v12476
        %v12478 = vpop.f32.mrf.mxu0
        %v12479 = vadd.f32 %v12150, %v12478
        %12480 = vmatmul.bf16.gmra.mxu0 %v6503
        %v12481 = vpop.f32.mrf.mxu0
        %v12482 = vadd.f32 %v12153, %v12481
        %v12483 = vpop.f32.mrf.mxu0
        %v12484 = vadd.f32 %v12155, %v12483
        %12485 = vmatmul.bf16.gmra.mxu0 %v6519
        %v12486 = vpop.f32.mrf.mxu0
        %v12487 = vadd.f32 %v12158, %v12486
        %v12488 = vpop.f32.mrf.mxu0
        %v12489 = vadd.f32 %v12160, %v12488
        %12490 = vmatmul.bf16.gmra.mxu0 %v6535
        %v12491 = vpop.f32.mrf.mxu0
        %v12492 = vadd.f32 %v12163, %v12491
        %v12493 = vpop.f32.mrf.mxu0
        %v12494 = vadd.f32 %v12165, %v12493
        %12495 = vdwg.mxu0
        %12496 = vmatpush.bf16.msra.mxu0 %v648
        %12497 = vmatpush.bf16.msra.mxu0 %v647
        %12498 = vmatpush.bf16.msra.mxu0 %v646
        %12499 = vmatpush.bf16.msra.mxu0 %v645
        %12500 = vmatpush.bf16.msra.mxu0 %v644
        %12501 = vmatpush.bf16.msra.mxu0 %v643
        %12502 = vmatpush.bf16.msra.mxu0 %v642
        %12503 = vmatpush.bf16.msra.mxu0 %v641
        %12504 = vmatmul.bf16.gmra.mxu0 %v5528
        %v12505 = vpop.f32.mrf.mxu0
        %v12506 = vadd.f32 %v12177, %v12505
        %v12507 = vpop.f32.mrf.mxu0
        %v12508 = vadd.f32 %v12179, %v12507
        %12509 = vmatmul.bf16.gmra.mxu0 %v5544
        %v12510 = vpop.f32.mrf.mxu0
        %v12511 = vadd.f32 %v12182, %v12510
        %v12512 = vpop.f32.mrf.mxu0
        %v12513 = vadd.f32 %v12184, %v12512
        %12514 = vmatmul.bf16.gmra.mxu0 %v5560
        %v12515 = vpop.f32.mrf.mxu0
        %v12516 = vadd.f32 %v12187, %v12515
        %v12517 = vpop.f32.mrf.mxu0
        %v12518 = vadd.f32 %v12189, %v12517
        %12519 = vmatmul.bf16.gmra.mxu0 %v5576
        %v12520 = vpop.f32.mrf.mxu0
        %v12521 = vadd.f32 %v12192, %v12520
        %v12522 = vpop.f32.mrf.mxu0
        %v12523 = vadd.f32 %v12194, %v12522
        %12524 = vmatmul.bf16.gmra.mxu0 %v5592
        %v12525 = vpop.f32.mrf.mxu0
        %v12526 = vadd.f32 %v12197, %v12525
        %v12527 = vpop.f32.mrf.mxu0
        %v12528 = vadd.f32 %v12199, %v12527
        %12529 = vmatmul.bf16.gmra.mxu0 %v5608
        %v12530 = vpop.f32.mrf.mxu0
        %v12531 = vadd.f32 %v12202, %v12530
        %v12532 = vpop.f32.mrf.mxu0
        %v12533 = vadd.f32 %v12204, %v12532
        %12534 = vmatmul.bf16.gmra.mxu0 %v5624
        %v12535 = vpop.f32.mrf.mxu0
        %v12536 = vadd.f32 %v12207, %v12535
        %v12537 = vpop.f32.mrf.mxu0
        %v12538 = vadd.f32 %v12209, %v12537
        %12539 = vmatmul.bf16.gmra.mxu0 %v5640
        %v12540 = vpop.f32.mrf.mxu0
        %v12541 = vadd.f32 %v12212, %v12540
        %v12542 = vpop.f32.mrf.mxu0
        %v12543 = vadd.f32 %v12214, %v12542
        %12544 = vmatmul.bf16.gmra.mxu0 %v5656
        %v12545 = vpop.f32.mrf.mxu0
        %v12546 = vadd.f32 %v12217, %v12545
        %v12547 = vpop.f32.mrf.mxu0
        %v12548 = vadd.f32 %v12219, %v12547
        %12549 = vmatmul.bf16.gmra.mxu0 %v5672
        %v12550 = vpop.f32.mrf.mxu0
        %v12551 = vadd.f32 %v12222, %v12550
        %v12552 = vpop.f32.mrf.mxu0
        %v12553 = vadd.f32 %v12224, %v12552
        %12554 = vmatmul.bf16.gmra.mxu0 %v5688
        %v12555 = vpop.f32.mrf.mxu0
        %v12556 = vadd.f32 %v12227, %v12555
        %v12557 = vpop.f32.mrf.mxu0
        %v12558 = vadd.f32 %v12229, %v12557
        %12559 = vmatmul.bf16.gmra.mxu0 %v5704
        %v12560 = vpop.f32.mrf.mxu0
        %v12561 = vadd.f32 %v12232, %v12560
        %v12562 = vpop.f32.mrf.mxu0
        %v12563 = vadd.f32 %v12234, %v12562
        %12564 = vmatmul.bf16.gmra.mxu0 %v5720
        %v12565 = vpop.f32.mrf.mxu0
        %v12566 = vadd.f32 %v12237, %v12565
        %v12567 = vpop.f32.mrf.mxu0
        %v12568 = vadd.f32 %v12239, %v12567
        %12569 = vmatmul.bf16.gmra.mxu0 %v5736
        %v12570 = vpop.f32.mrf.mxu0
        %v12571 = vadd.f32 %v12242, %v12570
        %v12572 = vpop.f32.mrf.mxu0
        %v12573 = vadd.f32 %v12244, %v12572
        %12574 = vmatmul.bf16.gmra.mxu0 %v5752
        %v12575 = vpop.f32.mrf.mxu0
        %v12576 = vadd.f32 %v12247, %v12575
        %v12577 = vpop.f32.mrf.mxu0
        %v12578 = vadd.f32 %v12249, %v12577
        %12579 = vmatmul.bf16.gmra.mxu0 %v5768
        %v12580 = vpop.f32.mrf.mxu0
        %v12581 = vadd.f32 %v12252, %v12580
        %v12582 = vpop.f32.mrf.mxu0
        %v12583 = vadd.f32 %v12254, %v12582
        %12584 = vmatmul.bf16.gmra.mxu0 %v5784
        %v12585 = vpop.f32.mrf.mxu0
        %v12586 = vadd.f32 %v12257, %v12585
        %v12587 = vpop.f32.mrf.mxu0
        %v12588 = vadd.f32 %v12259, %v12587
        %12589 = vmatmul.bf16.gmra.mxu0 %v5800
        %v12590 = vpop.f32.mrf.mxu0
        %v12591 = vadd.f32 %v12262, %v12590
        %v12592 = vpop.f32.mrf.mxu0
        %v12593 = vadd.f32 %v12264, %v12592
        %12594 = vmatmul.bf16.gmra.mxu0 %v5816
        %v12595 = vpop.f32.mrf.mxu0
        %v12596 = vadd.f32 %v12267, %v12595
        %v12597 = vpop.f32.mrf.mxu0
        %v12598 = vadd.f32 %v12269, %v12597
        %12599 = vmatmul.bf16.gmra.mxu0 %v5832
        %v12600 = vpop.f32.mrf.mxu0
        %v12601 = vadd.f32 %v12272, %v12600
        %v12602 = vpop.f32.mrf.mxu0
        %v12603 = vadd.f32 %v12274, %v12602
        %12604 = vmatmul.bf16.gmra.mxu0 %v5848
        %v12605 = vpop.f32.mrf.mxu0
        %v12606 = vadd.f32 %v12277, %v12605
        %v12607 = vpop.f32.mrf.mxu0
        %v12608 = vadd.f32 %v12279, %v12607
        %12609 = vmatmul.bf16.gmra.mxu0 %v5864
        %v12610 = vpop.f32.mrf.mxu0
        %v12611 = vadd.f32 %v12282, %v12610
        %v12612 = vpop.f32.mrf.mxu0
        %v12613 = vadd.f32 %v12284, %v12612
        %12614 = vmatmul.bf16.gmra.mxu0 %v5880
        %v12615 = vpop.f32.mrf.mxu0
        %v12616 = vadd.f32 %v12287, %v12615
        %v12617 = vpop.f32.mrf.mxu0
        %v12618 = vadd.f32 %v12289, %v12617
        %12619 = vmatmul.bf16.gmra.mxu0 %v5896
        %v12620 = vpop.f32.mrf.mxu0
        %v12621 = vadd.f32 %v12292, %v12620
        %v12622 = vpop.f32.mrf.mxu0
        %v12623 = vadd.f32 %v12294, %v12622
        %12624 = vmatmul.bf16.gmra.mxu0 %v5912
        %v12625 = vpop.f32.mrf.mxu0
        %v12626 = vadd.f32 %v12297, %v12625
        %v12627 = vpop.f32.mrf.mxu0
        %v12628 = vadd.f32 %v12299, %v12627
        %12629 = vmatmul.bf16.gmra.mxu0 %v5928
        %v12630 = vpop.f32.mrf.mxu0
        %v12631 = vadd.f32 %v12302, %v12630
        %v12632 = vpop.f32.mrf.mxu0
        %v12633 = vadd.f32 %v12304, %v12632
        %12634 = vmatmul.bf16.gmra.mxu0 %v5944
        %v12635 = vpop.f32.mrf.mxu0
        %v12636 = vadd.f32 %v12307, %v12635
        %v12637 = vpop.f32.mrf.mxu0
        %v12638 = vadd.f32 %v12309, %v12637
        %12639 = vmatmul.bf16.gmra.mxu0 %v5960
        %v12640 = vpop.f32.mrf.mxu0
        %v12641 = vadd.f32 %v12312, %v12640
        %v12642 = vpop.f32.mrf.mxu0
        %v12643 = vadd.f32 %v12314, %v12642
        %12644 = vmatmul.bf16.gmra.mxu0 %v5976
        %v12645 = vpop.f32.mrf.mxu0
        %v12646 = vadd.f32 %v12317, %v12645
        %v12647 = vpop.f32.mrf.mxu0
        %v12648 = vadd.f32 %v12319, %v12647
        %12649 = vmatmul.bf16.gmra.mxu0 %v5992
        %v12650 = vpop.f32.mrf.mxu0
        %v12651 = vadd.f32 %v12322, %v12650
        %v12652 = vpop.f32.mrf.mxu0
        %v12653 = vadd.f32 %v12324, %v12652
        %12654 = vmatmul.bf16.gmra.mxu0 %v6008
        %v12655 = vpop.f32.mrf.mxu0
        %v12656 = vadd.f32 %v12327, %v12655
        %v12657 = vpop.f32.mrf.mxu0
        %v12658 = vadd.f32 %v12329, %v12657
        %12659 = vmatmul.bf16.gmra.mxu0 %v6024
        %v12660 = vpop.f32.mrf.mxu0
        %v12661 = vadd.f32 %v12332, %v12660
        %v12662 = vpop.f32.mrf.mxu0
        %v12663 = vadd.f32 %v12334, %v12662
        %12664 = vmatmul.bf16.gmra.mxu0 %v6040
        %v12665 = vpop.f32.mrf.mxu0
        %v12666 = vadd.f32 %v12337, %v12665
        %v12667 = vpop.f32.mrf.mxu0
        %v12668 = vadd.f32 %v12339, %v12667
        %12669 = vmatmul.bf16.gmra.mxu0 %v6056
        %v12670 = vpop.f32.mrf.mxu0
        %v12671 = vadd.f32 %v12342, %v12670
        %v12672 = vpop.f32.mrf.mxu0
        %v12673 = vadd.f32 %v12344, %v12672
        %12674 = vmatmul.bf16.gmra.mxu0 %v6072
        %v12675 = vpop.f32.mrf.mxu0
        %v12676 = vadd.f32 %v12347, %v12675
        %v12677 = vpop.f32.mrf.mxu0
        %v12678 = vadd.f32 %v12349, %v12677
        %12679 = vmatmul.bf16.gmra.mxu0 %v6088
        %v12680 = vpop.f32.mrf.mxu0
        %v12681 = vadd.f32 %v12352, %v12680
        %v12682 = vpop.f32.mrf.mxu0
        %v12683 = vadd.f32 %v12354, %v12682
        %12684 = vmatmul.bf16.gmra.mxu0 %v6104
        %v12685 = vpop.f32.mrf.mxu0
        %v12686 = vadd.f32 %v12357, %v12685
        %v12687 = vpop.f32.mrf.mxu0
        %v12688 = vadd.f32 %v12359, %v12687
        %12689 = vmatmul.bf16.gmra.mxu0 %v6120
        %v12690 = vpop.f32.mrf.mxu0
        %v12691 = vadd.f32 %v12362, %v12690
        %v12692 = vpop.f32.mrf.mxu0
        %v12693 = vadd.f32 %v12364, %v12692
        %12694 = vmatmul.bf16.gmra.mxu0 %v6136
        %v12695 = vpop.f32.mrf.mxu0
        %v12696 = vadd.f32 %v12367, %v12695
        %v12697 = vpop.f32.mrf.mxu0
        %v12698 = vadd.f32 %v12369, %v12697
        %12699 = vmatmul.bf16.gmra.mxu0 %v6152
        %v12700 = vpop.f32.mrf.mxu0
        %v12701 = vadd.f32 %v12372, %v12700
        %v12702 = vpop.f32.mrf.mxu0
        %v12703 = vadd.f32 %v12374, %v12702
        %12704 = vmatmul.bf16.gmra.mxu0 %v6168
        %v12705 = vpop.f32.mrf.mxu0
        %v12706 = vadd.f32 %v12377, %v12705
        %v12707 = vpop.f32.mrf.mxu0
        %v12708 = vadd.f32 %v12379, %v12707
        %12709 = vmatmul.bf16.gmra.mxu0 %v6184
        %v12710 = vpop.f32.mrf.mxu0
        %v12711 = vadd.f32 %v12382, %v12710
        %v12712 = vpop.f32.mrf.mxu0
        %v12713 = vadd.f32 %v12384, %v12712
        %12714 = vmatmul.bf16.gmra.mxu0 %v6200
        %v12715 = vpop.f32.mrf.mxu0
        %v12716 = vadd.f32 %v12387, %v12715
        %v12717 = vpop.f32.mrf.mxu0
        %v12718 = vadd.f32 %v12389, %v12717
        %12719 = vmatmul.bf16.gmra.mxu0 %v6216
        %v12720 = vpop.f32.mrf.mxu0
        %v12721 = vadd.f32 %v12392, %v12720
        %v12722 = vpop.f32.mrf.mxu0
        %v12723 = vadd.f32 %v12394, %v12722
        %12724 = vmatmul.bf16.gmra.mxu0 %v6232
        %v12725 = vpop.f32.mrf.mxu0
        %v12726 = vadd.f32 %v12397, %v12725
        %v12727 = vpop.f32.mrf.mxu0
        %v12728 = vadd.f32 %v12399, %v12727
        %12729 = vmatmul.bf16.gmra.mxu0 %v6248
        %v12730 = vpop.f32.mrf.mxu0
        %v12731 = vadd.f32 %v12402, %v12730
        %v12732 = vpop.f32.mrf.mxu0
        %v12733 = vadd.f32 %v12404, %v12732
        %12734 = vmatmul.bf16.gmra.mxu0 %v6264
        %v12735 = vpop.f32.mrf.mxu0
        %v12736 = vadd.f32 %v12407, %v12735
        %v12737 = vpop.f32.mrf.mxu0
        %v12738 = vadd.f32 %v12409, %v12737
        %12739 = vmatmul.bf16.gmra.mxu0 %v6280
        %v12740 = vpop.f32.mrf.mxu0
        %v12741 = vadd.f32 %v12412, %v12740
        %v12742 = vpop.f32.mrf.mxu0
        %v12743 = vadd.f32 %v12414, %v12742
        %12744 = vmatmul.bf16.gmra.mxu0 %v6296
        %v12745 = vpop.f32.mrf.mxu0
        %v12746 = vadd.f32 %v12417, %v12745
        %v12747 = vpop.f32.mrf.mxu0
        %v12748 = vadd.f32 %v12419, %v12747
        %12749 = vmatmul.bf16.gmra.mxu0 %v6312
        %v12750 = vpop.f32.mrf.mxu0
        %v12751 = vadd.f32 %v12422, %v12750
        %v12752 = vpop.f32.mrf.mxu0
        %v12753 = vadd.f32 %v12424, %v12752
        %12754 = vmatmul.bf16.gmra.mxu0 %v6328
        %v12755 = vpop.f32.mrf.mxu0
        %v12756 = vadd.f32 %v12427, %v12755
        %v12757 = vpop.f32.mrf.mxu0
        %v12758 = vadd.f32 %v12429, %v12757
        %12759 = vmatmul.bf16.gmra.mxu0 %v6344
        %v12760 = vpop.f32.mrf.mxu0
        %v12761 = vadd.f32 %v12432, %v12760
        %v12762 = vpop.f32.mrf.mxu0
        %v12763 = vadd.f32 %v12434, %v12762
        %12764 = vmatmul.bf16.gmra.mxu0 %v6360
        %v12765 = vpop.f32.mrf.mxu0
        %v12766 = vadd.f32 %v12437, %v12765
        %v12767 = vpop.f32.mrf.mxu0
        %v12768 = vadd.f32 %v12439, %v12767
        %12769 = vmatmul.bf16.gmra.mxu0 %v6376
        %v12770 = vpop.f32.mrf.mxu0
        %v12771 = vadd.f32 %v12442, %v12770
        %v12772 = vpop.f32.mrf.mxu0
        %v12773 = vadd.f32 %v12444, %v12772
        %12774 = vmatmul.bf16.gmra.mxu0 %v6392
        %v12775 = vpop.f32.mrf.mxu0
        %v12776 = vadd.f32 %v12447, %v12775
        %v12777 = vpop.f32.mrf.mxu0
        %v12778 = vadd.f32 %v12449, %v12777
        %12779 = vmatmul.bf16.gmra.mxu0 %v6408
        %v12780 = vpop.f32.mrf.mxu0
        %v12781 = vadd.f32 %v12452, %v12780
        %v12782 = vpop.f32.mrf.mxu0
        %v12783 = vadd.f32 %v12454, %v12782
        %12784 = vmatmul.bf16.gmra.mxu0 %v6424
        %v12785 = vpop.f32.mrf.mxu0
        %v12786 = vadd.f32 %v12457, %v12785
        %v12787 = vpop.f32.mrf.mxu0
        %v12788 = vadd.f32 %v12459, %v12787
        %12789 = vmatmul.bf16.gmra.mxu0 %v6440
        %v12790 = vpop.f32.mrf.mxu0
        %v12791 = vadd.f32 %v12462, %v12790
        %v12792 = vpop.f32.mrf.mxu0
        %v12793 = vadd.f32 %v12464, %v12792
        %12794 = vmatmul.bf16.gmra.mxu0 %v6456
        %v12795 = vpop.f32.mrf.mxu0
        %v12796 = vadd.f32 %v12467, %v12795
        %v12797 = vpop.f32.mrf.mxu0
        %v12798 = vadd.f32 %v12469, %v12797
        %12799 = vmatmul.bf16.gmra.mxu0 %v6472
        %v12800 = vpop.f32.mrf.mxu0
        %v12801 = vadd.f32 %v12472, %v12800
        %v12802 = vpop.f32.mrf.mxu0
        %v12803 = vadd.f32 %v12474, %v12802
        %12804 = vmatmul.bf16.gmra.mxu0 %v6488
        %v12805 = vpop.f32.mrf.mxu0
        %v12806 = vadd.f32 %v12477, %v12805
        %v12807 = vpop.f32.mrf.mxu0
        %v12808 = vadd.f32 %v12479, %v12807
        %12809 = vmatmul.bf16.gmra.mxu0 %v6504
        %v12810 = vpop.f32.mrf.mxu0
        %v12811 = vadd.f32 %v12482, %v12810
        %v12812 = vpop.f32.mrf.mxu0
        %v12813 = vadd.f32 %v12484, %v12812
        %12814 = vmatmul.bf16.gmra.mxu0 %v6520
        %v12815 = vpop.f32.mrf.mxu0
        %v12816 = vadd.f32 %v12487, %v12815
        %v12817 = vpop.f32.mrf.mxu0
        %v12818 = vadd.f32 %v12489, %v12817
        %12819 = vmatmul.bf16.gmra.mxu0 %v6536
        %v12820 = vpop.f32.mrf.mxu0
        %v12821 = vadd.f32 %v12492, %v12820
        %v12822 = vpop.f32.mrf.mxu0
        %v12823 = vadd.f32 %v12494, %v12822
        %12824 = vdwg.mxu0
        %v12825 = vmax.f32 %v12506, 0.0
        %v12826 = vmax.f32 %v12508, 0.0
        %v12827 = vmax.f32 %v12511, 0.0
        %v12828 = vmax.f32 %v12513, 0.0
        %v12829 = vmax.f32 %v12516, 0.0
        %v12830 = vmax.f32 %v12518, 0.0
        %v12831 = vmax.f32 %v12521, 0.0
        %v12832 = vmax.f32 %v12523, 0.0
        %v12833 = vmax.f32 %v12526, 0.0
        %v12834 = vmax.f32 %v12528, 0.0
        %v12835 = vmax.f32 %v12531, 0.0
        %v12836 = vmax.f32 %v12533, 0.0
        %v12837 = vmax.f32 %v12536, 0.0
        %v12838 = vmax.f32 %v12538, 0.0
        %v12839 = vmax.f32 %v12541, 0.0
        %v12840 = vmax.f32 %v12543, 0.0
        %v12841 = vmax.f32 %v12546, 0.0
        %v12842 = vmax.f32 %v12548, 0.0
        %v12843 = vmax.f32 %v12551, 0.0
        %v12844 = vmax.f32 %v12553, 0.0
        %v12845 = vmax.f32 %v12556, 0.0
        %v12846 = vmax.f32 %v12558, 0.0
        %v12847 = vmax.f32 %v12561, 0.0
        %v12848 = vmax.f32 %v12563, 0.0
        %v12849 = vmax.f32 %v12566, 0.0
        %v12850 = vmax.f32 %v12568, 0.0
        %v12851 = vmax.f32 %v12571, 0.0
        %v12852 = vmax.f32 %v12573, 0.0
        %v12853 = vmax.f32 %v12576, 0.0
        %v12854 = vmax.f32 %v12578, 0.0
        %v12855 = vmax.f32 %v12581, 0.0
        %v12856 = vmax.f32 %v12583, 0.0
        %v12857 = vmax.f32 %v12586, 0.0
        %v12858 = vmax.f32 %v12588, 0.0
        %v12859 = vmax.f32 %v12591, 0.0
        %v12860 = vmax.f32 %v12593, 0.0
        %v12861 = vmax.f32 %v12596, 0.0
        %v12862 = vmax.f32 %v12598, 0.0
        %v12863 = vmax.f32 %v12601, 0.0
        %v12864 = vmax.f32 %v12603, 0.0
        %v12865 = vmax.f32 %v12606, 0.0
        %v12866 = vmax.f32 %v12608, 0.0
        %v12867 = vmax.f32 %v12611, 0.0
        %v12868 = vmax.f32 %v12613, 0.0
        %v12869 = vmax.f32 %v12616, 0.0
        %v12870 = vmax.f32 %v12618, 0.0
        %v12871 = vmax.f32 %v12621, 0.0
        %v12872 = vmax.f32 %v12623, 0.0
        %v12873 = vmax.f32 %v12626, 0.0
        %v12874 = vmax.f32 %v12628, 0.0
        %v12875 = vmax.f32 %v12631, 0.0
        %v12876 = vmax.f32 %v12633, 0.0
        %v12877 = vmax.f32 %v12636, 0.0
        %v12878 = vmax.f32 %v12638, 0.0
        %v12879 = vmax.f32 %v12641, 0.0
        %v12880 = vmax.f32 %v12643, 0.0
        %v12881 = vmax.f32 %v12646, 0.0
        %v12882 = vmax.f32 %v12648, 0.0
        %v12883 = vmax.f32 %v12651, 0.0
        %v12884 = vmax.f32 %v12653, 0.0
        %v12885 = vmax.f32 %v12656, 0.0
        %v12886 = vmax.f32 %v12658, 0.0
        %v12887 = vmax.f32 %v12661, 0.0
        %v12888 = vmax.f32 %v12663, 0.0
        %v12889 = vmax.f32 %v12666, 0.0
        %v12890 = vmax.f32 %v12668, 0.0
        %v12891 = vmax.f32 %v12671, 0.0
        %v12892 = vmax.f32 %v12673, 0.0
        %v12893 = vmax.f32 %v12676, 0.0
        %v12894 = vmax.f32 %v12678, 0.0
        %v12895 = vmax.f32 %v12681, 0.0
        %v12896 = vmax.f32 %v12683, 0.0
        %v12897 = vmax.f32 %v12686, 0.0
        %v12898 = vmax.f32 %v12688, 0.0
        %v12899 = vmax.f32 %v12691, 0.0
        %v12900 = vmax.f32 %v12693, 0.0
        %v12901 = vmax.f32 %v12696, 0.0
        %v12902 = vmax.f32 %v12698, 0.0
        %v12903 = vmax.f32 %v12701, 0.0
        %v12904 = vmax.f32 %v12703, 0.0
        %v12905 = vmax.f32 %v12706, 0.0
        %v12906 = vmax.f32 %v12708, 0.0
        %v12907 = vmax.f32 %v12711, 0.0
        %v12908 = vmax.f32 %v12713, 0.0
        %v12909 = vmax.f32 %v12716, 0.0
        %v12910 = vmax.f32 %v12718, 0.0
        %v12911 = vmax.f32 %v12721, 0.0
        %v12912 = vmax.f32 %v12723, 0.0
        %v12913 = vmax.f32 %v12726, 0.0
        %v12914 = vmax.f32 %v12728, 0.0
        %v12915 = vmax.f32 %v12731, 0.0
        %v12916 = vmax.f32 %v12733, 0.0
        %v12917 = vmax.f32 %v12736, 0.0
        %v12918 = vmax.f32 %v12738, 0.0
        %v12919 = vmax.f32 %v12741, 0.0
        %v12920 = vmax.f32 %v12743, 0.0
        %v12921 = vmax.f32 %v12746, 0.0
        %v12922 = vmax.f32 %v12748, 0.0
        %v12923 = vmax.f32 %v12751, 0.0
        %v12924 = vmax.f32 %v12753, 0.0
        %v12925 = vmax.f32 %v12756, 0.0
        %v12926 = vmax.f32 %v12758, 0.0
        %v12927 = vmax.f32 %v12761, 0.0
        %v12928 = vmax.f32 %v12763, 0.0
        %v12929 = vmax.f32 %v12766, 0.0
        %v12930 = vmax.f32 %v12768, 0.0
        %v12931 = vmax.f32 %v12771, 0.0
        %v12932 = vmax.f32 %v12773, 0.0
        %v12933 = vmax.f32 %v12776, 0.0
        %v12934 = vmax.f32 %v12778, 0.0
        %v12935 = vmax.f32 %v12781, 0.0
        %v12936 = vmax.f32 %v12783, 0.0
        %v12937 = vmax.f32 %v12786, 0.0
        %v12938 = vmax.f32 %v12788, 0.0
        %v12939 = vmax.f32 %v12791, 0.0
        %v12940 = vmax.f32 %v12793, 0.0
        %v12941 = vmax.f32 %v12796, 0.0
        %v12942 = vmax.f32 %v12798, 0.0
        %v12943 = vmax.f32 %v12801, 0.0
        %v12944 = vmax.f32 %v12803, 0.0
        %v12945 = vmax.f32 %v12806, 0.0
        %v12946 = vmax.f32 %v12808, 0.0
        %v12947 = vmax.f32 %v12811, 0.0
        %v12948 = vmax.f32 %v12813, 0.0
        %v12949 = vmax.f32 %v12816, 0.0
        %v12950 = vmax.f32 %v12818, 0.0
        %v12951 = vmax.f32 %v12821, 0.0
        %v12952 = vmax.f32 %v12823, 0.0
        %12953 = vst [vmem:[%s257] sm:$0xff] %v12825
        %12954 = vst [vmem:[%s257 + $0x8] sm:$0xff] %v12826
        %12955 = vst [vmem:[%s257 + $0x10] sm:$0xff] %v12827
        %12956 = vst [vmem:[%s257 + $0x18] sm:$0xff] %v12828
        %12957 = vst [vmem:[%s257 + $0x20] sm:$0xff] %v12829
        %12958 = vst [vmem:[%s257 + $0x28] sm:$0xff] %v12830
        %12959 = vst [vmem:[%s257 + $0x30] sm:$0xff] %v12831
        %12960 = vst [vmem:[%s257 + $0x38] sm:$0xff] %v12832
        %12961 = vst [vmem:[%s257 + $0x40] sm:$0xff] %v12833
        %12962 = vst [vmem:[%s257 + $0x48] sm:$0xff] %v12834
        %12963 = vst [vmem:[%s257 + $0x50] sm:$0xff] %v12835
        %12964 = vst [vmem:[%s257 + $0x58] sm:$0xff] %v12836
        %12965 = vst [vmem:[%s257 + $0x60] sm:$0xff] %v12837
        %12966 = vst [vmem:[%s257 + $0x68] sm:$0xff] %v12838
        %12967 = vst [vmem:[%s257 + $0x70] sm:$0xff] %v12839
        %12968 = vst [vmem:[%s257 + $0x78] sm:$0xff] %v12840
        %12969 = vst [vmem:[%s257 + $0x80] sm:$0xff] %v12841
        %12970 = vst [vmem:[%s257 + $0x88] sm:$0xff] %v12842
        %12971 = vst [vmem:[%s257 + $0x90] sm:$0xff] %v12843
        %12972 = vst [vmem:[%s257 + $0x98] sm:$0xff] %v12844
        %12973 = vst [vmem:[%s257 + $0xa0] sm:$0xff] %v12845
        %12974 = vst [vmem:[%s257 + $0xa8] sm:$0xff] %v12846
        %12975 = vst [vmem:[%s257 + $0xb0] sm:$0xff] %v12847
        %12976 = vst [vmem:[%s257 + $0xb8] sm:$0xff] %v12848
        %12977 = vst [vmem:[%s257 + $0xc0] sm:$0xff] %v12849
        %12978 = vst [vmem:[%s257 + $0xc8] sm:$0xff] %v12850
        %12979 = vst [vmem:[%s257 + $0xd0] sm:$0xff] %v12851
        %12980 = vst [vmem:[%s257 + $0xd8] sm:$0xff] %v12852
        %12981 = vst [vmem:[%s257 + $0xe0] sm:$0xff] %v12853
        %12982 = vst [vmem:[%s257 + $0xe8] sm:$0xff] %v12854
        %12983 = vst [vmem:[%s257 + $0xf0] sm:$0xff] %v12855
        %12984 = vst [vmem:[%s257 + $0xf8] sm:$0xff] %v12856
        %12985 = vst [vmem:[%s257 + $0x100] sm:$0xff] %v12857
        %12986 = vst [vmem:[%s257 + $0x108] sm:$0xff] %v12858
        %12987 = vst [vmem:[%s257 + $0x110] sm:$0xff] %v12859
        %12988 = vst [vmem:[%s257 + $0x118] sm:$0xff] %v12860
        %12989 = vst [vmem:[%s257 + $0x120] sm:$0xff] %v12861
        %12990 = vst [vmem:[%s257 + $0x128] sm:$0xff] %v12862
        %12991 = vst [vmem:[%s257 + $0x130] sm:$0xff] %v12863
        %12992 = vst [vmem:[%s257 + $0x138] sm:$0xff] %v12864
        %12993 = vst [vmem:[%s257 + $0x140] sm:$0xff] %v12865
        %12994 = vst [vmem:[%s257 + $0x148] sm:$0xff] %v12866
        %12995 = vst [vmem:[%s257 + $0x150] sm:$0xff] %v12867
        %12996 = vst [vmem:[%s257 + $0x158] sm:$0xff] %v12868
        %12997 = vst [vmem:[%s257 + $0x160] sm:$0xff] %v12869
        %12998 = vst [vmem:[%s257 + $0x168] sm:$0xff] %v12870
        %12999 = vst [vmem:[%s257 + $0x170] sm:$0xff] %v12871
        %13000 = vst [vmem:[%s257 + $0x178] sm:$0xff] %v12872
        %13001 = vst [vmem:[%s257 + $0x180] sm:$0xff] %v12873
        %13002 = vst [vmem:[%s257 + $0x188] sm:$0xff] %v12874
        %13003 = vst [vmem:[%s257 + $0x190] sm:$0xff] %v12875
        %13004 = vst [vmem:[%s257 + $0x198] sm:$0xff] %v12876
        %13005 = vst [vmem:[%s257 + $0x1a0] sm:$0xff] %v12877
        %13006 = vst [vmem:[%s257 + $0x1a8] sm:$0xff] %v12878
        %13007 = vst [vmem:[%s257 + $0x1b0] sm:$0xff] %v12879
        %13008 = vst [vmem:[%s257 + $0x1b8] sm:$0xff] %v12880
        %13009 = vst [vmem:[%s257 + $0x1c0] sm:$0xff] %v12881
        %13010 = vst [vmem:[%s257 + $0x1c8] sm:$0xff] %v12882
        %13011 = vst [vmem:[%s257 + $0x1d0] sm:$0xff] %v12883
        %13012 = vst [vmem:[%s257 + $0x1d8] sm:$0xff] %v12884
        %13013 = vst [vmem:[%s257 + $0x1e0] sm:$0xff] %v12885
        %13014 = vst [vmem:[%s257 + $0x1e8] sm:$0xff] %v12886
        %13015 = vst [vmem:[%s257 + $0x1f0] sm:$0xff] %v12887
        %13016 = vst [vmem:[%s257 + $0x1f8] sm:$0xff] %v12888
        %13017 = vst [vmem:[%s264] sm:$0xff] %v12889
        %13018 = vst [vmem:[%s264 + $0x8] sm:$0xff] %v12890
        %13019 = vst [vmem:[%s264 + $0x10] sm:$0xff] %v12891
        %13020 = vst [vmem:[%s264 + $0x18] sm:$0xff] %v12892
        %13021 = vst [vmem:[%s264 + $0x20] sm:$0xff] %v12893
        %13022 = vst [vmem:[%s264 + $0x28] sm:$0xff] %v12894
        %13023 = vst [vmem:[%s264 + $0x30] sm:$0xff] %v12895
        %13024 = vst [vmem:[%s264 + $0x38] sm:$0xff] %v12896
        %13025 = vst [vmem:[%s264 + $0x40] sm:$0xff] %v12897
        %13026 = vst [vmem:[%s264 + $0x48] sm:$0xff] %v12898
        %13027 = vst [vmem:[%s264 + $0x50] sm:$0xff] %v12899
        %13028 = vst [vmem:[%s264 + $0x58] sm:$0xff] %v12900
        %13029 = vst [vmem:[%s264 + $0x60] sm:$0xff] %v12901
        %13030 = vst [vmem:[%s264 + $0x68] sm:$0xff] %v12902
        %13031 = vst [vmem:[%s264 + $0x70] sm:$0xff] %v12903
        %13032 = vst [vmem:[%s264 + $0x78] sm:$0xff] %v12904
        %13033 = vst [vmem:[%s264 + $0x80] sm:$0xff] %v12905
        %13034 = vst [vmem:[%s264 + $0x88] sm:$0xff] %v12906
        %13035 = vst [vmem:[%s264 + $0x90] sm:$0xff] %v12907
        %13036 = vst [vmem:[%s264 + $0x98] sm:$0xff] %v12908
        %13037 = vst [vmem:[%s264 + $0xa0] sm:$0xff] %v12909
        %13038 = vst [vmem:[%s264 + $0xa8] sm:$0xff] %v12910
        %13039 = vst [vmem:[%s264 + $0xb0] sm:$0xff] %v12911
        %13040 = vst [vmem:[%s264 + $0xb8] sm:$0xff] %v12912
        %13041 = vst [vmem:[%s264 + $0xc0] sm:$0xff] %v12913
        %13042 = vst [vmem:[%s264 + $0xc8] sm:$0xff] %v12914
        %13043 = vst [vmem:[%s264 + $0xd0] sm:$0xff] %v12915
        %13044 = vst [vmem:[%s264 + $0xd8] sm:$0xff] %v12916
        %13045 = vst [vmem:[%s264 + $0xe0] sm:$0xff] %v12917
        %13046 = vst [vmem:[%s264 + $0xe8] sm:$0xff] %v12918
        %13047 = vst [vmem:[%s264 + $0xf0] sm:$0xff] %v12919
        %13048 = vst [vmem:[%s264 + $0xf8] sm:$0xff] %v12920
        %13049 = vst [vmem:[%s264 + $0x100] sm:$0xff] %v12921
        %13050 = vst [vmem:[%s264 + $0x108] sm:$0xff] %v12922
        %13051 = vst [vmem:[%s264 + $0x110] sm:$0xff] %v12923
        %13052 = vst [vmem:[%s264 + $0x118] sm:$0xff] %v12924
        %13053 = vst [vmem:[%s264 + $0x120] sm:$0xff] %v12925
        %13054 = vst [vmem:[%s264 + $0x128] sm:$0xff] %v12926
        %13055 = vst [vmem:[%s264 + $0x130] sm:$0xff] %v12927
        %13056 = vst [vmem:[%s264 + $0x138] sm:$0xff] %v12928
        %13057 = vst [vmem:[%s264 + $0x140] sm:$0xff] %v12929
        %13058 = vst [vmem:[%s264 + $0x148] sm:$0xff] %v12930
        %13059 = vst [vmem:[%s264 + $0x150] sm:$0xff] %v12931
        %13060 = vst [vmem:[%s264 + $0x158] sm:$0xff] %v12932
        %13061 = vst [vmem:[%s264 + $0x160] sm:$0xff] %v12933
        %13062 = vst [vmem:[%s264 + $0x168] sm:$0xff] %v12934
        %13063 = vst [vmem:[%s264 + $0x170] sm:$0xff] %v12935
        %13064 = vst [vmem:[%s264 + $0x178] sm:$0xff] %v12936
        %13065 = vst [vmem:[%s264 + $0x180] sm:$0xff] %v12937
        %13066 = vst [vmem:[%s264 + $0x188] sm:$0xff] %v12938
        %13067 = vst [vmem:[%s264 + $0x190] sm:$0xff] %v12939
        %13068 = vst [vmem:[%s264 + $0x198] sm:$0xff] %v12940
        %13069 = vst [vmem:[%s264 + $0x1a0] sm:$0xff] %v12941
        %13070 = vst [vmem:[%s264 + $0x1a8] sm:$0xff] %v12942
        %13071 = vst [vmem:[%s264 + $0x1b0] sm:$0xff] %v12943
        %13072 = vst [vmem:[%s264 + $0x1b8] sm:$0xff] %v12944
        %13073 = vst [vmem:[%s264 + $0x1c0] sm:$0xff] %v12945
        %13074 = vst [vmem:[%s264 + $0x1c8] sm:$0xff] %v12946
        %13075 = vst [vmem:[%s264 + $0x1d0] sm:$0xff] %v12947
        %13076 = vst [vmem:[%s264 + $0x1d8] sm:$0xff] %v12948
        %13077 = vst [vmem:[%s264 + $0x1e0] sm:$0xff] %v12949
        %13078 = vst [vmem:[%s264 + $0x1e8] sm:$0xff] %v12950
        %13079 = vst [vmem:[%s264 + $0x1f0] sm:$0xff] %v12951
        %13080 = vst [vmem:[%s264 + $0x1f8] sm:$0xff] %v12952
        %s13081 = sand.u32 %s118, 1
        %s13082 = scalar_lea.sflag [#allocation4], %s13081
        %s13083 = sand.u32 %s118, 1
        %s13084 = smul.addr %s13083, 512
        %s13085 = scalar_lea.vmem [#allocation7], %s13084
        %s13086 = sand.u32 %s146, 1
        %s13087 = scalar_lea.sflag [#allocation9], %s13086
        %s13088 = sand.u32 %s146, 1
        %s13089 = smul.addr %s13088, 512
        %s13090 = scalar_lea.vmem [#allocation8], %s13089
        // Predicated region
        $region41: #{tpu_custom_call.1} parent=31 // pred_check
          %p13091 = pneg %p128
        $region42: #{tpu_custom_call.1} parent=31 // pred_check_branch
          %13093 = sbr.rel (%p13091) target = $region44
        $region43: #{tpu_custom_call.1} parent=31 // pred_region
          %13095 = vsyncadd %s13082, 0
          %s13096 = smul.addr %s30, 64
          %s13097 = sadd.s32 %s31, %s13096
          %s13098 = smul.addr %s13097, 8
          %s13099 = scalar_lea.hbm %s3, %s13098
          %s13100 = sshll.u32 %s13085, 4
          %s13101 = int_to_ptr.vmem [resolvable:$true] %s13100
          %s13102 = sshll.u32 %s13099, 4
          %s13103 = int_to_ptr.hbm [resolvable:$true] %s13102
          %13108 = dma.vmem_to_hbm [thread:$0]  %s13101, 8192, %s13103, %s13082, 128, 128, 8
        $region44: #{tpu_custom_call.1} parent=31 // pred_fallthru
          _
        // Predicated region
        $region45: #{tpu_custom_call.1} parent=31 // pred_check
          %p13109 = pneg %p156
        $region46: #{tpu_custom_call.1} parent=31 // pred_check_branch
          %13111 = sbr.rel (%p13109) target = $region48
        $region47: #{tpu_custom_call.1} parent=31 // pred_region
          %13113 = vsyncadd %s13087, 0
          %s13114 = smul.addr %s30, 64
          %s13115 = sadd.s32 %s31, %s13114
          %s13116 = smul.addr %s13115, 8
          %s13117 = scalar_lea.hbm %s4, %s13116
          %s13118 = sshll.u32 %s13090, 4
          %s13119 = int_to_ptr.vmem [resolvable:$true] %s13118
          %s13120 = sshll.u32 %s13117, 4
          %s13121 = int_to_ptr.hbm [resolvable:$true] %s13120
          %13126 = dma.vmem_to_hbm [thread:$0]  %s13119, 8192, %s13121, %s13087, 128, 128, 8
        $region48: #{tpu_custom_call.1} parent=31 // pred_fallthru
          _
      $region32: #{tpu_custom_call.1} parent=5 // pred_fallthru
        _
      %p13127 = scmp.le.s32.totalorder 2, %s21
      // Predicated region
      $region49: #{tpu_custom_call.1} parent=5 // pred_check
        %p13128 = pneg %p13127
      $region50: #{tpu_custom_call.1} parent=5 // pred_check_branch
        %13130 = sbr.rel (%p13128) target = $region52
      $region51: #{tpu_custom_call.1} parent=5 // pred_region
        %s13131 = ssub.s32 %s21, 2
        // Predicated region
        $region53: #{tpu_custom_call.1} parent=51 // pred_check
          %p13132 = pneg %p134
        $region54: #{tpu_custom_call.1} parent=51 // pred_check_branch
          %13134 = sbr.rel (%p13132) target = $region56
        $region55: #{tpu_custom_call.1} parent=51 // pred_region
          %s13135 = sand.u32 %s119, 1
          %s13136 = scalar_lea.sflag [#allocation4], %s13135
          %s13137 = sand.u32 %s119, 1
          %s13138 = smul.addr %s13137, 512
          %s13139 = scalar_lea.vmem [#allocation7], %s13138
          %13141 = dma.done %s13136, 8192
        $region56: #{tpu_custom_call.1} parent=51 // pred_fallthru
          _
        // Predicated region
        $region57: #{tpu_custom_call.1} parent=51 // pred_check
          %p13142 = pneg %p162
        $region58: #{tpu_custom_call.1} parent=51 // pred_check_branch
          %13144 = sbr.rel (%p13142) target = $region60
        $region59: #{tpu_custom_call.1} parent=51 // pred_region
          %s13145 = sand.u32 %s147, 1
          %s13146 = scalar_lea.sflag [#allocation9], %s13145
          %s13147 = sand.u32 %s147, 1
          %s13148 = smul.addr %s13147, 512
          %s13149 = scalar_lea.vmem [#allocation8], %s13148
          %13151 = dma.done %s13146, 8192
        $region60: #{tpu_custom_call.1} parent=51 // pred_fallthru
          _
      $region52: #{tpu_custom_call.1} parent=5 // pred_fallthru
        _
    $region6: #{tpu_custom_call.1} parent=1 // loop_footer
      %s25 = sadd.s32 1, %s21
    $region7: #{tpu_custom_call.1} parent=1 // loop_footer_branch
      %20 = sbr.rel target = $region3
    $region8: #{tpu_custom_call.1} parent=1 // loop_exit
      _
    %13152 = vsyncpa [#allocation3], 1
    %s13153 = scalar_lea.sflag [#allocation3], 1
    %13154 = vsyncpa %s13153, 1
    %13155 = vsyncpa [#allocation6], 1
    %13156 = vsyncpa [#allocation4], 1
    %s13157 = scalar_lea.sflag [#allocation4], 1
    %13158 = vsyncpa %s13157, 1
    %13159 = vsyncpa [#allocation9], 1
    %s13160 = scalar_lea.sflag [#allocation9], 1
    %13161 = vsyncpa %s13160, 1

</llo_original>
